<compile_context>
chip_gen: v6e
topology: v6e:2x2x1
jax: 0.10.0
libtpu: 0.0.40
codegen_flags: <defaults>
</compile_context>

<pallas_src>
import functools

import jax
import jax.numpy as jnp
from jax.experimental import pallas as pl
from jax.experimental.pallas import tpu as pltpu

LN_EPS = 1e-5  # torch.nn.LayerNorm default


# --------------------------------------------------------------------------------------
# Pallas kernel: full Universal-Transformer forward for one (Bb, L, D) batch block
# --------------------------------------------------------------------------------------
def _layer_norm(x, gamma, beta):
    mu = jnp.mean(x, axis=-1, keepdims=True)
    var = jnp.mean((x - mu) ** 2, axis=-1, keepdims=True)
    return (x - mu) * jax.lax.rsqrt(var + LN_EPS) * gamma + beta


def _fused_ut_kernel(x_ref, bias_ref, time_ref,
                     wq_ref, wk_ref, wv_ref, wo_ref,
                     bq_ref, bk_ref, bv_ref, bo_ref,
                     g1_ref, be1_ref,
                     w1_ref, b1_ref, w2_ref, b2_ref,
                     g2_ref, be2_ref,
                     hw1_ref, hb1_ref, hw2_ref, hb2_ref,
                     o_ref,
                     *, num_heads, num_steps):
    Bb, L, D = x_ref.shape
    C_pad = o_ref.shape[2]
    H = num_heads
    dh = D // H
    scale = 1.0 / (dh ** 0.5)
    f32, bf16 = jnp.float32, jnp.bfloat16

    # ---- loop-invariant loads / broadcasts (hoisted: JAX does not CSE broadcasts) ------
    bias_full = jnp.broadcast_to(bias_ref[...], (Bb, L, L))     # additive key-padding bias
    bq, bk, bv, bo = bq_ref[...], bk_ref[...], bv_ref[...], bo_ref[...]
    b1, b2 = b1_ref[...], b2_ref[...]
    g1, be1 = g1_ref[...], be1_ref[...]
    g2, be2 = g2_ref[...], be2_ref[...]

    # residual stream kept in f32; input block arrives bf16 (halves the input DMA)
    x = x_ref[...].astype(f32).reshape(Bb * L, D)

    def ut_step(step, x):
        # x = x + time_embedding[step]
        x = x + time_ref[pl.ds(step, 1), :]               # (1, D) broadcast over all rows
        xb = x.astype(bf16)

        # ---- Q/K/V projections on the full (Bb*L, D) slab (bf16 in, f32 accum) --------
        # 1/sqrt(dh) folded into q once per step (one (R,D) mul instead of per-head score mul)
        q = (jnp.dot(xb, wq_ref[...], preferred_element_type=f32) + bq) * scale
        k = jnp.dot(xb, wk_ref[...], preferred_element_type=f32) + bk
        v = jnp.dot(xb, wv_ref[...], preferred_element_type=f32) + bv

        # ---- multi-head self-attention -------------------------------------------------
        # Static loop over heads (H small); only one (Bb,L,L) score buffer is live at a time.
        ctx_heads = []
        for h in range(H):
            cs = slice(h * dh, (h + 1) * dh)
            qh = q[:, cs].astype(bf16).reshape(Bb, L, dh)
            kh = k[:, cs].astype(bf16).reshape(Bb, L, dh)
            vh = v[:, cs].astype(bf16).reshape(Bb, L, dh)
            s = jnp.einsum('bqd,bkd->bqk', qh, kh,
                           preferred_element_type=f32) + bias_full
            s = s - jnp.max(s, axis=-1, keepdims=True)
            p = jnp.exp(s)
            p = p * pl.reciprocal(jnp.sum(p, axis=-1, keepdims=True), approx=True)
            ctx = jnp.einsum('bqk,bkd->bqd', p.astype(bf16), vh,
                             preferred_element_type=f32)
            ctx_heads.append(ctx.reshape(Bb * L, dh).astype(bf16))

        # Single full-K (K = D) output projection instead of H small K = dh matmuls.
        ctx_full = jnp.concatenate(ctx_heads, axis=-1)            # (Bb*L, D) bf16
        attn = jnp.dot(ctx_full, wo_ref[...], preferred_element_type=f32) + bo

        # ---- residual + LayerNorm 1 (post-norm; dropout identity in eval) --------------
        h1 = _layer_norm(x + attn, g1, be1)

        # ---- feed-forward: Linear -> ReLU -> Linear -------------------------------------
        ff = jnp.maximum(
            jnp.dot(h1.astype(bf16), w1_ref[...], preferred_element_type=f32) + b1, 0.0)
        ff = jnp.dot(ff.astype(bf16), w2_ref[...], preferred_element_type=f32) + b2

        # ---- residual + LayerNorm 2 ------------------------------------------------------
        return _layer_norm(h1 + ff, g2, be2)

    if num_steps <= 4:
        # short, fixed trip count: unroll at trace time for cross-step scheduler visibility
        for step in range(num_steps):
            x = ut_step(step, x)
    else:
        x = jax.lax.fori_loop(0, num_steps, ut_step, x)

    # ---- fused output head: Linear(D,D) -> ReLU -> Linear(D, C_pad), bf16 writeback ----
    hh = jnp.maximum(
        jnp.dot(x.astype(bf16), hw1_ref[...], preferred_element_type=f32) + hb1_ref[...], 0.0)
    out = jnp.dot(hh.astype(bf16), hw2_ref[...], preferred_element_type=f32) + hb2_ref[...]
    o_ref[...] = out.reshape(Bb, L, C_pad).astype(o_ref.dtype)


# --------------------------------------------------------------------------------------
# pallas_call wrapper
# --------------------------------------------------------------------------------------
def _vmem_capacity_bytes():
    """Physical VMEM of the local TPU generation (conservative fallback if unknown)."""
    try:
        return int(pltpu.get_tpu_info().vmem_capacity_bytes)
    except Exception:
        return 64 * 1024 * 1024        # assume the smallest (v7x-sized) VMEM


def _replicated_spec(shape, *, single_buffer):
    """BlockSpec for an array replicated across the batch grid (block == full array).

    Weights are never re-fetched (constant index_map), so request a single pipeline
    buffer when supported; fall back to the default double buffering otherwise.
    """
    index_map = lambda b: (0,) * len(shape)
    if single_buffer:
        try:
            return pl.BlockSpec(shape, index_map, pipeline_mode=pl.Buffered(1))
        except Exception:
            pass
    return pl.BlockSpec(shape, index_map)


def _pick_batch_block(B, L, D, Dff, C_pad, act_budget_bytes, target_rows=512):
    """Largest divisor of B whose per-block live activations fit the VMEM budget.

    Only one head's (Bb,L,L) score buffer is live at a time (sequential head loop), so
    scores are NOT multiplied by num_heads.  Also keeps >= 2 grid blocks when B > 1 so
    v7x's two TensorCores both get work (harmless extra grid step on 1-TC chips).
    """
    best = 1
    for bb in range(1, B + 1):
        if B % bb:
            continue
        rows = bb * L
        live = rows * (10 * D + Dff + C_pad) * 4 + 2 * bb * L * L * 4
        if bb > 1 and live > act_budget_bytes:
            break
        best = bb
        if rows >= target_rows:
            break
    if B > 1 and B // best < 2:
        best = max(d for d in range(1, B) if B % d == 0)   # largest proper divisor
    return best


def universal_transformer_forward(tokens, attention_mask, params, *, num_heads, num_steps,
                                  batch_block=None):
    B, L = tokens.shape
    D = params["embedding"].shape[1]
    Dff = params["w1"].shape[1]
    C = params["head_w2"].shape[1]
    C_pad = ((C + 127) // 128) * 128          # lane-dense output; sliced back below

    # --- glue in plain JAX: embedding gather, positional add, key-padding bias ---
    # x block crosses HBM in bf16 (residual math stays f32 inside the kernel).
    x = (params["embedding"][tokens] + params["pos"][:L][None, :, :]).astype(jnp.bfloat16)
    if attention_mask is None:
        bias = jnp.zeros((B, 1, L), jnp.float32)
    else:
        bias = (1.0 - attention_mask.astype(jnp.float32))[:, None, :] * -1e9

    # --- cast matmul weights to bf16 once (kernel accumulates in f32) ---
    bf = lambda w: w.astype(jnp.bfloat16)
    wq, wk, wv, wo = bf(params["wq"]), bf(params["wk"]), bf(params["wv"]), bf(params["wo"])
    w1, w2, hw1 = bf(params["w1"]), bf(params["w2"]), bf(params["head_w1"])
    hw2 = jnp.zeros((D, C_pad), jnp.bfloat16).at[:, :C].set(bf(params["head_w2"]))
    hb2 = jnp.zeros((1, C_pad), jnp.float32).at[:, :C].set(params["head_b2"])

    # --- generation-aware VMEM budget --------------------------------------------------
    cap = _vmem_capacity_bytes()
    if cap >= 96 * 1024 * 1024:                       # v5e / v6e: 128 MiB physical
        safe_cap = min(cap - (16 << 20), 112 << 20)
    else:                                             # v7x: 64 MiB per TensorCore
        safe_cap = (cap * 3) // 4                     # ~48 MiB, leave compiler headroom

    weight_bytes = 2 * (5 * D * D + 2 * D * Dff + D * C_pad)          # resident bf16 weights
    small_bytes = 4 * (num_steps * D + 14 * D + 2 * C_pad)            # biases / LN / time
    act_budget = max(safe_cap - 2 * weight_bytes - small_bytes - (4 << 20), 2 << 20)

    Bb = batch_block if batch_block is not None else _pick_batch_block(
        B, L, D, Dff, C_pad, act_budget)
    assert B % Bb == 0
    R = Bb * L

    io_bytes = 2 * (R * D * 2 + Bb * L * 4 + R * C_pad * 2)           # double-buffered blocks
    live_bytes = R * (10 * D + Dff + C_pad) * 4 + 2 * Bb * L * L * 4  # in-step temporaries
    need = 2 * weight_bytes + small_bytes + io_bytes + live_bytes
    vmem_limit = int(min(safe_cap, max(2 * need, 24 << 20)))

    kernel = functools.partial(_fused_ut_kernel, num_heads=num_heads, num_steps=num_steps)
    operands = (x, bias, params["time"],
                wq, wk, wv, wo,
                params["bq"], params["bk"], params["bv"], params["bo"],
                params["ln1_g"], params["ln1_b"],
                w1, params["b1"], w2, params["b2"],
                params["ln2_g"], params["ln2_b"],
                hw1, params["head_b1"], hw2, hb2)

    def run(single_buffer_weights):
        rep = functools.partial(_replicated_spec, single_buffer=single_buffer_weights)
        in_specs = [
            pl.BlockSpec((Bb, L, D), lambda b: (b, 0, 0)),      # x block (bf16)
            pl.BlockSpec((Bb, 1, L), lambda b: (b, 0, 0)),      # additive mask bias
            rep((num_steps, D)),                                # time-embedding table
            rep((D, D)), rep((D, D)), rep((D, D)), rep((D, D)), # wq, wk, wv, wo
            rep((1, D)), rep((1, D)), rep((1, D)), rep((1, D)), # bq, bk, bv, bo
            rep((1, D)), rep((1, D)),                           # ln1 gamma, beta
            rep((D, Dff)), rep((1, Dff)),                       # ffn w1, b1
            rep((Dff, D)), rep((1, D)),                         # ffn w2, b2
            rep((1, D)), rep((1, D)),                           # ln2 gamma, beta
            rep((D, D)), rep((1, D)),                           # head w1, b1
            rep((D, C_pad)), rep((1, C_pad)),                   # head w2, b2 (lane padded)
        ]
        return pl.pallas_call(
            kernel,
            out_shape=jax.ShapeDtypeStruct((B, L, C_pad), jnp.bfloat16),
            grid=(B // Bb,),
            in_specs=in_specs,
            out_specs=pl.BlockSpec((Bb, L, C_pad), lambda b: (b, 0, 0)),
            compiler_params=pltpu.CompilerParams(
                dimension_semantics=("parallel",),
                vmem_limit_bytes=vmem_limit),
        )(*operands)

    try:
        out = run(True)                 # single-buffered replicated weights
    except Exception:
        out = run(False)                # fall back to default double buffering

    return out[:, :, :C].astype(jnp.float32)


# --------------------------------------------------------------------------------------
# Parameters + pure-JAX reference (f32) for verification
# --------------------------------------------------------------------------------------
def init_params(key, vocab_size, num_classes, d_model, num_steps, max_len=1024):
    ks = jax.random.split(key, 24)
    s = 0.02
    n = lambda k, shape: jax.random.normal(k, shape, jnp.float32) * s
    return {
        "embedding": n(ks[0], (vocab_size, d_model)),
        "pos": n(ks[1], (max_len, d_model)),
        "time": n(ks[2], (num_steps, d_model)),
        "wq": n(ks[3], (d_model, d_model)), "bq": n(ks[4], (1, d_model)),
        "wk": n(ks[5], (d_model, d_model)), "bk": n(ks[6], (1, d_model)),
        "wv": n(ks[7], (d_model, d_model)), "bv": n(ks[8], (1, d_model)),
        "wo": n(ks[9], (d_model, d_model)), "bo": n(ks[10], (1, d_model)),
        "ln1_g": jnp.ones((1, d_model), jnp.float32), "ln1_b": jnp.zeros((1, d_model), jnp.float32),
        "ln2_g": jnp.ones((1, d_model), jnp.float32), "ln2_b": jnp.zeros((1, d_model), jnp.float32),
        "w1": n(ks[11], (d_model, d_model)), "b1": n(ks[12], (1, d_model)),
        "w2": n(ks[13], (d_model, d_model)), "b2": n(ks[14], (1, d_model)),
        "head_w1": n(ks[15], (d_model, d_model)), "head_b1": n(ks[16], (1, d_model)),
        "head_w2": n(ks[17], (d_model, num_classes)), "head_b2": n(ks[18], (1, num_classes)),
    }


def _reference_forward(tokens, attention_mask, params, *, num_heads, num_steps):
    B, L = tokens.shape
    D = params["embedding"].shape[1]
    H, dh = num_heads, D // num_heads
    x = params["embedding"][tokens] + params["pos"][:L][None]
    if attention_mask is None:
        bias = jnp.zeros((B, 1, 1, L), jnp.float32)
    else:
        bias = (1.0 - attention_mask.astype(jnp.float32))[:, None, None, :] * -1e9

    def ln(v, g, b):
        mu = v.mean(-1, keepdims=True)
        var = ((v - mu) ** 2).mean(-1, keepdims=True)
        return (v - mu) / jnp.sqrt(var + LN_EPS) * g + b

    for step in range(num_steps):
        x = x + params["time"][step][None, None, :]
        q = (x @ params["wq"] + params["bq"]).reshape(B, L, H, dh).transpose(0, 2, 1, 3)
        k = (x @ params["wk"] + params["bk"]).reshape(B, L, H, dh).transpose(0, 2, 1, 3)
        v = (x @ params["wv"] + params["bv"]).reshape(B, L, H, dh).transpose(0, 2, 1, 3)
        s = (q @ k.transpose(0, 1, 3, 2)) / jnp.sqrt(dh) + bias
        p = jax.nn.softmax(s, axis=-1)
        ctx = (p @ v).transpose(0, 2, 1, 3).reshape(B, L, D)
        attn = ctx @ params["wo"] + params["bo"]
        h1 = ln(x + attn, params["ln1_g"], params["ln1_b"])
        ff = jax.nn.relu(h1 @ params["w1"] + params["b1"]) @ params["w2"] + params["b2"]
        x = ln(h1 + ff, params["ln2_g"], params["ln2_b"])
    h = jax.nn.relu(x @ params["head_w1"] + params["head_b1"])
    return h @ params["head_w2"] + params["head_b2"]


# --------------------------------------------------------------------------------------
if __name__ == "__main__":
    VOCAB, NUM_CLASSES = 32, 8
    D_MODEL, NUM_HEADS, NUM_STEPS = 64, 4, 2
    B, L = 2, 8

    key = jax.random.PRNGKey(0)
    k_tok, k_param = jax.random.split(key)
    params = init_params(k_param, VOCAB, NUM_CLASSES, D_MODEL, NUM_STEPS)

    tokens = jax.random.randint(k_tok, (B, L), 0, VOCAB, dtype=jnp.int32)
    attention_mask = jnp.ones((B, L), jnp.int32).at[1, 6:].set(0)   # pad the tail of example 2

    out = universal_transformer_forward(
        tokens, attention_mask, params, num_heads=NUM_HEADS, num_steps=NUM_STEPS)
    out = jax.block_until_ready(out)

    assert out.shape == (B, L, NUM_CLASSES), out.shape
    assert bool(jnp.all(jnp.isfinite(out)))

    ref = _reference_forward(tokens, attention_mask, params,
                             num_heads=NUM_HEADS, num_steps=NUM_STEPS)
    max_err = float(jnp.max(jnp.abs(out - ref)))
    assert max_err < 5e-2, f"max abs err vs f32 reference: {max_err}"
    print("KERNEL_OK")
</pallas_src>

<mosaic_0001>
module attributes {stable_mosaic.version = 11 : i64} {
  func.func @_fused_ut_kernel(%arg0: i32, %arg1: memref<1x8x64xbf16, #tpu.memory_space<vmem>>, %arg2: memref<1x1x8xf32, #tpu.memory_space<vmem>>, %arg3: memref<2x64xf32, #tpu.memory_space<vmem>>, %arg4: memref<64x64xbf16, #tpu.memory_space<vmem>>, %arg5: memref<64x64xbf16, #tpu.memory_space<vmem>>, %arg6: memref<64x64xbf16, #tpu.memory_space<vmem>>, %arg7: memref<64x64xbf16, #tpu.memory_space<vmem>>, %arg8: memref<1x64xf32, #tpu.memory_space<vmem>>, %arg9: memref<1x64xf32, #tpu.memory_space<vmem>>, %arg10: memref<1x64xf32, #tpu.memory_space<vmem>>, %arg11: memref<1x64xf32, #tpu.memory_space<vmem>>, %arg12: memref<1x64xf32, #tpu.memory_space<vmem>>, %arg13: memref<1x64xf32, #tpu.memory_space<vmem>>, %arg14: memref<64x64xbf16, #tpu.memory_space<vmem>>, %arg15: memref<1x64xf32, #tpu.memory_space<vmem>>, %arg16: memref<64x64xbf16, #tpu.memory_space<vmem>>, %arg17: memref<1x64xf32, #tpu.memory_space<vmem>>, %arg18: memref<1x64xf32, #tpu.memory_space<vmem>>, %arg19: memref<1x64xf32, #tpu.memory_space<vmem>>, %arg20: memref<64x64xbf16, #tpu.memory_space<vmem>>, %arg21: memref<1x64xf32, #tpu.memory_space<vmem>>, %arg22: memref<64x128xbf16, #tpu.memory_space<vmem>>, %arg23: memref<1x128xf32, #tpu.memory_space<vmem>>, %arg24: memref<1x8x128xbf16, #tpu.memory_space<vmem>>) attributes {dimension_semantics = [#tpu.dimension_semantics<parallel>], iteration_bounds = array<i64: 2>, scalar_prefetch = 0 : i64, scratch_operands = 0 : i64, tpu.core_type = #tpu.core_type<tc>, window_params = [{transform_indices = @transform_0, window_bounds = array<i64: 1, 8, 64>}, {transform_indices = @transform_1, window_bounds = array<i64: 1, 1, 8>}, {pipeline_mode = #tpu.pipeline_mode<synchronous>, transform_indices = @transform_2, window_bounds = array<i64: 2, 64>}, {pipeline_mode = #tpu.pipeline_mode<synchronous>, transform_indices = @transform_3, window_bounds = array<i64: 64, 64>}, {pipeline_mode = #tpu.pipeline_mode<synchronous>, transform_indices = @transform_4, window_bounds = array<i64: 64, 64>}, {pipeline_mode = #tpu.pipeline_mode<synchronous>, transform_indices = @transform_5, window_bounds = array<i64: 64, 64>}, {pipeline_mode = #tpu.pipeline_mode<synchronous>, transform_indices = @transform_6, window_bounds = array<i64: 64, 64>}, {pipeline_mode = #tpu.pipeline_mode<synchronous>, transform_indices = @transform_7, window_bounds = array<i64: 1, 64>}, {pipeline_mode = #tpu.pipeline_mode<synchronous>, transform_indices = @transform_8, window_bounds = array<i64: 1, 64>}, {pipeline_mode = #tpu.pipeline_mode<synchronous>, transform_indices = @transform_9, window_bounds = array<i64: 1, 64>}, {pipeline_mode = #tpu.pipeline_mode<synchronous>, transform_indices = @transform_10, window_bounds = array<i64: 1, 64>}, {pipeline_mode = #tpu.pipeline_mode<synchronous>, transform_indices = @transform_11, window_bounds = array<i64: 1, 64>}, {pipeline_mode = #tpu.pipeline_mode<synchronous>, transform_indices = @transform_12, window_bounds = array<i64: 1, 64>}, {pipeline_mode = #tpu.pipeline_mode<synchronous>, transform_indices = @transform_13, window_bounds = array<i64: 64, 64>}, {pipeline_mode = #tpu.pipeline_mode<synchronous>, transform_indices = @transform_14, window_bounds = array<i64: 1, 64>}, {pipeline_mode = #tpu.pipeline_mode<synchronous>, transform_indices = @transform_15, window_bounds = array<i64: 64, 64>}, {pipeline_mode = #tpu.pipeline_mode<synchronous>, transform_indices = @transform_16, window_bounds = array<i64: 1, 64>}, {pipeline_mode = #tpu.pipeline_mode<synchronous>, transform_indices = @transform_17, window_bounds = array<i64: 1, 64>}, {pipeline_mode = #tpu.pipeline_mode<synchronous>, transform_indices = @transform_18, window_bounds = array<i64: 1, 64>}, {pipeline_mode = #tpu.pipeline_mode<synchronous>, transform_indices = @transform_19, window_bounds = array<i64: 64, 64>}, {pipeline_mode = #tpu.pipeline_mode<synchronous>, transform_indices = @transform_20, window_bounds = array<i64: 1, 64>}, {pipeline_mode = #tpu.pipeline_mode<synchronous>, transform_indices = @transform_21, window_bounds = array<i64: 64, 128>}, {pipeline_mode = #tpu.pipeline_mode<synchronous>, transform_indices = @transform_22, window_bounds = array<i64: 1, 128>}, {transform_indices = @transform_23, window_bounds = array<i64: 1, 8, 128>}]} {
    %c0 = arith.constant 0 : index
    %c0_0 = arith.constant 0 : index
    %c0_1 = arith.constant 0 : index
    %0 = vector.load %arg2[%c0, %c0_0, %c0_1] : memref<1x1x8xf32, #tpu.memory_space<vmem>>, vector<1x1x8xf32>
    %1 = vector.shape_cast %0 : vector<1x1x8xf32> to vector<1x1x8xf32>
    %2 = vector.broadcast %1 : vector<1x1x8xf32> to vector<1x8x8xf32>
    %c0_2 = arith.constant 0 : index
    %c0_3 = arith.constant 0 : index
    %3 = vector.load %arg8[%c0_2, %c0_3] : memref<1x64xf32, #tpu.memory_space<vmem>>, vector<1x64xf32>
    %c0_4 = arith.constant 0 : index
    %c0_5 = arith.constant 0 : index
    %4 = vector.load %arg9[%c0_4, %c0_5] : memref<1x64xf32, #tpu.memory_space<vmem>>, vector<1x64xf32>
    %c0_6 = arith.constant 0 : index
    %c0_7 = arith.constant 0 : index
    %5 = vector.load %arg10[%c0_6, %c0_7] : memref<1x64xf32, #tpu.memory_space<vmem>>, vector<1x64xf32>
    %c0_8 = arith.constant 0 : index
    %c0_9 = arith.constant 0 : index
    %6 = vector.load %arg11[%c0_8, %c0_9] : memref<1x64xf32, #tpu.memory_space<vmem>>, vector<1x64xf32>
    %c0_10 = arith.constant 0 : index
    %c0_11 = arith.constant 0 : index
    %7 = vector.load %arg15[%c0_10, %c0_11] : memref<1x64xf32, #tpu.memory_space<vmem>>, vector<1x64xf32>
    %c0_12 = arith.constant 0 : index
    %c0_13 = arith.constant 0 : index
    %8 = vector.load %arg17[%c0_12, %c0_13] : memref<1x64xf32, #tpu.memory_space<vmem>>, vector<1x64xf32>
    %c0_14 = arith.constant 0 : index
    %c0_15 = arith.constant 0 : index
    %9 = vector.load %arg12[%c0_14, %c0_15] : memref<1x64xf32, #tpu.memory_space<vmem>>, vector<1x64xf32>
    %c0_16 = arith.constant 0 : index
    %c0_17 = arith.constant 0 : index
    %10 = vector.load %arg13[%c0_16, %c0_17] : memref<1x64xf32, #tpu.memory_space<vmem>>, vector<1x64xf32>
    %c0_18 = arith.constant 0 : index
    %c0_19 = arith.constant 0 : index
    %11 = vector.load %arg18[%c0_18, %c0_19] : memref<1x64xf32, #tpu.memory_space<vmem>>, vector<1x64xf32>
    %c0_20 = arith.constant 0 : index
    %c0_21 = arith.constant 0 : index
    %12 = vector.load %arg19[%c0_20, %c0_21] : memref<1x64xf32, #tpu.memory_space<vmem>>, vector<1x64xf32>
    %c0_22 = arith.constant 0 : index
    %c0_23 = arith.constant 0 : index
    %c0_24 = arith.constant 0 : index
    %13 = vector.load %arg1[%c0_22, %c0_23, %c0_24] : memref<1x8x64xbf16, #tpu.memory_space<vmem>>, vector<1x8x64xbf16>
    %14 = arith.extf %13 : vector<1x8x64xbf16> to vector<1x8x64xf32>
    %15 = vector.shape_cast %14 : vector<1x8x64xf32> to vector<8x64xf32>
    %c0_25 = arith.constant 0 : index
    %c0_26 = arith.constant 0 : index
    %16 = vector.load %arg3[%c0_25, %c0_26] : memref<2x64xf32, #tpu.memory_space<vmem>>, vector<1x64xf32>
    %17 = vector.broadcast %16 : vector<1x64xf32> to vector<8x64xf32>
    %18 = arith.addf %15, %17 : vector<8x64xf32>
    %19 = arith.truncf %18 : vector<8x64xf32> to vector<8x64xbf16>
    %c0_27 = arith.constant 0 : index
    %c0_28 = arith.constant 0 : index
    %20 = vector.load %arg4[%c0_27, %c0_28] : memref<64x64xbf16, #tpu.memory_space<vmem>>, vector<64x64xbf16>
    %cst = arith.constant dense<0.000000e+00> : vector<8x64xf32>
    %21 = tpu.matmul %19, %20, %cst {dimension_numbers = #tpu.dot_dimension_numbers<[1], [0], [0], [1], [0, 0, 1, 1], [], []>} : vector<8x64xbf16>, vector<64x64xbf16>, vector<8x64xf32> -> vector<8x64xf32>
    %22 = vector.broadcast %3 : vector<1x64xf32> to vector<8x64xf32>
    %23 = arith.addf %21, %22 : vector<8x64xf32>
    %cst_29 = arith.constant 2.500000e-01 : f32
    %24 = vector.broadcast %cst_29 : f32 to vector<8x64xf32>
    %25 = arith.mulf %23, %24 : vector<8x64xf32>
    %c0_30 = arith.constant 0 : index
    %c0_31 = arith.constant 0 : index
    %26 = vector.load %arg5[%c0_30, %c0_31] : memref<64x64xbf16, #tpu.memory_space<vmem>>, vector<64x64xbf16>
    %cst_32 = arith.constant dense<0.000000e+00> : vector<8x64xf32>
    %27 = tpu.matmul %19, %26, %cst_32 {dimension_numbers = #tpu.dot_dimension_numbers<[1], [0], [0], [1], [0, 0, 1, 1], [], []>} : vector<8x64xbf16>, vector<64x64xbf16>, vector<8x64xf32> -> vector<8x64xf32>
    %28 = vector.broadcast %4 : vector<1x64xf32> to vector<8x64xf32>
    %29 = arith.addf %27, %28 : vector<8x64xf32>
    %c0_33 = arith.constant 0 : index
    %c0_34 = arith.constant 0 : index
    %30 = vector.load %arg6[%c0_33, %c0_34] : memref<64x64xbf16, #tpu.memory_space<vmem>>, vector<64x64xbf16>
    %cst_35 = arith.constant dense<0.000000e+00> : vector<8x64xf32>
    %31 = tpu.matmul %19, %30, %cst_35 {dimension_numbers = #tpu.dot_dimension_numbers<[1], [0], [0], [1], [0, 0, 1, 1], [], []>} : vector<8x64xbf16>, vector<64x64xbf16>, vector<8x64xf32> -> vector<8x64xf32>
    %32 = vector.broadcast %5 : vector<1x64xf32> to vector<8x64xf32>
    %33 = arith.addf %31, %32 : vector<8x64xf32>
    %34 = vector.extract_strided_slice %25 {offsets = [0, 0], sizes = [8, 16], strides = [1, 1]} : vector<8x64xf32> to vector<8x16xf32>
    %35 = arith.truncf %34 : vector<8x16xf32> to vector<8x16xbf16>
    %36 = vector.shape_cast %35 : vector<8x16xbf16> to vector<1x8x16xbf16>
    %37 = vector.extract_strided_slice %29 {offsets = [0, 0], sizes = [8, 16], strides = [1, 1]} : vector<8x64xf32> to vector<8x16xf32>
    %38 = arith.truncf %37 : vector<8x16xf32> to vector<8x16xbf16>
    %39 = vector.shape_cast %38 : vector<8x16xbf16> to vector<1x8x16xbf16>
    %40 = vector.extract_strided_slice %33 {offsets = [0, 0], sizes = [8, 16], strides = [1, 1]} : vector<8x64xf32> to vector<8x16xf32>
    %41 = arith.truncf %40 : vector<8x16xf32> to vector<8x16xbf16>
    %42 = vector.shape_cast %41 : vector<8x16xbf16> to vector<1x8x16xbf16>
    "tpu.trace_start"() <{level = 10 : i32, message = "bqd,bkd->bqk"}> : () -> ()
    %cst_36 = arith.constant dense<0.000000e+00> : vector<1x8x8xf32>
    %43 = tpu.matmul %36, %39, %cst_36 {dimension_numbers = #tpu.dot_dimension_numbers<[2], [2], [1], [1], [0, 0, 0, 1, 1, 1], [0], [0]>} : vector<1x8x16xbf16>, vector<1x8x16xbf16>, vector<1x8x8xf32> -> vector<1x8x8xf32>
    "tpu.trace_stop"() : () -> ()
    %44 = arith.addf %43, %2 : vector<1x8x8xf32>
    %cst_37 = arith.constant dense<0xFF800000> : vector<1x8xf32>
    %45 = vector.multi_reduction <maximumf>, %44, %cst_37 [2] : vector<1x8x8xf32> to vector<1x8xf32>
    %46 = vector.shape_cast %45 : vector<1x8xf32> to vector<1x8x1xf32>
    %47 = vector.broadcast %46 : vector<1x8x1xf32> to vector<1x8x8xf32>
    %48 = arith.subf %44, %47 : vector<1x8x8xf32>
    %49 = math.exp %48 : vector<1x8x8xf32>
    %cst_38 = arith.constant dense<0.000000e+00> : vector<1x8xf32>
    %50 = vector.multi_reduction <add>, %49, %cst_38 [2] : vector<1x8x8xf32> to vector<1x8xf32>
    %51 = vector.shape_cast %50 : vector<1x8xf32> to vector<1x8x1xf32>
    %52 = tpu.reciprocal %51 {approx = true} : vector<1x8x1xf32> -> vector<1x8x1xf32>
    %53 = vector.broadcast %52 : vector<1x8x1xf32> to vector<1x8x8xf32>
    %54 = arith.mulf %49, %53 : vector<1x8x8xf32>
    %55 = arith.truncf %54 : vector<1x8x8xf32> to vector<1x8x8xbf16>
    "tpu.trace_start"() <{level = 10 : i32, message = "bqk,bkd->bqd"}> : () -> ()
    %cst_39 = arith.constant dense<0.000000e+00> : vector<1x8x16xf32>
    %56 = tpu.matmul %55, %42, %cst_39 {dimension_numbers = #tpu.dot_dimension_numbers<[2], [1], [1], [2], [0, 0, 0, 1, 1, 2], [0], [0]>} : vector<1x8x8xbf16>, vector<1x8x16xbf16>, vector<1x8x16xf32> -> vector<1x8x16xf32>
    "tpu.trace_stop"() : () -> ()
    %57 = vector.shape_cast %56 : vector<1x8x16xf32> to vector<8x16xf32>
    %58 = arith.truncf %57 : vector<8x16xf32> to vector<8x16xbf16>
    %59 = vector.extract_strided_slice %25 {offsets = [0, 16], sizes = [8, 16], strides = [1, 1]} : vector<8x64xf32> to vector<8x16xf32>
    %60 = arith.truncf %59 : vector<8x16xf32> to vector<8x16xbf16>
    %61 = vector.shape_cast %60 : vector<8x16xbf16> to vector<1x8x16xbf16>
    %62 = vector.extract_strided_slice %29 {offsets = [0, 16], sizes = [8, 16], strides = [1, 1]} : vector<8x64xf32> to vector<8x16xf32>
    %63 = arith.truncf %62 : vector<8x16xf32> to vector<8x16xbf16>
    %64 = vector.shape_cast %63 : vector<8x16xbf16> to vector<1x8x16xbf16>
    %65 = vector.extract_strided_slice %33 {offsets = [0, 16], sizes = [8, 16], strides = [1, 1]} : vector<8x64xf32> to vector<8x16xf32>
    %66 = arith.truncf %65 : vector<8x16xf32> to vector<8x16xbf16>
    %67 = vector.shape_cast %66 : vector<8x16xbf16> to vector<1x8x16xbf16>
    "tpu.trace_start"() <{level = 10 : i32, message = "bqd,bkd->bqk"}> : () -> ()
    %cst_40 = arith.constant dense<0.000000e+00> : vector<1x8x8xf32>
    %68 = tpu.matmul %61, %64, %cst_40 {dimension_numbers = #tpu.dot_dimension_numbers<[2], [2], [1], [1], [0, 0, 0, 1, 1, 1], [0], [0]>} : vector<1x8x16xbf16>, vector<1x8x16xbf16>, vector<1x8x8xf32> -> vector<1x8x8xf32>
    "tpu.trace_stop"() : () -> ()
    %69 = arith.addf %68, %2 : vector<1x8x8xf32>
    %cst_41 = arith.constant dense<0xFF800000> : vector<1x8xf32>
    %70 = vector.multi_reduction <maximumf>, %69, %cst_41 [2] : vector<1x8x8xf32> to vector<1x8xf32>
    %71 = vector.shape_cast %70 : vector<1x8xf32> to vector<1x8x1xf32>
    %72 = vector.broadcast %71 : vector<1x8x1xf32> to vector<1x8x8xf32>
    %73 = arith.subf %69, %72 : vector<1x8x8xf32>
    %74 = math.exp %73 : vector<1x8x8xf32>
    %cst_42 = arith.constant dense<0.000000e+00> : vector<1x8xf32>
    %75 = vector.multi_reduction <add>, %74, %cst_42 [2] : vector<1x8x8xf32> to vector<1x8xf32>
    %76 = vector.shape_cast %75 : vector<1x8xf32> to vector<1x8x1xf32>
    %77 = tpu.reciprocal %76 {approx = true} : vector<1x8x1xf32> -> vector<1x8x1xf32>
    %78 = vector.broadcast %77 : vector<1x8x1xf32> to vector<1x8x8xf32>
    %79 = arith.mulf %74, %78 : vector<1x8x8xf32>
    %80 = arith.truncf %79 : vector<1x8x8xf32> to vector<1x8x8xbf16>
    "tpu.trace_start"() <{level = 10 : i32, message = "bqk,bkd->bqd"}> : () -> ()
    %cst_43 = arith.constant dense<0.000000e+00> : vector<1x8x16xf32>
    %81 = tpu.matmul %80, %67, %cst_43 {dimension_numbers = #tpu.dot_dimension_numbers<[2], [1], [1], [2], [0, 0, 0, 1, 1, 2], [0], [0]>} : vector<1x8x8xbf16>, vector<1x8x16xbf16>, vector<1x8x16xf32> -> vector<1x8x16xf32>
    "tpu.trace_stop"() : () -> ()
    %82 = vector.shape_cast %81 : vector<1x8x16xf32> to vector<8x16xf32>
    %83 = arith.truncf %82 : vector<8x16xf32> to vector<8x16xbf16>
    %84 = vector.extract_strided_slice %25 {offsets = [0, 32], sizes = [8, 16], strides = [1, 1]} : vector<8x64xf32> to vector<8x16xf32>
    %85 = arith.truncf %84 : vector<8x16xf32> to vector<8x16xbf16>
    %86 = vector.shape_cast %85 : vector<8x16xbf16> to vector<1x8x16xbf16>
    %87 = vector.extract_strided_slice %29 {offsets = [0, 32], sizes = [8, 16], strides = [1, 1]} : vector<8x64xf32> to vector<8x16xf32>
    %88 = arith.truncf %87 : vector<8x16xf32> to vector<8x16xbf16>
    %89 = vector.shape_cast %88 : vector<8x16xbf16> to vector<1x8x16xbf16>
    %90 = vector.extract_strided_slice %33 {offsets = [0, 32], sizes = [8, 16], strides = [1, 1]} : vector<8x64xf32> to vector<8x16xf32>
    %91 = arith.truncf %90 : vector<8x16xf32> to vector<8x16xbf16>
    %92 = vector.shape_cast %91 : vector<8x16xbf16> to vector<1x8x16xbf16>
    "tpu.trace_start"() <{level = 10 : i32, message = "bqd,bkd->bqk"}> : () -> ()
    %cst_44 = arith.constant dense<0.000000e+00> : vector<1x8x8xf32>
    %93 = tpu.matmul %86, %89, %cst_44 {dimension_numbers = #tpu.dot_dimension_numbers<[2], [2], [1], [1], [0, 0, 0, 1, 1, 1], [0], [0]>} : vector<1x8x16xbf16>, vector<1x8x16xbf16>, vector<1x8x8xf32> -> vector<1x8x8xf32>
    "tpu.trace_stop"() : () -> ()
    %94 = arith.addf %93, %2 : vector<1x8x8xf32>
    %cst_45 = arith.constant dense<0xFF800000> : vector<1x8xf32>
    %95 = vector.multi_reduction <maximumf>, %94, %cst_45 [2] : vector<1x8x8xf32> to vector<1x8xf32>
    %96 = vector.shape_cast %95 : vector<1x8xf32> to vector<1x8x1xf32>
    %97 = vector.broadcast %96 : vector<1x8x1xf32> to vector<1x8x8xf32>
    %98 = arith.subf %94, %97 : vector<1x8x8xf32>
    %99 = math.exp %98 : vector<1x8x8xf32>
    %cst_46 = arith.constant dense<0.000000e+00> : vector<1x8xf32>
    %100 = vector.multi_reduction <add>, %99, %cst_46 [2] : vector<1x8x8xf32> to vector<1x8xf32>
    %101 = vector.shape_cast %100 : vector<1x8xf32> to vector<1x8x1xf32>
    %102 = tpu.reciprocal %101 {approx = true} : vector<1x8x1xf32> -> vector<1x8x1xf32>
    %103 = vector.broadcast %102 : vector<1x8x1xf32> to vector<1x8x8xf32>
    %104 = arith.mulf %99, %103 : vector<1x8x8xf32>
    %105 = arith.truncf %104 : vector<1x8x8xf32> to vector<1x8x8xbf16>
    "tpu.trace_start"() <{level = 10 : i32, message = "bqk,bkd->bqd"}> : () -> ()
    %cst_47 = arith.constant dense<0.000000e+00> : vector<1x8x16xf32>
    %106 = tpu.matmul %105, %92, %cst_47 {dimension_numbers = #tpu.dot_dimension_numbers<[2], [1], [1], [2], [0, 0, 0, 1, 1, 2], [0], [0]>} : vector<1x8x8xbf16>, vector<1x8x16xbf16>, vector<1x8x16xf32> -> vector<1x8x16xf32>
    "tpu.trace_stop"() : () -> ()
    %107 = vector.shape_cast %106 : vector<1x8x16xf32> to vector<8x16xf32>
    %108 = arith.truncf %107 : vector<8x16xf32> to vector<8x16xbf16>
    %109 = vector.extract_strided_slice %25 {offsets = [0, 48], sizes = [8, 16], strides = [1, 1]} : vector<8x64xf32> to vector<8x16xf32>
    %110 = arith.truncf %109 : vector<8x16xf32> to vector<8x16xbf16>
    %111 = vector.shape_cast %110 : vector<8x16xbf16> to vector<1x8x16xbf16>
    %112 = vector.extract_strided_slice %29 {offsets = [0, 48], sizes = [8, 16], strides = [1, 1]} : vector<8x64xf32> to vector<8x16xf32>
    %113 = arith.truncf %112 : vector<8x16xf32> to vector<8x16xbf16>
    %114 = vector.shape_cast %113 : vector<8x16xbf16> to vector<1x8x16xbf16>
    %115 = vector.extract_strided_slice %33 {offsets = [0, 48], sizes = [8, 16], strides = [1, 1]} : vector<8x64xf32> to vector<8x16xf32>
    %116 = arith.truncf %115 : vector<8x16xf32> to vector<8x16xbf16>
    %117 = vector.shape_cast %116 : vector<8x16xbf16> to vector<1x8x16xbf16>
    "tpu.trace_start"() <{level = 10 : i32, message = "bqd,bkd->bqk"}> : () -> ()
    %cst_48 = arith.constant dense<0.000000e+00> : vector<1x8x8xf32>
    %118 = tpu.matmul %111, %114, %cst_48 {dimension_numbers = #tpu.dot_dimension_numbers<[2], [2], [1], [1], [0, 0, 0, 1, 1, 1], [0], [0]>} : vector<1x8x16xbf16>, vector<1x8x16xbf16>, vector<1x8x8xf32> -> vector<1x8x8xf32>
    "tpu.trace_stop"() : () -> ()
    %119 = arith.addf %118, %2 : vector<1x8x8xf32>
    %cst_49 = arith.constant dense<0xFF800000> : vector<1x8xf32>
    %120 = vector.multi_reduction <maximumf>, %119, %cst_49 [2] : vector<1x8x8xf32> to vector<1x8xf32>
    %121 = vector.shape_cast %120 : vector<1x8xf32> to vector<1x8x1xf32>
    %122 = vector.broadcast %121 : vector<1x8x1xf32> to vector<1x8x8xf32>
    %123 = arith.subf %119, %122 : vector<1x8x8xf32>
    %124 = math.exp %123 : vector<1x8x8xf32>
    %cst_50 = arith.constant dense<0.000000e+00> : vector<1x8xf32>
    %125 = vector.multi_reduction <add>, %124, %cst_50 [2] : vector<1x8x8xf32> to vector<1x8xf32>
    %126 = vector.shape_cast %125 : vector<1x8xf32> to vector<1x8x1xf32>
    %127 = tpu.reciprocal %126 {approx = true} : vector<1x8x1xf32> -> vector<1x8x1xf32>
    %128 = vector.broadcast %127 : vector<1x8x1xf32> to vector<1x8x8xf32>
    %129 = arith.mulf %124, %128 : vector<1x8x8xf32>
    %130 = arith.truncf %129 : vector<1x8x8xf32> to vector<1x8x8xbf16>
    "tpu.trace_start"() <{level = 10 : i32, message = "bqk,bkd->bqd"}> : () -> ()
    %cst_51 = arith.constant dense<0.000000e+00> : vector<1x8x16xf32>
    %131 = tpu.matmul %130, %117, %cst_51 {dimension_numbers = #tpu.dot_dimension_numbers<[2], [1], [1], [2], [0, 0, 0, 1, 1, 2], [0], [0]>} : vector<1x8x8xbf16>, vector<1x8x16xbf16>, vector<1x8x16xf32> -> vector<1x8x16xf32>
    "tpu.trace_stop"() : () -> ()
    %132 = vector.shape_cast %131 : vector<1x8x16xf32> to vector<8x16xf32>
    %133 = arith.truncf %132 : vector<8x16xf32> to vector<8x16xbf16>
    %134 = tpu.concatenate %58, %83, %108, %133 in 1 : vector<8x16xbf16>, vector<8x16xbf16>, vector<8x16xbf16>, vector<8x16xbf16> -> vector<8x64xbf16>
    %c0_52 = arith.constant 0 : index
    %c0_53 = arith.constant 0 : index
    %135 = vector.load %arg7[%c0_52, %c0_53] : memref<64x64xbf16, #tpu.memory_space<vmem>>, vector<64x64xbf16>
    %cst_54 = arith.constant dense<0.000000e+00> : vector<8x64xf32>
    %136 = tpu.matmul %134, %135, %cst_54 {dimension_numbers = #tpu.dot_dimension_numbers<[1], [0], [0], [1], [0, 0, 1, 1], [], []>} : vector<8x64xbf16>, vector<64x64xbf16>, vector<8x64xf32> -> vector<8x64xf32>
    %137 = vector.broadcast %6 : vector<1x64xf32> to vector<8x64xf32>
    %138 = arith.addf %136, %137 : vector<8x64xf32>
    %139 = arith.addf %18, %138 : vector<8x64xf32>
    %cst_55 = arith.constant dense<0.000000e+00> : vector<8xf32>
    %140 = vector.multi_reduction <add>, %139, %cst_55 [1] : vector<8x64xf32> to vector<8xf32>
    %141 = vector.shape_cast %140 : vector<8xf32> to vector<8x1xf32>
    %cst_56 = arith.constant 6.400000e+01 : f32
    %142 = vector.broadcast %cst_56 : f32 to vector<8x1xf32>
    %143 = arith.divf %141, %142 : vector<8x1xf32>
    %144 = vector.broadcast %143 : vector<8x1xf32> to vector<8x64xf32>
    %145 = arith.subf %139, %144 : vector<8x64xf32>
    %146 = arith.mulf %145, %145 : vector<8x64xf32>
    %cst_57 = arith.constant dense<0.000000e+00> : vector<8xf32>
    %147 = vector.multi_reduction <add>, %146, %cst_57 [1] : vector<8x64xf32> to vector<8xf32>
    %148 = vector.shape_cast %147 : vector<8xf32> to vector<8x1xf32>
    %cst_58 = arith.constant 6.400000e+01 : f32
    %149 = vector.broadcast %cst_58 : f32 to vector<8x1xf32>
    %150 = arith.divf %148, %149 : vector<8x1xf32>
    %151 = vector.broadcast %143 : vector<8x1xf32> to vector<8x64xf32>
    %152 = arith.subf %139, %151 : vector<8x64xf32>
    %cst_59 = arith.constant 9.99999974E-6 : f32
    %153 = vector.broadcast %cst_59 : f32 to vector<8x1xf32>
    %154 = arith.addf %150, %153 : vector<8x1xf32>
    %155 = math.rsqrt %154 : vector<8x1xf32>
    %156 = vector.broadcast %155 : vector<8x1xf32> to vector<8x64xf32>
    %157 = arith.mulf %152, %156 : vector<8x64xf32>
    %158 = vector.broadcast %9 : vector<1x64xf32> to vector<8x64xf32>
    %159 = arith.mulf %157, %158 : vector<8x64xf32>
    %160 = vector.broadcast %10 : vector<1x64xf32> to vector<8x64xf32>
    %161 = arith.addf %159, %160 : vector<8x64xf32>
    %162 = arith.truncf %161 : vector<8x64xf32> to vector<8x64xbf16>
    %c0_60 = arith.constant 0 : index
    %c0_61 = arith.constant 0 : index
    %163 = vector.load %arg14[%c0_60, %c0_61] : memref<64x64xbf16, #tpu.memory_space<vmem>>, vector<64x64xbf16>
    %cst_62 = arith.constant dense<0.000000e+00> : vector<8x64xf32>
    %164 = tpu.matmul %162, %163, %cst_62 {dimension_numbers = #tpu.dot_dimension_numbers<[1], [0], [0], [1], [0, 0, 1, 1], [], []>} : vector<8x64xbf16>, vector<64x64xbf16>, vector<8x64xf32> -> vector<8x64xf32>
    %165 = vector.broadcast %7 : vector<1x64xf32> to vector<8x64xf32>
    %166 = arith.addf %164, %165 : vector<8x64xf32>
    %cst_63 = arith.constant 0.000000e+00 : f32
    %167 = vector.broadcast %cst_63 : f32 to vector<8x64xf32>
    %168 = arith.maximumf %166, %167 : vector<8x64xf32>
    %169 = arith.truncf %168 : vector<8x64xf32> to vector<8x64xbf16>
    %c0_64 = arith.constant 0 : index
    %c0_65 = arith.constant 0 : index
    %170 = vector.load %arg16[%c0_64, %c0_65] : memref<64x64xbf16, #tpu.memory_space<vmem>>, vector<64x64xbf16>
    %cst_66 = arith.constant dense<0.000000e+00> : vector<8x64xf32>
    %171 = tpu.matmul %169, %170, %cst_66 {dimension_numbers = #tpu.dot_dimension_numbers<[1], [0], [0], [1], [0, 0, 1, 1], [], []>} : vector<8x64xbf16>, vector<64x64xbf16>, vector<8x64xf32> -> vector<8x64xf32>
    %172 = vector.broadcast %8 : vector<1x64xf32> to vector<8x64xf32>
    %173 = arith.addf %171, %172 : vector<8x64xf32>
    %174 = arith.addf %161, %173 : vector<8x64xf32>
    %cst_67 = arith.constant dense<0.000000e+00> : vector<8xf32>
    %175 = vector.multi_reduction <add>, %174, %cst_67 [1] : vector<8x64xf32> to vector<8xf32>
    %176 = vector.shape_cast %175 : vector<8xf32> to vector<8x1xf32>
    %cst_68 = arith.constant 6.400000e+01 : f32
    %177 = vector.broadcast %cst_68 : f32 to vector<8x1xf32>
    %178 = arith.divf %176, %177 : vector<8x1xf32>
    %179 = vector.broadcast %178 : vector<8x1xf32> to vector<8x64xf32>
    %180 = arith.subf %174, %179 : vector<8x64xf32>
    %181 = arith.mulf %180, %180 : vector<8x64xf32>
    %cst_69 = arith.constant dense<0.000000e+00> : vector<8xf32>
    %182 = vector.multi_reduction <add>, %181, %cst_69 [1] : vector<8x64xf32> to vector<8xf32>
    %183 = vector.shape_cast %182 : vector<8xf32> to vector<8x1xf32>
    %cst_70 = arith.constant 6.400000e+01 : f32
    %184 = vector.broadcast %cst_70 : f32 to vector<8x1xf32>
    %185 = arith.divf %183, %184 : vector<8x1xf32>
    %186 = vector.broadcast %178 : vector<8x1xf32> to vector<8x64xf32>
    %187 = arith.subf %174, %186 : vector<8x64xf32>
    %cst_71 = arith.constant 9.99999974E-6 : f32
    %188 = vector.broadcast %cst_71 : f32 to vector<8x1xf32>
    %189 = arith.addf %185, %188 : vector<8x1xf32>
    %190 = math.rsqrt %189 : vector<8x1xf32>
    %191 = vector.broadcast %190 : vector<8x1xf32> to vector<8x64xf32>
    %192 = arith.mulf %187, %191 : vector<8x64xf32>
    %193 = vector.broadcast %11 : vector<1x64xf32> to vector<8x64xf32>
    %194 = arith.mulf %192, %193 : vector<8x64xf32>
    %195 = vector.broadcast %12 : vector<1x64xf32> to vector<8x64xf32>
    %196 = arith.addf %194, %195 : vector<8x64xf32>
    %c1 = arith.constant 1 : index
    %c0_72 = arith.constant 0 : index
    %197 = vector.load %arg3[%c1, %c0_72] : memref<2x64xf32, #tpu.memory_space<vmem>>, vector<1x64xf32>
    %198 = vector.broadcast %197 : vector<1x64xf32> to vector<8x64xf32>
    %199 = arith.addf %196, %198 : vector<8x64xf32>
    %200 = arith.truncf %199 : vector<8x64xf32> to vector<8x64xbf16>
    %c0_73 = arith.constant 0 : index
    %c0_74 = arith.constant 0 : index
    %201 = vector.load %arg4[%c0_73, %c0_74] : memref<64x64xbf16, #tpu.memory_space<vmem>>, vector<64x64xbf16>
    %cst_75 = arith.constant dense<0.000000e+00> : vector<8x64xf32>
    %202 = tpu.matmul %200, %201, %cst_75 {dimension_numbers = #tpu.dot_dimension_numbers<[1], [0], [0], [1], [0, 0, 1, 1], [], []>} : vector<8x64xbf16>, vector<64x64xbf16>, vector<8x64xf32> -> vector<8x64xf32>
    %203 = vector.broadcast %3 : vector<1x64xf32> to vector<8x64xf32>
    %204 = arith.addf %202, %203 : vector<8x64xf32>
    %cst_76 = arith.constant 2.500000e-01 : f32
    %205 = vector.broadcast %cst_76 : f32 to vector<8x64xf32>
    %206 = arith.mulf %204, %205 : vector<8x64xf32>
    %c0_77 = arith.constant 0 : index
    %c0_78 = arith.constant 0 : index
    %207 = vector.load %arg5[%c0_77, %c0_78] : memref<64x64xbf16, #tpu.memory_space<vmem>>, vector<64x64xbf16>
    %cst_79 = arith.constant dense<0.000000e+00> : vector<8x64xf32>
    %208 = tpu.matmul %200, %207, %cst_79 {dimension_numbers = #tpu.dot_dimension_numbers<[1], [0], [0], [1], [0, 0, 1, 1], [], []>} : vector<8x64xbf16>, vector<64x64xbf16>, vector<8x64xf32> -> vector<8x64xf32>
    %209 = vector.broadcast %4 : vector<1x64xf32> to vector<8x64xf32>
    %210 = arith.addf %208, %209 : vector<8x64xf32>
    %c0_80 = arith.constant 0 : index
    %c0_81 = arith.constant 0 : index
    %211 = vector.load %arg6[%c0_80, %c0_81] : memref<64x64xbf16, #tpu.memory_space<vmem>>, vector<64x64xbf16>
    %cst_82 = arith.constant dense<0.000000e+00> : vector<8x64xf32>
    %212 = tpu.matmul %200, %211, %cst_82 {dimension_numbers = #tpu.dot_dimension_numbers<[1], [0], [0], [1], [0, 0, 1, 1], [], []>} : vector<8x64xbf16>, vector<64x64xbf16>, vector<8x64xf32> -> vector<8x64xf32>
    %213 = vector.broadcast %5 : vector<1x64xf32> to vector<8x64xf32>
    %214 = arith.addf %212, %213 : vector<8x64xf32>
    %215 = vector.extract_strided_slice %206 {offsets = [0, 0], sizes = [8, 16], strides = [1, 1]} : vector<8x64xf32> to vector<8x16xf32>
    %216 = arith.truncf %215 : vector<8x16xf32> to vector<8x16xbf16>
    %217 = vector.shape_cast %216 : vector<8x16xbf16> to vector<1x8x16xbf16>
    %218 = vector.extract_strided_slice %210 {offsets = [0, 0], sizes = [8, 16], strides = [1, 1]} : vector<8x64xf32> to vector<8x16xf32>
    %219 = arith.truncf %218 : vector<8x16xf32> to vector<8x16xbf16>
    %220 = vector.shape_cast %219 : vector<8x16xbf16> to vector<1x8x16xbf16>
    %221 = vector.extract_strided_slice %214 {offsets = [0, 0], sizes = [8, 16], strides = [1, 1]} : vector<8x64xf32> to vector<8x16xf32>
    %222 = arith.truncf %221 : vector<8x16xf32> to vector<8x16xbf16>
    %223 = vector.shape_cast %222 : vector<8x16xbf16> to vector<1x8x16xbf16>
    "tpu.trace_start"() <{level = 10 : i32, message = "bqd,bkd->bqk"}> : () -> ()
    %cst_83 = arith.constant dense<0.000000e+00> : vector<1x8x8xf32>
    %224 = tpu.matmul %217, %220, %cst_83 {dimension_numbers = #tpu.dot_dimension_numbers<[2], [2], [1], [1], [0, 0, 0, 1, 1, 1], [0], [0]>} : vector<1x8x16xbf16>, vector<1x8x16xbf16>, vector<1x8x8xf32> -> vector<1x8x8xf32>
    "tpu.trace_stop"() : () -> ()
    %225 = arith.addf %224, %2 : vector<1x8x8xf32>
    %cst_84 = arith.constant dense<0xFF800000> : vector<1x8xf32>
    %226 = vector.multi_reduction <maximumf>, %225, %cst_84 [2] : vector<1x8x8xf32> to vector<1x8xf32>
    %227 = vector.shape_cast %226 : vector<1x8xf32> to vector<1x8x1xf32>
    %228 = vector.broadcast %227 : vector<1x8x1xf32> to vector<1x8x8xf32>
    %229 = arith.subf %225, %228 : vector<1x8x8xf32>
    %230 = math.exp %229 : vector<1x8x8xf32>
    %cst_85 = arith.constant dense<0.000000e+00> : vector<1x8xf32>
    %231 = vector.multi_reduction <add>, %230, %cst_85 [2] : vector<1x8x8xf32> to vector<1x8xf32>
    %232 = vector.shape_cast %231 : vector<1x8xf32> to vector<1x8x1xf32>
    %233 = tpu.reciprocal %232 {approx = true} : vector<1x8x1xf32> -> vector<1x8x1xf32>
    %234 = vector.broadcast %233 : vector<1x8x1xf32> to vector<1x8x8xf32>
    %235 = arith.mulf %230, %234 : vector<1x8x8xf32>
    %236 = arith.truncf %235 : vector<1x8x8xf32> to vector<1x8x8xbf16>
    "tpu.trace_start"() <{level = 10 : i32, message = "bqk,bkd->bqd"}> : () -> ()
    %cst_86 = arith.constant dense<0.000000e+00> : vector<1x8x16xf32>
    %237 = tpu.matmul %236, %223, %cst_86 {dimension_numbers = #tpu.dot_dimension_numbers<[2], [1], [1], [2], [0, 0, 0, 1, 1, 2], [0], [0]>} : vector<1x8x8xbf16>, vector<1x8x16xbf16>, vector<1x8x16xf32> -> vector<1x8x16xf32>
    "tpu.trace_stop"() : () -> ()
    %238 = vector.shape_cast %237 : vector<1x8x16xf32> to vector<8x16xf32>
    %239 = arith.truncf %238 : vector<8x16xf32> to vector<8x16xbf16>
    %240 = vector.extract_strided_slice %206 {offsets = [0, 16], sizes = [8, 16], strides = [1, 1]} : vector<8x64xf32> to vector<8x16xf32>
    %241 = arith.truncf %240 : vector<8x16xf32> to vector<8x16xbf16>
    %242 = vector.shape_cast %241 : vector<8x16xbf16> to vector<1x8x16xbf16>
    %243 = vector.extract_strided_slice %210 {offsets = [0, 16], sizes = [8, 16], strides = [1, 1]} : vector<8x64xf32> to vector<8x16xf32>
    %244 = arith.truncf %243 : vector<8x16xf32> to vector<8x16xbf16>
    %245 = vector.shape_cast %244 : vector<8x16xbf16> to vector<1x8x16xbf16>
    %246 = vector.extract_strided_slice %214 {offsets = [0, 16], sizes = [8, 16], strides = [1, 1]} : vector<8x64xf32> to vector<8x16xf32>
    %247 = arith.truncf %246 : vector<8x16xf32> to vector<8x16xbf16>
    %248 = vector.shape_cast %247 : vector<8x16xbf16> to vector<1x8x16xbf16>
    "tpu.trace_start"() <{level = 10 : i32, message = "bqd,bkd->bqk"}> : () -> ()
    %cst_87 = arith.constant dense<0.000000e+00> : vector<1x8x8xf32>
    %249 = tpu.matmul %242, %245, %cst_87 {dimension_numbers = #tpu.dot_dimension_numbers<[2], [2], [1], [1], [0, 0, 0, 1, 1, 1], [0], [0]>} : vector<1x8x16xbf16>, vector<1x8x16xbf16>, vector<1x8x8xf32> -> vector<1x8x8xf32>
    "tpu.trace_stop"() : () -> ()
    %250 = arith.addf %249, %2 : vector<1x8x8xf32>
    %cst_88 = arith.constant dense<0xFF800000> : vector<1x8xf32>
    %251 = vector.multi_reduction <maximumf>, %250, %cst_88 [2] : vector<1x8x8xf32> to vector<1x8xf32>
    %252 = vector.shape_cast %251 : vector<1x8xf32> to vector<1x8x1xf32>
    %253 = vector.broadcast %252 : vector<1x8x1xf32> to vector<1x8x8xf32>
    %254 = arith.subf %250, %253 : vector<1x8x8xf32>
    %255 = math.exp %254 : vector<1x8x8xf32>
    %cst_89 = arith.constant dense<0.000000e+00> : vector<1x8xf32>
    %256 = vector.multi_reduction <add>, %255, %cst_89 [2] : vector<1x8x8xf32> to vector<1x8xf32>
    %257 = vector.shape_cast %256 : vector<1x8xf32> to vector<1x8x1xf32>
    %258 = tpu.reciprocal %257 {approx = true} : vector<1x8x1xf32> -> vector<1x8x1xf32>
    %259 = vector.broadcast %258 : vector<1x8x1xf32> to vector<1x8x8xf32>
    %260 = arith.mulf %255, %259 : vector<1x8x8xf32>
    %261 = arith.truncf %260 : vector<1x8x8xf32> to vector<1x8x8xbf16>
    "tpu.trace_start"() <{level = 10 : i32, message = "bqk,bkd->bqd"}> : () -> ()
    %cst_90 = arith.constant dense<0.000000e+00> : vector<1x8x16xf32>
    %262 = tpu.matmul %261, %248, %cst_90 {dimension_numbers = #tpu.dot_dimension_numbers<[2], [1], [1], [2], [0, 0, 0, 1, 1, 2], [0], [0]>} : vector<1x8x8xbf16>, vector<1x8x16xbf16>, vector<1x8x16xf32> -> vector<1x8x16xf32>
    "tpu.trace_stop"() : () -> ()
    %263 = vector.shape_cast %262 : vector<1x8x16xf32> to vector<8x16xf32>
    %264 = arith.truncf %263 : vector<8x16xf32> to vector<8x16xbf16>
    %265 = vector.extract_strided_slice %206 {offsets = [0, 32], sizes = [8, 16], strides = [1, 1]} : vector<8x64xf32> to vector<8x16xf32>
    %266 = arith.truncf %265 : vector<8x16xf32> to vector<8x16xbf16>
    %267 = vector.shape_cast %266 : vector<8x16xbf16> to vector<1x8x16xbf16>
    %268 = vector.extract_strided_slice %210 {offsets = [0, 32], sizes = [8, 16], strides = [1, 1]} : vector<8x64xf32> to vector<8x16xf32>
    %269 = arith.truncf %268 : vector<8x16xf32> to vector<8x16xbf16>
    %270 = vector.shape_cast %269 : vector<8x16xbf16> to vector<1x8x16xbf16>
    %271 = vector.extract_strided_slice %214 {offsets = [0, 32], sizes = [8, 16], strides = [1, 1]} : vector<8x64xf32> to vector<8x16xf32>
    %272 = arith.truncf %271 : vector<8x16xf32> to vector<8x16xbf16>
    %273 = vector.shape_cast %272 : vector<8x16xbf16> to vector<1x8x16xbf16>
    "tpu.trace_start"() <{level = 10 : i32, message = "bqd,bkd->bqk"}> : () -> ()
    %cst_91 = arith.constant dense<0.000000e+00> : vector<1x8x8xf32>
    %274 = tpu.matmul %267, %270, %cst_91 {dimension_numbers = #tpu.dot_dimension_numbers<[2], [2], [1], [1], [0, 0, 0, 1, 1, 1], [0], [0]>} : vector<1x8x16xbf16>, vector<1x8x16xbf16>, vector<1x8x8xf32> -> vector<1x8x8xf32>
    "tpu.trace_stop"() : () -> ()
    %275 = arith.addf %274, %2 : vector<1x8x8xf32>
    %cst_92 = arith.constant dense<0xFF800000> : vector<1x8xf32>
    %276 = vector.multi_reduction <maximumf>, %275, %cst_92 [2] : vector<1x8x8xf32> to vector<1x8xf32>
    %277 = vector.shape_cast %276 : vector<1x8xf32> to vector<1x8x1xf32>
    %278 = vector.broadcast %277 : vector<1x8x1xf32> to vector<1x8x8xf32>
    %279 = arith.subf %275, %278 : vector<1x8x8xf32>
    %280 = math.exp %279 : vector<1x8x8xf32>
    %cst_93 = arith.constant dense<0.000000e+00> : vector<1x8xf32>
    %281 = vector.multi_reduction <add>, %280, %cst_93 [2] : vector<1x8x8xf32> to vector<1x8xf32>
    %282 = vector.shape_cast %281 : vector<1x8xf32> to vector<1x8x1xf32>
    %283 = tpu.reciprocal %282 {approx = true} : vector<1x8x1xf32> -> vector<1x8x1xf32>
    %284 = vector.broadcast %283 : vector<1x8x1xf32> to vector<1x8x8xf32>
    %285 = arith.mulf %280, %284 : vector<1x8x8xf32>
    %286 = arith.truncf %285 : vector<1x8x8xf32> to vector<1x8x8xbf16>
    "tpu.trace_start"() <{level = 10 : i32, message = "bqk,bkd->bqd"}> : () -> ()
    %cst_94 = arith.constant dense<0.000000e+00> : vector<1x8x16xf32>
    %287 = tpu.matmul %286, %273, %cst_94 {dimension_numbers = #tpu.dot_dimension_numbers<[2], [1], [1], [2], [0, 0, 0, 1, 1, 2], [0], [0]>} : vector<1x8x8xbf16>, vector<1x8x16xbf16>, vector<1x8x16xf32> -> vector<1x8x16xf32>
    "tpu.trace_stop"() : () -> ()
    %288 = vector.shape_cast %287 : vector<1x8x16xf32> to vector<8x16xf32>
    %289 = arith.truncf %288 : vector<8x16xf32> to vector<8x16xbf16>
    %290 = vector.extract_strided_slice %206 {offsets = [0, 48], sizes = [8, 16], strides = [1, 1]} : vector<8x64xf32> to vector<8x16xf32>
    %291 = arith.truncf %290 : vector<8x16xf32> to vector<8x16xbf16>
    %292 = vector.shape_cast %291 : vector<8x16xbf16> to vector<1x8x16xbf16>
    %293 = vector.extract_strided_slice %210 {offsets = [0, 48], sizes = [8, 16], strides = [1, 1]} : vector<8x64xf32> to vector<8x16xf32>
    %294 = arith.truncf %293 : vector<8x16xf32> to vector<8x16xbf16>
    %295 = vector.shape_cast %294 : vector<8x16xbf16> to vector<1x8x16xbf16>
    %296 = vector.extract_strided_slice %214 {offsets = [0, 48], sizes = [8, 16], strides = [1, 1]} : vector<8x64xf32> to vector<8x16xf32>
    %297 = arith.truncf %296 : vector<8x16xf32> to vector<8x16xbf16>
    %298 = vector.shape_cast %297 : vector<8x16xbf16> to vector<1x8x16xbf16>
    "tpu.trace_start"() <{level = 10 : i32, message = "bqd,bkd->bqk"}> : () -> ()
    %cst_95 = arith.constant dense<0.000000e+00> : vector<1x8x8xf32>
    %299 = tpu.matmul %292, %295, %cst_95 {dimension_numbers = #tpu.dot_dimension_numbers<[2], [2], [1], [1], [0, 0, 0, 1, 1, 1], [0], [0]>} : vector<1x8x16xbf16>, vector<1x8x16xbf16>, vector<1x8x8xf32> -> vector<1x8x8xf32>
    "tpu.trace_stop"() : () -> ()
    %300 = arith.addf %299, %2 : vector<1x8x8xf32>
    %cst_96 = arith.constant dense<0xFF800000> : vector<1x8xf32>
    %301 = vector.multi_reduction <maximumf>, %300, %cst_96 [2] : vector<1x8x8xf32> to vector<1x8xf32>
    %302 = vector.shape_cast %301 : vector<1x8xf32> to vector<1x8x1xf32>
    %303 = vector.broadcast %302 : vector<1x8x1xf32> to vector<1x8x8xf32>
    %304 = arith.subf %300, %303 : vector<1x8x8xf32>
    %305 = math.exp %304 : vector<1x8x8xf32>
    %cst_97 = arith.constant dense<0.000000e+00> : vector<1x8xf32>
    %306 = vector.multi_reduction <add>, %305, %cst_97 [2] : vector<1x8x8xf32> to vector<1x8xf32>
    %307 = vector.shape_cast %306 : vector<1x8xf32> to vector<1x8x1xf32>
    %308 = tpu.reciprocal %307 {approx = true} : vector<1x8x1xf32> -> vector<1x8x1xf32>
    %309 = vector.broadcast %308 : vector<1x8x1xf32> to vector<1x8x8xf32>
    %310 = arith.mulf %305, %309 : vector<1x8x8xf32>
    %311 = arith.truncf %310 : vector<1x8x8xf32> to vector<1x8x8xbf16>
    "tpu.trace_start"() <{level = 10 : i32, message = "bqk,bkd->bqd"}> : () -> ()
    %cst_98 = arith.constant dense<0.000000e+00> : vector<1x8x16xf32>
    %312 = tpu.matmul %311, %298, %cst_98 {dimension_numbers = #tpu.dot_dimension_numbers<[2], [1], [1], [2], [0, 0, 0, 1, 1, 2], [0], [0]>} : vector<1x8x8xbf16>, vector<1x8x16xbf16>, vector<1x8x16xf32> -> vector<1x8x16xf32>
    "tpu.trace_stop"() : () -> ()
    %313 = vector.shape_cast %312 : vector<1x8x16xf32> to vector<8x16xf32>
    %314 = arith.truncf %313 : vector<8x16xf32> to vector<8x16xbf16>
    %315 = tpu.concatenate %239, %264, %289, %314 in 1 : vector<8x16xbf16>, vector<8x16xbf16>, vector<8x16xbf16>, vector<8x16xbf16> -> vector<8x64xbf16>
    %c0_99 = arith.constant 0 : index
    %c0_100 = arith.constant 0 : index
    %316 = vector.load %arg7[%c0_99, %c0_100] : memref<64x64xbf16, #tpu.memory_space<vmem>>, vector<64x64xbf16>
    %cst_101 = arith.constant dense<0.000000e+00> : vector<8x64xf32>
    %317 = tpu.matmul %315, %316, %cst_101 {dimension_numbers = #tpu.dot_dimension_numbers<[1], [0], [0], [1], [0, 0, 1, 1], [], []>} : vector<8x64xbf16>, vector<64x64xbf16>, vector<8x64xf32> -> vector<8x64xf32>
    %318 = vector.broadcast %6 : vector<1x64xf32> to vector<8x64xf32>
    %319 = arith.addf %317, %318 : vector<8x64xf32>
    %320 = arith.addf %199, %319 : vector<8x64xf32>
    %cst_102 = arith.constant dense<0.000000e+00> : vector<8xf32>
    %321 = vector.multi_reduction <add>, %320, %cst_102 [1] : vector<8x64xf32> to vector<8xf32>
    %322 = vector.shape_cast %321 : vector<8xf32> to vector<8x1xf32>
    %cst_103 = arith.constant 6.400000e+01 : f32
    %323 = vector.broadcast %cst_103 : f32 to vector<8x1xf32>
    %324 = arith.divf %322, %323 : vector<8x1xf32>
    %325 = vector.broadcast %324 : vector<8x1xf32> to vector<8x64xf32>
    %326 = arith.subf %320, %325 : vector<8x64xf32>
    %327 = arith.mulf %326, %326 : vector<8x64xf32>
    %cst_104 = arith.constant dense<0.000000e+00> : vector<8xf32>
    %328 = vector.multi_reduction <add>, %327, %cst_104 [1] : vector<8x64xf32> to vector<8xf32>
    %329 = vector.shape_cast %328 : vector<8xf32> to vector<8x1xf32>
    %cst_105 = arith.constant 6.400000e+01 : f32
    %330 = vector.broadcast %cst_105 : f32 to vector<8x1xf32>
    %331 = arith.divf %329, %330 : vector<8x1xf32>
    %332 = vector.broadcast %324 : vector<8x1xf32> to vector<8x64xf32>
    %333 = arith.subf %320, %332 : vector<8x64xf32>
    %cst_106 = arith.constant 9.99999974E-6 : f32
    %334 = vector.broadcast %cst_106 : f32 to vector<8x1xf32>
    %335 = arith.addf %331, %334 : vector<8x1xf32>
    %336 = math.rsqrt %335 : vector<8x1xf32>
    %337 = vector.broadcast %336 : vector<8x1xf32> to vector<8x64xf32>
    %338 = arith.mulf %333, %337 : vector<8x64xf32>
    %339 = vector.broadcast %9 : vector<1x64xf32> to vector<8x64xf32>
    %340 = arith.mulf %338, %339 : vector<8x64xf32>
    %341 = vector.broadcast %10 : vector<1x64xf32> to vector<8x64xf32>
    %342 = arith.addf %340, %341 : vector<8x64xf32>
    %343 = arith.truncf %342 : vector<8x64xf32> to vector<8x64xbf16>
    %c0_107 = arith.constant 0 : index
    %c0_108 = arith.constant 0 : index
    %344 = vector.load %arg14[%c0_107, %c0_108] : memref<64x64xbf16, #tpu.memory_space<vmem>>, vector<64x64xbf16>
    %cst_109 = arith.constant dense<0.000000e+00> : vector<8x64xf32>
    %345 = tpu.matmul %343, %344, %cst_109 {dimension_numbers = #tpu.dot_dimension_numbers<[1], [0], [0], [1], [0, 0, 1, 1], [], []>} : vector<8x64xbf16>, vector<64x64xbf16>, vector<8x64xf32> -> vector<8x64xf32>
    %346 = vector.broadcast %7 : vector<1x64xf32> to vector<8x64xf32>
    %347 = arith.addf %345, %346 : vector<8x64xf32>
    %cst_110 = arith.constant 0.000000e+00 : f32
    %348 = vector.broadcast %cst_110 : f32 to vector<8x64xf32>
    %349 = arith.maximumf %347, %348 : vector<8x64xf32>
    %350 = arith.truncf %349 : vector<8x64xf32> to vector<8x64xbf16>
    %c0_111 = arith.constant 0 : index
    %c0_112 = arith.constant 0 : index
    %351 = vector.load %arg16[%c0_111, %c0_112] : memref<64x64xbf16, #tpu.memory_space<vmem>>, vector<64x64xbf16>
    %cst_113 = arith.constant dense<0.000000e+00> : vector<8x64xf32>
    %352 = tpu.matmul %350, %351, %cst_113 {dimension_numbers = #tpu.dot_dimension_numbers<[1], [0], [0], [1], [0, 0, 1, 1], [], []>} : vector<8x64xbf16>, vector<64x64xbf16>, vector<8x64xf32> -> vector<8x64xf32>
    %353 = vector.broadcast %8 : vector<1x64xf32> to vector<8x64xf32>
    %354 = arith.addf %352, %353 : vector<8x64xf32>
    %355 = arith.addf %342, %354 : vector<8x64xf32>
    %cst_114 = arith.constant dense<0.000000e+00> : vector<8xf32>
    %356 = vector.multi_reduction <add>, %355, %cst_114 [1] : vector<8x64xf32> to vector<8xf32>
    %357 = vector.shape_cast %356 : vector<8xf32> to vector<8x1xf32>
    %cst_115 = arith.constant 6.400000e+01 : f32
    %358 = vector.broadcast %cst_115 : f32 to vector<8x1xf32>
    %359 = arith.divf %357, %358 : vector<8x1xf32>
    %360 = vector.broadcast %359 : vector<8x1xf32> to vector<8x64xf32>
    %361 = arith.subf %355, %360 : vector<8x64xf32>
    %362 = arith.mulf %361, %361 : vector<8x64xf32>
    %cst_116 = arith.constant dense<0.000000e+00> : vector<8xf32>
    %363 = vector.multi_reduction <add>, %362, %cst_116 [1] : vector<8x64xf32> to vector<8xf32>
    %364 = vector.shape_cast %363 : vector<8xf32> to vector<8x1xf32>
    %cst_117 = arith.constant 6.400000e+01 : f32
    %365 = vector.broadcast %cst_117 : f32 to vector<8x1xf32>
    %366 = arith.divf %364, %365 : vector<8x1xf32>
    %367 = vector.broadcast %359 : vector<8x1xf32> to vector<8x64xf32>
    %368 = arith.subf %355, %367 : vector<8x64xf32>
    %cst_118 = arith.constant 9.99999974E-6 : f32
    %369 = vector.broadcast %cst_118 : f32 to vector<8x1xf32>
    %370 = arith.addf %366, %369 : vector<8x1xf32>
    %371 = math.rsqrt %370 : vector<8x1xf32>
    %372 = vector.broadcast %371 : vector<8x1xf32> to vector<8x64xf32>
    %373 = arith.mulf %368, %372 : vector<8x64xf32>
    %374 = vector.broadcast %11 : vector<1x64xf32> to vector<8x64xf32>
    %375 = arith.mulf %373, %374 : vector<8x64xf32>
    %376 = vector.broadcast %12 : vector<1x64xf32> to vector<8x64xf32>
    %377 = arith.addf %375, %376 : vector<8x64xf32>
    %378 = arith.truncf %377 : vector<8x64xf32> to vector<8x64xbf16>
    %c0_119 = arith.constant 0 : index
    %c0_120 = arith.constant 0 : index
    %379 = vector.load %arg20[%c0_119, %c0_120] : memref<64x64xbf16, #tpu.memory_space<vmem>>, vector<64x64xbf16>
    %cst_121 = arith.constant dense<0.000000e+00> : vector<8x64xf32>
    %380 = tpu.matmul %378, %379, %cst_121 {dimension_numbers = #tpu.dot_dimension_numbers<[1], [0], [0], [1], [0, 0, 1, 1], [], []>} : vector<8x64xbf16>, vector<64x64xbf16>, vector<8x64xf32> -> vector<8x64xf32>
    %c0_122 = arith.constant 0 : index
    %c0_123 = arith.constant 0 : index
    %381 = vector.load %arg21[%c0_122, %c0_123] : memref<1x64xf32, #tpu.memory_space<vmem>>, vector<1x64xf32>
    %382 = vector.broadcast %381 : vector<1x64xf32> to vector<8x64xf32>
    %383 = arith.addf %380, %382 : vector<8x64xf32>
    %cst_124 = arith.constant 0.000000e+00 : f32
    %384 = vector.broadcast %cst_124 : f32 to vector<8x64xf32>
    %385 = arith.maximumf %383, %384 : vector<8x64xf32>
    %386 = arith.truncf %385 : vector<8x64xf32> to vector<8x64xbf16>
    %c0_125 = arith.constant 0 : index
    %c0_126 = arith.constant 0 : index
    %387 = vector.load %arg22[%c0_125, %c0_126] : memref<64x128xbf16, #tpu.memory_space<vmem>>, vector<64x128xbf16>
    %cst_127 = arith.constant dense<0.000000e+00> : vector<8x128xf32>
    %388 = tpu.matmul %386, %387, %cst_127 {dimension_numbers = #tpu.dot_dimension_numbers<[1], [0], [0], [1], [0, 0, 1, 1], [], []>} : vector<8x64xbf16>, vector<64x128xbf16>, vector<8x128xf32> -> vector<8x128xf32>
    %c0_128 = arith.constant 0 : index
    %c0_129 = arith.constant 0 : index
    %389 = vector.load %arg23[%c0_128, %c0_129] : memref<1x128xf32, #tpu.memory_space<vmem>>, vector<1x128xf32>
    %390 = vector.broadcast %389 : vector<1x128xf32> to vector<8x128xf32>
    %391 = arith.addf %388, %390 : vector<8x128xf32>
    %392 = vector.shape_cast %391 : vector<8x128xf32> to vector<1x8x128xf32>
    %393 = arith.truncf %392 : vector<1x8x128xf32> to vector<1x8x128xbf16>
    %c0_130 = arith.constant 0 : index
    %c0_131 = arith.constant 0 : index
    %c0_132 = arith.constant 0 : index
    %394 = vector.load %arg24[%c0_130, %c0_131, %c0_132] : memref<1x8x128xbf16, #tpu.memory_space<vmem>>, vector<1x8x128xbf16>
    tpu.vector_store %arg24[%c0_130, %c0_131, %c0_132], %393 {strides = array<i32>} : memref<1x8x128xbf16, #tpu.memory_space<vmem>>, vector<1x8x128xbf16>,
    return
  }
  func.func @transform_0(%arg0: i32) -> (i32, i32, i32) {
    %c0_i32 = arith.constant 0 : i32
    %c0_i32_0 = arith.constant 0 : i32
    %c0_i32_1 = arith.constant 0 : i32
    return %arg0, %c0_i32, %c0_i32_0 : i32, i32, i32
  }
  func.func @transform_1(%arg0: i32) -> (i32, i32, i32) {
    %c0_i32 = arith.constant 0 : i32
    %c0_i32_0 = arith.constant 0 : i32
    %c0_i32_1 = arith.constant 0 : i32
    return %arg0, %c0_i32, %c0_i32_0 : i32, i32, i32
  }
  func.func @transform_2(%arg0: i32) -> (i32, i32) {
    %c0_i32 = arith.constant 0 : i32
    %c0_i32_0 = arith.constant 0 : i32
    %c0_i32_1 = arith.constant 0 : i32
    return %c0_i32, %c0_i32_0 : i32, i32
  }
  func.func @transform_3(%arg0: i32) -> (i32, i32) {
    %c0_i32 = arith.constant 0 : i32
    %c0_i32_0 = arith.constant 0 : i32
    %c0_i32_1 = arith.constant 0 : i32
    return %c0_i32, %c0_i32_0 : i32, i32
  }
  func.func @transform_4(%arg0: i32) -> (i32, i32) {
    %c0_i32 = arith.constant 0 : i32
    %c0_i32_0 = arith.constant 0 : i32
    %c0_i32_1 = arith.constant 0 : i32
    return %c0_i32, %c0_i32_0 : i32, i32
  }
  func.func @transform_5(%arg0: i32) -> (i32, i32) {
    %c0_i32 = arith.constant 0 : i32
    %c0_i32_0 = arith.constant 0 : i32
    %c0_i32_1 = arith.constant 0 : i32
    return %c0_i32, %c0_i32_0 : i32, i32
  }
  func.func @transform_6(%arg0: i32) -> (i32, i32) {
    %c0_i32 = arith.constant 0 : i32
    %c0_i32_0 = arith.constant 0 : i32
    %c0_i32_1 = arith.constant 0 : i32
    return %c0_i32, %c0_i32_0 : i32, i32
  }
  func.func @transform_7(%arg0: i32) -> (i32, i32) {
    %c0_i32 = arith.constant 0 : i32
    %c0_i32_0 = arith.constant 0 : i32
    %c0_i32_1 = arith.constant 0 : i32
    return %c0_i32, %c0_i32_0 : i32, i32
  }
  func.func @transform_8(%arg0: i32) -> (i32, i32) {
    %c0_i32 = arith.constant 0 : i32
    %c0_i32_0 = arith.constant 0 : i32
    %c0_i32_1 = arith.constant 0 : i32
    return %c0_i32, %c0_i32_0 : i32, i32
  }
  func.func @transform_9(%arg0: i32) -> (i32, i32) {
    %c0_i32 = arith.constant 0 : i32
    %c0_i32_0 = arith.constant 0 : i32
    %c0_i32_1 = arith.constant 0 : i32
    return %c0_i32, %c0_i32_0 : i32, i32
  }
  func.func @transform_10(%arg0: i32) -> (i32, i32) {
    %c0_i32 = arith.constant 0 : i32
    %c0_i32_0 = arith.constant 0 : i32
    %c0_i32_1 = arith.constant 0 : i32
    return %c0_i32, %c0_i32_0 : i32, i32
  }
  func.func @transform_11(%arg0: i32) -> (i32, i32) {
    %c0_i32 = arith.constant 0 : i32
    %c0_i32_0 = arith.constant 0 : i32
    %c0_i32_1 = arith.constant 0 : i32
    return %c0_i32, %c0_i32_0 : i32, i32
  }
  func.func @transform_12(%arg0: i32) -> (i32, i32) {
    %c0_i32 = arith.constant 0 : i32
    %c0_i32_0 = arith.constant 0 : i32
    %c0_i32_1 = arith.constant 0 : i32
    return %c0_i32, %c0_i32_0 : i32, i32
  }
  func.func @transform_13(%arg0: i32) -> (i32, i32) {
    %c0_i32 = arith.constant 0 : i32
    %c0_i32_0 = arith.constant 0 : i32
    %c0_i32_1 = arith.constant 0 : i32
    return %c0_i32, %c0_i32_0 : i32, i32
  }
  func.func @transform_14(%arg0: i32) -> (i32, i32) {
    %c0_i32 = arith.constant 0 : i32
    %c0_i32_0 = arith.constant 0 : i32
    %c0_i32_1 = arith.constant 0 : i32
    return %c0_i32, %c0_i32_0 : i32, i32
  }
  func.func @transform_15(%arg0: i32) -> (i32, i32) {
    %c0_i32 = arith.constant 0 : i32
    %c0_i32_0 = arith.constant 0 : i32
    %c0_i32_1 = arith.constant 0 : i32
    return %c0_i32, %c0_i32_0 : i32, i32
  }
  func.func @transform_16(%arg0: i32) -> (i32, i32) {
    %c0_i32 = arith.constant 0 : i32
    %c0_i32_0 = arith.constant 0 : i32
    %c0_i32_1 = arith.constant 0 : i32
    return %c0_i32, %c0_i32_0 : i32, i32
  }
  func.func @transform_17(%arg0: i32) -> (i32, i32) {
    %c0_i32 = arith.constant 0 : i32
    %c0_i32_0 = arith.constant 0 : i32
    %c0_i32_1 = arith.constant 0 : i32
    return %c0_i32, %c0_i32_0 : i32, i32
  }
  func.func @transform_18(%arg0: i32) -> (i32, i32) {
    %c0_i32 = arith.constant 0 : i32
    %c0_i32_0 = arith.constant 0 : i32
    %c0_i32_1 = arith.constant 0 : i32
    return %c0_i32, %c0_i32_0 : i32, i32
  }
  func.func @transform_19(%arg0: i32) -> (i32, i32) {
    %c0_i32 = arith.constant 0 : i32
    %c0_i32_0 = arith.constant 0 : i32
    %c0_i32_1 = arith.constant 0 : i32
    return %c0_i32, %c0_i32_0 : i32, i32
  }
  func.func @transform_20(%arg0: i32) -> (i32, i32) {
    %c0_i32 = arith.constant 0 : i32
    %c0_i32_0 = arith.constant 0 : i32
    %c0_i32_1 = arith.constant 0 : i32
    return %c0_i32, %c0_i32_0 : i32, i32
  }
  func.func @transform_21(%arg0: i32) -> (i32, i32) {
    %c0_i32 = arith.constant 0 : i32
    %c0_i32_0 = arith.constant 0 : i32
    %c0_i32_1 = arith.constant 0 : i32
    return %c0_i32, %c0_i32_0 : i32, i32
  }
  func.func @transform_22(%arg0: i32) -> (i32, i32) {
    %c0_i32 = arith.constant 0 : i32
    %c0_i32_0 = arith.constant 0 : i32
    %c0_i32_1 = arith.constant 0 : i32
    return %c0_i32, %c0_i32_0 : i32, i32
  }
  func.func @transform_23(%arg0: i32) -> (i32, i32, i32) {
    %c0_i32 = arith.constant 0 : i32
    %c0_i32_0 = arith.constant 0 : i32
    %c0_i32_1 = arith.constant 0 : i32
    return %arg0, %c0_i32, %c0_i32_0 : i32, i32, i32
  }
}

module attributes {stable_mosaic.version = 11 : i64} {
  func.func @_fused_ut_kernel(%arg0: i32, %arg1: memref<1x8x64xbf16, #tpu.memory_space<vmem>>, %arg2: memref<1x1x8xf32, #tpu.memory_space<vmem>>, %arg3: memref<2x64xf32, #tpu.memory_space<vmem>>, %arg4: memref<64x64xbf16, #tpu.memory_space<vmem>>, %arg5: memref<64x64xbf16, #tpu.memory_space<vmem>>, %arg6: memref<64x64xbf16, #tpu.memory_space<vmem>>, %arg7: memref<64x64xbf16, #tpu.memory_space<vmem>>, %arg8: memref<1x64xf32, #tpu.memory_space<vmem>>, %arg9: memref<1x64xf32, #tpu.memory_space<vmem>>, %arg10: memref<1x64xf32, #tpu.memory_space<vmem>>, %arg11: memref<1x64xf32, #tpu.memory_space<vmem>>, %arg12: memref<1x64xf32, #tpu.memory_space<vmem>>, %arg13: memref<1x64xf32, #tpu.memory_space<vmem>>, %arg14: memref<64x64xbf16, #tpu.memory_space<vmem>>, %arg15: memref<1x64xf32, #tpu.memory_space<vmem>>, %arg16: memref<64x64xbf16, #tpu.memory_space<vmem>>, %arg17: memref<1x64xf32, #tpu.memory_space<vmem>>, %arg18: memref<1x64xf32, #tpu.memory_space<vmem>>, %arg19: memref<1x64xf32, #tpu.memory_space<vmem>>, %arg20: memref<64x64xbf16, #tpu.memory_space<vmem>>, %arg21: memref<1x64xf32, #tpu.memory_space<vmem>>, %arg22: memref<64x128xbf16, #tpu.memory_space<vmem>>, %arg23: memref<1x128xf32, #tpu.memory_space<vmem>>, %arg24: memref<1x8x128xbf16, #tpu.memory_space<vmem>>) attributes {dimension_semantics = [#tpu.dimension_semantics<parallel>], iteration_bounds = array<i64: 2>, scalar_prefetch = 0 : i64, scratch_operands = 0 : i64, tpu.core_type = #tpu.core_type<tc>, window_params = [{transform_indices = @transform_0, window_bounds = array<i64: 1, 8, 64>}, {transform_indices = @transform_1, window_bounds = array<i64: 1, 1, 8>}, {pipeline_mode = #tpu.pipeline_mode<synchronous>, transform_indices = @transform_2, window_bounds = array<i64: 2, 64>}, {pipeline_mode = #tpu.pipeline_mode<synchronous>, transform_indices = @transform_3, window_bounds = array<i64: 64, 64>}, {pipeline_mode = #tpu.pipeline_mode<synchronous>, transform_indices = @transform_4, window_bounds = array<i64: 64, 64>}, {pipeline_mode = #tpu.pipeline_mode<synchronous>, transform_indices = @transform_5, window_bounds = array<i64: 64, 64>}, {pipeline_mode = #tpu.pipeline_mode<synchronous>, transform_indices = @transform_6, window_bounds = array<i64: 64, 64>}, {pipeline_mode = #tpu.pipeline_mode<synchronous>, transform_indices = @transform_7, window_bounds = array<i64: 1, 64>}, {pipeline_mode = #tpu.pipeline_mode<synchronous>, transform_indices = @transform_8, window_bounds = array<i64: 1, 64>}, {pipeline_mode = #tpu.pipeline_mode<synchronous>, transform_indices = @transform_9, window_bounds = array<i64: 1, 64>}, {pipeline_mode = #tpu.pipeline_mode<synchronous>, transform_indices = @transform_10, window_bounds = array<i64: 1, 64>}, {pipeline_mode = #tpu.pipeline_mode<synchronous>, transform_indices = @transform_11, window_bounds = array<i64: 1, 64>}, {pipeline_mode = #tpu.pipeline_mode<synchronous>, transform_indices = @transform_12, window_bounds = array<i64: 1, 64>}, {pipeline_mode = #tpu.pipeline_mode<synchronous>, transform_indices = @transform_13, window_bounds = array<i64: 64, 64>}, {pipeline_mode = #tpu.pipeline_mode<synchronous>, transform_indices = @transform_14, window_bounds = array<i64: 1, 64>}, {pipeline_mode = #tpu.pipeline_mode<synchronous>, transform_indices = @transform_15, window_bounds = array<i64: 64, 64>}, {pipeline_mode = #tpu.pipeline_mode<synchronous>, transform_indices = @transform_16, window_bounds = array<i64: 1, 64>}, {pipeline_mode = #tpu.pipeline_mode<synchronous>, transform_indices = @transform_17, window_bounds = array<i64: 1, 64>}, {pipeline_mode = #tpu.pipeline_mode<synchronous>, transform_indices = @transform_18, window_bounds = array<i64: 1, 64>}, {pipeline_mode = #tpu.pipeline_mode<synchronous>, transform_indices = @transform_19, window_bounds = array<i64: 64, 64>}, {pipeline_mode = #tpu.pipeline_mode<synchronous>, transform_indices = @transform_20, window_bounds = array<i64: 1, 64>}, {pipeline_mode = #tpu.pipeline_mode<synchronous>, transform_indices = @transform_21, window_bounds = array<i64: 64, 128>}, {pipeline_mode = #tpu.pipeline_mode<synchronous>, transform_indices = @transform_22, window_bounds = array<i64: 1, 128>}, {transform_indices = @transform_23, window_bounds = array<i64: 1, 8, 128>}]} {
    %c0 = arith.constant 0 : index
    %c0_0 = arith.constant 0 : index
    %c0_1 = arith.constant 0 : index
    %0 = vector.load %arg2[%c0, %c0_0, %c0_1] : memref<1x1x8xf32, #tpu.memory_space<vmem>>, vector<1x1x8xf32>
    %1 = vector.shape_cast %0 : vector<1x1x8xf32> to vector<1x1x8xf32>
    %2 = vector.broadcast %1 : vector<1x1x8xf32> to vector<1x8x8xf32>
    %c0_2 = arith.constant 0 : index
    %c0_3 = arith.constant 0 : index
    %3 = vector.load %arg8[%c0_2, %c0_3] : memref<1x64xf32, #tpu.memory_space<vmem>>, vector<1x64xf32>
    %c0_4 = arith.constant 0 : index
    %c0_5 = arith.constant 0 : index
    %4 = vector.load %arg9[%c0_4, %c0_5] : memref<1x64xf32, #tpu.memory_space<vmem>>, vector<1x64xf32>
    %c0_6 = arith.constant 0 : index
    %c0_7 = arith.constant 0 : index
    %5 = vector.load %arg10[%c0_6, %c0_7] : memref<1x64xf32, #tpu.memory_space<vmem>>, vector<1x64xf32>
    %c0_8 = arith.constant 0 : index
    %c0_9 = arith.constant 0 : index
    %6 = vector.load %arg11[%c0_8, %c0_9] : memref<1x64xf32, #tpu.memory_space<vmem>>, vector<1x64xf32>
    %c0_10 = arith.constant 0 : index
    %c0_11 = arith.constant 0 : index
    %7 = vector.load %arg15[%c0_10, %c0_11] : memref<1x64xf32, #tpu.memory_space<vmem>>, vector<1x64xf32>
    %c0_12 = arith.constant 0 : index
    %c0_13 = arith.constant 0 : index
    %8 = vector.load %arg17[%c0_12, %c0_13] : memref<1x64xf32, #tpu.memory_space<vmem>>, vector<1x64xf32>
    %c0_14 = arith.constant 0 : index
    %c0_15 = arith.constant 0 : index
    %9 = vector.load %arg12[%c0_14, %c0_15] : memref<1x64xf32, #tpu.memory_space<vmem>>, vector<1x64xf32>
    %c0_16 = arith.constant 0 : index
    %c0_17 = arith.constant 0 : index
    %10 = vector.load %arg13[%c0_16, %c0_17] : memref<1x64xf32, #tpu.memory_space<vmem>>, vector<1x64xf32>
    %c0_18 = arith.constant 0 : index
    %c0_19 = arith.constant 0 : index
    %11 = vector.load %arg18[%c0_18, %c0_19] : memref<1x64xf32, #tpu.memory_space<vmem>>, vector<1x64xf32>
    %c0_20 = arith.constant 0 : index
    %c0_21 = arith.constant 0 : index
    %12 = vector.load %arg19[%c0_20, %c0_21] : memref<1x64xf32, #tpu.memory_space<vmem>>, vector<1x64xf32>
    %c0_22 = arith.constant 0 : index
    %c0_23 = arith.constant 0 : index
    %c0_24 = arith.constant 0 : index
    %13 = vector.load %arg1[%c0_22, %c0_23, %c0_24] : memref<1x8x64xbf16, #tpu.memory_space<vmem>>, vector<1x8x64xbf16>
    %14 = arith.extf %13 : vector<1x8x64xbf16> to vector<1x8x64xf32>
    %15 = vector.shape_cast %14 : vector<1x8x64xf32> to vector<8x64xf32>
    %c0_25 = arith.constant 0 : index
    %c0_26 = arith.constant 0 : index
    %16 = vector.load %arg3[%c0_25, %c0_26] : memref<2x64xf32, #tpu.memory_space<vmem>>, vector<1x64xf32>
    %17 = vector.broadcast %16 : vector<1x64xf32> to vector<8x64xf32>
    %18 = arith.addf %15, %17 : vector<8x64xf32>
    %19 = arith.truncf %18 : vector<8x64xf32> to vector<8x64xbf16>
    %c0_27 = arith.constant 0 : index
    %c0_28 = arith.constant 0 : index
    %20 = vector.load %arg4[%c0_27, %c0_28] : memref<64x64xbf16, #tpu.memory_space<vmem>>, vector<64x64xbf16>
    %cst = arith.constant dense<0.000000e+00> : vector<8x64xf32>
    %21 = tpu.matmul %19, %20, %cst {dimension_numbers = #tpu.dot_dimension_numbers<[1], [0], [0], [1], [0, 0, 1, 1], [], []>} : vector<8x64xbf16>, vector<64x64xbf16>, vector<8x64xf32> -> vector<8x64xf32>
    %22 = vector.broadcast %3 : vector<1x64xf32> to vector<8x64xf32>
    %23 = arith.addf %21, %22 : vector<8x64xf32>
    %cst_29 = arith.constant 2.500000e-01 : f32
    %24 = vector.broadcast %cst_29 : f32 to vector<8x64xf32>
    %25 = arith.mulf %23, %24 : vector<8x64xf32>
    %c0_30 = arith.constant 0 : index
    %c0_31 = arith.constant 0 : index
    %26 = vector.load %arg5[%c0_30, %c0_31] : memref<64x64xbf16, #tpu.memory_space<vmem>>, vector<64x64xbf16>
    %cst_32 = arith.constant dense<0.000000e+00> : vector<8x64xf32>
    %27 = tpu.matmul %19, %26, %cst_32 {dimension_numbers = #tpu.dot_dimension_numbers<[1], [0], [0], [1], [0, 0, 1, 1], [], []>} : vector<8x64xbf16>, vector<64x64xbf16>, vector<8x64xf32> -> vector<8x64xf32>
    %28 = vector.broadcast %4 : vector<1x64xf32> to vector<8x64xf32>
    %29 = arith.addf %27, %28 : vector<8x64xf32>
    %c0_33 = arith.constant 0 : index
    %c0_34 = arith.constant 0 : index
    %30 = vector.load %arg6[%c0_33, %c0_34] : memref<64x64xbf16, #tpu.memory_space<vmem>>, vector<64x64xbf16>
    %cst_35 = arith.constant dense<0.000000e+00> : vector<8x64xf32>
    %31 = tpu.matmul %19, %30, %cst_35 {dimension_numbers = #tpu.dot_dimension_numbers<[1], [0], [0], [1], [0, 0, 1, 1], [], []>} : vector<8x64xbf16>, vector<64x64xbf16>, vector<8x64xf32> -> vector<8x64xf32>
    %32 = vector.broadcast %5 : vector<1x64xf32> to vector<8x64xf32>
    %33 = arith.addf %31, %32 : vector<8x64xf32>
    %34 = vector.extract_strided_slice %25 {offsets = [0, 0], sizes = [8, 16], strides = [1, 1]} : vector<8x64xf32> to vector<8x16xf32>
    %35 = arith.truncf %34 : vector<8x16xf32> to vector<8x16xbf16>
    %36 = vector.shape_cast %35 : vector<8x16xbf16> to vector<1x8x16xbf16>
    %37 = vector.extract_strided_slice %29 {offsets = [0, 0], sizes = [8, 16], strides = [1, 1]} : vector<8x64xf32> to vector<8x16xf32>
    %38 = arith.truncf %37 : vector<8x16xf32> to vector<8x16xbf16>
    %39 = vector.shape_cast %38 : vector<8x16xbf16> to vector<1x8x16xbf16>
    %40 = vector.extract_strided_slice %33 {offsets = [0, 0], sizes = [8, 16], strides = [1, 1]} : vector<8x64xf32> to vector<8x16xf32>
    %41 = arith.truncf %40 : vector<8x16xf32> to vector<8x16xbf16>
    %42 = vector.shape_cast %41 : vector<8x16xbf16> to vector<1x8x16xbf16>
    "tpu.trace_start"() <{level = 10 : i32, message = "bqd,bkd->bqk"}> : () -> ()
    %cst_36 = arith.constant dense<0.000000e+00> : vector<1x8x8xf32>
    %43 = tpu.matmul %36, %39, %cst_36 {dimension_numbers = #tpu.dot_dimension_numbers<[2], [2], [1], [1], [0, 0, 0, 1, 1, 1], [0], [0]>} : vector<1x8x16xbf16>, vector<1x8x16xbf16>, vector<1x8x8xf32> -> vector<1x8x8xf32>
    "tpu.trace_stop"() : () -> ()
    %44 = arith.addf %43, %2 : vector<1x8x8xf32>
    %cst_37 = arith.constant dense<0xFF800000> : vector<1x8xf32>
    %45 = vector.multi_reduction <maximumf>, %44, %cst_37 [2] : vector<1x8x8xf32> to vector<1x8xf32>
    %46 = vector.shape_cast %45 : vector<1x8xf32> to vector<1x8x1xf32>
    %47 = vector.broadcast %46 : vector<1x8x1xf32> to vector<1x8x8xf32>
    %48 = arith.subf %44, %47 : vector<1x8x8xf32>
    %49 = math.exp %48 : vector<1x8x8xf32>
    %cst_38 = arith.constant dense<0.000000e+00> : vector<1x8xf32>
    %50 = vector.multi_reduction <add>, %49, %cst_38 [2] : vector<1x8x8xf32> to vector<1x8xf32>
    %51 = vector.shape_cast %50 : vector<1x8xf32> to vector<1x8x1xf32>
    %52 = tpu.reciprocal %51 {approx = true} : vector<1x8x1xf32> -> vector<1x8x1xf32>
    %53 = vector.broadcast %52 : vector<1x8x1xf32> to vector<1x8x8xf32>
    %54 = arith.mulf %49, %53 : vector<1x8x8xf32>
    %55 = arith.truncf %54 : vector<1x8x8xf32> to vector<1x8x8xbf16>
    "tpu.trace_start"() <{level = 10 : i32, message = "bqk,bkd->bqd"}> : () -> ()
    %cst_39 = arith.constant dense<0.000000e+00> : vector<1x8x16xf32>
    %56 = tpu.matmul %55, %42, %cst_39 {dimension_numbers = #tpu.dot_dimension_numbers<[2], [1], [1], [2], [0, 0, 0, 1, 1, 2], [0], [0]>} : vector<1x8x8xbf16>, vector<1x8x16xbf16>, vector<1x8x16xf32> -> vector<1x8x16xf32>
    "tpu.trace_stop"() : () -> ()
    %57 = vector.shape_cast %56 : vector<1x8x16xf32> to vector<8x16xf32>
    %58 = arith.truncf %57 : vector<8x16xf32> to vector<8x16xbf16>
    %59 = vector.extract_strided_slice %25 {offsets = [0, 16], sizes = [8, 16], strides = [1, 1]} : vector<8x64xf32> to vector<8x16xf32>
    %60 = arith.truncf %59 : vector<8x16xf32> to vector<8x16xbf16>
    %61 = vector.shape_cast %60 : vector<8x16xbf16> to vector<1x8x16xbf16>
    %62 = vector.extract_strided_slice %29 {offsets = [0, 16], sizes = [8, 16], strides = [1, 1]} : vector<8x64xf32> to vector<8x16xf32>
    %63 = arith.truncf %62 : vector<8x16xf32> to vector<8x16xbf16>
    %64 = vector.shape_cast %63 : vector<8x16xbf16> to vector<1x8x16xbf16>
    %65 = vector.extract_strided_slice %33 {offsets = [0, 16], sizes = [8, 16], strides = [1, 1]} : vector<8x64xf32> to vector<8x16xf32>
    %66 = arith.truncf %65 : vector<8x16xf32> to vector<8x16xbf16>
    %67 = vector.shape_cast %66 : vector<8x16xbf16> to vector<1x8x16xbf16>
    "tpu.trace_start"() <{level = 10 : i32, message = "bqd,bkd->bqk"}> : () -> ()
    %cst_40 = arith.constant dense<0.000000e+00> : vector<1x8x8xf32>
    %68 = tpu.matmul %61, %64, %cst_40 {dimension_numbers = #tpu.dot_dimension_numbers<[2], [2], [1], [1], [0, 0, 0, 1, 1, 1], [0], [0]>} : vector<1x8x16xbf16>, vector<1x8x16xbf16>, vector<1x8x8xf32> -> vector<1x8x8xf32>
    "tpu.trace_stop"() : () -> ()
    %69 = arith.addf %68, %2 : vector<1x8x8xf32>
    %cst_41 = arith.constant dense<0xFF800000> : vector<1x8xf32>
    %70 = vector.multi_reduction <maximumf>, %69, %cst_41 [2] : vector<1x8x8xf32> to vector<1x8xf32>
    %71 = vector.shape_cast %70 : vector<1x8xf32> to vector<1x8x1xf32>
    %72 = vector.broadcast %71 : vector<1x8x1xf32> to vector<1x8x8xf32>
    %73 = arith.subf %69, %72 : vector<1x8x8xf32>
    %74 = math.exp %73 : vector<1x8x8xf32>
    %cst_42 = arith.constant dense<0.000000e+00> : vector<1x8xf32>
    %75 = vector.multi_reduction <add>, %74, %cst_42 [2] : vector<1x8x8xf32> to vector<1x8xf32>
    %76 = vector.shape_cast %75 : vector<1x8xf32> to vector<1x8x1xf32>
    %77 = tpu.reciprocal %76 {approx = true} : vector<1x8x1xf32> -> vector<1x8x1xf32>
    %78 = vector.broadcast %77 : vector<1x8x1xf32> to vector<1x8x8xf32>
    %79 = arith.mulf %74, %78 : vector<1x8x8xf32>
    %80 = arith.truncf %79 : vector<1x8x8xf32> to vector<1x8x8xbf16>
    "tpu.trace_start"() <{level = 10 : i32, message = "bqk,bkd->bqd"}> : () -> ()
    %cst_43 = arith.constant dense<0.000000e+00> : vector<1x8x16xf32>
    %81 = tpu.matmul %80, %67, %cst_43 {dimension_numbers = #tpu.dot_dimension_numbers<[2], [1], [1], [2], [0, 0, 0, 1, 1, 2], [0], [0]>} : vector<1x8x8xbf16>, vector<1x8x16xbf16>, vector<1x8x16xf32> -> vector<1x8x16xf32>
    "tpu.trace_stop"() : () -> ()
    %82 = vector.shape_cast %81 : vector<1x8x16xf32> to vector<8x16xf32>
    %83 = arith.truncf %82 : vector<8x16xf32> to vector<8x16xbf16>
    %84 = vector.extract_strided_slice %25 {offsets = [0, 32], sizes = [8, 16], strides = [1, 1]} : vector<8x64xf32> to vector<8x16xf32>
    %85 = arith.truncf %84 : vector<8x16xf32> to vector<8x16xbf16>
    %86 = vector.shape_cast %85 : vector<8x16xbf16> to vector<1x8x16xbf16>
    %87 = vector.extract_strided_slice %29 {offsets = [0, 32], sizes = [8, 16], strides = [1, 1]} : vector<8x64xf32> to vector<8x16xf32>
    %88 = arith.truncf %87 : vector<8x16xf32> to vector<8x16xbf16>
    %89 = vector.shape_cast %88 : vector<8x16xbf16> to vector<1x8x16xbf16>
    %90 = vector.extract_strided_slice %33 {offsets = [0, 32], sizes = [8, 16], strides = [1, 1]} : vector<8x64xf32> to vector<8x16xf32>
    %91 = arith.truncf %90 : vector<8x16xf32> to vector<8x16xbf16>
    %92 = vector.shape_cast %91 : vector<8x16xbf16> to vector<1x8x16xbf16>
    "tpu.trace_start"() <{level = 10 : i32, message = "bqd,bkd->bqk"}> : () -> ()
    %cst_44 = arith.constant dense<0.000000e+00> : vector<1x8x8xf32>
    %93 = tpu.matmul %86, %89, %cst_44 {dimension_numbers = #tpu.dot_dimension_numbers<[2], [2], [1], [1], [0, 0, 0, 1, 1, 1], [0], [0]>} : vector<1x8x16xbf16>, vector<1x8x16xbf16>, vector<1x8x8xf32> -> vector<1x8x8xf32>
    "tpu.trace_stop"() : () -> ()
    %94 = arith.addf %93, %2 : vector<1x8x8xf32>
    %cst_45 = arith.constant dense<0xFF800000> : vector<1x8xf32>
    %95 = vector.multi_reduction <maximumf>, %94, %cst_45 [2] : vector<1x8x8xf32> to vector<1x8xf32>
    %96 = vector.shape_cast %95 : vector<1x8xf32> to vector<1x8x1xf32>
    %97 = vector.broadcast %96 : vector<1x8x1xf32> to vector<1x8x8xf32>
    %98 = arith.subf %94, %97 : vector<1x8x8xf32>
    %99 = math.exp %98 : vector<1x8x8xf32>
    %cst_46 = arith.constant dense<0.000000e+00> : vector<1x8xf32>
    %100 = vector.multi_reduction <add>, %99, %cst_46 [2] : vector<1x8x8xf32> to vector<1x8xf32>
    %101 = vector.shape_cast %100 : vector<1x8xf32> to vector<1x8x1xf32>
    %102 = tpu.reciprocal %101 {approx = true} : vector<1x8x1xf32> -> vector<1x8x1xf32>
    %103 = vector.broadcast %102 : vector<1x8x1xf32> to vector<1x8x8xf32>
    %104 = arith.mulf %99, %103 : vector<1x8x8xf32>
    %105 = arith.truncf %104 : vector<1x8x8xf32> to vector<1x8x8xbf16>
    "tpu.trace_start"() <{level = 10 : i32, message = "bqk,bkd->bqd"}> : () -> ()
    %cst_47 = arith.constant dense<0.000000e+00> : vector<1x8x16xf32>
    %106 = tpu.matmul %105, %92, %cst_47 {dimension_numbers = #tpu.dot_dimension_numbers<[2], [1], [1], [2], [0, 0, 0, 1, 1, 2], [0], [0]>} : vector<1x8x8xbf16>, vector<1x8x16xbf16>, vector<1x8x16xf32> -> vector<1x8x16xf32>
    "tpu.trace_stop"() : () -> ()
    %107 = vector.shape_cast %106 : vector<1x8x16xf32> to vector<8x16xf32>
    %108 = arith.truncf %107 : vector<8x16xf32> to vector<8x16xbf16>
    %109 = vector.extract_strided_slice %25 {offsets = [0, 48], sizes = [8, 16], strides = [1, 1]} : vector<8x64xf32> to vector<8x16xf32>
    %110 = arith.truncf %109 : vector<8x16xf32> to vector<8x16xbf16>
    %111 = vector.shape_cast %110 : vector<8x16xbf16> to vector<1x8x16xbf16>
    %112 = vector.extract_strided_slice %29 {offsets = [0, 48], sizes = [8, 16], strides = [1, 1]} : vector<8x64xf32> to vector<8x16xf32>
    %113 = arith.truncf %112 : vector<8x16xf32> to vector<8x16xbf16>
    %114 = vector.shape_cast %113 : vector<8x16xbf16> to vector<1x8x16xbf16>
    %115 = vector.extract_strided_slice %33 {offsets = [0, 48], sizes = [8, 16], strides = [1, 1]} : vector<8x64xf32> to vector<8x16xf32>
    %116 = arith.truncf %115 : vector<8x16xf32> to vector<8x16xbf16>
    %117 = vector.shape_cast %116 : vector<8x16xbf16> to vector<1x8x16xbf16>
    "tpu.trace_start"() <{level = 10 : i32, message = "bqd,bkd->bqk"}> : () -> ()
    %cst_48 = arith.constant dense<0.000000e+00> : vector<1x8x8xf32>
    %118 = tpu.matmul %111, %114, %cst_48 {dimension_numbers = #tpu.dot_dimension_numbers<[2], [2], [1], [1], [0, 0, 0, 1, 1, 1], [0], [0]>} : vector<1x8x16xbf16>, vector<1x8x16xbf16>, vector<1x8x8xf32> -> vector<1x8x8xf32>
    "tpu.trace_stop"() : () -> ()
    %119 = arith.addf %118, %2 : vector<1x8x8xf32>
    %cst_49 = arith.constant dense<0xFF800000> : vector<1x8xf32>
    %120 = vector.multi_reduction <maximumf>, %119, %cst_49 [2] : vector<1x8x8xf32> to vector<1x8xf32>
    %121 = vector.shape_cast %120 : vector<1x8xf32> to vector<1x8x1xf32>
    %122 = vector.broadcast %121 : vector<1x8x1xf32> to vector<1x8x8xf32>
    %123 = arith.subf %119, %122 : vector<1x8x8xf32>
    %124 = math.exp %123 : vector<1x8x8xf32>
    %cst_50 = arith.constant dense<0.000000e+00> : vector<1x8xf32>
    %125 = vector.multi_reduction <add>, %124, %cst_50 [2] : vector<1x8x8xf32> to vector<1x8xf32>
    %126 = vector.shape_cast %125 : vector<1x8xf32> to vector<1x8x1xf32>
    %127 = tpu.reciprocal %126 {approx = true} : vector<1x8x1xf32> -> vector<1x8x1xf32>
    %128 = vector.broadcast %127 : vector<1x8x1xf32> to vector<1x8x8xf32>
    %129 = arith.mulf %124, %128 : vector<1x8x8xf32>
    %130 = arith.truncf %129 : vector<1x8x8xf32> to vector<1x8x8xbf16>
    "tpu.trace_start"() <{level = 10 : i32, message = "bqk,bkd->bqd"}> : () -> ()
    %cst_51 = arith.constant dense<0.000000e+00> : vector<1x8x16xf32>
    %131 = tpu.matmul %130, %117, %cst_51 {dimension_numbers = #tpu.dot_dimension_numbers<[2], [1], [1], [2], [0, 0, 0, 1, 1, 2], [0], [0]>} : vector<1x8x8xbf16>, vector<1x8x16xbf16>, vector<1x8x16xf32> -> vector<1x8x16xf32>
    "tpu.trace_stop"() : () -> ()
    %132 = vector.shape_cast %131 : vector<1x8x16xf32> to vector<8x16xf32>
    %133 = arith.truncf %132 : vector<8x16xf32> to vector<8x16xbf16>
    %134 = tpu.concatenate %58, %83, %108, %133 in 1 : vector<8x16xbf16>, vector<8x16xbf16>, vector<8x16xbf16>, vector<8x16xbf16> -> vector<8x64xbf16>
    %c0_52 = arith.constant 0 : index
    %c0_53 = arith.constant 0 : index
    %135 = vector.load %arg7[%c0_52, %c0_53] : memref<64x64xbf16, #tpu.memory_space<vmem>>, vector<64x64xbf16>
    %cst_54 = arith.constant dense<0.000000e+00> : vector<8x64xf32>
    %136 = tpu.matmul %134, %135, %cst_54 {dimension_numbers = #tpu.dot_dimension_numbers<[1], [0], [0], [1], [0, 0, 1, 1], [], []>} : vector<8x64xbf16>, vector<64x64xbf16>, vector<8x64xf32> -> vector<8x64xf32>
    %137 = vector.broadcast %6 : vector<1x64xf32> to vector<8x64xf32>
    %138 = arith.addf %136, %137 : vector<8x64xf32>
    %139 = arith.addf %18, %138 : vector<8x64xf32>
    %cst_55 = arith.constant dense<0.000000e+00> : vector<8xf32>
    %140 = vector.multi_reduction <add>, %139, %cst_55 [1] : vector<8x64xf32> to vector<8xf32>
    %141 = vector.shape_cast %140 : vector<8xf32> to vector<8x1xf32>
    %cst_56 = arith.constant 6.400000e+01 : f32
    %142 = vector.broadcast %cst_56 : f32 to vector<8x1xf32>
    %143 = arith.divf %141, %142 : vector<8x1xf32>
    %144 = vector.broadcast %143 : vector<8x1xf32> to vector<8x64xf32>
    %145 = arith.subf %139, %144 : vector<8x64xf32>
    %146 = arith.mulf %145, %145 : vector<8x64xf32>
    %cst_57 = arith.constant dense<0.000000e+00> : vector<8xf32>
    %147 = vector.multi_reduction <add>, %146, %cst_57 [1] : vector<8x64xf32> to vector<8xf32>
    %148 = vector.shape_cast %147 : vector<8xf32> to vector<8x1xf32>
    %cst_58 = arith.constant 6.400000e+01 : f32
    %149 = vector.broadcast %cst_58 : f32 to vector<8x1xf32>
    %150 = arith.divf %148, %149 : vector<8x1xf32>
    %151 = vector.broadcast %143 : vector<8x1xf32> to vector<8x64xf32>
    %152 = arith.subf %139, %151 : vector<8x64xf32>
    %cst_59 = arith.constant 9.99999974E-6 : f32
    %153 = vector.broadcast %cst_59 : f32 to vector<8x1xf32>
    %154 = arith.addf %150, %153 : vector<8x1xf32>
    %155 = math.rsqrt %154 : vector<8x1xf32>
    %156 = vector.broadcast %155 : vector<8x1xf32> to vector<8x64xf32>
    %157 = arith.mulf %152, %156 : vector<8x64xf32>
    %158 = vector.broadcast %9 : vector<1x64xf32> to vector<8x64xf32>
    %159 = arith.mulf %157, %158 : vector<8x64xf32>
    %160 = vector.broadcast %10 : vector<1x64xf32> to vector<8x64xf32>
    %161 = arith.addf %159, %160 : vector<8x64xf32>
    %162 = arith.truncf %161 : vector<8x64xf32> to vector<8x64xbf16>
    %c0_60 = arith.constant 0 : index
    %c0_61 = arith.constant 0 : index
    %163 = vector.load %arg14[%c0_60, %c0_61] : memref<64x64xbf16, #tpu.memory_space<vmem>>, vector<64x64xbf16>
    %cst_62 = arith.constant dense<0.000000e+00> : vector<8x64xf32>
    %164 = tpu.matmul %162, %163, %cst_62 {dimension_numbers = #tpu.dot_dimension_numbers<[1], [0], [0], [1], [0, 0, 1, 1], [], []>} : vector<8x64xbf16>, vector<64x64xbf16>, vector<8x64xf32> -> vector<8x64xf32>
    %165 = vector.broadcast %7 : vector<1x64xf32> to vector<8x64xf32>
    %166 = arith.addf %164, %165 : vector<8x64xf32>
    %cst_63 = arith.constant 0.000000e+00 : f32
    %167 = vector.broadcast %cst_63 : f32 to vector<8x64xf32>
    %168 = arith.maximumf %166, %167 : vector<8x64xf32>
    %169 = arith.truncf %168 : vector<8x64xf32> to vector<8x64xbf16>
    %c0_64 = arith.constant 0 : index
    %c0_65 = arith.constant 0 : index
    %170 = vector.load %arg16[%c0_64, %c0_65] : memref<64x64xbf16, #tpu.memory_space<vmem>>, vector<64x64xbf16>
    %cst_66 = arith.constant dense<0.000000e+00> : vector<8x64xf32>
    %171 = tpu.matmul %169, %170, %cst_66 {dimension_numbers = #tpu.dot_dimension_numbers<[1], [0], [0], [1], [0, 0, 1, 1], [], []>} : vector<8x64xbf16>, vector<64x64xbf16>, vector<8x64xf32> -> vector<8x64xf32>
    %172 = vector.broadcast %8 : vector<1x64xf32> to vector<8x64xf32>
    %173 = arith.addf %171, %172 : vector<8x64xf32>
    %174 = arith.addf %161, %173 : vector<8x64xf32>
    %cst_67 = arith.constant dense<0.000000e+00> : vector<8xf32>
    %175 = vector.multi_reduction <add>, %174, %cst_67 [1] : vector<8x64xf32> to vector<8xf32>
    %176 = vector.shape_cast %175 : vector<8xf32> to vector<8x1xf32>
    %cst_68 = arith.constant 6.400000e+01 : f32
    %177 = vector.broadcast %cst_68 : f32 to vector<8x1xf32>
    %178 = arith.divf %176, %177 : vector<8x1xf32>
    %179 = vector.broadcast %178 : vector<8x1xf32> to vector<8x64xf32>
    %180 = arith.subf %174, %179 : vector<8x64xf32>
    %181 = arith.mulf %180, %180 : vector<8x64xf32>
    %cst_69 = arith.constant dense<0.000000e+00> : vector<8xf32>
    %182 = vector.multi_reduction <add>, %181, %cst_69 [1] : vector<8x64xf32> to vector<8xf32>
    %183 = vector.shape_cast %182 : vector<8xf32> to vector<8x1xf32>
    %cst_70 = arith.constant 6.400000e+01 : f32
    %184 = vector.broadcast %cst_70 : f32 to vector<8x1xf32>
    %185 = arith.divf %183, %184 : vector<8x1xf32>
    %186 = vector.broadcast %178 : vector<8x1xf32> to vector<8x64xf32>
    %187 = arith.subf %174, %186 : vector<8x64xf32>
    %cst_71 = arith.constant 9.99999974E-6 : f32
    %188 = vector.broadcast %cst_71 : f32 to vector<8x1xf32>
    %189 = arith.addf %185, %188 : vector<8x1xf32>
    %190 = math.rsqrt %189 : vector<8x1xf32>
    %191 = vector.broadcast %190 : vector<8x1xf32> to vector<8x64xf32>
    %192 = arith.mulf %187, %191 : vector<8x64xf32>
    %193 = vector.broadcast %11 : vector<1x64xf32> to vector<8x64xf32>
    %194 = arith.mulf %192, %193 : vector<8x64xf32>
    %195 = vector.broadcast %12 : vector<1x64xf32> to vector<8x64xf32>
    %196 = arith.addf %194, %195 : vector<8x64xf32>
    %c1 = arith.constant 1 : index
    %c0_72 = arith.constant 0 : index
    %197 = vector.load %arg3[%c1, %c0_72] : memref<2x64xf32, #tpu.memory_space<vmem>>, vector<1x64xf32>
    %198 = vector.broadcast %197 : vector<1x64xf32> to vector<8x64xf32>
    %199 = arith.addf %196, %198 : vector<8x64xf32>
    %200 = arith.truncf %199 : vector<8x64xf32> to vector<8x64xbf16>
    %c0_73 = arith.constant 0 : index
    %c0_74 = arith.constant 0 : index
    %201 = vector.load %arg4[%c0_73, %c0_74] : memref<64x64xbf16, #tpu.memory_space<vmem>>, vector<64x64xbf16>
    %cst_75 = arith.constant dense<0.000000e+00> : vector<8x64xf32>
    %202 = tpu.matmul %200, %201, %cst_75 {dimension_numbers = #tpu.dot_dimension_numbers<[1], [0], [0], [1], [0, 0, 1, 1], [], []>} : vector<8x64xbf16>, vector<64x64xbf16>, vector<8x64xf32> -> vector<8x64xf32>
    %203 = vector.broadcast %3 : vector<1x64xf32> to vector<8x64xf32>
    %204 = arith.addf %202, %203 : vector<8x64xf32>
    %cst_76 = arith.constant 2.500000e-01 : f32
    %205 = vector.broadcast %cst_76 : f32 to vector<8x64xf32>
    %206 = arith.mulf %204, %205 : vector<8x64xf32>
    %c0_77 = arith.constant 0 : index
    %c0_78 = arith.constant 0 : index
    %207 = vector.load %arg5[%c0_77, %c0_78] : memref<64x64xbf16, #tpu.memory_space<vmem>>, vector<64x64xbf16>
    %cst_79 = arith.constant dense<0.000000e+00> : vector<8x64xf32>
    %208 = tpu.matmul %200, %207, %cst_79 {dimension_numbers = #tpu.dot_dimension_numbers<[1], [0], [0], [1], [0, 0, 1, 1], [], []>} : vector<8x64xbf16>, vector<64x64xbf16>, vector<8x64xf32> -> vector<8x64xf32>
    %209 = vector.broadcast %4 : vector<1x64xf32> to vector<8x64xf32>
    %210 = arith.addf %208, %209 : vector<8x64xf32>
    %c0_80 = arith.constant 0 : index
    %c0_81 = arith.constant 0 : index
    %211 = vector.load %arg6[%c0_80, %c0_81] : memref<64x64xbf16, #tpu.memory_space<vmem>>, vector<64x64xbf16>
    %cst_82 = arith.constant dense<0.000000e+00> : vector<8x64xf32>
    %212 = tpu.matmul %200, %211, %cst_82 {dimension_numbers = #tpu.dot_dimension_numbers<[1], [0], [0], [1], [0, 0, 1, 1], [], []>} : vector<8x64xbf16>, vector<64x64xbf16>, vector<8x64xf32> -> vector<8x64xf32>
    %213 = vector.broadcast %5 : vector<1x64xf32> to vector<8x64xf32>
    %214 = arith.addf %212, %213 : vector<8x64xf32>
    %215 = vector.extract_strided_slice %206 {offsets = [0, 0], sizes = [8, 16], strides = [1, 1]} : vector<8x64xf32> to vector<8x16xf32>
    %216 = arith.truncf %215 : vector<8x16xf32> to vector<8x16xbf16>
    %217 = vector.shape_cast %216 : vector<8x16xbf16> to vector<1x8x16xbf16>
    %218 = vector.extract_strided_slice %210 {offsets = [0, 0], sizes = [8, 16], strides = [1, 1]} : vector<8x64xf32> to vector<8x16xf32>
    %219 = arith.truncf %218 : vector<8x16xf32> to vector<8x16xbf16>
    %220 = vector.shape_cast %219 : vector<8x16xbf16> to vector<1x8x16xbf16>
    %221 = vector.extract_strided_slice %214 {offsets = [0, 0], sizes = [8, 16], strides = [1, 1]} : vector<8x64xf32> to vector<8x16xf32>
    %222 = arith.truncf %221 : vector<8x16xf32> to vector<8x16xbf16>
    %223 = vector.shape_cast %222 : vector<8x16xbf16> to vector<1x8x16xbf16>
    "tpu.trace_start"() <{level = 10 : i32, message = "bqd,bkd->bqk"}> : () -> ()
    %cst_83 = arith.constant dense<0.000000e+00> : vector<1x8x8xf32>
    %224 = tpu.matmul %217, %220, %cst_83 {dimension_numbers = #tpu.dot_dimension_numbers<[2], [2], [1], [1], [0, 0, 0, 1, 1, 1], [0], [0]>} : vector<1x8x16xbf16>, vector<1x8x16xbf16>, vector<1x8x8xf32> -> vector<1x8x8xf32>
    "tpu.trace_stop"() : () -> ()
    %225 = arith.addf %224, %2 : vector<1x8x8xf32>
    %cst_84 = arith.constant dense<0xFF800000> : vector<1x8xf32>
    %226 = vector.multi_reduction <maximumf>, %225, %cst_84 [2] : vector<1x8x8xf32> to vector<1x8xf32>
    %227 = vector.shape_cast %226 : vector<1x8xf32> to vector<1x8x1xf32>
    %228 = vector.broadcast %227 : vector<1x8x1xf32> to vector<1x8x8xf32>
    %229 = arith.subf %225, %228 : vector<1x8x8xf32>
    %230 = math.exp %229 : vector<1x8x8xf32>
    %cst_85 = arith.constant dense<0.000000e+00> : vector<1x8xf32>
    %231 = vector.multi_reduction <add>, %230, %cst_85 [2] : vector<1x8x8xf32> to vector<1x8xf32>
    %232 = vector.shape_cast %231 : vector<1x8xf32> to vector<1x8x1xf32>
    %233 = tpu.reciprocal %232 {approx = true} : vector<1x8x1xf32> -> vector<1x8x1xf32>
    %234 = vector.broadcast %233 : vector<1x8x1xf32> to vector<1x8x8xf32>
    %235 = arith.mulf %230, %234 : vector<1x8x8xf32>
    %236 = arith.truncf %235 : vector<1x8x8xf32> to vector<1x8x8xbf16>
    "tpu.trace_start"() <{level = 10 : i32, message = "bqk,bkd->bqd"}> : () -> ()
    %cst_86 = arith.constant dense<0.000000e+00> : vector<1x8x16xf32>
    %237 = tpu.matmul %236, %223, %cst_86 {dimension_numbers = #tpu.dot_dimension_numbers<[2], [1], [1], [2], [0, 0, 0, 1, 1, 2], [0], [0]>} : vector<1x8x8xbf16>, vector<1x8x16xbf16>, vector<1x8x16xf32> -> vector<1x8x16xf32>
    "tpu.trace_stop"() : () -> ()
    %238 = vector.shape_cast %237 : vector<1x8x16xf32> to vector<8x16xf32>
    %239 = arith.truncf %238 : vector<8x16xf32> to vector<8x16xbf16>
    %240 = vector.extract_strided_slice %206 {offsets = [0, 16], sizes = [8, 16], strides = [1, 1]} : vector<8x64xf32> to vector<8x16xf32>
    %241 = arith.truncf %240 : vector<8x16xf32> to vector<8x16xbf16>
    %242 = vector.shape_cast %241 : vector<8x16xbf16> to vector<1x8x16xbf16>
    %243 = vector.extract_strided_slice %210 {offsets = [0, 16], sizes = [8, 16], strides = [1, 1]} : vector<8x64xf32> to vector<8x16xf32>
    %244 = arith.truncf %243 : vector<8x16xf32> to vector<8x16xbf16>
    %245 = vector.shape_cast %244 : vector<8x16xbf16> to vector<1x8x16xbf16>
    %246 = vector.extract_strided_slice %214 {offsets = [0, 16], sizes = [8, 16], strides = [1, 1]} : vector<8x64xf32> to vector<8x16xf32>
    %247 = arith.truncf %246 : vector<8x16xf32> to vector<8x16xbf16>
    %248 = vector.shape_cast %247 : vector<8x16xbf16> to vector<1x8x16xbf16>
    "tpu.trace_start"() <{level = 10 : i32, message = "bqd,bkd->bqk"}> : () -> ()
    %cst_87 = arith.constant dense<0.000000e+00> : vector<1x8x8xf32>
    %249 = tpu.matmul %242, %245, %cst_87 {dimension_numbers = #tpu.dot_dimension_numbers<[2], [2], [1], [1], [0, 0, 0, 1, 1, 1], [0], [0]>} : vector<1x8x16xbf16>, vector<1x8x16xbf16>, vector<1x8x8xf32> -> vector<1x8x8xf32>
    "tpu.trace_stop"() : () -> ()
    %250 = arith.addf %249, %2 : vector<1x8x8xf32>
    %cst_88 = arith.constant dense<0xFF800000> : vector<1x8xf32>
    %251 = vector.multi_reduction <maximumf>, %250, %cst_88 [2] : vector<1x8x8xf32> to vector<1x8xf32>
    %252 = vector.shape_cast %251 : vector<1x8xf32> to vector<1x8x1xf32>
    %253 = vector.broadcast %252 : vector<1x8x1xf32> to vector<1x8x8xf32>
    %254 = arith.subf %250, %253 : vector<1x8x8xf32>
    %255 = math.exp %254 : vector<1x8x8xf32>
    %cst_89 = arith.constant dense<0.000000e+00> : vector<1x8xf32>
    %256 = vector.multi_reduction <add>, %255, %cst_89 [2] : vector<1x8x8xf32> to vector<1x8xf32>
    %257 = vector.shape_cast %256 : vector<1x8xf32> to vector<1x8x1xf32>
    %258 = tpu.reciprocal %257 {approx = true} : vector<1x8x1xf32> -> vector<1x8x1xf32>
    %259 = vector.broadcast %258 : vector<1x8x1xf32> to vector<1x8x8xf32>
    %260 = arith.mulf %255, %259 : vector<1x8x8xf32>
    %261 = arith.truncf %260 : vector<1x8x8xf32> to vector<1x8x8xbf16>
    "tpu.trace_start"() <{level = 10 : i32, message = "bqk,bkd->bqd"}> : () -> ()
    %cst_90 = arith.constant dense<0.000000e+00> : vector<1x8x16xf32>
    %262 = tpu.matmul %261, %248, %cst_90 {dimension_numbers = #tpu.dot_dimension_numbers<[2], [1], [1], [2], [0, 0, 0, 1, 1, 2], [0], [0]>} : vector<1x8x8xbf16>, vector<1x8x16xbf16>, vector<1x8x16xf32> -> vector<1x8x16xf32>
    "tpu.trace_stop"() : () -> ()
    %263 = vector.shape_cast %262 : vector<1x8x16xf32> to vector<8x16xf32>
    %264 = arith.truncf %263 : vector<8x16xf32> to vector<8x16xbf16>
    %265 = vector.extract_strided_slice %206 {offsets = [0, 32], sizes = [8, 16], strides = [1, 1]} : vector<8x64xf32> to vector<8x16xf32>
    %266 = arith.truncf %265 : vector<8x16xf32> to vector<8x16xbf16>
    %267 = vector.shape_cast %266 : vector<8x16xbf16> to vector<1x8x16xbf16>
    %268 = vector.extract_strided_slice %210 {offsets = [0, 32], sizes = [8, 16], strides = [1, 1]} : vector<8x64xf32> to vector<8x16xf32>
    %269 = arith.truncf %268 : vector<8x16xf32> to vector<8x16xbf16>
    %270 = vector.shape_cast %269 : vector<8x16xbf16> to vector<1x8x16xbf16>
    %271 = vector.extract_strided_slice %214 {offsets = [0, 32], sizes = [8, 16], strides = [1, 1]} : vector<8x64xf32> to vector<8x16xf32>
    %272 = arith.truncf %271 : vector<8x16xf32> to vector<8x16xbf16>
    %273 = vector.shape_cast %272 : vector<8x16xbf16> to vector<1x8x16xbf16>
    "tpu.trace_start"() <{level = 10 : i32, message = "bqd,bkd->bqk"}> : () -> ()
    %cst_91 = arith.constant dense<0.000000e+00> : vector<1x8x8xf32>
    %274 = tpu.matmul %267, %270, %cst_91 {dimension_numbers = #tpu.dot_dimension_numbers<[2], [2], [1], [1], [0, 0, 0, 1, 1, 1], [0], [0]>} : vector<1x8x16xbf16>, vector<1x8x16xbf16>, vector<1x8x8xf32> -> vector<1x8x8xf32>
    "tpu.trace_stop"() : () -> ()
    %275 = arith.addf %274, %2 : vector<1x8x8xf32>
    %cst_92 = arith.constant dense<0xFF800000> : vector<1x8xf32>
    %276 = vector.multi_reduction <maximumf>, %275, %cst_92 [2] : vector<1x8x8xf32> to vector<1x8xf32>
    %277 = vector.shape_cast %276 : vector<1x8xf32> to vector<1x8x1xf32>
    %278 = vector.broadcast %277 : vector<1x8x1xf32> to vector<1x8x8xf32>
    %279 = arith.subf %275, %278 : vector<1x8x8xf32>
    %280 = math.exp %279 : vector<1x8x8xf32>
    %cst_93 = arith.constant dense<0.000000e+00> : vector<1x8xf32>
    %281 = vector.multi_reduction <add>, %280, %cst_93 [2] : vector<1x8x8xf32> to vector<1x8xf32>
    %282 = vector.shape_cast %281 : vector<1x8xf32> to vector<1x8x1xf32>
    %283 = tpu.reciprocal %282 {approx = true} : vector<1x8x1xf32> -> vector<1x8x1xf32>
    %284 = vector.broadcast %283 : vector<1x8x1xf32> to vector<1x8x8xf32>
    %285 = arith.mulf %280, %284 : vector<1x8x8xf32>
    %286 = arith.truncf %285 : vector<1x8x8xf32> to vector<1x8x8xbf16>
    "tpu.trace_start"() <{level = 10 : i32, message = "bqk,bkd->bqd"}> : () -> ()
    %cst_94 = arith.constant dense<0.000000e+00> : vector<1x8x16xf32>
    %287 = tpu.matmul %286, %273, %cst_94 {dimension_numbers = #tpu.dot_dimension_numbers<[2], [1], [1], [2], [0, 0, 0, 1, 1, 2], [0], [0]>} : vector<1x8x8xbf16>, vector<1x8x16xbf16>, vector<1x8x16xf32> -> vector<1x8x16xf32>
    "tpu.trace_stop"() : () -> ()
    %288 = vector.shape_cast %287 : vector<1x8x16xf32> to vector<8x16xf32>
    %289 = arith.truncf %288 : vector<8x16xf32> to vector<8x16xbf16>
    %290 = vector.extract_strided_slice %206 {offsets = [0, 48], sizes = [8, 16], strides = [1, 1]} : vector<8x64xf32> to vector<8x16xf32>
    %291 = arith.truncf %290 : vector<8x16xf32> to vector<8x16xbf16>
    %292 = vector.shape_cast %291 : vector<8x16xbf16> to vector<1x8x16xbf16>
    %293 = vector.extract_strided_slice %210 {offsets = [0, 48], sizes = [8, 16], strides = [1, 1]} : vector<8x64xf32> to vector<8x16xf32>
    %294 = arith.truncf %293 : vector<8x16xf32> to vector<8x16xbf16>
    %295 = vector.shape_cast %294 : vector<8x16xbf16> to vector<1x8x16xbf16>
    %296 = vector.extract_strided_slice %214 {offsets = [0, 48], sizes = [8, 16], strides = [1, 1]} : vector<8x64xf32> to vector<8x16xf32>
    %297 = arith.truncf %296 : vector<8x16xf32> to vector<8x16xbf16>
    %298 = vector.shape_cast %297 : vector<8x16xbf16> to vector<1x8x16xbf16>
    "tpu.trace_start"() <{level = 10 : i32, message = "bqd,bkd->bqk"}> : () -> ()
    %cst_95 = arith.constant dense<0.000000e+00> : vector<1x8x8xf32>
    %299 = tpu.matmul %292, %295, %cst_95 {dimension_numbers = #tpu.dot_dimension_numbers<[2], [2], [1], [1], [0, 0, 0, 1, 1, 1], [0], [0]>} : vector<1x8x16xbf16>, vector<1x8x16xbf16>, vector<1x8x8xf32> -> vector<1x8x8xf32>
    "tpu.trace_stop"() : () -> ()
    %300 = arith.addf %299, %2 : vector<1x8x8xf32>
    %cst_96 = arith.constant dense<0xFF800000> : vector<1x8xf32>
    %301 = vector.multi_reduction <maximumf>, %300, %cst_96 [2] : vector<1x8x8xf32> to vector<1x8xf32>
    %302 = vector.shape_cast %301 : vector<1x8xf32> to vector<1x8x1xf32>
    %303 = vector.broadcast %302 : vector<1x8x1xf32> to vector<1x8x8xf32>
    %304 = arith.subf %300, %303 : vector<1x8x8xf32>
    %305 = math.exp %304 : vector<1x8x8xf32>
    %cst_97 = arith.constant dense<0.000000e+00> : vector<1x8xf32>
    %306 = vector.multi_reduction <add>, %305, %cst_97 [2] : vector<1x8x8xf32> to vector<1x8xf32>
    %307 = vector.shape_cast %306 : vector<1x8xf32> to vector<1x8x1xf32>
    %308 = tpu.reciprocal %307 {approx = true} : vector<1x8x1xf32> -> vector<1x8x1xf32>
    %309 = vector.broadcast %308 : vector<1x8x1xf32> to vector<1x8x8xf32>
    %310 = arith.mulf %305, %309 : vector<1x8x8xf32>
    %311 = arith.truncf %310 : vector<1x8x8xf32> to vector<1x8x8xbf16>
    "tpu.trace_start"() <{level = 10 : i32, message = "bqk,bkd->bqd"}> : () -> ()
    %cst_98 = arith.constant dense<0.000000e+00> : vector<1x8x16xf32>
    %312 = tpu.matmul %311, %298, %cst_98 {dimension_numbers = #tpu.dot_dimension_numbers<[2], [1], [1], [2], [0, 0, 0, 1, 1, 2], [0], [0]>} : vector<1x8x8xbf16>, vector<1x8x16xbf16>, vector<1x8x16xf32> -> vector<1x8x16xf32>
    "tpu.trace_stop"() : () -> ()
    %313 = vector.shape_cast %312 : vector<1x8x16xf32> to vector<8x16xf32>
    %314 = arith.truncf %313 : vector<8x16xf32> to vector<8x16xbf16>
    %315 = tpu.concatenate %239, %264, %289, %314 in 1 : vector<8x16xbf16>, vector<8x16xbf16>, vector<8x16xbf16>, vector<8x16xbf16> -> vector<8x64xbf16>
    %c0_99 = arith.constant 0 : index
    %c0_100 = arith.constant 0 : index
    %316 = vector.load %arg7[%c0_99, %c0_100] : memref<64x64xbf16, #tpu.memory_space<vmem>>, vector<64x64xbf16>
    %cst_101 = arith.constant dense<0.000000e+00> : vector<8x64xf32>
    %317 = tpu.matmul %315, %316, %cst_101 {dimension_numbers = #tpu.dot_dimension_numbers<[1], [0], [0], [1], [0, 0, 1, 1], [], []>} : vector<8x64xbf16>, vector<64x64xbf16>, vector<8x64xf32> -> vector<8x64xf32>
    %318 = vector.broadcast %6 : vector<1x64xf32> to vector<8x64xf32>
    %319 = arith.addf %317, %318 : vector<8x64xf32>
    %320 = arith.addf %199, %319 : vector<8x64xf32>
    %cst_102 = arith.constant dense<0.000000e+00> : vector<8xf32>
    %321 = vector.multi_reduction <add>, %320, %cst_102 [1] : vector<8x64xf32> to vector<8xf32>
    %322 = vector.shape_cast %321 : vector<8xf32> to vector<8x1xf32>
    %cst_103 = arith.constant 6.400000e+01 : f32
    %323 = vector.broadcast %cst_103 : f32 to vector<8x1xf32>
    %324 = arith.divf %322, %323 : vector<8x1xf32>
    %325 = vector.broadcast %324 : vector<8x1xf32> to vector<8x64xf32>
    %326 = arith.subf %320, %325 : vector<8x64xf32>
    %327 = arith.mulf %326, %326 : vector<8x64xf32>
    %cst_104 = arith.constant dense<0.000000e+00> : vector<8xf32>
    %328 = vector.multi_reduction <add>, %327, %cst_104 [1] : vector<8x64xf32> to vector<8xf32>
    %329 = vector.shape_cast %328 : vector<8xf32> to vector<8x1xf32>
    %cst_105 = arith.constant 6.400000e+01 : f32
    %330 = vector.broadcast %cst_105 : f32 to vector<8x1xf32>
    %331 = arith.divf %329, %330 : vector<8x1xf32>
    %332 = vector.broadcast %324 : vector<8x1xf32> to vector<8x64xf32>
    %333 = arith.subf %320, %332 : vector<8x64xf32>
    %cst_106 = arith.constant 9.99999974E-6 : f32
    %334 = vector.broadcast %cst_106 : f32 to vector<8x1xf32>
    %335 = arith.addf %331, %334 : vector<8x1xf32>
    %336 = math.rsqrt %335 : vector<8x1xf32>
    %337 = vector.broadcast %336 : vector<8x1xf32> to vector<8x64xf32>
    %338 = arith.mulf %333, %337 : vector<8x64xf32>
    %339 = vector.broadcast %9 : vector<1x64xf32> to vector<8x64xf32>
    %340 = arith.mulf %338, %339 : vector<8x64xf32>
    %341 = vector.broadcast %10 : vector<1x64xf32> to vector<8x64xf32>
    %342 = arith.addf %340, %341 : vector<8x64xf32>
    %343 = arith.truncf %342 : vector<8x64xf32> to vector<8x64xbf16>
    %c0_107 = arith.constant 0 : index
    %c0_108 = arith.constant 0 : index
    %344 = vector.load %arg14[%c0_107, %c0_108] : memref<64x64xbf16, #tpu.memory_space<vmem>>, vector<64x64xbf16>
    %cst_109 = arith.constant dense<0.000000e+00> : vector<8x64xf32>
    %345 = tpu.matmul %343, %344, %cst_109 {dimension_numbers = #tpu.dot_dimension_numbers<[1], [0], [0], [1], [0, 0, 1, 1], [], []>} : vector<8x64xbf16>, vector<64x64xbf16>, vector<8x64xf32> -> vector<8x64xf32>
    %346 = vector.broadcast %7 : vector<1x64xf32> to vector<8x64xf32>
    %347 = arith.addf %345, %346 : vector<8x64xf32>
    %cst_110 = arith.constant 0.000000e+00 : f32
    %348 = vector.broadcast %cst_110 : f32 to vector<8x64xf32>
    %349 = arith.maximumf %347, %348 : vector<8x64xf32>
    %350 = arith.truncf %349 : vector<8x64xf32> to vector<8x64xbf16>
    %c0_111 = arith.constant 0 : index
    %c0_112 = arith.constant 0 : index
    %351 = vector.load %arg16[%c0_111, %c0_112] : memref<64x64xbf16, #tpu.memory_space<vmem>>, vector<64x64xbf16>
    %cst_113 = arith.constant dense<0.000000e+00> : vector<8x64xf32>
    %352 = tpu.matmul %350, %351, %cst_113 {dimension_numbers = #tpu.dot_dimension_numbers<[1], [0], [0], [1], [0, 0, 1, 1], [], []>} : vector<8x64xbf16>, vector<64x64xbf16>, vector<8x64xf32> -> vector<8x64xf32>
    %353 = vector.broadcast %8 : vector<1x64xf32> to vector<8x64xf32>
    %354 = arith.addf %352, %353 : vector<8x64xf32>
    %355 = arith.addf %342, %354 : vector<8x64xf32>
    %cst_114 = arith.constant dense<0.000000e+00> : vector<8xf32>
    %356 = vector.multi_reduction <add>, %355, %cst_114 [1] : vector<8x64xf32> to vector<8xf32>
    %357 = vector.shape_cast %356 : vector<8xf32> to vector<8x1xf32>
    %cst_115 = arith.constant 6.400000e+01 : f32
    %358 = vector.broadcast %cst_115 : f32 to vector<8x1xf32>
    %359 = arith.divf %357, %358 : vector<8x1xf32>
    %360 = vector.broadcast %359 : vector<8x1xf32> to vector<8x64xf32>
    %361 = arith.subf %355, %360 : vector<8x64xf32>
    %362 = arith.mulf %361, %361 : vector<8x64xf32>
    %cst_116 = arith.constant dense<0.000000e+00> : vector<8xf32>
    %363 = vector.multi_reduction <add>, %362, %cst_116 [1] : vector<8x64xf32> to vector<8xf32>
    %364 = vector.shape_cast %363 : vector<8xf32> to vector<8x1xf32>
    %cst_117 = arith.constant 6.400000e+01 : f32
    %365 = vector.broadcast %cst_117 : f32 to vector<8x1xf32>
    %366 = arith.divf %364, %365 : vector<8x1xf32>
    %367 = vector.broadcast %359 : vector<8x1xf32> to vector<8x64xf32>
    %368 = arith.subf %355, %367 : vector<8x64xf32>
    %cst_118 = arith.constant 9.99999974E-6 : f32
    %369 = vector.broadcast %cst_118 : f32 to vector<8x1xf32>
    %370 = arith.addf %366, %369 : vector<8x1xf32>
    %371 = math.rsqrt %370 : vector<8x1xf32>
    %372 = vector.broadcast %371 : vector<8x1xf32> to vector<8x64xf32>
    %373 = arith.mulf %368, %372 : vector<8x64xf32>
    %374 = vector.broadcast %11 : vector<1x64xf32> to vector<8x64xf32>
    %375 = arith.mulf %373, %374 : vector<8x64xf32>
    %376 = vector.broadcast %12 : vector<1x64xf32> to vector<8x64xf32>
    %377 = arith.addf %375, %376 : vector<8x64xf32>
    %378 = arith.truncf %377 : vector<8x64xf32> to vector<8x64xbf16>
    %c0_119 = arith.constant 0 : index
    %c0_120 = arith.constant 0 : index
    %379 = vector.load %arg20[%c0_119, %c0_120] : memref<64x64xbf16, #tpu.memory_space<vmem>>, vector<64x64xbf16>
    %cst_121 = arith.constant dense<0.000000e+00> : vector<8x64xf32>
    %380 = tpu.matmul %378, %379, %cst_121 {dimension_numbers = #tpu.dot_dimension_numbers<[1], [0], [0], [1], [0, 0, 1, 1], [], []>} : vector<8x64xbf16>, vector<64x64xbf16>, vector<8x64xf32> -> vector<8x64xf32>
    %c0_122 = arith.constant 0 : index
    %c0_123 = arith.constant 0 : index
    %381 = vector.load %arg21[%c0_122, %c0_123] : memref<1x64xf32, #tpu.memory_space<vmem>>, vector<1x64xf32>
    %382 = vector.broadcast %381 : vector<1x64xf32> to vector<8x64xf32>
    %383 = arith.addf %380, %382 : vector<8x64xf32>
    %cst_124 = arith.constant 0.000000e+00 : f32
    %384 = vector.broadcast %cst_124 : f32 to vector<8x64xf32>
    %385 = arith.maximumf %383, %384 : vector<8x64xf32>
    %386 = arith.truncf %385 : vector<8x64xf32> to vector<8x64xbf16>
    %c0_125 = arith.constant 0 : index
    %c0_126 = arith.constant 0 : index
    %387 = vector.load %arg22[%c0_125, %c0_126] : memref<64x128xbf16, #tpu.memory_space<vmem>>, vector<64x128xbf16>
    %cst_127 = arith.constant dense<0.000000e+00> : vector<8x128xf32>
    %388 = tpu.matmul %386, %387, %cst_127 {dimension_numbers = #tpu.dot_dimension_numbers<[1], [0], [0], [1], [0, 0, 1, 1], [], []>} : vector<8x64xbf16>, vector<64x128xbf16>, vector<8x128xf32> -> vector<8x128xf32>
    %c0_128 = arith.constant 0 : index
    %c0_129 = arith.constant 0 : index
    %389 = vector.load %arg23[%c0_128, %c0_129] : memref<1x128xf32, #tpu.memory_space<vmem>>, vector<1x128xf32>
    %390 = vector.broadcast %389 : vector<1x128xf32> to vector<8x128xf32>
    %391 = arith.addf %388, %390 : vector<8x128xf32>
    %392 = vector.shape_cast %391 : vector<8x128xf32> to vector<1x8x128xf32>
    %393 = arith.truncf %392 : vector<1x8x128xf32> to vector<1x8x128xbf16>
    %c0_130 = arith.constant 0 : index
    %c0_131 = arith.constant 0 : index
    %c0_132 = arith.constant 0 : index
    %394 = vector.load %arg24[%c0_130, %c0_131, %c0_132] : memref<1x8x128xbf16, #tpu.memory_space<vmem>>, vector<1x8x128xbf16>
    tpu.vector_store %arg24[%c0_130, %c0_131, %c0_132], %393 {strides = array<i32>} : memref<1x8x128xbf16, #tpu.memory_space<vmem>>, vector<1x8x128xbf16>,
    return
  }
  func.func @transform_0(%arg0: i32) -> (i32, i32, i32) {
    %c0_i32 = arith.constant 0 : i32
    %c0_i32_0 = arith.constant 0 : i32
    %c0_i32_1 = arith.constant 0 : i32
    return %arg0, %c0_i32, %c0_i32_0 : i32, i32, i32
  }
  func.func @transform_1(%arg0: i32) -> (i32, i32, i32) {
    %c0_i32 = arith.constant 0 : i32
    %c0_i32_0 = arith.constant 0 : i32
    %c0_i32_1 = arith.constant 0 : i32
    return %arg0, %c0_i32, %c0_i32_0 : i32, i32, i32
  }
  func.func @transform_2(%arg0: i32) -> (i32, i32) {
    %c0_i32 = arith.constant 0 : i32
    %c0_i32_0 = arith.constant 0 : i32
    %c0_i32_1 = arith.constant 0 : i32
    return %c0_i32, %c0_i32_0 : i32, i32
  }
  func.func @transform_3(%arg0: i32) -> (i32, i32) {
    %c0_i32 = arith.constant 0 : i32
    %c0_i32_0 = arith.constant 0 : i32
    %c0_i32_1 = arith.constant 0 : i32
    return %c0_i32, %c0_i32_0 : i32, i32
  }
  func.func @transform_4(%arg0: i32) -> (i32, i32) {
    %c0_i32 = arith.constant 0 : i32
    %c0_i32_0 = arith.constant 0 : i32
    %c0_i32_1 = arith.constant 0 : i32
    return %c0_i32, %c0_i32_0 : i32, i32
  }
  func.func @transform_5(%arg0: i32) -> (i32, i32) {
    %c0_i32 = arith.constant 0 : i32
    %c0_i32_0 = arith.constant 0 : i32
    %c0_i32_1 = arith.constant 0 : i32
    return %c0_i32, %c0_i32_0 : i32, i32
  }
  func.func @transform_6(%arg0: i32) -> (i32, i32) {
    %c0_i32 = arith.constant 0 : i32
    %c0_i32_0 = arith.constant 0 : i32
    %c0_i32_1 = arith.constant 0 : i32
    return %c0_i32, %c0_i32_0 : i32, i32
  }
  func.func @transform_7(%arg0: i32) -> (i32, i32) {
    %c0_i32 = arith.constant 0 : i32
    %c0_i32_0 = arith.constant 0 : i32
    %c0_i32_1 = arith.constant 0 : i32
    return %c0_i32, %c0_i32_0 : i32, i32
  }
  func.func @transform_8(%arg0: i32) -> (i32, i32) {
    %c0_i32 = arith.constant 0 : i32
    %c0_i32_0 = arith.constant 0 : i32
    %c0_i32_1 = arith.constant 0 : i32
    return %c0_i32, %c0_i32_0 : i32, i32
  }
  func.func @transform_9(%arg0: i32) -> (i32, i32) {
    %c0_i32 = arith.constant 0 : i32
    %c0_i32_0 = arith.constant 0 : i32
    %c0_i32_1 = arith.constant 0 : i32
    return %c0_i32, %c0_i32_0 : i32, i32
  }
  func.func @transform_10(%arg0: i32) -> (i32, i32) {
    %c0_i32 = arith.constant 0 : i32
    %c0_i32_0 = arith.constant 0 : i32
    %c0_i32_1 = arith.constant 0 : i32
    return %c0_i32, %c0_i32_0 : i32, i32
  }
  func.func @transform_11(%arg0: i32) -> (i32, i32) {
    %c0_i32 = arith.constant 0 : i32
    %c0_i32_0 = arith.constant 0 : i32
    %c0_i32_1 = arith.constant 0 : i32
    return %c0_i32, %c0_i32_0 : i32, i32
  }
  func.func @transform_12(%arg0: i32) -> (i32, i32) {
    %c0_i32 = arith.constant 0 : i32
    %c0_i32_0 = arith.constant 0 : i32
    %c0_i32_1 = arith.constant 0 : i32
    return %c0_i32, %c0_i32_0 : i32, i32
  }
  func.func @transform_13(%arg0: i32) -> (i32, i32) {
    %c0_i32 = arith.constant 0 : i32
    %c0_i32_0 = arith.constant 0 : i32
    %c0_i32_1 = arith.constant 0 : i32
    return %c0_i32, %c0_i32_0 : i32, i32
  }
  func.func @transform_14(%arg0: i32) -> (i32, i32) {
    %c0_i32 = arith.constant 0 : i32
    %c0_i32_0 = arith.constant 0 : i32
    %c0_i32_1 = arith.constant 0 : i32
    return %c0_i32, %c0_i32_0 : i32, i32
  }
  func.func @transform_15(%arg0: i32) -> (i32, i32) {
    %c0_i32 = arith.constant 0 : i32
    %c0_i32_0 = arith.constant 0 : i32
    %c0_i32_1 = arith.constant 0 : i32
    return %c0_i32, %c0_i32_0 : i32, i32
  }
  func.func @transform_16(%arg0: i32) -> (i32, i32) {
    %c0_i32 = arith.constant 0 : i32
    %c0_i32_0 = arith.constant 0 : i32
    %c0_i32_1 = arith.constant 0 : i32
    return %c0_i32, %c0_i32_0 : i32, i32
  }
  func.func @transform_17(%arg0: i32) -> (i32, i32) {
    %c0_i32 = arith.constant 0 : i32
    %c0_i32_0 = arith.constant 0 : i32
    %c0_i32_1 = arith.constant 0 : i32
    return %c0_i32, %c0_i32_0 : i32, i32
  }
  func.func @transform_18(%arg0: i32) -> (i32, i32) {
    %c0_i32 = arith.constant 0 : i32
    %c0_i32_0 = arith.constant 0 : i32
    %c0_i32_1 = arith.constant 0 : i32
    return %c0_i32, %c0_i32_0 : i32, i32
  }
  func.func @transform_19(%arg0: i32) -> (i32, i32) {
    %c0_i32 = arith.constant 0 : i32
    %c0_i32_0 = arith.constant 0 : i32
    %c0_i32_1 = arith.constant 0 : i32
    return %c0_i32, %c0_i32_0 : i32, i32
  }
  func.func @transform_20(%arg0: i32) -> (i32, i32) {
    %c0_i32 = arith.constant 0 : i32
    %c0_i32_0 = arith.constant 0 : i32
    %c0_i32_1 = arith.constant 0 : i32
    return %c0_i32, %c0_i32_0 : i32, i32
  }
  func.func @transform_21(%arg0: i32) -> (i32, i32) {
    %c0_i32 = arith.constant 0 : i32
    %c0_i32_0 = arith.constant 0 : i32
    %c0_i32_1 = arith.constant 0 : i32
    return %c0_i32, %c0_i32_0 : i32, i32
  }
  func.func @transform_22(%arg0: i32) -> (i32, i32) {
    %c0_i32 = arith.constant 0 : i32
    %c0_i32_0 = arith.constant 0 : i32
    %c0_i32_1 = arith.constant 0 : i32
    return %c0_i32, %c0_i32_0 : i32, i32
  }
  func.func @transform_23(%arg0: i32) -> (i32, i32, i32) {
    %c0_i32 = arith.constant 0 : i32
    %c0_i32_0 = arith.constant 0 : i32
    %c0_i32_1 = arith.constant 0 : i32
    return %arg0, %c0_i32, %c0_i32_0 : i32, i32, i32
  }
}

</mosaic_0001>

<llo_original>
// kernel: tpu_custom_call.1
$region0: #{tpu_custom_call.1}
  #allocation0 [shape = 'u32[]', space=smem, size = 0x4, offset = 0x4, fixed_abs, tag = 'smem constant byte address 0x4 - core index']
  #allocation1 [shape = 'u32[144,128]{1,0:T(1,128)}', space=vmem, size = 0x12000, scoped, tag = 'internal scratch']
  %s0 = inlined_call_operand.hbm [shape: bf16[2,8,64], index: 0, kind: input, shape index: {}]
  %s1 = inlined_call_operand.hbm [shape: f32[2,1,8], index: 1, kind: input, shape index: {}]
  %s2 = inlined_call_operand.vmem [shape: f32[2,64], index: 2, kind: input, shape index: {}]
  %s3 = inlined_call_operand.hbm [shape: bf16[64,64], index: 3, kind: input, shape index: {}]
  %s4 = inlined_call_operand.hbm [shape: bf16[64,64], index: 4, kind: input, shape index: {}]
  %s5 = inlined_call_operand.hbm [shape: bf16[64,64], index: 5, kind: input, shape index: {}]
  %s6 = inlined_call_operand.hbm [shape: bf16[64,64], index: 6, kind: input, shape index: {}]
  %s7 = inlined_call_operand.hbm [shape: f32[1,64], index: 7, kind: input, shape index: {}]
  %s8 = inlined_call_operand.hbm [shape: f32[1,64], index: 8, kind: input, shape index: {}]
  %s9 = inlined_call_operand.hbm [shape: f32[1,64], index: 9, kind: input, shape index: {}]
  %s10 = inlined_call_operand.hbm [shape: f32[1,64], index: 10, kind: input, shape index: {}]
  %s11 = inlined_call_operand.hbm [shape: f32[1,64], index: 11, kind: input, shape index: {}]
  %s12 = inlined_call_operand.hbm [shape: f32[1,64], index: 12, kind: input, shape index: {}]
  %s13 = inlined_call_operand.hbm [shape: bf16[64,64], index: 13, kind: input, shape index: {}]
  %s14 = inlined_call_operand.hbm [shape: f32[1,64], index: 14, kind: input, shape index: {}]
  %s15 = inlined_call_operand.hbm [shape: bf16[64,64], index: 15, kind: input, shape index: {}]
  %s16 = inlined_call_operand.hbm [shape: f32[1,64], index: 16, kind: input, shape index: {}]
  %s17 = inlined_call_operand.hbm [shape: f32[1,64], index: 17, kind: input, shape index: {}]
  %s18 = inlined_call_operand.hbm [shape: f32[1,64], index: 18, kind: input, shape index: {}]
  %s19 = inlined_call_operand.vmem [shape: bf16[64,64], index: 19, kind: input, shape index: {}]
  %s20 = inlined_call_operand.vmem [shape: f32[1,64], index: 20, kind: input, shape index: {}]
  %s21 = inlined_call_operand.hbm [shape: bf16[64,128], index: 21, kind: input, shape index: {}]
  %s22 = inlined_call_operand.vmem [shape: f32[1,128], index: 22, kind: input, shape index: {}]
  %s23 = inlined_call_operand.hbm [shape: bf16[2,8,128], index: 23, kind: output, shape index: {}]
  %s24 = sld [smem:[#allocation0]]
  $region201: #{tpu_custom_call.1} parent=0
    _
  %s26 = ssub.s32 1, %s24
  %s27 = scalar_select 0, %s26, %s24
  $region1: #{tpu_custom_call.1} parent=0
    #allocation2 [shape = 'u8[4096]{0}', space=vmem, size = 0x1000, scoped, tag = 'input window, operand 0']
    #allocation3 [shape = 's32[2]{0}', space=sflag, size = 0x8, scoped, tag = 'scoped memory for tpu_custom_call.1']
    #allocation4 [shape = 's32[2]{0}', space=sflag, size = 0x8, scoped, tag = 'scoped memory for tpu_custom_call.1']
    #allocation5 [shape = 'u8[1024]{0}', space=vmem, size = 0x400, scoped, tag = 'input window, operand 1']
    #allocation6 [shape = 's32[2]{0}', space=sflag, size = 0x8, scoped, tag = 'scoped memory for tpu_custom_call.1']
    #allocation7 [shape = 'u8[16384]{0}', space=vmem, size = 0x4000, scoped, tag = 'input window, operand 3, single buffered']
    #allocation8 [shape = 'u8[16384]{0}', space=vmem, size = 0x4000, scoped, tag = 'input window, operand 4, single buffered']
    #allocation9 [shape = 's32[1]{0}', space=sflag, size = 0x4, scoped, tag = 'scoped memory for tpu_custom_call.1']
    #allocation10 [shape = 'u8[16384]{0}', space=vmem, size = 0x4000, scoped, tag = 'input window, operand 5, single buffered']
    #allocation11 [shape = 'u8[16384]{0}', space=vmem, size = 0x4000, scoped, tag = 'input window, operand 6, single buffered']
    #allocation12 [shape = 's32[1]{0}', space=sflag, size = 0x4, scoped, tag = 'scoped memory for tpu_custom_call.1']
    #allocation13 [shape = 'u8[512]{0}', space=vmem, size = 0x400, scoped, tag = 'input window, operand 7, single buffered']
    #allocation14 [shape = 'u8[512]{0}', space=vmem, size = 0x400, scoped, tag = 'input window, operand 8, single buffered']
    #allocation15 [shape = 's32[1]{0}', space=sflag, size = 0x4, scoped, tag = 'scoped memory for tpu_custom_call.1']
    #allocation16 [shape = 'u8[512]{0}', space=vmem, size = 0x400, scoped, tag = 'input window, operand 9, single buffered']
    #allocation17 [shape = 'u8[512]{0}', space=vmem, size = 0x400, scoped, tag = 'input window, operand 10, single buffered']
    #allocation18 [shape = 's32[1]{0}', space=sflag, size = 0x4, scoped, tag = 'scoped memory for tpu_custom_call.1']
    #allocation19 [shape = 'u8[512]{0}', space=vmem, size = 0x400, scoped, tag = 'input window, operand 11, single buffered']
    #allocation20 [shape = 'u8[512]{0}', space=vmem, size = 0x400, scoped, tag = 'input window, operand 12, single buffered']
    #allocation21 [shape = 's32[1]{0}', space=sflag, size = 0x4, scoped, tag = 'scoped memory for tpu_custom_call.1']
    #allocation22 [shape = 'u8[16384]{0}', space=vmem, size = 0x4000, scoped, tag = 'input window, operand 13, single buffered']
    #allocation23 [shape = 'u8[512]{0}', space=vmem, size = 0x400, scoped, tag = 'input window, operand 14, single buffered']
    #allocation24 [shape = 's32[1]{0}', space=sflag, size = 0x4, scoped, tag = 'scoped memory for tpu_custom_call.1']
    #allocation25 [shape = 'u8[16384]{0}', space=vmem, size = 0x4000, scoped, tag = 'input window, operand 15, single buffered']
    #allocation26 [shape = 'u8[512]{0}', space=vmem, size = 0x400, scoped, tag = 'input window, operand 16, single buffered']
    #allocation27 [shape = 's32[1]{0}', space=sflag, size = 0x4, scoped, tag = 'scoped memory for tpu_custom_call.1']
    #allocation28 [shape = 'u8[512]{0}', space=vmem, size = 0x400, scoped, tag = 'input window, operand 17, single buffered']
    #allocation29 [shape = 'u8[512]{0}', space=vmem, size = 0x400, scoped, tag = 'input window, operand 18, single buffered']
    #allocation30 [shape = 's32[1]{0}', space=sflag, size = 0x4, scoped, tag = 'scoped memory for tpu_custom_call.1']
    #allocation31 [shape = 'u8[16384]{0}', space=vmem, size = 0x4000, scoped, tag = 'input window, operand 21, single buffered']
    #allocation32 [shape = 'u8[4096]{0}', space=vmem, size = 0x1000, scoped, tag = 'output window, operand 0']
    %28 = vsyncpa [#allocation3], 0
    %s29 = scalar_lea.sflag [#allocation3], 1
    %30 = vsyncpa %s29, 0
    %31 = vsyncpa [#allocation6], 0
    %s32 = scalar_lea.sflag [#allocation6], 1
    %33 = vsyncpa %s32, 0
    %34 = vsyncpa [#allocation9], 0
    %35 = vsyncpa [#allocation12], 0
    %36 = vsyncpa [#allocation15], 0
    %37 = vsyncpa [#allocation18], 0
    %38 = vsyncpa [#allocation21], 0
    %39 = vsyncpa [#allocation24], 0
    %40 = vsyncpa [#allocation27], 0
    %41 = vsyncpa [#allocation30], 0
    %42 = vsyncpa [#allocation4], 0
    %s43 = scalar_lea.sflag [#allocation4], 1
    %44 = vsyncpa %s43, 0
    loop: start=0, step=1, limit=4
    $region2: #{tpu_custom_call.1} parent=1 // loop_pre_header
      _
    $region3: #{tpu_custom_call.1} parent=1 // loop_header
      %s46 = sphi 0, %s50
      %p47 = scmp.ge.s32.totalorder %s46, 4
      %s56 = sphi 0, %s58
      %s59 = sphi 0, %s56
      %s60 = sphi 0, %s59
      %s76 = sphi 0, %s60
      %s82 = sphi 0, %s84
      %s85 = sphi 0, %s82
      %s86 = sphi 0, %s85
      %s102 = sphi 0, %s86
      %s106 = sphi 0, %s106
      %s108 = sphi 0, %s106
      %s109 = sphi 0, %s108
      %s123 = sphi 0, %s109
      %s127 = sphi 0, %s127
      %s129 = sphi 0, %s127
      %s130 = sphi 0, %s129
      %s144 = sphi 0, %s130
      %s148 = sphi 0, %s148
      %s150 = sphi 0, %s148
      %s151 = sphi 0, %s150
      %s165 = sphi 0, %s151
      %s169 = sphi 0, %s169
      %s171 = sphi 0, %s169
      %s172 = sphi 0, %s171
      %s186 = sphi 0, %s172
      %s190 = sphi 0, %s190
      %s192 = sphi 0, %s190
      %s193 = sphi 0, %s192
      %s207 = sphi 0, %s193
      %s211 = sphi 0, %s211
      %s213 = sphi 0, %s211
      %s214 = sphi 0, %s213
      %s228 = sphi 0, %s214
      %s232 = sphi 0, %s232
      %s234 = sphi 0, %s232
      %s235 = sphi 0, %s234
      %s249 = sphi 0, %s235
      %s253 = sphi 0, %s253
      %s255 = sphi 0, %s253
      %s256 = sphi 0, %s255
      %s270 = sphi 0, %s256
      %s274 = sphi 0, %s274
      %s276 = sphi 0, %s274
      %s277 = sphi 0, %s276
      %s291 = sphi 0, %s277
      %s295 = sphi 0, %s295
      %s297 = sphi 0, %s295
      %s298 = sphi 0, %s297
      %s312 = sphi 0, %s298
      %s316 = sphi 0, %s316
      %s318 = sphi 0, %s316
      %s319 = sphi 0, %s318
      %s333 = sphi 0, %s319
      %s337 = sphi 0, %s337
      %s339 = sphi 0, %s337
      %s340 = sphi 0, %s339
      %s354 = sphi 0, %s340
      %s358 = sphi 0, %s358
      %s360 = sphi 0, %s358
      %s361 = sphi 0, %s360
      %s375 = sphi 0, %s361
      %s379 = sphi 0, %s379
      %s381 = sphi 0, %s379
      %s382 = sphi 0, %s381
      %s396 = sphi 0, %s382
      %s400 = sphi 0, %s400
      %s402 = sphi 0, %s400
      %s403 = sphi 0, %s402
      %s417 = sphi 0, %s403
      %s421 = sphi 0, %s421
      %s423 = sphi 0, %s421
      %s424 = sphi 0, %s423
      %s438 = sphi 0, %s424
      %s442 = sphi 0, %s442
      %s444 = sphi 0, %s442
      %s445 = sphi 0, %s444
      %s459 = sphi 0, %s445
      %s463 = sphi 0, %s463
      %s465 = sphi 0, %s463
      %s466 = sphi 0, %s465
      %s480 = sphi 0, %s466
      %s484 = sphi 0, %s484
      %s486 = sphi 0, %s484
      %s487 = sphi 0, %s486
      %s501 = sphi 0, %s487
      %s505 = sphi 0, %s505
      %s507 = sphi 0, %s505
      %s508 = sphi 0, %s507
      %s522 = sphi 0, %s508
      %s526 = sphi 0, %s526
      %s528 = sphi 0, %s526
      %s529 = sphi 0, %s528
      %s543 = sphi 0, %s529
      %s549 = sphi 0, %s551
      %s552 = sphi 0, %s549
      %s553 = sphi 0, %s552
      %s569 = sphi 0, %s553
    $region4: #{tpu_custom_call.1} parent=1 // loop_header_branch
      %49 = sbr.rel (%p47) target = $region8
    $region5: #{tpu_custom_call.1} parent=1 // loop_body
      %s51 = ssub.s32 %s46, 1
      %s52 = ssub.s32 %s46, 2
      %s53 = sadd.s32 %s46, 1
      %s54 = ssub.s32 %s46, %s53
      %p55 = scmp.eq.s32.totalorder %s54, 0
      %s57 = sadd.s32 %s56, 1
      %s58 = scalar_select %p55, %s56, %s57
      %p61 = pneg %p55
      %p62 = scmp.eq.s32.totalorder %s46, 1
      %p63 = por %p61, %p62
      %p64 = scmp.ne.s32.totalorder %s56, %s59
      %p65 = scmp.eq.s32.totalorder %s46, 0
      %p66 = por %p64, %p65
      %p67 = scmp.ne.s32.totalorder %s56, %s59
      %p68 = scmp.eq.s32.totalorder %s51, 1
      %p69 = por %p67, %p68
      %p70 = scmp.ne.s32.totalorder %s59, %s60
      %p71 = scmp.eq.s32.totalorder %s51, 0
      %p72 = por %p70, %p71
      %p73 = scmp.ne.s32.totalorder %s59, %s60
      %p74 = scmp.eq.s32.totalorder %s52, 1
      %p75 = por %p73, %p74
      %p77 = scmp.ne.s32.totalorder %s60, %s76
      %p78 = scmp.eq.s32.totalorder %s52, 0
      %p79 = por %p77, %p78
      %s80 = ssub.s32 %s46, %s53
      %p81 = scmp.eq.s32.totalorder %s80, 0
      %s83 = sadd.s32 %s82, 1
      %s84 = scalar_select %p81, %s82, %s83
      %p87 = pneg %p81
      %p88 = scmp.eq.s32.totalorder %s46, 1
      %p89 = por %p87, %p88
      %p90 = scmp.ne.s32.totalorder %s82, %s85
      %p91 = scmp.eq.s32.totalorder %s46, 0
      %p92 = por %p90, %p91
      %p93 = scmp.ne.s32.totalorder %s82, %s85
      %p94 = scmp.eq.s32.totalorder %s51, 1
      %p95 = por %p93, %p94
      %p96 = scmp.ne.s32.totalorder %s85, %s86
      %p97 = scmp.eq.s32.totalorder %s51, 0
      %p98 = por %p96, %p97
      %p99 = scmp.ne.s32.totalorder %s85, %s86
      %p100 = scmp.eq.s32.totalorder %s52, 1
      %p101 = por %p99, %p100
      %p103 = scmp.ne.s32.totalorder %s86, %s102
      %p104 = scmp.eq.s32.totalorder %s52, 0
      %p105 = por %p103, %p104
      %s107 = sadd.s32 %s106, 1
      %p110 = scmp.eq.s32.totalorder %s46, 1
      %p111 = scmp.ne.s32.totalorder %s106, %s108
      %p112 = scmp.eq.s32.totalorder %s46, 0
      %p113 = por %p111, %p112
      %p114 = scmp.ne.s32.totalorder %s106, %s108
      %p115 = scmp.eq.s32.totalorder %s51, 1
      %p116 = por %p114, %p115
      %p117 = scmp.ne.s32.totalorder %s108, %s109
      %p118 = scmp.eq.s32.totalorder %s51, 0
      %p119 = por %p117, %p118
      %p120 = scmp.ne.s32.totalorder %s108, %s109
      %p121 = scmp.eq.s32.totalorder %s52, 1
      %p122 = por %p120, %p121
      %p124 = scmp.ne.s32.totalorder %s109, %s123
      %p125 = scmp.eq.s32.totalorder %s52, 0
      %p126 = por %p124, %p125
      %s128 = sadd.s32 %s127, 1
      %p131 = scmp.eq.s32.totalorder %s46, 1
      %p132 = scmp.ne.s32.totalorder %s127, %s129
      %p133 = scmp.eq.s32.totalorder %s46, 0
      %p134 = por %p132, %p133
      %p135 = scmp.ne.s32.totalorder %s127, %s129
      %p136 = scmp.eq.s32.totalorder %s51, 1
      %p137 = por %p135, %p136
      %p138 = scmp.ne.s32.totalorder %s129, %s130
      %p139 = scmp.eq.s32.totalorder %s51, 0
      %p140 = por %p138, %p139
      %p141 = scmp.ne.s32.totalorder %s129, %s130
      %p142 = scmp.eq.s32.totalorder %s52, 1
      %p143 = por %p141, %p142
      %p145 = scmp.ne.s32.totalorder %s130, %s144
      %p146 = scmp.eq.s32.totalorder %s52, 0
      %p147 = por %p145, %p146
      %s149 = sadd.s32 %s148, 1
      %p152 = scmp.eq.s32.totalorder %s46, 1
      %p153 = scmp.ne.s32.totalorder %s148, %s150
      %p154 = scmp.eq.s32.totalorder %s46, 0
      %p155 = por %p153, %p154
      %p156 = scmp.ne.s32.totalorder %s148, %s150
      %p157 = scmp.eq.s32.totalorder %s51, 1
      %p158 = por %p156, %p157
      %p159 = scmp.ne.s32.totalorder %s150, %s151
      %p160 = scmp.eq.s32.totalorder %s51, 0
      %p161 = por %p159, %p160
      %p162 = scmp.ne.s32.totalorder %s150, %s151
      %p163 = scmp.eq.s32.totalorder %s52, 1
      %p164 = por %p162, %p163
      %p166 = scmp.ne.s32.totalorder %s151, %s165
      %p167 = scmp.eq.s32.totalorder %s52, 0
      %p168 = por %p166, %p167
      %s170 = sadd.s32 %s169, 1
      %p173 = scmp.eq.s32.totalorder %s46, 1
      %p174 = scmp.ne.s32.totalorder %s169, %s171
      %p175 = scmp.eq.s32.totalorder %s46, 0
      %p176 = por %p174, %p175
      %p177 = scmp.ne.s32.totalorder %s169, %s171
      %p178 = scmp.eq.s32.totalorder %s51, 1
      %p179 = por %p177, %p178
      %p180 = scmp.ne.s32.totalorder %s171, %s172
      %p181 = scmp.eq.s32.totalorder %s51, 0
      %p182 = por %p180, %p181
      %p183 = scmp.ne.s32.totalorder %s171, %s172
      %p184 = scmp.eq.s32.totalorder %s52, 1
      %p185 = por %p183, %p184
      %p187 = scmp.ne.s32.totalorder %s172, %s186
      %p188 = scmp.eq.s32.totalorder %s52, 0
      %p189 = por %p187, %p188
      %s191 = sadd.s32 %s190, 1
      %p194 = scmp.eq.s32.totalorder %s46, 1
      %p195 = scmp.ne.s32.totalorder %s190, %s192
      %p196 = scmp.eq.s32.totalorder %s46, 0
      %p197 = por %p195, %p196
      %p198 = scmp.ne.s32.totalorder %s190, %s192
      %p199 = scmp.eq.s32.totalorder %s51, 1
      %p200 = por %p198, %p199
      %p201 = scmp.ne.s32.totalorder %s192, %s193
      %p202 = scmp.eq.s32.totalorder %s51, 0
      %p203 = por %p201, %p202
      %p204 = scmp.ne.s32.totalorder %s192, %s193
      %p205 = scmp.eq.s32.totalorder %s52, 1
      %p206 = por %p204, %p205
      %p208 = scmp.ne.s32.totalorder %s193, %s207
      %p209 = scmp.eq.s32.totalorder %s52, 0
      %p210 = por %p208, %p209
      %s212 = sadd.s32 %s211, 1
      %p215 = scmp.eq.s32.totalorder %s46, 1
      %p216 = scmp.ne.s32.totalorder %s211, %s213
      %p217 = scmp.eq.s32.totalorder %s46, 0
      %p218 = por %p216, %p217
      %p219 = scmp.ne.s32.totalorder %s211, %s213
      %p220 = scmp.eq.s32.totalorder %s51, 1
      %p221 = por %p219, %p220
      %p222 = scmp.ne.s32.totalorder %s213, %s214
      %p223 = scmp.eq.s32.totalorder %s51, 0
      %p224 = por %p222, %p223
      %p225 = scmp.ne.s32.totalorder %s213, %s214
      %p226 = scmp.eq.s32.totalorder %s52, 1
      %p227 = por %p225, %p226
      %p229 = scmp.ne.s32.totalorder %s214, %s228
      %p230 = scmp.eq.s32.totalorder %s52, 0
      %p231 = por %p229, %p230
      %s233 = sadd.s32 %s232, 1
      %p236 = scmp.eq.s32.totalorder %s46, 1
      %p237 = scmp.ne.s32.totalorder %s232, %s234
      %p238 = scmp.eq.s32.totalorder %s46, 0
      %p239 = por %p237, %p238
      %p240 = scmp.ne.s32.totalorder %s232, %s234
      %p241 = scmp.eq.s32.totalorder %s51, 1
      %p242 = por %p240, %p241
      %p243 = scmp.ne.s32.totalorder %s234, %s235
      %p244 = scmp.eq.s32.totalorder %s51, 0
      %p245 = por %p243, %p244
      %p246 = scmp.ne.s32.totalorder %s234, %s235
      %p247 = scmp.eq.s32.totalorder %s52, 1
      %p248 = por %p246, %p247
      %p250 = scmp.ne.s32.totalorder %s235, %s249
      %p251 = scmp.eq.s32.totalorder %s52, 0
      %p252 = por %p250, %p251
      %s254 = sadd.s32 %s253, 1
      %p257 = scmp.eq.s32.totalorder %s46, 1
      %p258 = scmp.ne.s32.totalorder %s253, %s255
      %p259 = scmp.eq.s32.totalorder %s46, 0
      %p260 = por %p258, %p259
      %p261 = scmp.ne.s32.totalorder %s253, %s255
      %p262 = scmp.eq.s32.totalorder %s51, 1
      %p263 = por %p261, %p262
      %p264 = scmp.ne.s32.totalorder %s255, %s256
      %p265 = scmp.eq.s32.totalorder %s51, 0
      %p266 = por %p264, %p265
      %p267 = scmp.ne.s32.totalorder %s255, %s256
      %p268 = scmp.eq.s32.totalorder %s52, 1
      %p269 = por %p267, %p268
      %p271 = scmp.ne.s32.totalorder %s256, %s270
      %p272 = scmp.eq.s32.totalorder %s52, 0
      %p273 = por %p271, %p272
      %s275 = sadd.s32 %s274, 1
      %p278 = scmp.eq.s32.totalorder %s46, 1
      %p279 = scmp.ne.s32.totalorder %s274, %s276
      %p280 = scmp.eq.s32.totalorder %s46, 0
      %p281 = por %p279, %p280
      %p282 = scmp.ne.s32.totalorder %s274, %s276
      %p283 = scmp.eq.s32.totalorder %s51, 1
      %p284 = por %p282, %p283
      %p285 = scmp.ne.s32.totalorder %s276, %s277
      %p286 = scmp.eq.s32.totalorder %s51, 0
      %p287 = por %p285, %p286
      %p288 = scmp.ne.s32.totalorder %s276, %s277
      %p289 = scmp.eq.s32.totalorder %s52, 1
      %p290 = por %p288, %p289
      %p292 = scmp.ne.s32.totalorder %s277, %s291
      %p293 = scmp.eq.s32.totalorder %s52, 0
      %p294 = por %p292, %p293
      %s296 = sadd.s32 %s295, 1
      %p299 = scmp.eq.s32.totalorder %s46, 1
      %p300 = scmp.ne.s32.totalorder %s295, %s297
      %p301 = scmp.eq.s32.totalorder %s46, 0
      %p302 = por %p300, %p301
      %p303 = scmp.ne.s32.totalorder %s295, %s297
      %p304 = scmp.eq.s32.totalorder %s51, 1
      %p305 = por %p303, %p304
      %p306 = scmp.ne.s32.totalorder %s297, %s298
      %p307 = scmp.eq.s32.totalorder %s51, 0
      %p308 = por %p306, %p307
      %p309 = scmp.ne.s32.totalorder %s297, %s298
      %p310 = scmp.eq.s32.totalorder %s52, 1
      %p311 = por %p309, %p310
      %p313 = scmp.ne.s32.totalorder %s298, %s312
      %p314 = scmp.eq.s32.totalorder %s52, 0
      %p315 = por %p313, %p314
      %s317 = sadd.s32 %s316, 1
      %p320 = scmp.eq.s32.totalorder %s46, 1
      %p321 = scmp.ne.s32.totalorder %s316, %s318
      %p322 = scmp.eq.s32.totalorder %s46, 0
      %p323 = por %p321, %p322
      %p324 = scmp.ne.s32.totalorder %s316, %s318
      %p325 = scmp.eq.s32.totalorder %s51, 1
      %p326 = por %p324, %p325
      %p327 = scmp.ne.s32.totalorder %s318, %s319
      %p328 = scmp.eq.s32.totalorder %s51, 0
      %p329 = por %p327, %p328
      %p330 = scmp.ne.s32.totalorder %s318, %s319
      %p331 = scmp.eq.s32.totalorder %s52, 1
      %p332 = por %p330, %p331
      %p334 = scmp.ne.s32.totalorder %s319, %s333
      %p335 = scmp.eq.s32.totalorder %s52, 0
      %p336 = por %p334, %p335
      %s338 = sadd.s32 %s337, 1
      %p341 = scmp.eq.s32.totalorder %s46, 1
      %p342 = scmp.ne.s32.totalorder %s337, %s339
      %p343 = scmp.eq.s32.totalorder %s46, 0
      %p344 = por %p342, %p343
      %p345 = scmp.ne.s32.totalorder %s337, %s339
      %p346 = scmp.eq.s32.totalorder %s51, 1
      %p347 = por %p345, %p346
      %p348 = scmp.ne.s32.totalorder %s339, %s340
      %p349 = scmp.eq.s32.totalorder %s51, 0
      %p350 = por %p348, %p349
      %p351 = scmp.ne.s32.totalorder %s339, %s340
      %p352 = scmp.eq.s32.totalorder %s52, 1
      %p353 = por %p351, %p352
      %p355 = scmp.ne.s32.totalorder %s340, %s354
      %p356 = scmp.eq.s32.totalorder %s52, 0
      %p357 = por %p355, %p356
      %s359 = sadd.s32 %s358, 1
      %p362 = scmp.eq.s32.totalorder %s46, 1
      %p363 = scmp.ne.s32.totalorder %s358, %s360
      %p364 = scmp.eq.s32.totalorder %s46, 0
      %p365 = por %p363, %p364
      %p366 = scmp.ne.s32.totalorder %s358, %s360
      %p367 = scmp.eq.s32.totalorder %s51, 1
      %p368 = por %p366, %p367
      %p369 = scmp.ne.s32.totalorder %s360, %s361
      %p370 = scmp.eq.s32.totalorder %s51, 0
      %p371 = por %p369, %p370
      %p372 = scmp.ne.s32.totalorder %s360, %s361
      %p373 = scmp.eq.s32.totalorder %s52, 1
      %p374 = por %p372, %p373
      %p376 = scmp.ne.s32.totalorder %s361, %s375
      %p377 = scmp.eq.s32.totalorder %s52, 0
      %p378 = por %p376, %p377
      %s380 = sadd.s32 %s379, 1
      %p383 = scmp.eq.s32.totalorder %s46, 1
      %p384 = scmp.ne.s32.totalorder %s379, %s381
      %p385 = scmp.eq.s32.totalorder %s46, 0
      %p386 = por %p384, %p385
      %p387 = scmp.ne.s32.totalorder %s379, %s381
      %p388 = scmp.eq.s32.totalorder %s51, 1
      %p389 = por %p387, %p388
      %p390 = scmp.ne.s32.totalorder %s381, %s382
      %p391 = scmp.eq.s32.totalorder %s51, 0
      %p392 = por %p390, %p391
      %p393 = scmp.ne.s32.totalorder %s381, %s382
      %p394 = scmp.eq.s32.totalorder %s52, 1
      %p395 = por %p393, %p394
      %p397 = scmp.ne.s32.totalorder %s382, %s396
      %p398 = scmp.eq.s32.totalorder %s52, 0
      %p399 = por %p397, %p398
      %s401 = sadd.s32 %s400, 1
      %p404 = scmp.eq.s32.totalorder %s46, 1
      %p405 = scmp.ne.s32.totalorder %s400, %s402
      %p406 = scmp.eq.s32.totalorder %s46, 0
      %p407 = por %p405, %p406
      %p408 = scmp.ne.s32.totalorder %s400, %s402
      %p409 = scmp.eq.s32.totalorder %s51, 1
      %p410 = por %p408, %p409
      %p411 = scmp.ne.s32.totalorder %s402, %s403
      %p412 = scmp.eq.s32.totalorder %s51, 0
      %p413 = por %p411, %p412
      %p414 = scmp.ne.s32.totalorder %s402, %s403
      %p415 = scmp.eq.s32.totalorder %s52, 1
      %p416 = por %p414, %p415
      %p418 = scmp.ne.s32.totalorder %s403, %s417
      %p419 = scmp.eq.s32.totalorder %s52, 0
      %p420 = por %p418, %p419
      %s422 = sadd.s32 %s421, 1
      %p425 = scmp.eq.s32.totalorder %s46, 1
      %p426 = scmp.ne.s32.totalorder %s421, %s423
      %p427 = scmp.eq.s32.totalorder %s46, 0
      %p428 = por %p426, %p427
      %p429 = scmp.ne.s32.totalorder %s421, %s423
      %p430 = scmp.eq.s32.totalorder %s51, 1
      %p431 = por %p429, %p430
      %p432 = scmp.ne.s32.totalorder %s423, %s424
      %p433 = scmp.eq.s32.totalorder %s51, 0
      %p434 = por %p432, %p433
      %p435 = scmp.ne.s32.totalorder %s423, %s424
      %p436 = scmp.eq.s32.totalorder %s52, 1
      %p437 = por %p435, %p436
      %p439 = scmp.ne.s32.totalorder %s424, %s438
      %p440 = scmp.eq.s32.totalorder %s52, 0
      %p441 = por %p439, %p440
      %s443 = sadd.s32 %s442, 1
      %p446 = scmp.eq.s32.totalorder %s46, 1
      %p447 = scmp.ne.s32.totalorder %s442, %s444
      %p448 = scmp.eq.s32.totalorder %s46, 0
      %p449 = por %p447, %p448
      %p450 = scmp.ne.s32.totalorder %s442, %s444
      %p451 = scmp.eq.s32.totalorder %s51, 1
      %p452 = por %p450, %p451
      %p453 = scmp.ne.s32.totalorder %s444, %s445
      %p454 = scmp.eq.s32.totalorder %s51, 0
      %p455 = por %p453, %p454
      %p456 = scmp.ne.s32.totalorder %s444, %s445
      %p457 = scmp.eq.s32.totalorder %s52, 1
      %p458 = por %p456, %p457
      %p460 = scmp.ne.s32.totalorder %s445, %s459
      %p461 = scmp.eq.s32.totalorder %s52, 0
      %p462 = por %p460, %p461
      %s464 = sadd.s32 %s463, 1
      %p467 = scmp.eq.s32.totalorder %s46, 1
      %p468 = scmp.ne.s32.totalorder %s463, %s465
      %p469 = scmp.eq.s32.totalorder %s46, 0
      %p470 = por %p468, %p469
      %p471 = scmp.ne.s32.totalorder %s463, %s465
      %p472 = scmp.eq.s32.totalorder %s51, 1
      %p473 = por %p471, %p472
      %p474 = scmp.ne.s32.totalorder %s465, %s466
      %p475 = scmp.eq.s32.totalorder %s51, 0
      %p476 = por %p474, %p475
      %p477 = scmp.ne.s32.totalorder %s465, %s466
      %p478 = scmp.eq.s32.totalorder %s52, 1
      %p479 = por %p477, %p478
      %p481 = scmp.ne.s32.totalorder %s466, %s480
      %p482 = scmp.eq.s32.totalorder %s52, 0
      %p483 = por %p481, %p482
      %s485 = sadd.s32 %s484, 1
      %p488 = scmp.eq.s32.totalorder %s46, 1
      %p489 = scmp.ne.s32.totalorder %s484, %s486
      %p490 = scmp.eq.s32.totalorder %s46, 0
      %p491 = por %p489, %p490
      %p492 = scmp.ne.s32.totalorder %s484, %s486
      %p493 = scmp.eq.s32.totalorder %s51, 1
      %p494 = por %p492, %p493
      %p495 = scmp.ne.s32.totalorder %s486, %s487
      %p496 = scmp.eq.s32.totalorder %s51, 0
      %p497 = por %p495, %p496
      %p498 = scmp.ne.s32.totalorder %s486, %s487
      %p499 = scmp.eq.s32.totalorder %s52, 1
      %p500 = por %p498, %p499
      %p502 = scmp.ne.s32.totalorder %s487, %s501
      %p503 = scmp.eq.s32.totalorder %s52, 0
      %p504 = por %p502, %p503
      %s506 = sadd.s32 %s505, 1
      %p509 = scmp.eq.s32.totalorder %s46, 1
      %p510 = scmp.ne.s32.totalorder %s505, %s507
      %p511 = scmp.eq.s32.totalorder %s46, 0
      %p512 = por %p510, %p511
      %p513 = scmp.ne.s32.totalorder %s505, %s507
      %p514 = scmp.eq.s32.totalorder %s51, 1
      %p515 = por %p513, %p514
      %p516 = scmp.ne.s32.totalorder %s507, %s508
      %p517 = scmp.eq.s32.totalorder %s51, 0
      %p518 = por %p516, %p517
      %p519 = scmp.ne.s32.totalorder %s507, %s508
      %p520 = scmp.eq.s32.totalorder %s52, 1
      %p521 = por %p519, %p520
      %p523 = scmp.ne.s32.totalorder %s508, %s522
      %p524 = scmp.eq.s32.totalorder %s52, 0
      %p525 = por %p523, %p524
      %s527 = sadd.s32 %s526, 1
      %p530 = scmp.eq.s32.totalorder %s46, 1
      %p531 = scmp.ne.s32.totalorder %s526, %s528
      %p532 = scmp.eq.s32.totalorder %s46, 0
      %p533 = por %p531, %p532
      %p534 = scmp.ne.s32.totalorder %s526, %s528
      %p535 = scmp.eq.s32.totalorder %s51, 1
      %p536 = por %p534, %p535
      %p537 = scmp.ne.s32.totalorder %s528, %s529
      %p538 = scmp.eq.s32.totalorder %s51, 0
      %p539 = por %p537, %p538
      %p540 = scmp.ne.s32.totalorder %s528, %s529
      %p541 = scmp.eq.s32.totalorder %s52, 1
      %p542 = por %p540, %p541
      %p544 = scmp.ne.s32.totalorder %s529, %s543
      %p545 = scmp.eq.s32.totalorder %s52, 0
      %p546 = por %p544, %p545
      %s547 = ssub.s32 %s46, %s53
      %p548 = scmp.eq.s32.totalorder %s547, 0
      %s550 = sadd.s32 %s549, 1
      %s551 = scalar_select %p548, %s549, %s550
      %p554 = pneg %p548
      %p555 = scmp.eq.s32.totalorder %s46, 1
      %p556 = por %p554, %p555
      %p557 = scmp.ne.s32.totalorder %s549, %s552
      %p558 = scmp.eq.s32.totalorder %s46, 0
      %p559 = por %p557, %p558
      %p560 = scmp.ne.s32.totalorder %s549, %s552
      %p561 = scmp.eq.s32.totalorder %s51, 1
      %p562 = por %p560, %p561
      %p563 = scmp.ne.s32.totalorder %s552, %s553
      %p564 = scmp.eq.s32.totalorder %s51, 0
      %p565 = por %p563, %p564
      %p566 = scmp.ne.s32.totalorder %s552, %s553
      %p567 = scmp.eq.s32.totalorder %s52, 1
      %p568 = por %p566, %p567
      %p570 = scmp.ne.s32.totalorder %s553, %s569
      %p571 = scmp.eq.s32.totalorder %s52, 0
      %p572 = por %p570, %p571
      %p573 = scmp.le.s32.totalorder 1, %s46
      %p574 = scmp.lt.s32.totalorder %s46, 3
      %p575 = pnand %p573, %p574
      %p576 = pneg %p575
      // Predicated region
      $region9: #{tpu_custom_call.1} parent=5 // pred_check
        _
      $region10: #{tpu_custom_call.1} parent=5 // pred_check_branch
        %578 = sbr.rel (%p575) target = $region12
      $region11: #{tpu_custom_call.1} parent=5 // pred_region
        %s579 = ssub.s32 %s46, 1
        // Predicated region
        $region13: #{tpu_custom_call.1} parent=11 // pred_check
          %p580 = pneg %p119
        $region14: #{tpu_custom_call.1} parent=11 // pred_check_branch
          %582 = sbr.rel (%p580) target = $region16
        $region15: #{tpu_custom_call.1} parent=11 // pred_region
          _
        $region16: #{tpu_custom_call.1} parent=11 // pred_fallthru
          _
        // Predicated region
        $region17: #{tpu_custom_call.1} parent=11 // pred_check
          %p583 = pneg %p140
        $region18: #{tpu_custom_call.1} parent=11 // pred_check_branch
          %585 = sbr.rel (%p583) target = $region20
        $region19: #{tpu_custom_call.1} parent=11 // pred_region
          %s587 = ssub.s32 512, 512
          %588 = vsyncadd [#allocation6], %s587
          %s589 = sshll.u32 [#allocation7], 4
          %s590 = int_to_ptr.vmem [resolvable:$true] %s589
          %595 = dma.hbm_to_vmem [thread:$0]  %s3, 512, %s590, [#allocation6], 64, 64, 4
        $region20: #{tpu_custom_call.1} parent=11 // pred_fallthru
          _
        // Predicated region
        $region21: #{tpu_custom_call.1} parent=11 // pred_check
          %p596 = pneg %p161
        $region22: #{tpu_custom_call.1} parent=11 // pred_check_branch
          %598 = sbr.rel (%p596) target = $region24
        $region23: #{tpu_custom_call.1} parent=11 // pred_region
          %s600 = ssub.s32 512, 512
          %601 = vsyncadd [#allocation9], %s600
          %s602 = sshll.u32 [#allocation8], 4
          %s603 = int_to_ptr.vmem [resolvable:$true] %s602
          %608 = dma.hbm_to_vmem [thread:$0]  %s4, 512, %s603, [#allocation9], 64, 64, 4
        $region24: #{tpu_custom_call.1} parent=11 // pred_fallthru
          _
        // Predicated region
        $region25: #{tpu_custom_call.1} parent=11 // pred_check
          %p609 = pneg %p182
        $region26: #{tpu_custom_call.1} parent=11 // pred_check_branch
          %611 = sbr.rel (%p609) target = $region28
        $region27: #{tpu_custom_call.1} parent=11 // pred_region
          %s613 = ssub.s32 512, 512
          %614 = vsyncadd [#allocation9], %s613
          %s615 = sshll.u32 [#allocation10], 4
          %s616 = int_to_ptr.vmem [resolvable:$true] %s615
          %621 = dma.hbm_to_vmem [thread:$0]  %s5, 512, %s616, [#allocation9], 64, 64, 4
        $region28: #{tpu_custom_call.1} parent=11 // pred_fallthru
          _
        // Predicated region
        $region29: #{tpu_custom_call.1} parent=11 // pred_check
          %p622 = pneg %p203
        $region30: #{tpu_custom_call.1} parent=11 // pred_check_branch
          %624 = sbr.rel (%p622) target = $region32
        $region31: #{tpu_custom_call.1} parent=11 // pred_region
          %s626 = ssub.s32 512, 512
          %627 = vsyncadd [#allocation12], %s626
          %s628 = sshll.u32 [#allocation11], 4
          %s629 = int_to_ptr.vmem [resolvable:$true] %s628
          %634 = dma.hbm_to_vmem [thread:$0]  %s6, 512, %s629, [#allocation12], 64, 64, 4
        $region32: #{tpu_custom_call.1} parent=11 // pred_fallthru
          _
        // Predicated region
        $region33: #{tpu_custom_call.1} parent=11 // pred_check
          %p635 = pneg %p224
        $region34: #{tpu_custom_call.1} parent=11 // pred_check_branch
          %637 = sbr.rel (%p635) target = $region36
        $region35: #{tpu_custom_call.1} parent=11 // pred_region
          %s639 = ssub.s32 16, 16
          %640 = vsyncadd [#allocation12], %s639
          %s642 = sshll.u32 [#allocation13], 4
          %s643 = int_to_ptr.vmem [resolvable:$true] %s642
          %645 = dma.hbm_to_vmem [thread:$0]  %s7, 16, %s643, [#allocation12]
        $region36: #{tpu_custom_call.1} parent=11 // pred_fallthru
          _
        // Predicated region
        $region37: #{tpu_custom_call.1} parent=11 // pred_check
          %p646 = pneg %p245
        $region38: #{tpu_custom_call.1} parent=11 // pred_check_branch
          %648 = sbr.rel (%p646) target = $region40
        $region39: #{tpu_custom_call.1} parent=11 // pred_region
          %s650 = ssub.s32 16, 16
          %651 = vsyncadd [#allocation15], %s650
          %s653 = sshll.u32 [#allocation14], 4
          %s654 = int_to_ptr.vmem [resolvable:$true] %s653
          %656 = dma.hbm_to_vmem [thread:$0]  %s8, 16, %s654, [#allocation15]
        $region40: #{tpu_custom_call.1} parent=11 // pred_fallthru
          _
        // Predicated region
        $region41: #{tpu_custom_call.1} parent=11 // pred_check
          %p657 = pneg %p266
        $region42: #{tpu_custom_call.1} parent=11 // pred_check_branch
          %659 = sbr.rel (%p657) target = $region44
        $region43: #{tpu_custom_call.1} parent=11 // pred_region
          %s661 = ssub.s32 16, 16
          %662 = vsyncadd [#allocation15], %s661
          %s664 = sshll.u32 [#allocation16], 4
          %s665 = int_to_ptr.vmem [resolvable:$true] %s664
          %667 = dma.hbm_to_vmem [thread:$0]  %s9, 16, %s665, [#allocation15]
        $region44: #{tpu_custom_call.1} parent=11 // pred_fallthru
          _
        // Predicated region
        $region45: #{tpu_custom_call.1} parent=11 // pred_check
          %p668 = pneg %p287
        $region46: #{tpu_custom_call.1} parent=11 // pred_check_branch
          %670 = sbr.rel (%p668) target = $region48
        $region47: #{tpu_custom_call.1} parent=11 // pred_region
          %s672 = ssub.s32 16, 16
          %673 = vsyncadd [#allocation18], %s672
          %s675 = sshll.u32 [#allocation17], 4
          %s676 = int_to_ptr.vmem [resolvable:$true] %s675
          %678 = dma.hbm_to_vmem [thread:$0]  %s10, 16, %s676, [#allocation18]
        $region48: #{tpu_custom_call.1} parent=11 // pred_fallthru
          _
        // Predicated region
        $region49: #{tpu_custom_call.1} parent=11 // pred_check
          %p679 = pneg %p308
        $region50: #{tpu_custom_call.1} parent=11 // pred_check_branch
          %681 = sbr.rel (%p679) target = $region52
        $region51: #{tpu_custom_call.1} parent=11 // pred_region
          %s683 = ssub.s32 16, 16
          %684 = vsyncadd [#allocation18], %s683
          %s686 = sshll.u32 [#allocation19], 4
          %s687 = int_to_ptr.vmem [resolvable:$true] %s686
          %689 = dma.hbm_to_vmem [thread:$0]  %s11, 16, %s687, [#allocation18]
        $region52: #{tpu_custom_call.1} parent=11 // pred_fallthru
          _
        // Predicated region
        $region53: #{tpu_custom_call.1} parent=11 // pred_check
          %p690 = pneg %p329
        $region54: #{tpu_custom_call.1} parent=11 // pred_check_branch
          %692 = sbr.rel (%p690) target = $region56
        $region55: #{tpu_custom_call.1} parent=11 // pred_region
          %s694 = ssub.s32 16, 16
          %695 = vsyncadd [#allocation21], %s694
          %s697 = sshll.u32 [#allocation20], 4
          %s698 = int_to_ptr.vmem [resolvable:$true] %s697
          %700 = dma.hbm_to_vmem [thread:$0]  %s12, 16, %s698, [#allocation21]
        $region56: #{tpu_custom_call.1} parent=11 // pred_fallthru
          _
        // Predicated region
        $region57: #{tpu_custom_call.1} parent=11 // pred_check
          %p701 = pneg %p350
        $region58: #{tpu_custom_call.1} parent=11 // pred_check_branch
          %703 = sbr.rel (%p701) target = $region60
        $region59: #{tpu_custom_call.1} parent=11 // pred_region
          %s705 = ssub.s32 512, 512
          %706 = vsyncadd [#allocation21], %s705
          %s707 = sshll.u32 [#allocation22], 4
          %s708 = int_to_ptr.vmem [resolvable:$true] %s707
          %713 = dma.hbm_to_vmem [thread:$0]  %s13, 512, %s708, [#allocation21], 64, 64, 4
        $region60: #{tpu_custom_call.1} parent=11 // pred_fallthru
          _
        // Predicated region
        $region61: #{tpu_custom_call.1} parent=11 // pred_check
          %p714 = pneg %p371
        $region62: #{tpu_custom_call.1} parent=11 // pred_check_branch
          %716 = sbr.rel (%p714) target = $region64
        $region63: #{tpu_custom_call.1} parent=11 // pred_region
          %s718 = ssub.s32 16, 16
          %719 = vsyncadd [#allocation24], %s718
          %s721 = sshll.u32 [#allocation23], 4
          %s722 = int_to_ptr.vmem [resolvable:$true] %s721
          %724 = dma.hbm_to_vmem [thread:$0]  %s14, 16, %s722, [#allocation24]
        $region64: #{tpu_custom_call.1} parent=11 // pred_fallthru
          _
        // Predicated region
        $region65: #{tpu_custom_call.1} parent=11 // pred_check
          %p725 = pneg %p392
        $region66: #{tpu_custom_call.1} parent=11 // pred_check_branch
          %727 = sbr.rel (%p725) target = $region68
        $region67: #{tpu_custom_call.1} parent=11 // pred_region
          %s729 = ssub.s32 512, 512
          %730 = vsyncadd [#allocation24], %s729
          %s731 = sshll.u32 [#allocation25], 4
          %s732 = int_to_ptr.vmem [resolvable:$true] %s731
          %737 = dma.hbm_to_vmem [thread:$0]  %s15, 512, %s732, [#allocation24], 64, 64, 4
        $region68: #{tpu_custom_call.1} parent=11 // pred_fallthru
          _
        // Predicated region
        $region69: #{tpu_custom_call.1} parent=11 // pred_check
          %p738 = pneg %p413
        $region70: #{tpu_custom_call.1} parent=11 // pred_check_branch
          %740 = sbr.rel (%p738) target = $region72
        $region71: #{tpu_custom_call.1} parent=11 // pred_region
          %s742 = ssub.s32 16, 16
          %743 = vsyncadd [#allocation27], %s742
          %s745 = sshll.u32 [#allocation26], 4
          %s746 = int_to_ptr.vmem [resolvable:$true] %s745
          %748 = dma.hbm_to_vmem [thread:$0]  %s16, 16, %s746, [#allocation27]
        $region72: #{tpu_custom_call.1} parent=11 // pred_fallthru
          _
        // Predicated region
        $region73: #{tpu_custom_call.1} parent=11 // pred_check
          %p749 = pneg %p434
        $region74: #{tpu_custom_call.1} parent=11 // pred_check_branch
          %751 = sbr.rel (%p749) target = $region76
        $region75: #{tpu_custom_call.1} parent=11 // pred_region
          %s753 = ssub.s32 16, 16
          %754 = vsyncadd [#allocation27], %s753
          %s756 = sshll.u32 [#allocation28], 4
          %s757 = int_to_ptr.vmem [resolvable:$true] %s756
          %759 = dma.hbm_to_vmem [thread:$0]  %s17, 16, %s757, [#allocation27]
        $region76: #{tpu_custom_call.1} parent=11 // pred_fallthru
          _
        // Predicated region
        $region77: #{tpu_custom_call.1} parent=11 // pred_check
          %p760 = pneg %p455
        $region78: #{tpu_custom_call.1} parent=11 // pred_check_branch
          %762 = sbr.rel (%p760) target = $region80
        $region79: #{tpu_custom_call.1} parent=11 // pred_region
          %s764 = ssub.s32 16, 16
          %765 = vsyncadd [#allocation30], %s764
          %s767 = sshll.u32 [#allocation29], 4
          %s768 = int_to_ptr.vmem [resolvable:$true] %s767
          %770 = dma.hbm_to_vmem [thread:$0]  %s18, 16, %s768, [#allocation30]
        $region80: #{tpu_custom_call.1} parent=11 // pred_fallthru
          _
        // Predicated region
        $region81: #{tpu_custom_call.1} parent=11 // pred_check
          %p771 = pneg %p476
        $region82: #{tpu_custom_call.1} parent=11 // pred_check_branch
          %773 = sbr.rel (%p771) target = $region84
        $region83: #{tpu_custom_call.1} parent=11 // pred_region
          _
        $region84: #{tpu_custom_call.1} parent=11 // pred_fallthru
          _
        // Predicated region
        $region85: #{tpu_custom_call.1} parent=11 // pred_check
          %p774 = pneg %p497
        $region86: #{tpu_custom_call.1} parent=11 // pred_check_branch
          %776 = sbr.rel (%p774) target = $region88
        $region87: #{tpu_custom_call.1} parent=11 // pred_region
          _
        $region88: #{tpu_custom_call.1} parent=11 // pred_fallthru
          _
        // Predicated region
        $region89: #{tpu_custom_call.1} parent=11 // pred_check
          %p777 = pneg %p518
        $region90: #{tpu_custom_call.1} parent=11 // pred_check_branch
          %779 = sbr.rel (%p777) target = $region92
        $region91: #{tpu_custom_call.1} parent=11 // pred_region
          %s781 = ssub.s32 512, 512
          %782 = vsyncadd [#allocation30], %s781
          %s783 = sshll.u32 [#allocation31], 4
          %s784 = int_to_ptr.vmem [resolvable:$true] %s783
          %789 = dma.hbm_to_vmem [thread:$0]  %s21, 512, %s784, [#allocation30], 64, 64, 4
        $region92: #{tpu_custom_call.1} parent=11 // pred_fallthru
          _
        // Predicated region
        $region93: #{tpu_custom_call.1} parent=11 // pred_check
          %p790 = pneg %p539
        $region94: #{tpu_custom_call.1} parent=11 // pred_check_branch
          %792 = sbr.rel (%p790) target = $region96
        $region95: #{tpu_custom_call.1} parent=11 // pred_region
          _
        $region96: #{tpu_custom_call.1} parent=11 // pred_fallthru
          _
      $region12: #{tpu_custom_call.1} parent=5 // pred_fallthru
        _
      %p793 = scmp.lt.s32.totalorder %s46, 2
      // Predicated region
      $region97: #{tpu_custom_call.1} parent=5 // pred_check
        %p794 = pneg %p793
      $region98: #{tpu_custom_call.1} parent=5 // pred_check_branch
        %796 = sbr.rel (%p794) target = $region100
      $region99: #{tpu_custom_call.1} parent=5 // pred_region
        // Predicated region
        $region101: #{tpu_custom_call.1} parent=99 // pred_check
          %p797 = pneg %p66
        $region102: #{tpu_custom_call.1} parent=99 // pred_check_branch
          %799 = sbr.rel (%p797) target = $region104
        $region103: #{tpu_custom_call.1} parent=99 // pred_region
          %s800 = sand.u32 %s56, 1
          %s801 = scalar_lea.sflag [#allocation3], %s800
          %s802 = sand.u32 %s56, 1
          %s803 = smul.addr %s802, 4
          %s804 = scalar_lea.vmem [#allocation2], %s803
          %s806 = ssub.s32 64, 64
          %807 = vsyncadd %s801, %s806
          %s808 = smul.addr %s46, 64
          %s809 = scalar_lea.hbm %s0, %s808
          %s811 = sshll.u32 %s804, 4
          %s812 = int_to_ptr.vmem [resolvable:$true] %s811
          %814 = dma.hbm_to_vmem [thread:$0]  %s809, 64, %s812, %s801
        $region104: #{tpu_custom_call.1} parent=99 // pred_fallthru
          _
        // Predicated region
        $region105: #{tpu_custom_call.1} parent=99 // pred_check
          %p815 = pneg %p92
        $region106: #{tpu_custom_call.1} parent=99 // pred_check_branch
          %817 = sbr.rel (%p815) target = $region108
        $region107: #{tpu_custom_call.1} parent=99 // pred_region
          %s818 = sand.u32 %s46, 1
          %s819 = scalar_lea.sflag [#allocation6], %s818
          %s820 = sand.u32 %s82, 1
          %s821 = scalar_lea.vmem [#allocation5], %s820
          %s823 = ssub.s32 16, 16
          %824 = vsyncadd %s819, %s823
          %s825 = smul.addr %s46, 16
          %s826 = scalar_lea.hbm %s1, %s825
          %s828 = sshll.u32 %s821, 4
          %s829 = int_to_ptr.vmem [resolvable:$true] %s828
          %831 = dma.hbm_to_vmem [thread:$0]  %s826, 16, %s829, %s819
        $region108: #{tpu_custom_call.1} parent=99 // pred_fallthru
          _
      $region100: #{tpu_custom_call.1} parent=5 // pred_fallthru
        _
      %p832 = scmp.le.s32.totalorder 1, %s46
      %p833 = scmp.lt.s32.totalorder %s46, 3
      %p834 = pnand %p832, %p833
      %p835 = pneg %p834
      // Predicated region
      $region109: #{tpu_custom_call.1} parent=5 // pred_check
        _
      $region110: #{tpu_custom_call.1} parent=5 // pred_check_branch
        %837 = sbr.rel (%p834) target = $region112
      $region111: #{tpu_custom_call.1} parent=5 // pred_region
        %s838 = ssub.s32 %s46, 1
        %s839 = sand.u32 %s59, 1
        %s840 = scalar_lea.sflag [#allocation3], %s839
        %s841 = sand.u32 %s59, 1
        %s842 = smul.addr %s841, 4
        %s843 = scalar_lea.vmem [#allocation2], %s842
        // Predicated region
        $region113: #{tpu_custom_call.1} parent=111 // pred_check
          %p844 = pneg %p72
        $region114: #{tpu_custom_call.1} parent=111 // pred_check_branch
          %846 = sbr.rel (%p844) target = $region116
        $region115: #{tpu_custom_call.1} parent=111 // pred_region
          %847 = dma.done %s840, 64
        $region116: #{tpu_custom_call.1} parent=111 // pred_fallthru
          _
        %s848 = sand.u32 %s51, 1
        %s849 = scalar_lea.sflag [#allocation6], %s848
        %s850 = sand.u32 %s85, 1
        %s851 = scalar_lea.vmem [#allocation5], %s850
        // Predicated region
        $region117: #{tpu_custom_call.1} parent=111 // pred_check
          %p852 = pneg %p98
        $region118: #{tpu_custom_call.1} parent=111 // pred_check_branch
          %854 = sbr.rel (%p852) target = $region120
        $region119: #{tpu_custom_call.1} parent=111 // pred_region
          %855 = dma.done %s849, 16
        $region120: #{tpu_custom_call.1} parent=111 // pred_fallthru
          _
        // Predicated region
        $region121: #{tpu_custom_call.1} parent=111 // pred_check
          %p856 = pneg %p140
        $region122: #{tpu_custom_call.1} parent=111 // pred_check_branch
          %858 = sbr.rel (%p856) target = $region124
        $region123: #{tpu_custom_call.1} parent=111 // pred_region
          %859 = dma.done [#allocation6], 512
        $region124: #{tpu_custom_call.1} parent=111 // pred_fallthru
          _
        // Predicated region
        $region125: #{tpu_custom_call.1} parent=111 // pred_check
          %p860 = pneg %p161
        $region126: #{tpu_custom_call.1} parent=111 // pred_check_branch
          %862 = sbr.rel (%p860) target = $region128
        $region127: #{tpu_custom_call.1} parent=111 // pred_region
          %863 = dma.done [#allocation9], 512
        $region128: #{tpu_custom_call.1} parent=111 // pred_fallthru
          _
        // Predicated region
        $region129: #{tpu_custom_call.1} parent=111 // pred_check
          %p864 = pneg %p182
        $region130: #{tpu_custom_call.1} parent=111 // pred_check_branch
          %866 = sbr.rel (%p864) target = $region132
        $region131: #{tpu_custom_call.1} parent=111 // pred_region
          %867 = dma.done [#allocation9], 512
        $region132: #{tpu_custom_call.1} parent=111 // pred_fallthru
          _
        // Predicated region
        $region133: #{tpu_custom_call.1} parent=111 // pred_check
          %p868 = pneg %p203
        $region134: #{tpu_custom_call.1} parent=111 // pred_check_branch
          %870 = sbr.rel (%p868) target = $region136
        $region135: #{tpu_custom_call.1} parent=111 // pred_region
          %871 = dma.done [#allocation12], 512
        $region136: #{tpu_custom_call.1} parent=111 // pred_fallthru
          _
        // Predicated region
        $region137: #{tpu_custom_call.1} parent=111 // pred_check
          %p872 = pneg %p224
        $region138: #{tpu_custom_call.1} parent=111 // pred_check_branch
          %874 = sbr.rel (%p872) target = $region140
        $region139: #{tpu_custom_call.1} parent=111 // pred_region
          %875 = dma.done [#allocation12], 16
        $region140: #{tpu_custom_call.1} parent=111 // pred_fallthru
          _
        // Predicated region
        $region141: #{tpu_custom_call.1} parent=111 // pred_check
          %p876 = pneg %p245
        $region142: #{tpu_custom_call.1} parent=111 // pred_check_branch
          %878 = sbr.rel (%p876) target = $region144
        $region143: #{tpu_custom_call.1} parent=111 // pred_region
          %879 = dma.done [#allocation15], 16
        $region144: #{tpu_custom_call.1} parent=111 // pred_fallthru
          _
        // Predicated region
        $region145: #{tpu_custom_call.1} parent=111 // pred_check
          %p880 = pneg %p266
        $region146: #{tpu_custom_call.1} parent=111 // pred_check_branch
          %882 = sbr.rel (%p880) target = $region148
        $region147: #{tpu_custom_call.1} parent=111 // pred_region
          %883 = dma.done [#allocation15], 16
        $region148: #{tpu_custom_call.1} parent=111 // pred_fallthru
          _
        // Predicated region
        $region149: #{tpu_custom_call.1} parent=111 // pred_check
          %p884 = pneg %p287
        $region150: #{tpu_custom_call.1} parent=111 // pred_check_branch
          %886 = sbr.rel (%p884) target = $region152
        $region151: #{tpu_custom_call.1} parent=111 // pred_region
          %887 = dma.done [#allocation18], 16
        $region152: #{tpu_custom_call.1} parent=111 // pred_fallthru
          _
        // Predicated region
        $region153: #{tpu_custom_call.1} parent=111 // pred_check
          %p888 = pneg %p308
        $region154: #{tpu_custom_call.1} parent=111 // pred_check_branch
          %890 = sbr.rel (%p888) target = $region156
        $region155: #{tpu_custom_call.1} parent=111 // pred_region
          %891 = dma.done [#allocation18], 16
        $region156: #{tpu_custom_call.1} parent=111 // pred_fallthru
          _
        // Predicated region
        $region157: #{tpu_custom_call.1} parent=111 // pred_check
          %p892 = pneg %p329
        $region158: #{tpu_custom_call.1} parent=111 // pred_check_branch
          %894 = sbr.rel (%p892) target = $region160
        $region159: #{tpu_custom_call.1} parent=111 // pred_region
          %895 = dma.done [#allocation21], 16
        $region160: #{tpu_custom_call.1} parent=111 // pred_fallthru
          _
        // Predicated region
        $region161: #{tpu_custom_call.1} parent=111 // pred_check
          %p896 = pneg %p350
        $region162: #{tpu_custom_call.1} parent=111 // pred_check_branch
          %898 = sbr.rel (%p896) target = $region164
        $region163: #{tpu_custom_call.1} parent=111 // pred_region
          %899 = dma.done [#allocation21], 512
        $region164: #{tpu_custom_call.1} parent=111 // pred_fallthru
          _
        // Predicated region
        $region165: #{tpu_custom_call.1} parent=111 // pred_check
          %p900 = pneg %p371
        $region166: #{tpu_custom_call.1} parent=111 // pred_check_branch
          %902 = sbr.rel (%p900) target = $region168
        $region167: #{tpu_custom_call.1} parent=111 // pred_region
          %903 = dma.done [#allocation24], 16
        $region168: #{tpu_custom_call.1} parent=111 // pred_fallthru
          _
        // Predicated region
        $region169: #{tpu_custom_call.1} parent=111 // pred_check
          %p904 = pneg %p392
        $region170: #{tpu_custom_call.1} parent=111 // pred_check_branch
          %906 = sbr.rel (%p904) target = $region172
        $region171: #{tpu_custom_call.1} parent=111 // pred_region
          %907 = dma.done [#allocation24], 512
        $region172: #{tpu_custom_call.1} parent=111 // pred_fallthru
          _
        // Predicated region
        $region173: #{tpu_custom_call.1} parent=111 // pred_check
          %p908 = pneg %p413
        $region174: #{tpu_custom_call.1} parent=111 // pred_check_branch
          %910 = sbr.rel (%p908) target = $region176
        $region175: #{tpu_custom_call.1} parent=111 // pred_region
          %911 = dma.done [#allocation27], 16
        $region176: #{tpu_custom_call.1} parent=111 // pred_fallthru
          _
        // Predicated region
        $region177: #{tpu_custom_call.1} parent=111 // pred_check
          %p912 = pneg %p434
        $region178: #{tpu_custom_call.1} parent=111 // pred_check_branch
          %914 = sbr.rel (%p912) target = $region180
        $region179: #{tpu_custom_call.1} parent=111 // pred_region
          %915 = dma.done [#allocation27], 16
        $region180: #{tpu_custom_call.1} parent=111 // pred_fallthru
          _
        // Predicated region
        $region181: #{tpu_custom_call.1} parent=111 // pred_check
          %p916 = pneg %p455
        $region182: #{tpu_custom_call.1} parent=111 // pred_check_branch
          %918 = sbr.rel (%p916) target = $region184
        $region183: #{tpu_custom_call.1} parent=111 // pred_region
          %919 = dma.done [#allocation30], 16
        $region184: #{tpu_custom_call.1} parent=111 // pred_fallthru
          _
        // Predicated region
        $region185: #{tpu_custom_call.1} parent=111 // pred_check
          %p920 = pneg %p518
        $region186: #{tpu_custom_call.1} parent=111 // pred_check_branch
          %922 = sbr.rel (%p920) target = $region188
        $region187: #{tpu_custom_call.1} parent=111 // pred_region
          %923 = dma.done [#allocation30], 512
        $region188: #{tpu_custom_call.1} parent=111 // pred_fallthru
          _
        %s924 = sand.u32 %s59, 1
        %s925 = scalar_lea.sflag [#allocation3], %s924
        %s926 = sand.u32 %s59, 1
        %s927 = smul.addr %s926, 4
        %s928 = scalar_lea.vmem [#allocation2], %s927
        %p929 = pneg %p72
        %p930 = pneg %p69
        %s931 = sand.u32 %s51, 1
        %s932 = scalar_lea.sflag [#allocation6], %s931
        %s933 = sand.u32 %s85, 1
        %s934 = scalar_lea.vmem [#allocation5], %s933
        %p935 = pneg %p98
        %p936 = pneg %p95
        %p937 = pneg %p119
        %p938 = pneg %p116
        %p939 = pneg %p140
        %p940 = pneg %p137
        %p941 = pneg %p161
        %p942 = pneg %p158
        %p943 = pneg %p182
        %p944 = pneg %p179
        %p945 = pneg %p203
        %p946 = pneg %p200
        %p947 = pneg %p224
        %p948 = pneg %p221
        %p949 = pneg %p245
        %p950 = pneg %p242
        %p951 = pneg %p266
        %p952 = pneg %p263
        %p953 = pneg %p287
        %p954 = pneg %p284
        %p955 = pneg %p308
        %p956 = pneg %p305
        %p957 = pneg %p329
        %p958 = pneg %p326
        %p959 = pneg %p350
        %p960 = pneg %p347
        %p961 = pneg %p371
        %p962 = pneg %p368
        %p963 = pneg %p392
        %p964 = pneg %p389
        %p965 = pneg %p413
        %p966 = pneg %p410
        %p967 = pneg %p434
        %p968 = pneg %p431
        %p969 = pneg %p455
        %p970 = pneg %p452
        %p971 = pneg %p476
        %p972 = pneg %p473
        %p973 = pneg %p497
        %p974 = pneg %p494
        %p975 = pneg %p518
        %p976 = pneg %p515
        %p977 = pneg %p539
        %p978 = pneg %p536
        %p979 = pneg %p565
        %p980 = pneg %p562
        %s981 = sand.u32 %s552, 1
        %s982 = scalar_lea.sflag [#allocation4], %s981
        %s983 = sand.u32 %s552, 1
        %s984 = smul.addr %s983, 4
        %s985 = scalar_lea.vmem [#allocation32], %s984
        %v987 = vld [vmem:[%s851] sm:$0x1]
        %v989 = vlaneseq
        %v990 = vshrl.u32 %v989, 7
        %v991 = vsub.s32 0, %v990
        %v992 = vrot.slane %v987, %v991
        %v994 = vld [vmem:[#allocation13] sm:$0x1]
        %v995 = vld [vmem:[#allocation14] sm:$0x1]
        %v996 = vld [vmem:[#allocation16] sm:$0x1]
        %v997 = vld [vmem:[#allocation17] sm:$0x1]
        %v998 = vld [vmem:[#allocation23] sm:$0x1]
        %v999 = vld [vmem:[#allocation26] sm:$0x1]
        %v1000 = vld [vmem:[#allocation19] sm:$0x1]
        %v1001 = vld [vmem:[#allocation20] sm:$0x1]
        %v1002 = vld [vmem:[#allocation28] sm:$0x1]
        %v1003 = vld [vmem:[#allocation29] sm:$0x1]
        %v1004 = vld [vmem:[%s843] sm:$0xf]
        %v1005 = vunpack.c.l.bf16 %v1004
        %v1006 = vld [vmem:[%s2] sm:$0x1]
        %v1007 = vlaneseq
        %v1008 = vshrl.u32 %v1007, 7
        %v1009 = vsub.s32 0, %v1008
        %v1010 = vrot.slane %v1006, %v1009
        %v1011 = vadd.f32 %v1005, %v1010
        %v1012 = vpack.c.bf16 %v1011, %v1011
        %v1013 = vld [vmem:[#allocation7] sm:$0xf]
        %v1014 = vld [vmem:[#allocation7 + $0x4] sm:$0xf]
        %v1015 = vld [vmem:[#allocation7 + $0x8] sm:$0xf]
        %v1016 = vld [vmem:[#allocation7 + $0xc] sm:$0xf]
        %v1017 = vld [vmem:[#allocation7 + $0x10] sm:$0xf]
        %v1018 = vld [vmem:[#allocation7 + $0x14] sm:$0xf]
        %v1019 = vld [vmem:[#allocation7 + $0x18] sm:$0xf]
        %v1020 = vld [vmem:[#allocation7 + $0x1c] sm:$0xf]
        %v1022 = vlaneseq
        %v1023 = vshrl.u32 %v1022, 7
        %v1024 = vsub.s32 0, %v1023
        %v1025 = vrot.slane %v994, %v1024
        %v1035 = vunpack.c.l.b16 %v1013
        %v1036 = vunpack.c.l.b16 %v1014
        %v1037 = vunpack.c.l.b16 %v1015
        %v1038 = vunpack.c.l.b16 %v1016
        %v1039 = vunpack.c.l.b16 %v1017
        %v1040 = vunpack.c.l.b16 %v1018
        %v1041 = vunpack.c.l.b16 %v1019
        %v1042 = vunpack.c.l.b16 %v1020
        %v1043 = vpack.c.b16 %v1036, %v1035
        %v1044 = vpack.c.b16 %v1038, %v1037
        %v1045 = vpack.c.b16 %v1040, %v1039
        %v1046 = vpack.c.b16 %v1042, %v1041
        %vm1051 = vcmask 523264
        %v1053 = vsel %vm1051, %v1012, 0
        %1055 = vmatprep.subr.bf16.mxu0 0
        %1056 = vmatpush1.bf16.msra.mxu0 0
        %1057 = vmatprep.subr.bf16.mxu0 0
        %1058 = vmatpush1.bf16.msra.mxu0 0
        %1059 = vmatprep.subr.bf16.mxu0 0
        %1060 = vmatpush1.bf16.msra.mxu0 0
        %1061 = vmatprep.subr.bf16.mxu0 0
        %1062 = vmatpush1.bf16.msra.mxu0 0
        %1063 = vmatprep.subr.bf16.mxu0 0
        %1064 = vmatpush1.bf16.msra.mxu0 %v1046
        %1065 = vmatprep.subr.bf16.mxu0 0
        %1066 = vmatpush1.bf16.msra.mxu0 %v1045
        %1067 = vmatprep.subr.bf16.mxu0 0
        %1068 = vmatpush1.bf16.msra.mxu0 %v1044
        %1069 = vmatprep.subr.bf16.mxu0 0
        %1070 = vmatpush1.bf16.msra.mxu0 %v1043
        %1071 = vmatprep.subr.bf16.mxu0 0
        %1072 = vmatpush2.bf16.msra.mxu0 0
        %1073 = vmatprep.subr.bf16.mxu0 0
        %1074 = vmatpush2.bf16.msra.mxu0 0
        %1075 = vmatprep.subr.bf16.mxu0 0
        %1076 = vmatpush2.bf16.msra.mxu0 0
        %1077 = vmatprep.subr.bf16.mxu0 0
        %1078 = vmatpush2.bf16.msra.mxu0 0
        %1079 = vmatprep.subr.bf16.mxu0 0
        %1080 = vmatpush2.bf16.msra.mxu0 0
        %1081 = vmatprep.subr.bf16.mxu0 0
        %1082 = vmatpush2.bf16.msra.mxu0 0
        %1083 = vmatprep.subr.bf16.mxu0 0
        %1084 = vmatpush2.bf16.msra.mxu0 0
        %1085 = vmatprep.subr.bf16.mxu0 0
        %1086 = vmatpush2.bf16.msra.mxu0 0
        %1087 = vmatprep.mubr.bf16.mxu0 0
        %1088 = vmatmul.mubr.bf16.gmra.mxu0 %v1053
        %v1089 = vpop.f32.mrf.mxu0
        %v1090 = vadd.f32 %v1025, %v1089
        %v1091 = vpop.f32.mrf.mxu0
        %v1092 = vpop.f32.mrf.mxu0
        %v1093 = vpop.f32.mrf.mxu0
        %1094 = vdwg.mxu0
        %v1095 = vmul.f32 %v1090, 0.25
        %v1096 = vld [vmem:[#allocation8] sm:$0xf]
        %v1097 = vld [vmem:[#allocation8 + $0x4] sm:$0xf]
        %v1098 = vld [vmem:[#allocation8 + $0x8] sm:$0xf]
        %v1099 = vld [vmem:[#allocation8 + $0xc] sm:$0xf]
        %v1100 = vld [vmem:[#allocation8 + $0x10] sm:$0xf]
        %v1101 = vld [vmem:[#allocation8 + $0x14] sm:$0xf]
        %v1102 = vld [vmem:[#allocation8 + $0x18] sm:$0xf]
        %v1103 = vld [vmem:[#allocation8 + $0x1c] sm:$0xf]
        %v1105 = vlaneseq
        %v1106 = vshrl.u32 %v1105, 7
        %v1107 = vsub.s32 0, %v1106
        %v1108 = vrot.slane %v995, %v1107
        %v1118 = vunpack.c.l.b16 %v1096
        %v1119 = vunpack.c.l.b16 %v1097
        %v1120 = vunpack.c.l.b16 %v1098
        %v1121 = vunpack.c.l.b16 %v1099
        %v1122 = vunpack.c.l.b16 %v1100
        %v1123 = vunpack.c.l.b16 %v1101
        %v1124 = vunpack.c.l.b16 %v1102
        %v1125 = vunpack.c.l.b16 %v1103
        %v1126 = vpack.c.b16 %v1119, %v1118
        %v1127 = vpack.c.b16 %v1121, %v1120
        %v1128 = vpack.c.b16 %v1123, %v1122
        %v1129 = vpack.c.b16 %v1125, %v1124
        %1134 = vmatprep.subr.bf16.mxu0 0
        %1135 = vmatpush1.bf16.msra.mxu0 0
        %1136 = vmatprep.subr.bf16.mxu0 0
        %1137 = vmatpush1.bf16.msra.mxu0 0
        %1138 = vmatprep.subr.bf16.mxu0 0
        %1139 = vmatpush1.bf16.msra.mxu0 0
        %1140 = vmatprep.subr.bf16.mxu0 0
        %1141 = vmatpush1.bf16.msra.mxu0 0
        %1142 = vmatprep.subr.bf16.mxu0 0
        %1143 = vmatpush1.bf16.msra.mxu0 %v1129
        %1144 = vmatprep.subr.bf16.mxu0 0
        %1145 = vmatpush1.bf16.msra.mxu0 %v1128
        %1146 = vmatprep.subr.bf16.mxu0 0
        %1147 = vmatpush1.bf16.msra.mxu0 %v1127
        %1148 = vmatprep.subr.bf16.mxu0 0
        %1149 = vmatpush1.bf16.msra.mxu0 %v1126
        %1150 = vmatprep.subr.bf16.mxu0 0
        %1151 = vmatpush2.bf16.msra.mxu0 0
        %1152 = vmatprep.subr.bf16.mxu0 0
        %1153 = vmatpush2.bf16.msra.mxu0 0
        %1154 = vmatprep.subr.bf16.mxu0 0
        %1155 = vmatpush2.bf16.msra.mxu0 0
        %1156 = vmatprep.subr.bf16.mxu0 0
        %1157 = vmatpush2.bf16.msra.mxu0 0
        %1158 = vmatprep.subr.bf16.mxu0 0
        %1159 = vmatpush2.bf16.msra.mxu0 0
        %1160 = vmatprep.subr.bf16.mxu0 0
        %1161 = vmatpush2.bf16.msra.mxu0 0
        %1162 = vmatprep.subr.bf16.mxu0 0
        %1163 = vmatpush2.bf16.msra.mxu0 0
        %1164 = vmatprep.subr.bf16.mxu0 0
        %1165 = vmatpush2.bf16.msra.mxu0 0
        %1166 = vmatprep.mubr.bf16.mxu0 0
        %1167 = vmatmul.mubr.bf16.gmra.mxu0 %v1053
        %v1168 = vpop.f32.mrf.mxu0
        %v1169 = vadd.f32 %v1108, %v1168
        %v1170 = vpop.f32.mrf.mxu0
        %v1171 = vpop.f32.mrf.mxu0
        %v1172 = vpop.f32.mrf.mxu0
        %1173 = vdwg.mxu0
        %v1174 = vld [vmem:[#allocation10] sm:$0xf]
        %v1175 = vld [vmem:[#allocation10 + $0x4] sm:$0xf]
        %v1176 = vld [vmem:[#allocation10 + $0x8] sm:$0xf]
        %v1177 = vld [vmem:[#allocation10 + $0xc] sm:$0xf]
        %v1178 = vld [vmem:[#allocation10 + $0x10] sm:$0xf]
        %v1179 = vld [vmem:[#allocation10 + $0x14] sm:$0xf]
        %v1180 = vld [vmem:[#allocation10 + $0x18] sm:$0xf]
        %v1181 = vld [vmem:[#allocation10 + $0x1c] sm:$0xf]
        %v1183 = vlaneseq
        %v1184 = vshrl.u32 %v1183, 7
        %v1185 = vsub.s32 0, %v1184
        %v1186 = vrot.slane %v996, %v1185
        %v1196 = vunpack.c.l.b16 %v1174
        %v1197 = vunpack.c.l.b16 %v1175
        %v1198 = vunpack.c.l.b16 %v1176
        %v1199 = vunpack.c.l.b16 %v1177
        %v1200 = vunpack.c.l.b16 %v1178
        %v1201 = vunpack.c.l.b16 %v1179
        %v1202 = vunpack.c.l.b16 %v1180
        %v1203 = vunpack.c.l.b16 %v1181
        %v1204 = vpack.c.b16 %v1197, %v1196
        %v1205 = vpack.c.b16 %v1199, %v1198
        %v1206 = vpack.c.b16 %v1201, %v1200
        %v1207 = vpack.c.b16 %v1203, %v1202
        %1212 = vmatprep.subr.bf16.mxu0 0
        %1213 = vmatpush1.bf16.msra.mxu0 0
        %1214 = vmatprep.subr.bf16.mxu0 0
        %1215 = vmatpush1.bf16.msra.mxu0 0
        %1216 = vmatprep.subr.bf16.mxu0 0
        %1217 = vmatpush1.bf16.msra.mxu0 0
        %1218 = vmatprep.subr.bf16.mxu0 0
        %1219 = vmatpush1.bf16.msra.mxu0 0
        %1220 = vmatprep.subr.bf16.mxu0 0
        %1221 = vmatpush1.bf16.msra.mxu0 %v1207
        %1222 = vmatprep.subr.bf16.mxu0 0
        %1223 = vmatpush1.bf16.msra.mxu0 %v1206
        %1224 = vmatprep.subr.bf16.mxu0 0
        %1225 = vmatpush1.bf16.msra.mxu0 %v1205
        %1226 = vmatprep.subr.bf16.mxu0 0
        %1227 = vmatpush1.bf16.msra.mxu0 %v1204
        %1228 = vmatprep.subr.bf16.mxu0 0
        %1229 = vmatpush2.bf16.msra.mxu0 0
        %1230 = vmatprep.subr.bf16.mxu0 0
        %1231 = vmatpush2.bf16.msra.mxu0 0
        %1232 = vmatprep.subr.bf16.mxu0 0
        %1233 = vmatpush2.bf16.msra.mxu0 0
        %1234 = vmatprep.subr.bf16.mxu0 0
        %1235 = vmatpush2.bf16.msra.mxu0 0
        %1236 = vmatprep.subr.bf16.mxu0 0
        %1237 = vmatpush2.bf16.msra.mxu0 0
        %1238 = vmatprep.subr.bf16.mxu0 0
        %1239 = vmatpush2.bf16.msra.mxu0 0
        %1240 = vmatprep.subr.bf16.mxu0 0
        %1241 = vmatpush2.bf16.msra.mxu0 0
        %1242 = vmatprep.subr.bf16.mxu0 0
        %1243 = vmatpush2.bf16.msra.mxu0 0
        %1244 = vmatprep.mubr.bf16.mxu0 0
        %1245 = vmatmul.mubr.bf16.gmra.mxu0 %v1053
        %v1246 = vpop.f32.mrf.mxu0
        %v1247 = vadd.f32 %v1186, %v1246
        %v1248 = vpop.f32.mrf.mxu0
        %v1249 = vpop.f32.mrf.mxu0
        %v1250 = vpop.f32.mrf.mxu0
        %1251 = vdwg.mxu0
        %v1252 = vpack.c.bf16 %v1095, %v1095
        %v1253 = vpack.c.bf16 %v1169, %v1169
        %v1254 = vpack.c.bf16 %v1247, %v1247
        %vm1255 = vcmask 130048
        %v1257 = vsel %vm1255, %v1252, 0
        %v1260 = vsel %vm1255, %v1253, 0
        %1262 = vmatprep.subr.bf16.mxu0 0
        %1263 = vmatpush1.bf16.xpose.msra.mxu0 0
        %1264 = vmatprep.subr.bf16.mxu0 0
        %1265 = vmatpush1.bf16.xpose.msra.mxu0 0
        %1266 = vmatprep.subr.bf16.mxu0 0
        %1267 = vmatpush1.bf16.xpose.msra.mxu0 0
        %1268 = vmatprep.subr.bf16.mxu0 0
        %1269 = vmatpush1.bf16.xpose.msra.mxu0 0
        %1270 = vmatprep.subr.bf16.mxu0 0
        %1271 = vmatpush1.bf16.xpose.msra.mxu0 0
        %1272 = vmatprep.subr.bf16.mxu0 0
        %1273 = vmatpush1.bf16.xpose.msra.mxu0 0
        %1274 = vmatprep.subr.bf16.mxu0 0
        %1275 = vmatpush1.bf16.xpose.msra.mxu0 0
        %1276 = vmatprep.subr.bf16.mxu0 0
        %1277 = vmatpush1.bf16.xpose.msra.mxu0 %v1260
        %1278 = vmatprep.subr.bf16.mxu0 0
        %1279 = vmatpush2.bf16.xpose.msra.mxu0 0
        %1280 = vmatprep.subr.bf16.mxu0 0
        %1281 = vmatpush2.bf16.xpose.msra.mxu0 0
        %1282 = vmatprep.subr.bf16.mxu0 0
        %1283 = vmatpush2.bf16.xpose.msra.mxu0 0
        %1284 = vmatprep.subr.bf16.mxu0 0
        %1285 = vmatpush2.bf16.xpose.msra.mxu0 0
        %1286 = vmatprep.subr.bf16.mxu0 0
        %1287 = vmatpush2.bf16.xpose.msra.mxu0 0
        %1288 = vmatprep.subr.bf16.mxu0 0
        %1289 = vmatpush2.bf16.xpose.msra.mxu0 0
        %1290 = vmatprep.subr.bf16.mxu0 0
        %1291 = vmatpush2.bf16.xpose.msra.mxu0 0
        %1292 = vmatprep.subr.bf16.mxu0 0
        %1293 = vmatpush2.bf16.xpose.msra.mxu0 0
        %1294 = vmatprep.mubr.bf16.mxu0 0
        %1295 = vmatmul.mubr.bf16.gmra.mxu0 %v1257
        %v1296 = vpop.f32.mrf.mxu0
        %v1297 = vadd.f32 %v992, %v1296
        %v1298 = vpop.f32.mrf.mxu0
        %v1299 = vpop.f32.mrf.mxu0
        %v1300 = vpop.f32.mrf.mxu0
        %1301 = vdwg.mxu0
        %vm1302 = vcmask 64512
        %v1303 = vsel %vm1302, %v1297, -inf
        %1304 = vmax.xlane.f32.xlu0 %v1303
        %v1305 = vpop.xlane.xlu0 %1304
        %v1306 = vsub.f32 %v1297, %v1305
        %v1307 = vmul.f32 %v1306, 1.442695
        %v1308 = vpow.pop %v1307
        %v1309 = vsel %vm1302, %v1308, 0.0
        %1310 = vadd.xlane.f32.xlu0 %v1309
        %v1311 = vpop.xlane.xlu0 %1310
        %v1312 = vrcp.pop %v1311
        %v1313 = vmul.f32 %v1308, %v1312
        %v1314 = vpack.c.bf16 %v1313, %v1313
        %v1316 = vsel %vm1302, %v1314, 0
        %vm1318 = vcmask 1043456
        %v1320 = vsel %vm1318, %v1254, 0
        %1322 = vmatprep.subr.bf16.mxu0 0
        %1323 = vmatpush1.bf16.msra.mxu0 0
        %1324 = vmatprep.subr.bf16.mxu0 0
        %1325 = vmatpush1.bf16.msra.mxu0 0
        %1326 = vmatprep.subr.bf16.mxu0 0
        %1327 = vmatpush1.bf16.msra.mxu0 0
        %1328 = vmatprep.subr.bf16.mxu0 0
        %1329 = vmatpush1.bf16.msra.mxu0 0
        %1330 = vmatprep.subr.bf16.mxu0 0
        %1331 = vmatpush1.bf16.msra.mxu0 0
        %1332 = vmatprep.subr.bf16.mxu0 0
        %1333 = vmatpush1.bf16.msra.mxu0 0
        %1334 = vmatprep.subr.bf16.mxu0 0
        %1335 = vmatpush1.bf16.msra.mxu0 0
        %1336 = vmatprep.subr.bf16.mxu0 0
        %1337 = vmatpush1.bf16.msra.mxu0 %v1320
        %1338 = vmatprep.subr.bf16.mxu0 0
        %1339 = vmatpush2.bf16.msra.mxu0 0
        %1340 = vmatprep.subr.bf16.mxu0 0
        %1341 = vmatpush2.bf16.msra.mxu0 0
        %1342 = vmatprep.subr.bf16.mxu0 0
        %1343 = vmatpush2.bf16.msra.mxu0 0
        %1344 = vmatprep.subr.bf16.mxu0 0
        %1345 = vmatpush2.bf16.msra.mxu0 0
        %1346 = vmatprep.subr.bf16.mxu0 0
        %1347 = vmatpush2.bf16.msra.mxu0 0
        %1348 = vmatprep.subr.bf16.mxu0 0
        %1349 = vmatpush2.bf16.msra.mxu0 0
        %1350 = vmatprep.subr.bf16.mxu0 0
        %1351 = vmatpush2.bf16.msra.mxu0 0
        %1352 = vmatprep.subr.bf16.mxu0 0
        %1353 = vmatpush2.bf16.msra.mxu0 0
        %1354 = vmatprep.mubr.bf16.mxu0 0
        %1355 = vmatmul.mubr.bf16.gmra.mxu0 %v1316
        %v1356 = vpop.f32.mrf.mxu0
        %v1357 = vadd.f32 0.0, %v1356
        %v1358 = vpop.f32.mrf.mxu0
        %v1359 = vpop.f32.mrf.mxu0
        %v1360 = vpop.f32.mrf.mxu0
        %1361 = vdwg.mxu0
        %v1362 = vpack.c.bf16 %v1357, %v1357
        %1364 = vrot.lane.b32.xlu0 %v1252, 112
        %v1365 = vpop.permute.xlu0 %1364
        %1367 = vrot.lane.b32.xlu0 %v1253, 112
        %v1368 = vpop.permute.xlu0 %1367
        %v1370 = vsel %vm1255, %v1365, 0
        %v1373 = vsel %vm1255, %v1368, 0
        %1375 = vmatprep.subr.bf16.mxu0 0
        %1376 = vmatpush1.bf16.xpose.msra.mxu0 0
        %1377 = vmatprep.subr.bf16.mxu0 0
        %1378 = vmatpush1.bf16.xpose.msra.mxu0 0
        %1379 = vmatprep.subr.bf16.mxu0 0
        %1380 = vmatpush1.bf16.xpose.msra.mxu0 0
        %1381 = vmatprep.subr.bf16.mxu0 0
        %1382 = vmatpush1.bf16.xpose.msra.mxu0 0
        %1383 = vmatprep.subr.bf16.mxu0 0
        %1384 = vmatpush1.bf16.xpose.msra.mxu0 0
        %1385 = vmatprep.subr.bf16.mxu0 0
        %1386 = vmatpush1.bf16.xpose.msra.mxu0 0
        %1387 = vmatprep.subr.bf16.mxu0 0
        %1388 = vmatpush1.bf16.xpose.msra.mxu0 0
        %1389 = vmatprep.subr.bf16.mxu0 0
        %1390 = vmatpush1.bf16.xpose.msra.mxu0 %v1373
        %1391 = vmatprep.subr.bf16.mxu0 0
        %1392 = vmatpush2.bf16.xpose.msra.mxu0 0
        %1393 = vmatprep.subr.bf16.mxu0 0
        %1394 = vmatpush2.bf16.xpose.msra.mxu0 0
        %1395 = vmatprep.subr.bf16.mxu0 0
        %1396 = vmatpush2.bf16.xpose.msra.mxu0 0
        %1397 = vmatprep.subr.bf16.mxu0 0
        %1398 = vmatpush2.bf16.xpose.msra.mxu0 0
        %1399 = vmatprep.subr.bf16.mxu0 0
        %1400 = vmatpush2.bf16.xpose.msra.mxu0 0
        %1401 = vmatprep.subr.bf16.mxu0 0
        %1402 = vmatpush2.bf16.xpose.msra.mxu0 0
        %1403 = vmatprep.subr.bf16.mxu0 0
        %1404 = vmatpush2.bf16.xpose.msra.mxu0 0
        %1405 = vmatprep.subr.bf16.mxu0 0
        %1406 = vmatpush2.bf16.xpose.msra.mxu0 0
        %1407 = vmatprep.mubr.bf16.mxu0 0
        %1408 = vmatmul.mubr.bf16.gmra.mxu0 %v1370
        %v1409 = vpop.f32.mrf.mxu0
        %v1410 = vadd.f32 %v992, %v1409
        %v1411 = vpop.f32.mrf.mxu0
        %v1412 = vpop.f32.mrf.mxu0
        %v1413 = vpop.f32.mrf.mxu0
        %1414 = vdwg.mxu0
        %v1415 = vsel %vm1302, %v1410, -inf
        %1416 = vmax.xlane.f32.xlu0 %v1415
        %v1417 = vpop.xlane.xlu0 %1416
        %v1418 = vsub.f32 %v1410, %v1417
        %v1419 = vmul.f32 %v1418, 1.442695
        %v1420 = vpow.pop %v1419
        %v1421 = vsel %vm1302, %v1420, 0.0
        %1422 = vadd.xlane.f32.xlu0 %v1421
        %v1423 = vpop.xlane.xlu0 %1422
        %v1424 = vrcp.pop %v1423
        %v1425 = vmul.f32 %v1420, %v1424
        %v1426 = vpack.c.bf16 %v1425, %v1425
        %1428 = vrot.lane.b32.xlu0 %v1254, 112
        %v1429 = vpop.permute.xlu0 %1428
        %v1431 = vsel %vm1302, %v1426, 0
        %v1434 = vsel %vm1318, %v1429, 0
        %1436 = vmatprep.subr.bf16.mxu0 0
        %1437 = vmatpush1.bf16.msra.mxu0 0
        %1438 = vmatprep.subr.bf16.mxu0 0
        %1439 = vmatpush1.bf16.msra.mxu0 0
        %1440 = vmatprep.subr.bf16.mxu0 0
        %1441 = vmatpush1.bf16.msra.mxu0 0
        %1442 = vmatprep.subr.bf16.mxu0 0
        %1443 = vmatpush1.bf16.msra.mxu0 0
        %1444 = vmatprep.subr.bf16.mxu0 0
        %1445 = vmatpush1.bf16.msra.mxu0 0
        %1446 = vmatprep.subr.bf16.mxu0 0
        %1447 = vmatpush1.bf16.msra.mxu0 0
        %1448 = vmatprep.subr.bf16.mxu0 0
        %1449 = vmatpush1.bf16.msra.mxu0 0
        %1450 = vmatprep.subr.bf16.mxu0 0
        %1451 = vmatpush1.bf16.msra.mxu0 %v1434
        %1452 = vmatprep.subr.bf16.mxu0 0
        %1453 = vmatpush2.bf16.msra.mxu0 0
        %1454 = vmatprep.subr.bf16.mxu0 0
        %1455 = vmatpush2.bf16.msra.mxu0 0
        %1456 = vmatprep.subr.bf16.mxu0 0
        %1457 = vmatpush2.bf16.msra.mxu0 0
        %1458 = vmatprep.subr.bf16.mxu0 0
        %1459 = vmatpush2.bf16.msra.mxu0 0
        %1460 = vmatprep.subr.bf16.mxu0 0
        %1461 = vmatpush2.bf16.msra.mxu0 0
        %1462 = vmatprep.subr.bf16.mxu0 0
        %1463 = vmatpush2.bf16.msra.mxu0 0
        %1464 = vmatprep.subr.bf16.mxu0 0
        %1465 = vmatpush2.bf16.msra.mxu0 0
        %1466 = vmatprep.subr.bf16.mxu0 0
        %1467 = vmatpush2.bf16.msra.mxu0 0
        %1468 = vmatprep.mubr.bf16.mxu0 0
        %1469 = vmatmul.mubr.bf16.gmra.mxu0 %v1431
        %v1470 = vpop.f32.mrf.mxu0
        %v1471 = vadd.f32 0.0, %v1470
        %v1472 = vpop.f32.mrf.mxu0
        %v1473 = vpop.f32.mrf.mxu0
        %v1474 = vpop.f32.mrf.mxu0
        %1475 = vdwg.mxu0
        %v1476 = vpack.c.bf16 %v1471, %v1471
        %1477 = vrot.lane.b32.xlu0 %v1252, 96
        %v1478 = vpop.permute.xlu0 %1477
        %1479 = vrot.lane.b32.xlu0 %v1253, 96
        %v1480 = vpop.permute.xlu0 %1479
        %v1482 = vsel %vm1255, %v1478, 0
        %v1485 = vsel %vm1255, %v1480, 0
        %1487 = vmatprep.subr.bf16.mxu0 0
        %1488 = vmatpush1.bf16.xpose.msra.mxu0 0
        %1489 = vmatprep.subr.bf16.mxu0 0
        %1490 = vmatpush1.bf16.xpose.msra.mxu0 0
        %1491 = vmatprep.subr.bf16.mxu0 0
        %1492 = vmatpush1.bf16.xpose.msra.mxu0 0
        %1493 = vmatprep.subr.bf16.mxu0 0
        %1494 = vmatpush1.bf16.xpose.msra.mxu0 0
        %1495 = vmatprep.subr.bf16.mxu0 0
        %1496 = vmatpush1.bf16.xpose.msra.mxu0 0
        %1497 = vmatprep.subr.bf16.mxu0 0
        %1498 = vmatpush1.bf16.xpose.msra.mxu0 0
        %1499 = vmatprep.subr.bf16.mxu0 0
        %1500 = vmatpush1.bf16.xpose.msra.mxu0 0
        %1501 = vmatprep.subr.bf16.mxu0 0
        %1502 = vmatpush1.bf16.xpose.msra.mxu0 %v1485
        %1503 = vmatprep.subr.bf16.mxu0 0
        %1504 = vmatpush2.bf16.xpose.msra.mxu0 0
        %1505 = vmatprep.subr.bf16.mxu0 0
        %1506 = vmatpush2.bf16.xpose.msra.mxu0 0
        %1507 = vmatprep.subr.bf16.mxu0 0
        %1508 = vmatpush2.bf16.xpose.msra.mxu0 0
        %1509 = vmatprep.subr.bf16.mxu0 0
        %1510 = vmatpush2.bf16.xpose.msra.mxu0 0
        %1511 = vmatprep.subr.bf16.mxu0 0
        %1512 = vmatpush2.bf16.xpose.msra.mxu0 0
        %1513 = vmatprep.subr.bf16.mxu0 0
        %1514 = vmatpush2.bf16.xpose.msra.mxu0 0
        %1515 = vmatprep.subr.bf16.mxu0 0
        %1516 = vmatpush2.bf16.xpose.msra.mxu0 0
        %1517 = vmatprep.subr.bf16.mxu0 0
        %1518 = vmatpush2.bf16.xpose.msra.mxu0 0
        %1519 = vmatprep.mubr.bf16.mxu0 0
        %1520 = vmatmul.mubr.bf16.gmra.mxu0 %v1482
        %v1521 = vpop.f32.mrf.mxu0
        %v1522 = vadd.f32 %v992, %v1521
        %v1523 = vpop.f32.mrf.mxu0
        %v1524 = vpop.f32.mrf.mxu0
        %v1525 = vpop.f32.mrf.mxu0
        %1526 = vdwg.mxu0
        %v1527 = vsel %vm1302, %v1522, -inf
        %1528 = vmax.xlane.f32.xlu0 %v1527
        %v1529 = vpop.xlane.xlu0 %1528
        %v1530 = vsub.f32 %v1522, %v1529
        %v1531 = vmul.f32 %v1530, 1.442695
        %v1532 = vpow.pop %v1531
        %v1533 = vsel %vm1302, %v1532, 0.0
        %1534 = vadd.xlane.f32.xlu0 %v1533
        %v1535 = vpop.xlane.xlu0 %1534
        %v1536 = vrcp.pop %v1535
        %v1537 = vmul.f32 %v1532, %v1536
        %v1538 = vpack.c.bf16 %v1537, %v1537
        %1539 = vrot.lane.b32.xlu0 %v1254, 96
        %v1540 = vpop.permute.xlu0 %1539
        %v1542 = vsel %vm1302, %v1538, 0
        %v1545 = vsel %vm1318, %v1540, 0
        %1547 = vmatprep.subr.bf16.mxu0 0
        %1548 = vmatpush1.bf16.msra.mxu0 0
        %1549 = vmatprep.subr.bf16.mxu0 0
        %1550 = vmatpush1.bf16.msra.mxu0 0
        %1551 = vmatprep.subr.bf16.mxu0 0
        %1552 = vmatpush1.bf16.msra.mxu0 0
        %1553 = vmatprep.subr.bf16.mxu0 0
        %1554 = vmatpush1.bf16.msra.mxu0 0
        %1555 = vmatprep.subr.bf16.mxu0 0
        %1556 = vmatpush1.bf16.msra.mxu0 0
        %1557 = vmatprep.subr.bf16.mxu0 0
        %1558 = vmatpush1.bf16.msra.mxu0 0
        %1559 = vmatprep.subr.bf16.mxu0 0
        %1560 = vmatpush1.bf16.msra.mxu0 0
        %1561 = vmatprep.subr.bf16.mxu0 0
        %1562 = vmatpush1.bf16.msra.mxu0 %v1545
        %1563 = vmatprep.subr.bf16.mxu0 0
        %1564 = vmatpush2.bf16.msra.mxu0 0
        %1565 = vmatprep.subr.bf16.mxu0 0
        %1566 = vmatpush2.bf16.msra.mxu0 0
        %1567 = vmatprep.subr.bf16.mxu0 0
        %1568 = vmatpush2.bf16.msra.mxu0 0
        %1569 = vmatprep.subr.bf16.mxu0 0
        %1570 = vmatpush2.bf16.msra.mxu0 0
        %1571 = vmatprep.subr.bf16.mxu0 0
        %1572 = vmatpush2.bf16.msra.mxu0 0
        %1573 = vmatprep.subr.bf16.mxu0 0
        %1574 = vmatpush2.bf16.msra.mxu0 0
        %1575 = vmatprep.subr.bf16.mxu0 0
        %1576 = vmatpush2.bf16.msra.mxu0 0
        %1577 = vmatprep.subr.bf16.mxu0 0
        %1578 = vmatpush2.bf16.msra.mxu0 0
        %1579 = vmatprep.mubr.bf16.mxu0 0
        %1580 = vmatmul.mubr.bf16.gmra.mxu0 %v1542
        %v1581 = vpop.f32.mrf.mxu0
        %v1582 = vadd.f32 0.0, %v1581
        %v1583 = vpop.f32.mrf.mxu0
        %v1584 = vpop.f32.mrf.mxu0
        %v1585 = vpop.f32.mrf.mxu0
        %1586 = vdwg.mxu0
        %v1587 = vpack.c.bf16 %v1582, %v1582
        %1588 = vrot.lane.b32.xlu0 %v1252, 80
        %v1589 = vpop.permute.xlu0 %1588
        %1590 = vrot.lane.b32.xlu0 %v1253, 80
        %v1591 = vpop.permute.xlu0 %1590
        %v1593 = vsel %vm1255, %v1589, 0
        %v1596 = vsel %vm1255, %v1591, 0
        %1598 = vmatprep.subr.bf16.mxu0 0
        %1599 = vmatpush1.bf16.xpose.msra.mxu0 0
        %1600 = vmatprep.subr.bf16.mxu0 0
        %1601 = vmatpush1.bf16.xpose.msra.mxu0 0
        %1602 = vmatprep.subr.bf16.mxu0 0
        %1603 = vmatpush1.bf16.xpose.msra.mxu0 0
        %1604 = vmatprep.subr.bf16.mxu0 0
        %1605 = vmatpush1.bf16.xpose.msra.mxu0 0
        %1606 = vmatprep.subr.bf16.mxu0 0
        %1607 = vmatpush1.bf16.xpose.msra.mxu0 0
        %1608 = vmatprep.subr.bf16.mxu0 0
        %1609 = vmatpush1.bf16.xpose.msra.mxu0 0
        %1610 = vmatprep.subr.bf16.mxu0 0
        %1611 = vmatpush1.bf16.xpose.msra.mxu0 0
        %1612 = vmatprep.subr.bf16.mxu0 0
        %1613 = vmatpush1.bf16.xpose.msra.mxu0 %v1596
        %1614 = vmatprep.subr.bf16.mxu0 0
        %1615 = vmatpush2.bf16.xpose.msra.mxu0 0
        %1616 = vmatprep.subr.bf16.mxu0 0
        %1617 = vmatpush2.bf16.xpose.msra.mxu0 0
        %1618 = vmatprep.subr.bf16.mxu0 0
        %1619 = vmatpush2.bf16.xpose.msra.mxu0 0
        %1620 = vmatprep.subr.bf16.mxu0 0
        %1621 = vmatpush2.bf16.xpose.msra.mxu0 0
        %1622 = vmatprep.subr.bf16.mxu0 0
        %1623 = vmatpush2.bf16.xpose.msra.mxu0 0
        %1624 = vmatprep.subr.bf16.mxu0 0
        %1625 = vmatpush2.bf16.xpose.msra.mxu0 0
        %1626 = vmatprep.subr.bf16.mxu0 0
        %1627 = vmatpush2.bf16.xpose.msra.mxu0 0
        %1628 = vmatprep.subr.bf16.mxu0 0
        %1629 = vmatpush2.bf16.xpose.msra.mxu0 0
        %1630 = vmatprep.mubr.bf16.mxu0 0
        %1631 = vmatmul.mubr.bf16.gmra.mxu0 %v1593
        %v1632 = vpop.f32.mrf.mxu0
        %v1633 = vadd.f32 %v992, %v1632
        %v1634 = vpop.f32.mrf.mxu0
        %v1635 = vpop.f32.mrf.mxu0
        %v1636 = vpop.f32.mrf.mxu0
        %1637 = vdwg.mxu0
        %v1638 = vsel %vm1302, %v1633, -inf
        %1639 = vmax.xlane.f32.xlu0 %v1638
        %v1640 = vpop.xlane.xlu0 %1639
        %v1641 = vsub.f32 %v1633, %v1640
        %v1642 = vmul.f32 %v1641, 1.442695
        %v1643 = vpow.pop %v1642
        %v1644 = vsel %vm1302, %v1643, 0.0
        %1645 = vadd.xlane.f32.xlu0 %v1644
        %v1646 = vpop.xlane.xlu0 %1645
        %v1647 = vrcp.pop %v1646
        %v1648 = vmul.f32 %v1643, %v1647
        %v1649 = vpack.c.bf16 %v1648, %v1648
        %1650 = vrot.lane.b32.xlu0 %v1254, 80
        %v1651 = vpop.permute.xlu0 %1650
        %v1653 = vsel %vm1302, %v1649, 0
        %v1656 = vsel %vm1318, %v1651, 0
        %1658 = vmatprep.subr.bf16.mxu0 0
        %1659 = vmatpush1.bf16.msra.mxu0 0
        %1660 = vmatprep.subr.bf16.mxu0 0
        %1661 = vmatpush1.bf16.msra.mxu0 0
        %1662 = vmatprep.subr.bf16.mxu0 0
        %1663 = vmatpush1.bf16.msra.mxu0 0
        %1664 = vmatprep.subr.bf16.mxu0 0
        %1665 = vmatpush1.bf16.msra.mxu0 0
        %1666 = vmatprep.subr.bf16.mxu0 0
        %1667 = vmatpush1.bf16.msra.mxu0 0
        %1668 = vmatprep.subr.bf16.mxu0 0
        %1669 = vmatpush1.bf16.msra.mxu0 0
        %1670 = vmatprep.subr.bf16.mxu0 0
        %1671 = vmatpush1.bf16.msra.mxu0 0
        %1672 = vmatprep.subr.bf16.mxu0 0
        %1673 = vmatpush1.bf16.msra.mxu0 %v1656
        %1674 = vmatprep.subr.bf16.mxu0 0
        %1675 = vmatpush2.bf16.msra.mxu0 0
        %1676 = vmatprep.subr.bf16.mxu0 0
        %1677 = vmatpush2.bf16.msra.mxu0 0
        %1678 = vmatprep.subr.bf16.mxu0 0
        %1679 = vmatpush2.bf16.msra.mxu0 0
        %1680 = vmatprep.subr.bf16.mxu0 0
        %1681 = vmatpush2.bf16.msra.mxu0 0
        %1682 = vmatprep.subr.bf16.mxu0 0
        %1683 = vmatpush2.bf16.msra.mxu0 0
        %1684 = vmatprep.subr.bf16.mxu0 0
        %1685 = vmatpush2.bf16.msra.mxu0 0
        %1686 = vmatprep.subr.bf16.mxu0 0
        %1687 = vmatpush2.bf16.msra.mxu0 0
        %1688 = vmatprep.subr.bf16.mxu0 0
        %1689 = vmatpush2.bf16.msra.mxu0 0
        %1690 = vmatprep.mubr.bf16.mxu0 0
        %1691 = vmatmul.mubr.bf16.gmra.mxu0 %v1653
        %v1692 = vpop.f32.mrf.mxu0
        %v1693 = vadd.f32 0.0, %v1692
        %v1694 = vpop.f32.mrf.mxu0
        %v1695 = vpop.f32.mrf.mxu0
        %v1696 = vpop.f32.mrf.mxu0
        %1697 = vdwg.mxu0
        %v1698 = vpack.c.bf16 %v1693, %v1693
        %1700 = vrot.lane.b32.xlu0 %v1476, 16
        %v1701 = vpop.permute.xlu0 %1700
        %1703 = vrot.lane.b32.xlu0 %v1587, 32
        %v1704 = vpop.permute.xlu0 %1703
        %1706 = vrot.lane.b32.xlu0 %v1698, 48
        %v1707 = vpop.permute.xlu0 %1706
        %v1710 = vsel %vm1255, %v1362, %v1701
        %vm1711 = vcmask 261120
        %v1713 = vsel %vm1711, %v1710, %v1704
        %vm1714 = vcmask 392192
        %v1716 = vsel %vm1714, %v1713, %v1707
        %v1717 = vld [vmem:[#allocation11] sm:$0xf]
        %v1718 = vld [vmem:[#allocation11 + $0x4] sm:$0xf]
        %v1719 = vld [vmem:[#allocation11 + $0x8] sm:$0xf]
        %v1720 = vld [vmem:[#allocation11 + $0xc] sm:$0xf]
        %v1721 = vld [vmem:[#allocation11 + $0x10] sm:$0xf]
        %v1722 = vld [vmem:[#allocation11 + $0x14] sm:$0xf]
        %v1723 = vld [vmem:[#allocation11 + $0x18] sm:$0xf]
        %v1724 = vld [vmem:[#allocation11 + $0x1c] sm:$0xf]
        %v1726 = vlaneseq
        %v1727 = vshrl.u32 %v1726, 7
        %v1728 = vsub.s32 0, %v1727
        %v1729 = vrot.slane %v997, %v1728
        %v1739 = vunpack.c.l.b16 %v1717
        %v1740 = vunpack.c.l.b16 %v1718
        %v1741 = vunpack.c.l.b16 %v1719
        %v1742 = vunpack.c.l.b16 %v1720
        %v1743 = vunpack.c.l.b16 %v1721
        %v1744 = vunpack.c.l.b16 %v1722
        %v1745 = vunpack.c.l.b16 %v1723
        %v1746 = vunpack.c.l.b16 %v1724
        %v1747 = vpack.c.b16 %v1740, %v1739
        %v1748 = vpack.c.b16 %v1742, %v1741
        %v1749 = vpack.c.b16 %v1744, %v1743
        %v1750 = vpack.c.b16 %v1746, %v1745
        %v1755 = vsel %vm1051, %v1716, 0
        %1757 = vmatprep.subr.bf16.mxu0 0
        %1758 = vmatpush1.bf16.msra.mxu0 0
        %1759 = vmatprep.subr.bf16.mxu0 0
        %1760 = vmatpush1.bf16.msra.mxu0 0
        %1761 = vmatprep.subr.bf16.mxu0 0
        %1762 = vmatpush1.bf16.msra.mxu0 0
        %1763 = vmatprep.subr.bf16.mxu0 0
        %1764 = vmatpush1.bf16.msra.mxu0 0
        %1765 = vmatprep.subr.bf16.mxu0 0
        %1766 = vmatpush1.bf16.msra.mxu0 %v1750
        %1767 = vmatprep.subr.bf16.mxu0 0
        %1768 = vmatpush1.bf16.msra.mxu0 %v1749
        %1769 = vmatprep.subr.bf16.mxu0 0
        %1770 = vmatpush1.bf16.msra.mxu0 %v1748
        %1771 = vmatprep.subr.bf16.mxu0 0
        %1772 = vmatpush1.bf16.msra.mxu0 %v1747
        %1773 = vmatprep.subr.bf16.mxu0 0
        %1774 = vmatpush2.bf16.msra.mxu0 0
        %1775 = vmatprep.subr.bf16.mxu0 0
        %1776 = vmatpush2.bf16.msra.mxu0 0
        %1777 = vmatprep.subr.bf16.mxu0 0
        %1778 = vmatpush2.bf16.msra.mxu0 0
        %1779 = vmatprep.subr.bf16.mxu0 0
        %1780 = vmatpush2.bf16.msra.mxu0 0
        %1781 = vmatprep.subr.bf16.mxu0 0
        %1782 = vmatpush2.bf16.msra.mxu0 0
        %1783 = vmatprep.subr.bf16.mxu0 0
        %1784 = vmatpush2.bf16.msra.mxu0 0
        %1785 = vmatprep.subr.bf16.mxu0 0
        %1786 = vmatpush2.bf16.msra.mxu0 0
        %1787 = vmatprep.subr.bf16.mxu0 0
        %1788 = vmatpush2.bf16.msra.mxu0 0
        %1789 = vmatprep.mubr.bf16.mxu0 0
        %1790 = vmatmul.mubr.bf16.gmra.mxu0 %v1755
        %v1791 = vpop.f32.mrf.mxu0
        %v1792 = vadd.f32 %v1729, %v1791
        %v1793 = vpop.f32.mrf.mxu0
        %v1794 = vpop.f32.mrf.mxu0
        %v1795 = vpop.f32.mrf.mxu0
        %1796 = vdwg.mxu0
        %v1797 = vadd.f32 %v1011, %v1792
        %v1798 = vsel %vm1051, %v1797, 0.0
        %1799 = vadd.xlane.f32.xlu0 %v1798
        %v1800 = vpop.xlane.xlu0 %1799
        %v1801 = vrcp.pop 64.0
        %v1802 = vmul.f32 %v1800, %v1801
        %v1803 = vsub.f32 %v1797, %v1802
        %v1804 = vmul.f32 %v1803, %v1803
        %v1805 = vsel %vm1051, %v1804, 0.0
        %1806 = vadd.xlane.f32.xlu0 %v1805
        %v1807 = vpop.xlane.xlu0 %1806
        %v1808 = vmul.f32 %v1807, %v1801
        %v1809 = vadd.f32 %v1808, 1e-05
        %v1810 = vrsqrt.pop %v1809
        %v1811 = vmul.f32 %v1803, %v1810
        %v1813 = vlaneseq
        %v1814 = vshrl.u32 %v1813, 7
        %v1815 = vsub.s32 0, %v1814
        %v1816 = vrot.slane %v1000, %v1815
        %v1818 = vmul.f32 %v1811, %v1816
        %v1820 = vlaneseq
        %v1821 = vshrl.u32 %v1820, 7
        %v1822 = vsub.s32 0, %v1821
        %v1823 = vrot.slane %v1001, %v1822
        %v1825 = vadd.f32 %v1818, %v1823
        %v1826 = vpack.c.bf16 %v1825, %v1825
        %v1827 = vld [vmem:[#allocation22] sm:$0xf]
        %v1828 = vld [vmem:[#allocation22 + $0x4] sm:$0xf]
        %v1829 = vld [vmem:[#allocation22 + $0x8] sm:$0xf]
        %v1830 = vld [vmem:[#allocation22 + $0xc] sm:$0xf]
        %v1831 = vld [vmem:[#allocation22 + $0x10] sm:$0xf]
        %v1832 = vld [vmem:[#allocation22 + $0x14] sm:$0xf]
        %v1833 = vld [vmem:[#allocation22 + $0x18] sm:$0xf]
        %v1834 = vld [vmem:[#allocation22 + $0x1c] sm:$0xf]
        %v1836 = vlaneseq
        %v1837 = vshrl.u32 %v1836, 7
        %v1838 = vsub.s32 0, %v1837
        %v1839 = vrot.slane %v998, %v1838
        %v1849 = vunpack.c.l.b16 %v1827
        %v1850 = vunpack.c.l.b16 %v1828
        %v1851 = vunpack.c.l.b16 %v1829
        %v1852 = vunpack.c.l.b16 %v1830
        %v1853 = vunpack.c.l.b16 %v1831
        %v1854 = vunpack.c.l.b16 %v1832
        %v1855 = vunpack.c.l.b16 %v1833
        %v1856 = vunpack.c.l.b16 %v1834
        %v1857 = vpack.c.b16 %v1850, %v1849
        %v1858 = vpack.c.b16 %v1852, %v1851
        %v1859 = vpack.c.b16 %v1854, %v1853
        %v1860 = vpack.c.b16 %v1856, %v1855
        %v1866 = vsel %vm1051, %v1826, 0
        %1868 = vmatprep.subr.bf16.mxu0 0
        %1869 = vmatpush1.bf16.msra.mxu0 0
        %1870 = vmatprep.subr.bf16.mxu0 0
        %1871 = vmatpush1.bf16.msra.mxu0 0
        %1872 = vmatprep.subr.bf16.mxu0 0
        %1873 = vmatpush1.bf16.msra.mxu0 0
        %1874 = vmatprep.subr.bf16.mxu0 0
        %1875 = vmatpush1.bf16.msra.mxu0 0
        %1876 = vmatprep.subr.bf16.mxu0 0
        %1877 = vmatpush1.bf16.msra.mxu0 %v1860
        %1878 = vmatprep.subr.bf16.mxu0 0
        %1879 = vmatpush1.bf16.msra.mxu0 %v1859
        %1880 = vmatprep.subr.bf16.mxu0 0
        %1881 = vmatpush1.bf16.msra.mxu0 %v1858
        %1882 = vmatprep.subr.bf16.mxu0 0
        %1883 = vmatpush1.bf16.msra.mxu0 %v1857
        %1884 = vmatprep.subr.bf16.mxu0 0
        %1885 = vmatpush2.bf16.msra.mxu0 0
        %1886 = vmatprep.subr.bf16.mxu0 0
        %1887 = vmatpush2.bf16.msra.mxu0 0
        %1888 = vmatprep.subr.bf16.mxu0 0
        %1889 = vmatpush2.bf16.msra.mxu0 0
        %1890 = vmatprep.subr.bf16.mxu0 0
        %1891 = vmatpush2.bf16.msra.mxu0 0
        %1892 = vmatprep.subr.bf16.mxu0 0
        %1893 = vmatpush2.bf16.msra.mxu0 0
        %1894 = vmatprep.subr.bf16.mxu0 0
        %1895 = vmatpush2.bf16.msra.mxu0 0
        %1896 = vmatprep.subr.bf16.mxu0 0
        %1897 = vmatpush2.bf16.msra.mxu0 0
        %1898 = vmatprep.subr.bf16.mxu0 0
        %1899 = vmatpush2.bf16.msra.mxu0 0
        %1900 = vmatprep.mubr.bf16.mxu0 0
        %1901 = vmatmul.mubr.bf16.gmra.mxu0 %v1866
        %v1902 = vpop.f32.mrf.mxu0
        %v1903 = vadd.f32 %v1839, %v1902
        %v1904 = vpop.f32.mrf.mxu0
        %v1905 = vpop.f32.mrf.mxu0
        %v1906 = vpop.f32.mrf.mxu0
        %1907 = vdwg.mxu0
        %v1908 = vmax.f32 %v1903, 0.0
        %v1909 = vpack.c.bf16 %v1908, %v1908
        %v1910 = vld [vmem:[#allocation25] sm:$0xf]
        %v1911 = vld [vmem:[#allocation25 + $0x4] sm:$0xf]
        %v1912 = vld [vmem:[#allocation25 + $0x8] sm:$0xf]
        %v1913 = vld [vmem:[#allocation25 + $0xc] sm:$0xf]
        %v1914 = vld [vmem:[#allocation25 + $0x10] sm:$0xf]
        %v1915 = vld [vmem:[#allocation25 + $0x14] sm:$0xf]
        %v1916 = vld [vmem:[#allocation25 + $0x18] sm:$0xf]
        %v1917 = vld [vmem:[#allocation25 + $0x1c] sm:$0xf]
        %v1919 = vlaneseq
        %v1920 = vshrl.u32 %v1919, 7
        %v1921 = vsub.s32 0, %v1920
        %v1922 = vrot.slane %v999, %v1921
        %v1932 = vunpack.c.l.b16 %v1910
        %v1933 = vunpack.c.l.b16 %v1911
        %v1934 = vunpack.c.l.b16 %v1912
        %v1935 = vunpack.c.l.b16 %v1913
        %v1936 = vunpack.c.l.b16 %v1914
        %v1937 = vunpack.c.l.b16 %v1915
        %v1938 = vunpack.c.l.b16 %v1916
        %v1939 = vunpack.c.l.b16 %v1917
        %v1940 = vpack.c.b16 %v1933, %v1932
        %v1941 = vpack.c.b16 %v1935, %v1934
        %v1942 = vpack.c.b16 %v1937, %v1936
        %v1943 = vpack.c.b16 %v1939, %v1938
        %v1949 = vsel %vm1051, %v1909, 0
        %1951 = vmatprep.subr.bf16.mxu0 0
        %1952 = vmatpush1.bf16.msra.mxu0 0
        %1953 = vmatprep.subr.bf16.mxu0 0
        %1954 = vmatpush1.bf16.msra.mxu0 0
        %1955 = vmatprep.subr.bf16.mxu0 0
        %1956 = vmatpush1.bf16.msra.mxu0 0
        %1957 = vmatprep.subr.bf16.mxu0 0
        %1958 = vmatpush1.bf16.msra.mxu0 0
        %1959 = vmatprep.subr.bf16.mxu0 0
        %1960 = vmatpush1.bf16.msra.mxu0 %v1943
        %1961 = vmatprep.subr.bf16.mxu0 0
        %1962 = vmatpush1.bf16.msra.mxu0 %v1942
        %1963 = vmatprep.subr.bf16.mxu0 0
        %1964 = vmatpush1.bf16.msra.mxu0 %v1941
        %1965 = vmatprep.subr.bf16.mxu0 0
        %1966 = vmatpush1.bf16.msra.mxu0 %v1940
        %1967 = vmatprep.subr.bf16.mxu0 0
        %1968 = vmatpush2.bf16.msra.mxu0 0
        %1969 = vmatprep.subr.bf16.mxu0 0
        %1970 = vmatpush2.bf16.msra.mxu0 0
        %1971 = vmatprep.subr.bf16.mxu0 0
        %1972 = vmatpush2.bf16.msra.mxu0 0
        %1973 = vmatprep.subr.bf16.mxu0 0
        %1974 = vmatpush2.bf16.msra.mxu0 0
        %1975 = vmatprep.subr.bf16.mxu0 0
        %1976 = vmatpush2.bf16.msra.mxu0 0
        %1977 = vmatprep.subr.bf16.mxu0 0
        %1978 = vmatpush2.bf16.msra.mxu0 0
        %1979 = vmatprep.subr.bf16.mxu0 0
        %1980 = vmatpush2.bf16.msra.mxu0 0
        %1981 = vmatprep.subr.bf16.mxu0 0
        %1982 = vmatpush2.bf16.msra.mxu0 0
        %1983 = vmatprep.mubr.bf16.mxu0 0
        %1984 = vmatmul.mubr.bf16.gmra.mxu0 %v1949
        %v1985 = vpop.f32.mrf.mxu0
        %v1986 = vadd.f32 %v1922, %v1985
        %v1987 = vpop.f32.mrf.mxu0
        %v1988 = vpop.f32.mrf.mxu0
        %v1989 = vpop.f32.mrf.mxu0
        %1990 = vdwg.mxu0
        %v1991 = vadd.f32 %v1825, %v1986
        %v1992 = vsel %vm1051, %v1991, 0.0
        %1993 = vadd.xlane.f32.xlu0 %v1992
        %v1994 = vpop.xlane.xlu0 %1993
        %v1995 = vmul.f32 %v1994, %v1801
        %v1996 = vsub.f32 %v1991, %v1995
        %v1997 = vmul.f32 %v1996, %v1996
        %v1998 = vsel %vm1051, %v1997, 0.0
        %1999 = vadd.xlane.f32.xlu0 %v1998
        %v2000 = vpop.xlane.xlu0 %1999
        %v2001 = vmul.f32 %v2000, %v1801
        %v2002 = vadd.f32 %v2001, 1e-05
        %v2003 = vrsqrt.pop %v2002
        %v2004 = vmul.f32 %v1996, %v2003
        %v2006 = vlaneseq
        %v2007 = vshrl.u32 %v2006, 7
        %v2008 = vsub.s32 0, %v2007
        %v2009 = vrot.slane %v1002, %v2008
        %v2011 = vmul.f32 %v2004, %v2009
        %v2013 = vlaneseq
        %v2014 = vshrl.u32 %v2013, 7
        %v2015 = vsub.s32 0, %v2014
        %v2016 = vrot.slane %v1003, %v2015
        %v2018 = vadd.f32 %v2011, %v2016
        %v2019 = vld [vmem:[%s2 + $0x1] sm:$0x1]
        %v2020 = vlaneseq
        %v2021 = vshrl.u32 %v2020, 7
        %v2022 = vsub.s32 0, %v2021
        %v2023 = vrot.slane %v2019, %v2022
        %v2024 = vadd.f32 %v2018, %v2023
        %v2025 = vpack.c.bf16 %v2024, %v2024
        %v2026 = vld [vmem:[#allocation7] sm:$0xf]
        %v2027 = vld [vmem:[#allocation7 + $0x4] sm:$0xf]
        %v2028 = vld [vmem:[#allocation7 + $0x8] sm:$0xf]
        %v2029 = vld [vmem:[#allocation7 + $0xc] sm:$0xf]
        %v2030 = vld [vmem:[#allocation7 + $0x10] sm:$0xf]
        %v2031 = vld [vmem:[#allocation7 + $0x14] sm:$0xf]
        %v2032 = vld [vmem:[#allocation7 + $0x18] sm:$0xf]
        %v2033 = vld [vmem:[#allocation7 + $0x1c] sm:$0xf]
        %v2042 = vunpack.c.l.b16 %v2026
        %v2043 = vunpack.c.l.b16 %v2027
        %v2044 = vunpack.c.l.b16 %v2028
        %v2045 = vunpack.c.l.b16 %v2029
        %v2046 = vunpack.c.l.b16 %v2030
        %v2047 = vunpack.c.l.b16 %v2031
        %v2048 = vunpack.c.l.b16 %v2032
        %v2049 = vunpack.c.l.b16 %v2033
        %v2050 = vpack.c.b16 %v2043, %v2042
        %v2051 = vpack.c.b16 %v2045, %v2044
        %v2052 = vpack.c.b16 %v2047, %v2046
        %v2053 = vpack.c.b16 %v2049, %v2048
        %v2059 = vsel %vm1051, %v2025, 0
        %2061 = vmatprep.subr.bf16.mxu0 0
        %2062 = vmatpush1.bf16.msra.mxu0 0
        %2063 = vmatprep.subr.bf16.mxu0 0
        %2064 = vmatpush1.bf16.msra.mxu0 0
        %2065 = vmatprep.subr.bf16.mxu0 0
        %2066 = vmatpush1.bf16.msra.mxu0 0
        %2067 = vmatprep.subr.bf16.mxu0 0
        %2068 = vmatpush1.bf16.msra.mxu0 0
        %2069 = vmatprep.subr.bf16.mxu0 0
        %2070 = vmatpush1.bf16.msra.mxu0 %v2053
        %2071 = vmatprep.subr.bf16.mxu0 0
        %2072 = vmatpush1.bf16.msra.mxu0 %v2052
        %2073 = vmatprep.subr.bf16.mxu0 0
        %2074 = vmatpush1.bf16.msra.mxu0 %v2051
        %2075 = vmatprep.subr.bf16.mxu0 0
        %2076 = vmatpush1.bf16.msra.mxu0 %v2050
        %2077 = vmatprep.subr.bf16.mxu0 0
        %2078 = vmatpush2.bf16.msra.mxu0 0
        %2079 = vmatprep.subr.bf16.mxu0 0
        %2080 = vmatpush2.bf16.msra.mxu0 0
        %2081 = vmatprep.subr.bf16.mxu0 0
        %2082 = vmatpush2.bf16.msra.mxu0 0
        %2083 = vmatprep.subr.bf16.mxu0 0
        %2084 = vmatpush2.bf16.msra.mxu0 0
        %2085 = vmatprep.subr.bf16.mxu0 0
        %2086 = vmatpush2.bf16.msra.mxu0 0
        %2087 = vmatprep.subr.bf16.mxu0 0
        %2088 = vmatpush2.bf16.msra.mxu0 0
        %2089 = vmatprep.subr.bf16.mxu0 0
        %2090 = vmatpush2.bf16.msra.mxu0 0
        %2091 = vmatprep.subr.bf16.mxu0 0
        %2092 = vmatpush2.bf16.msra.mxu0 0
        %2093 = vmatprep.mubr.bf16.mxu0 0
        %2094 = vmatmul.mubr.bf16.gmra.mxu0 %v2059
        %v2095 = vpop.f32.mrf.mxu0
        %v2096 = vadd.f32 %v1025, %v2095
        %v2097 = vpop.f32.mrf.mxu0
        %v2098 = vpop.f32.mrf.mxu0
        %v2099 = vpop.f32.mrf.mxu0
        %2100 = vdwg.mxu0
        %v2101 = vmul.f32 %v2096, 0.25
        %v2102 = vld [vmem:[#allocation8] sm:$0xf]
        %v2103 = vld [vmem:[#allocation8 + $0x4] sm:$0xf]
        %v2104 = vld [vmem:[#allocation8 + $0x8] sm:$0xf]
        %v2105 = vld [vmem:[#allocation8 + $0xc] sm:$0xf]
        %v2106 = vld [vmem:[#allocation8 + $0x10] sm:$0xf]
        %v2107 = vld [vmem:[#allocation8 + $0x14] sm:$0xf]
        %v2108 = vld [vmem:[#allocation8 + $0x18] sm:$0xf]
        %v2109 = vld [vmem:[#allocation8 + $0x1c] sm:$0xf]
        %v2118 = vunpack.c.l.b16 %v2102
        %v2119 = vunpack.c.l.b16 %v2103
        %v2120 = vunpack.c.l.b16 %v2104
        %v2121 = vunpack.c.l.b16 %v2105
        %v2122 = vunpack.c.l.b16 %v2106
        %v2123 = vunpack.c.l.b16 %v2107
        %v2124 = vunpack.c.l.b16 %v2108
        %v2125 = vunpack.c.l.b16 %v2109
        %v2126 = vpack.c.b16 %v2119, %v2118
        %v2127 = vpack.c.b16 %v2121, %v2120
        %v2128 = vpack.c.b16 %v2123, %v2122
        %v2129 = vpack.c.b16 %v2125, %v2124
        %2134 = vmatprep.subr.bf16.mxu0 0
        %2135 = vmatpush1.bf16.msra.mxu0 0
        %2136 = vmatprep.subr.bf16.mxu0 0
        %2137 = vmatpush1.bf16.msra.mxu0 0
        %2138 = vmatprep.subr.bf16.mxu0 0
        %2139 = vmatpush1.bf16.msra.mxu0 0
        %2140 = vmatprep.subr.bf16.mxu0 0
        %2141 = vmatpush1.bf16.msra.mxu0 0
        %2142 = vmatprep.subr.bf16.mxu0 0
        %2143 = vmatpush1.bf16.msra.mxu0 %v2129
        %2144 = vmatprep.subr.bf16.mxu0 0
        %2145 = vmatpush1.bf16.msra.mxu0 %v2128
        %2146 = vmatprep.subr.bf16.mxu0 0
        %2147 = vmatpush1.bf16.msra.mxu0 %v2127
        %2148 = vmatprep.subr.bf16.mxu0 0
        %2149 = vmatpush1.bf16.msra.mxu0 %v2126
        %2150 = vmatprep.subr.bf16.mxu0 0
        %2151 = vmatpush2.bf16.msra.mxu0 0
        %2152 = vmatprep.subr.bf16.mxu0 0
        %2153 = vmatpush2.bf16.msra.mxu0 0
        %2154 = vmatprep.subr.bf16.mxu0 0
        %2155 = vmatpush2.bf16.msra.mxu0 0
        %2156 = vmatprep.subr.bf16.mxu0 0
        %2157 = vmatpush2.bf16.msra.mxu0 0
        %2158 = vmatprep.subr.bf16.mxu0 0
        %2159 = vmatpush2.bf16.msra.mxu0 0
        %2160 = vmatprep.subr.bf16.mxu0 0
        %2161 = vmatpush2.bf16.msra.mxu0 0
        %2162 = vmatprep.subr.bf16.mxu0 0
        %2163 = vmatpush2.bf16.msra.mxu0 0
        %2164 = vmatprep.subr.bf16.mxu0 0
        %2165 = vmatpush2.bf16.msra.mxu0 0
        %2166 = vmatprep.mubr.bf16.mxu0 0
        %2167 = vmatmul.mubr.bf16.gmra.mxu0 %v2059
        %v2168 = vpop.f32.mrf.mxu0
        %v2169 = vadd.f32 %v1108, %v2168
        %v2170 = vpop.f32.mrf.mxu0
        %v2171 = vpop.f32.mrf.mxu0
        %v2172 = vpop.f32.mrf.mxu0
        %2173 = vdwg.mxu0
        %v2174 = vld [vmem:[#allocation10] sm:$0xf]
        %v2175 = vld [vmem:[#allocation10 + $0x4] sm:$0xf]
        %v2176 = vld [vmem:[#allocation10 + $0x8] sm:$0xf]
        %v2177 = vld [vmem:[#allocation10 + $0xc] sm:$0xf]
        %v2178 = vld [vmem:[#allocation10 + $0x10] sm:$0xf]
        %v2179 = vld [vmem:[#allocation10 + $0x14] sm:$0xf]
        %v2180 = vld [vmem:[#allocation10 + $0x18] sm:$0xf]
        %v2181 = vld [vmem:[#allocation10 + $0x1c] sm:$0xf]
        %v2190 = vunpack.c.l.b16 %v2174
        %v2191 = vunpack.c.l.b16 %v2175
        %v2192 = vunpack.c.l.b16 %v2176
        %v2193 = vunpack.c.l.b16 %v2177
        %v2194 = vunpack.c.l.b16 %v2178
        %v2195 = vunpack.c.l.b16 %v2179
        %v2196 = vunpack.c.l.b16 %v2180
        %v2197 = vunpack.c.l.b16 %v2181
        %v2198 = vpack.c.b16 %v2191, %v2190
        %v2199 = vpack.c.b16 %v2193, %v2192
        %v2200 = vpack.c.b16 %v2195, %v2194
        %v2201 = vpack.c.b16 %v2197, %v2196
        %2206 = vmatprep.subr.bf16.mxu0 0
        %2207 = vmatpush1.bf16.msra.mxu0 0
        %2208 = vmatprep.subr.bf16.mxu0 0
        %2209 = vmatpush1.bf16.msra.mxu0 0
        %2210 = vmatprep.subr.bf16.mxu0 0
        %2211 = vmatpush1.bf16.msra.mxu0 0
        %2212 = vmatprep.subr.bf16.mxu0 0
        %2213 = vmatpush1.bf16.msra.mxu0 0
        %2214 = vmatprep.subr.bf16.mxu0 0
        %2215 = vmatpush1.bf16.msra.mxu0 %v2201
        %2216 = vmatprep.subr.bf16.mxu0 0
        %2217 = vmatpush1.bf16.msra.mxu0 %v2200
        %2218 = vmatprep.subr.bf16.mxu0 0
        %2219 = vmatpush1.bf16.msra.mxu0 %v2199
        %2220 = vmatprep.subr.bf16.mxu0 0
        %2221 = vmatpush1.bf16.msra.mxu0 %v2198
        %2222 = vmatprep.subr.bf16.mxu0 0
        %2223 = vmatpush2.bf16.msra.mxu0 0
        %2224 = vmatprep.subr.bf16.mxu0 0
        %2225 = vmatpush2.bf16.msra.mxu0 0
        %2226 = vmatprep.subr.bf16.mxu0 0
        %2227 = vmatpush2.bf16.msra.mxu0 0
        %2228 = vmatprep.subr.bf16.mxu0 0
        %2229 = vmatpush2.bf16.msra.mxu0 0
        %2230 = vmatprep.subr.bf16.mxu0 0
        %2231 = vmatpush2.bf16.msra.mxu0 0
        %2232 = vmatprep.subr.bf16.mxu0 0
        %2233 = vmatpush2.bf16.msra.mxu0 0
        %2234 = vmatprep.subr.bf16.mxu0 0
        %2235 = vmatpush2.bf16.msra.mxu0 0
        %2236 = vmatprep.subr.bf16.mxu0 0
        %2237 = vmatpush2.bf16.msra.mxu0 0
        %2238 = vmatprep.mubr.bf16.mxu0 0
        %2239 = vmatmul.mubr.bf16.gmra.mxu0 %v2059
        %v2240 = vpop.f32.mrf.mxu0
        %v2241 = vadd.f32 %v1186, %v2240
        %v2242 = vpop.f32.mrf.mxu0
        %v2243 = vpop.f32.mrf.mxu0
        %v2244 = vpop.f32.mrf.mxu0
        %2245 = vdwg.mxu0
        %v2246 = vpack.c.bf16 %v2101, %v2101
        %v2247 = vpack.c.bf16 %v2169, %v2169
        %v2248 = vpack.c.bf16 %v2241, %v2241
        %v2250 = vsel %vm1255, %v2246, 0
        %v2253 = vsel %vm1255, %v2247, 0
        %2255 = vmatprep.subr.bf16.mxu0 0
        %2256 = vmatpush1.bf16.xpose.msra.mxu0 0
        %2257 = vmatprep.subr.bf16.mxu0 0
        %2258 = vmatpush1.bf16.xpose.msra.mxu0 0
        %2259 = vmatprep.subr.bf16.mxu0 0
        %2260 = vmatpush1.bf16.xpose.msra.mxu0 0
        %2261 = vmatprep.subr.bf16.mxu0 0
        %2262 = vmatpush1.bf16.xpose.msra.mxu0 0
        %2263 = vmatprep.subr.bf16.mxu0 0
        %2264 = vmatpush1.bf16.xpose.msra.mxu0 0
        %2265 = vmatprep.subr.bf16.mxu0 0
        %2266 = vmatpush1.bf16.xpose.msra.mxu0 0
        %2267 = vmatprep.subr.bf16.mxu0 0
        %2268 = vmatpush1.bf16.xpose.msra.mxu0 0
        %2269 = vmatprep.subr.bf16.mxu0 0
        %2270 = vmatpush1.bf16.xpose.msra.mxu0 %v2253
        %2271 = vmatprep.subr.bf16.mxu0 0
        %2272 = vmatpush2.bf16.xpose.msra.mxu0 0
        %2273 = vmatprep.subr.bf16.mxu0 0
        %2274 = vmatpush2.bf16.xpose.msra.mxu0 0
        %2275 = vmatprep.subr.bf16.mxu0 0
        %2276 = vmatpush2.bf16.xpose.msra.mxu0 0
        %2277 = vmatprep.subr.bf16.mxu0 0
        %2278 = vmatpush2.bf16.xpose.msra.mxu0 0
        %2279 = vmatprep.subr.bf16.mxu0 0
        %2280 = vmatpush2.bf16.xpose.msra.mxu0 0
        %2281 = vmatprep.subr.bf16.mxu0 0
        %2282 = vmatpush2.bf16.xpose.msra.mxu0 0
        %2283 = vmatprep.subr.bf16.mxu0 0
        %2284 = vmatpush2.bf16.xpose.msra.mxu0 0
        %2285 = vmatprep.subr.bf16.mxu0 0
        %2286 = vmatpush2.bf16.xpose.msra.mxu0 0
        %2287 = vmatprep.mubr.bf16.mxu0 0
        %2288 = vmatmul.mubr.bf16.gmra.mxu0 %v2250
        %v2289 = vpop.f32.mrf.mxu0
        %v2290 = vadd.f32 %v992, %v2289
        %v2291 = vpop.f32.mrf.mxu0
        %v2292 = vpop.f32.mrf.mxu0
        %v2293 = vpop.f32.mrf.mxu0
        %2294 = vdwg.mxu0
        %v2295 = vsel %vm1302, %v2290, -inf
        %2296 = vmax.xlane.f32.xlu0 %v2295
        %v2297 = vpop.xlane.xlu0 %2296
        %v2298 = vsub.f32 %v2290, %v2297
        %v2299 = vmul.f32 %v2298, 1.442695
        %v2300 = vpow.pop %v2299
        %v2301 = vsel %vm1302, %v2300, 0.0
        %2302 = vadd.xlane.f32.xlu0 %v2301
        %v2303 = vpop.xlane.xlu0 %2302
        %v2304 = vrcp.pop %v2303
        %v2305 = vmul.f32 %v2300, %v2304
        %v2306 = vpack.c.bf16 %v2305, %v2305
        %v2308 = vsel %vm1302, %v2306, 0
        %v2311 = vsel %vm1318, %v2248, 0
        %2313 = vmatprep.subr.bf16.mxu0 0
        %2314 = vmatpush1.bf16.msra.mxu0 0
        %2315 = vmatprep.subr.bf16.mxu0 0
        %2316 = vmatpush1.bf16.msra.mxu0 0
        %2317 = vmatprep.subr.bf16.mxu0 0
        %2318 = vmatpush1.bf16.msra.mxu0 0
        %2319 = vmatprep.subr.bf16.mxu0 0
        %2320 = vmatpush1.bf16.msra.mxu0 0
        %2321 = vmatprep.subr.bf16.mxu0 0
        %2322 = vmatpush1.bf16.msra.mxu0 0
        %2323 = vmatprep.subr.bf16.mxu0 0
        %2324 = vmatpush1.bf16.msra.mxu0 0
        %2325 = vmatprep.subr.bf16.mxu0 0
        %2326 = vmatpush1.bf16.msra.mxu0 0
        %2327 = vmatprep.subr.bf16.mxu0 0
        %2328 = vmatpush1.bf16.msra.mxu0 %v2311
        %2329 = vmatprep.subr.bf16.mxu0 0
        %2330 = vmatpush2.bf16.msra.mxu0 0
        %2331 = vmatprep.subr.bf16.mxu0 0
        %2332 = vmatpush2.bf16.msra.mxu0 0
        %2333 = vmatprep.subr.bf16.mxu0 0
        %2334 = vmatpush2.bf16.msra.mxu0 0
        %2335 = vmatprep.subr.bf16.mxu0 0
        %2336 = vmatpush2.bf16.msra.mxu0 0
        %2337 = vmatprep.subr.bf16.mxu0 0
        %2338 = vmatpush2.bf16.msra.mxu0 0
        %2339 = vmatprep.subr.bf16.mxu0 0
        %2340 = vmatpush2.bf16.msra.mxu0 0
        %2341 = vmatprep.subr.bf16.mxu0 0
        %2342 = vmatpush2.bf16.msra.mxu0 0
        %2343 = vmatprep.subr.bf16.mxu0 0
        %2344 = vmatpush2.bf16.msra.mxu0 0
        %2345 = vmatprep.mubr.bf16.mxu0 0
        %2346 = vmatmul.mubr.bf16.gmra.mxu0 %v2308
        %v2347 = vpop.f32.mrf.mxu0
        %v2348 = vadd.f32 0.0, %v2347
        %v2349 = vpop.f32.mrf.mxu0
        %v2350 = vpop.f32.mrf.mxu0
        %v2351 = vpop.f32.mrf.mxu0
        %2352 = vdwg.mxu0
        %v2353 = vpack.c.bf16 %v2348, %v2348
        %2355 = vrot.lane.b32.xlu0 %v2246, 112
        %v2356 = vpop.permute.xlu0 %2355
        %2358 = vrot.lane.b32.xlu0 %v2247, 112
        %v2359 = vpop.permute.xlu0 %2358
        %v2361 = vsel %vm1255, %v2356, 0
        %v2364 = vsel %vm1255, %v2359, 0
        %2366 = vmatprep.subr.bf16.mxu0 0
        %2367 = vmatpush1.bf16.xpose.msra.mxu0 0
        %2368 = vmatprep.subr.bf16.mxu0 0
        %2369 = vmatpush1.bf16.xpose.msra.mxu0 0
        %2370 = vmatprep.subr.bf16.mxu0 0
        %2371 = vmatpush1.bf16.xpose.msra.mxu0 0
        %2372 = vmatprep.subr.bf16.mxu0 0
        %2373 = vmatpush1.bf16.xpose.msra.mxu0 0
        %2374 = vmatprep.subr.bf16.mxu0 0
        %2375 = vmatpush1.bf16.xpose.msra.mxu0 0
        %2376 = vmatprep.subr.bf16.mxu0 0
        %2377 = vmatpush1.bf16.xpose.msra.mxu0 0
        %2378 = vmatprep.subr.bf16.mxu0 0
        %2379 = vmatpush1.bf16.xpose.msra.mxu0 0
        %2380 = vmatprep.subr.bf16.mxu0 0
        %2381 = vmatpush1.bf16.xpose.msra.mxu0 %v2364
        %2382 = vmatprep.subr.bf16.mxu0 0
        %2383 = vmatpush2.bf16.xpose.msra.mxu0 0
        %2384 = vmatprep.subr.bf16.mxu0 0
        %2385 = vmatpush2.bf16.xpose.msra.mxu0 0
        %2386 = vmatprep.subr.bf16.mxu0 0
        %2387 = vmatpush2.bf16.xpose.msra.mxu0 0
        %2388 = vmatprep.subr.bf16.mxu0 0
        %2389 = vmatpush2.bf16.xpose.msra.mxu0 0
        %2390 = vmatprep.subr.bf16.mxu0 0
        %2391 = vmatpush2.bf16.xpose.msra.mxu0 0
        %2392 = vmatprep.subr.bf16.mxu0 0
        %2393 = vmatpush2.bf16.xpose.msra.mxu0 0
        %2394 = vmatprep.subr.bf16.mxu0 0
        %2395 = vmatpush2.bf16.xpose.msra.mxu0 0
        %2396 = vmatprep.subr.bf16.mxu0 0
        %2397 = vmatpush2.bf16.xpose.msra.mxu0 0
        %2398 = vmatprep.mubr.bf16.mxu0 0
        %2399 = vmatmul.mubr.bf16.gmra.mxu0 %v2361
        %v2400 = vpop.f32.mrf.mxu0
        %v2401 = vadd.f32 %v992, %v2400
        %v2402 = vpop.f32.mrf.mxu0
        %v2403 = vpop.f32.mrf.mxu0
        %v2404 = vpop.f32.mrf.mxu0
        %2405 = vdwg.mxu0
        %v2406 = vsel %vm1302, %v2401, -inf
        %2407 = vmax.xlane.f32.xlu0 %v2406
        %v2408 = vpop.xlane.xlu0 %2407
        %v2409 = vsub.f32 %v2401, %v2408
        %v2410 = vmul.f32 %v2409, 1.442695
        %v2411 = vpow.pop %v2410
        %v2412 = vsel %vm1302, %v2411, 0.0
        %2413 = vadd.xlane.f32.xlu0 %v2412
        %v2414 = vpop.xlane.xlu0 %2413
        %v2415 = vrcp.pop %v2414
        %v2416 = vmul.f32 %v2411, %v2415
        %v2417 = vpack.c.bf16 %v2416, %v2416
        %2419 = vrot.lane.b32.xlu0 %v2248, 112
        %v2420 = vpop.permute.xlu0 %2419
        %v2422 = vsel %vm1302, %v2417, 0
        %v2425 = vsel %vm1318, %v2420, 0
        %2427 = vmatprep.subr.bf16.mxu0 0
        %2428 = vmatpush1.bf16.msra.mxu0 0
        %2429 = vmatprep.subr.bf16.mxu0 0
        %2430 = vmatpush1.bf16.msra.mxu0 0
        %2431 = vmatprep.subr.bf16.mxu0 0
        %2432 = vmatpush1.bf16.msra.mxu0 0
        %2433 = vmatprep.subr.bf16.mxu0 0
        %2434 = vmatpush1.bf16.msra.mxu0 0
        %2435 = vmatprep.subr.bf16.mxu0 0
        %2436 = vmatpush1.bf16.msra.mxu0 0
        %2437 = vmatprep.subr.bf16.mxu0 0
        %2438 = vmatpush1.bf16.msra.mxu0 0
        %2439 = vmatprep.subr.bf16.mxu0 0
        %2440 = vmatpush1.bf16.msra.mxu0 0
        %2441 = vmatprep.subr.bf16.mxu0 0
        %2442 = vmatpush1.bf16.msra.mxu0 %v2425
        %2443 = vmatprep.subr.bf16.mxu0 0
        %2444 = vmatpush2.bf16.msra.mxu0 0
        %2445 = vmatprep.subr.bf16.mxu0 0
        %2446 = vmatpush2.bf16.msra.mxu0 0
        %2447 = vmatprep.subr.bf16.mxu0 0
        %2448 = vmatpush2.bf16.msra.mxu0 0
        %2449 = vmatprep.subr.bf16.mxu0 0
        %2450 = vmatpush2.bf16.msra.mxu0 0
        %2451 = vmatprep.subr.bf16.mxu0 0
        %2452 = vmatpush2.bf16.msra.mxu0 0
        %2453 = vmatprep.subr.bf16.mxu0 0
        %2454 = vmatpush2.bf16.msra.mxu0 0
        %2455 = vmatprep.subr.bf16.mxu0 0
        %2456 = vmatpush2.bf16.msra.mxu0 0
        %2457 = vmatprep.subr.bf16.mxu0 0
        %2458 = vmatpush2.bf16.msra.mxu0 0
        %2459 = vmatprep.mubr.bf16.mxu0 0
        %2460 = vmatmul.mubr.bf16.gmra.mxu0 %v2422
        %v2461 = vpop.f32.mrf.mxu0
        %v2462 = vadd.f32 0.0, %v2461
        %v2463 = vpop.f32.mrf.mxu0
        %v2464 = vpop.f32.mrf.mxu0
        %v2465 = vpop.f32.mrf.mxu0
        %2466 = vdwg.mxu0
        %v2467 = vpack.c.bf16 %v2462, %v2462
        %2468 = vrot.lane.b32.xlu0 %v2246, 96
        %v2469 = vpop.permute.xlu0 %2468
        %2470 = vrot.lane.b32.xlu0 %v2247, 96
        %v2471 = vpop.permute.xlu0 %2470
        %v2473 = vsel %vm1255, %v2469, 0
        %v2476 = vsel %vm1255, %v2471, 0
        %2478 = vmatprep.subr.bf16.mxu0 0
        %2479 = vmatpush1.bf16.xpose.msra.mxu0 0
        %2480 = vmatprep.subr.bf16.mxu0 0
        %2481 = vmatpush1.bf16.xpose.msra.mxu0 0
        %2482 = vmatprep.subr.bf16.mxu0 0
        %2483 = vmatpush1.bf16.xpose.msra.mxu0 0
        %2484 = vmatprep.subr.bf16.mxu0 0
        %2485 = vmatpush1.bf16.xpose.msra.mxu0 0
        %2486 = vmatprep.subr.bf16.mxu0 0
        %2487 = vmatpush1.bf16.xpose.msra.mxu0 0
        %2488 = vmatprep.subr.bf16.mxu0 0
        %2489 = vmatpush1.bf16.xpose.msra.mxu0 0
        %2490 = vmatprep.subr.bf16.mxu0 0
        %2491 = vmatpush1.bf16.xpose.msra.mxu0 0
        %2492 = vmatprep.subr.bf16.mxu0 0
        %2493 = vmatpush1.bf16.xpose.msra.mxu0 %v2476
        %2494 = vmatprep.subr.bf16.mxu0 0
        %2495 = vmatpush2.bf16.xpose.msra.mxu0 0
        %2496 = vmatprep.subr.bf16.mxu0 0
        %2497 = vmatpush2.bf16.xpose.msra.mxu0 0
        %2498 = vmatprep.subr.bf16.mxu0 0
        %2499 = vmatpush2.bf16.xpose.msra.mxu0 0
        %2500 = vmatprep.subr.bf16.mxu0 0
        %2501 = vmatpush2.bf16.xpose.msra.mxu0 0
        %2502 = vmatprep.subr.bf16.mxu0 0
        %2503 = vmatpush2.bf16.xpose.msra.mxu0 0
        %2504 = vmatprep.subr.bf16.mxu0 0
        %2505 = vmatpush2.bf16.xpose.msra.mxu0 0
        %2506 = vmatprep.subr.bf16.mxu0 0
        %2507 = vmatpush2.bf16.xpose.msra.mxu0 0
        %2508 = vmatprep.subr.bf16.mxu0 0
        %2509 = vmatpush2.bf16.xpose.msra.mxu0 0
        %2510 = vmatprep.mubr.bf16.mxu0 0
        %2511 = vmatmul.mubr.bf16.gmra.mxu0 %v2473
        %v2512 = vpop.f32.mrf.mxu0
        %v2513 = vadd.f32 %v992, %v2512
        %v2514 = vpop.f32.mrf.mxu0
        %v2515 = vpop.f32.mrf.mxu0
        %v2516 = vpop.f32.mrf.mxu0
        %2517 = vdwg.mxu0
        %v2518 = vsel %vm1302, %v2513, -inf
        %2519 = vmax.xlane.f32.xlu0 %v2518
        %v2520 = vpop.xlane.xlu0 %2519
        %v2521 = vsub.f32 %v2513, %v2520
        %v2522 = vmul.f32 %v2521, 1.442695
        %v2523 = vpow.pop %v2522
        %v2524 = vsel %vm1302, %v2523, 0.0
        %2525 = vadd.xlane.f32.xlu0 %v2524
        %v2526 = vpop.xlane.xlu0 %2525
        %v2527 = vrcp.pop %v2526
        %v2528 = vmul.f32 %v2523, %v2527
        %v2529 = vpack.c.bf16 %v2528, %v2528
        %2530 = vrot.lane.b32.xlu0 %v2248, 96
        %v2531 = vpop.permute.xlu0 %2530
        %v2533 = vsel %vm1302, %v2529, 0
        %v2536 = vsel %vm1318, %v2531, 0
        %2538 = vmatprep.subr.bf16.mxu0 0
        %2539 = vmatpush1.bf16.msra.mxu0 0
        %2540 = vmatprep.subr.bf16.mxu0 0
        %2541 = vmatpush1.bf16.msra.mxu0 0
        %2542 = vmatprep.subr.bf16.mxu0 0
        %2543 = vmatpush1.bf16.msra.mxu0 0
        %2544 = vmatprep.subr.bf16.mxu0 0
        %2545 = vmatpush1.bf16.msra.mxu0 0
        %2546 = vmatprep.subr.bf16.mxu0 0
        %2547 = vmatpush1.bf16.msra.mxu0 0
        %2548 = vmatprep.subr.bf16.mxu0 0
        %2549 = vmatpush1.bf16.msra.mxu0 0
        %2550 = vmatprep.subr.bf16.mxu0 0
        %2551 = vmatpush1.bf16.msra.mxu0 0
        %2552 = vmatprep.subr.bf16.mxu0 0
        %2553 = vmatpush1.bf16.msra.mxu0 %v2536
        %2554 = vmatprep.subr.bf16.mxu0 0
        %2555 = vmatpush2.bf16.msra.mxu0 0
        %2556 = vmatprep.subr.bf16.mxu0 0
        %2557 = vmatpush2.bf16.msra.mxu0 0
        %2558 = vmatprep.subr.bf16.mxu0 0
        %2559 = vmatpush2.bf16.msra.mxu0 0
        %2560 = vmatprep.subr.bf16.mxu0 0
        %2561 = vmatpush2.bf16.msra.mxu0 0
        %2562 = vmatprep.subr.bf16.mxu0 0
        %2563 = vmatpush2.bf16.msra.mxu0 0
        %2564 = vmatprep.subr.bf16.mxu0 0
        %2565 = vmatpush2.bf16.msra.mxu0 0
        %2566 = vmatprep.subr.bf16.mxu0 0
        %2567 = vmatpush2.bf16.msra.mxu0 0
        %2568 = vmatprep.subr.bf16.mxu0 0
        %2569 = vmatpush2.bf16.msra.mxu0 0
        %2570 = vmatprep.mubr.bf16.mxu0 0
        %2571 = vmatmul.mubr.bf16.gmra.mxu0 %v2533
        %v2572 = vpop.f32.mrf.mxu0
        %v2573 = vadd.f32 0.0, %v2572
        %v2574 = vpop.f32.mrf.mxu0
        %v2575 = vpop.f32.mrf.mxu0
        %v2576 = vpop.f32.mrf.mxu0
        %2577 = vdwg.mxu0
        %v2578 = vpack.c.bf16 %v2573, %v2573
        %2579 = vrot.lane.b32.xlu0 %v2246, 80
        %v2580 = vpop.permute.xlu0 %2579
        %2581 = vrot.lane.b32.xlu0 %v2247, 80
        %v2582 = vpop.permute.xlu0 %2581
        %v2584 = vsel %vm1255, %v2580, 0
        %v2587 = vsel %vm1255, %v2582, 0
        %2589 = vmatprep.subr.bf16.mxu0 0
        %2590 = vmatpush1.bf16.xpose.msra.mxu0 0
        %2591 = vmatprep.subr.bf16.mxu0 0
        %2592 = vmatpush1.bf16.xpose.msra.mxu0 0
        %2593 = vmatprep.subr.bf16.mxu0 0
        %2594 = vmatpush1.bf16.xpose.msra.mxu0 0
        %2595 = vmatprep.subr.bf16.mxu0 0
        %2596 = vmatpush1.bf16.xpose.msra.mxu0 0
        %2597 = vmatprep.subr.bf16.mxu0 0
        %2598 = vmatpush1.bf16.xpose.msra.mxu0 0
        %2599 = vmatprep.subr.bf16.mxu0 0
        %2600 = vmatpush1.bf16.xpose.msra.mxu0 0
        %2601 = vmatprep.subr.bf16.mxu0 0
        %2602 = vmatpush1.bf16.xpose.msra.mxu0 0
        %2603 = vmatprep.subr.bf16.mxu0 0
        %2604 = vmatpush1.bf16.xpose.msra.mxu0 %v2587
        %2605 = vmatprep.subr.bf16.mxu0 0
        %2606 = vmatpush2.bf16.xpose.msra.mxu0 0
        %2607 = vmatprep.subr.bf16.mxu0 0
        %2608 = vmatpush2.bf16.xpose.msra.mxu0 0
        %2609 = vmatprep.subr.bf16.mxu0 0
        %2610 = vmatpush2.bf16.xpose.msra.mxu0 0
        %2611 = vmatprep.subr.bf16.mxu0 0
        %2612 = vmatpush2.bf16.xpose.msra.mxu0 0
        %2613 = vmatprep.subr.bf16.mxu0 0
        %2614 = vmatpush2.bf16.xpose.msra.mxu0 0
        %2615 = vmatprep.subr.bf16.mxu0 0
        %2616 = vmatpush2.bf16.xpose.msra.mxu0 0
        %2617 = vmatprep.subr.bf16.mxu0 0
        %2618 = vmatpush2.bf16.xpose.msra.mxu0 0
        %2619 = vmatprep.subr.bf16.mxu0 0
        %2620 = vmatpush2.bf16.xpose.msra.mxu0 0
        %2621 = vmatprep.mubr.bf16.mxu0 0
        %2622 = vmatmul.mubr.bf16.gmra.mxu0 %v2584
        %v2623 = vpop.f32.mrf.mxu0
        %v2624 = vadd.f32 %v992, %v2623
        %v2625 = vpop.f32.mrf.mxu0
        %v2626 = vpop.f32.mrf.mxu0
        %v2627 = vpop.f32.mrf.mxu0
        %2628 = vdwg.mxu0
        %v2629 = vsel %vm1302, %v2624, -inf
        %2630 = vmax.xlane.f32.xlu0 %v2629
        %v2631 = vpop.xlane.xlu0 %2630
        %v2632 = vsub.f32 %v2624, %v2631
        %v2633 = vmul.f32 %v2632, 1.442695
        %v2634 = vpow.pop %v2633
        %v2635 = vsel %vm1302, %v2634, 0.0
        %2636 = vadd.xlane.f32.xlu0 %v2635
        %v2637 = vpop.xlane.xlu0 %2636
        %v2638 = vrcp.pop %v2637
        %v2639 = vmul.f32 %v2634, %v2638
        %v2640 = vpack.c.bf16 %v2639, %v2639
        %2641 = vrot.lane.b32.xlu0 %v2248, 80
        %v2642 = vpop.permute.xlu0 %2641
        %v2644 = vsel %vm1302, %v2640, 0
        %v2647 = vsel %vm1318, %v2642, 0
        %2649 = vmatprep.subr.bf16.mxu0 0
        %2650 = vmatpush1.bf16.msra.mxu0 0
        %2651 = vmatprep.subr.bf16.mxu0 0
        %2652 = vmatpush1.bf16.msra.mxu0 0
        %2653 = vmatprep.subr.bf16.mxu0 0
        %2654 = vmatpush1.bf16.msra.mxu0 0
        %2655 = vmatprep.subr.bf16.mxu0 0
        %2656 = vmatpush1.bf16.msra.mxu0 0
        %2657 = vmatprep.subr.bf16.mxu0 0
        %2658 = vmatpush1.bf16.msra.mxu0 0
        %2659 = vmatprep.subr.bf16.mxu0 0
        %2660 = vmatpush1.bf16.msra.mxu0 0
        %2661 = vmatprep.subr.bf16.mxu0 0
        %2662 = vmatpush1.bf16.msra.mxu0 0
        %2663 = vmatprep.subr.bf16.mxu0 0
        %2664 = vmatpush1.bf16.msra.mxu0 %v2647
        %2665 = vmatprep.subr.bf16.mxu0 0
        %2666 = vmatpush2.bf16.msra.mxu0 0
        %2667 = vmatprep.subr.bf16.mxu0 0
        %2668 = vmatpush2.bf16.msra.mxu0 0
        %2669 = vmatprep.subr.bf16.mxu0 0
        %2670 = vmatpush2.bf16.msra.mxu0 0
        %2671 = vmatprep.subr.bf16.mxu0 0
        %2672 = vmatpush2.bf16.msra.mxu0 0
        %2673 = vmatprep.subr.bf16.mxu0 0
        %2674 = vmatpush2.bf16.msra.mxu0 0
        %2675 = vmatprep.subr.bf16.mxu0 0
        %2676 = vmatpush2.bf16.msra.mxu0 0
        %2677 = vmatprep.subr.bf16.mxu0 0
        %2678 = vmatpush2.bf16.msra.mxu0 0
        %2679 = vmatprep.subr.bf16.mxu0 0
        %2680 = vmatpush2.bf16.msra.mxu0 0
        %2681 = vmatprep.mubr.bf16.mxu0 0
        %2682 = vmatmul.mubr.bf16.gmra.mxu0 %v2644
        %v2683 = vpop.f32.mrf.mxu0
        %v2684 = vadd.f32 0.0, %v2683
        %v2685 = vpop.f32.mrf.mxu0
        %v2686 = vpop.f32.mrf.mxu0
        %v2687 = vpop.f32.mrf.mxu0
        %2688 = vdwg.mxu0
        %v2689 = vpack.c.bf16 %v2684, %v2684
        %2691 = vrot.lane.b32.xlu0 %v2467, 16
        %v2692 = vpop.permute.xlu0 %2691
        %2694 = vrot.lane.b32.xlu0 %v2578, 32
        %v2695 = vpop.permute.xlu0 %2694
        %2697 = vrot.lane.b32.xlu0 %v2689, 48
        %v2698 = vpop.permute.xlu0 %2697
        %v2701 = vsel %vm1255, %v2353, %v2692
        %v2703 = vsel %vm1711, %v2701, %v2695
        %v2705 = vsel %vm1714, %v2703, %v2698
        %v2706 = vld [vmem:[#allocation11] sm:$0xf]
        %v2707 = vld [vmem:[#allocation11 + $0x4] sm:$0xf]
        %v2708 = vld [vmem:[#allocation11 + $0x8] sm:$0xf]
        %v2709 = vld [vmem:[#allocation11 + $0xc] sm:$0xf]
        %v2710 = vld [vmem:[#allocation11 + $0x10] sm:$0xf]
        %v2711 = vld [vmem:[#allocation11 + $0x14] sm:$0xf]
        %v2712 = vld [vmem:[#allocation11 + $0x18] sm:$0xf]
        %v2713 = vld [vmem:[#allocation11 + $0x1c] sm:$0xf]
        %v2722 = vunpack.c.l.b16 %v2706
        %v2723 = vunpack.c.l.b16 %v2707
        %v2724 = vunpack.c.l.b16 %v2708
        %v2725 = vunpack.c.l.b16 %v2709
        %v2726 = vunpack.c.l.b16 %v2710
        %v2727 = vunpack.c.l.b16 %v2711
        %v2728 = vunpack.c.l.b16 %v2712
        %v2729 = vunpack.c.l.b16 %v2713
        %v2730 = vpack.c.b16 %v2723, %v2722
        %v2731 = vpack.c.b16 %v2725, %v2724
        %v2732 = vpack.c.b16 %v2727, %v2726
        %v2733 = vpack.c.b16 %v2729, %v2728
        %v2738 = vsel %vm1051, %v2705, 0
        %2740 = vmatprep.subr.bf16.mxu0 0
        %2741 = vmatpush1.bf16.msra.mxu0 0
        %2742 = vmatprep.subr.bf16.mxu0 0
        %2743 = vmatpush1.bf16.msra.mxu0 0
        %2744 = vmatprep.subr.bf16.mxu0 0
        %2745 = vmatpush1.bf16.msra.mxu0 0
        %2746 = vmatprep.subr.bf16.mxu0 0
        %2747 = vmatpush1.bf16.msra.mxu0 0
        %2748 = vmatprep.subr.bf16.mxu0 0
        %2749 = vmatpush1.bf16.msra.mxu0 %v2733
        %2750 = vmatprep.subr.bf16.mxu0 0
        %2751 = vmatpush1.bf16.msra.mxu0 %v2732
        %2752 = vmatprep.subr.bf16.mxu0 0
        %2753 = vmatpush1.bf16.msra.mxu0 %v2731
        %2754 = vmatprep.subr.bf16.mxu0 0
        %2755 = vmatpush1.bf16.msra.mxu0 %v2730
        %2756 = vmatprep.subr.bf16.mxu0 0
        %2757 = vmatpush2.bf16.msra.mxu0 0
        %2758 = vmatprep.subr.bf16.mxu0 0
        %2759 = vmatpush2.bf16.msra.mxu0 0
        %2760 = vmatprep.subr.bf16.mxu0 0
        %2761 = vmatpush2.bf16.msra.mxu0 0
        %2762 = vmatprep.subr.bf16.mxu0 0
        %2763 = vmatpush2.bf16.msra.mxu0 0
        %2764 = vmatprep.subr.bf16.mxu0 0
        %2765 = vmatpush2.bf16.msra.mxu0 0
        %2766 = vmatprep.subr.bf16.mxu0 0
        %2767 = vmatpush2.bf16.msra.mxu0 0
        %2768 = vmatprep.subr.bf16.mxu0 0
        %2769 = vmatpush2.bf16.msra.mxu0 0
        %2770 = vmatprep.subr.bf16.mxu0 0
        %2771 = vmatpush2.bf16.msra.mxu0 0
        %2772 = vmatprep.mubr.bf16.mxu0 0
        %2773 = vmatmul.mubr.bf16.gmra.mxu0 %v2738
        %v2774 = vpop.f32.mrf.mxu0
        %v2775 = vadd.f32 %v1729, %v2774
        %v2776 = vpop.f32.mrf.mxu0
        %v2777 = vpop.f32.mrf.mxu0
        %v2778 = vpop.f32.mrf.mxu0
        %2779 = vdwg.mxu0
        %v2780 = vadd.f32 %v2024, %v2775
        %v2781 = vsel %vm1051, %v2780, 0.0
        %2782 = vadd.xlane.f32.xlu0 %v2781
        %v2783 = vpop.xlane.xlu0 %2782
        %v2784 = vmul.f32 %v2783, %v1801
        %v2785 = vsub.f32 %v2780, %v2784
        %v2786 = vmul.f32 %v2785, %v2785
        %v2787 = vsel %vm1051, %v2786, 0.0
        %2788 = vadd.xlane.f32.xlu0 %v2787
        %v2789 = vpop.xlane.xlu0 %2788
        %v2790 = vmul.f32 %v2789, %v1801
        %v2791 = vadd.f32 %v2790, 1e-05
        %v2792 = vrsqrt.pop %v2791
        %v2793 = vmul.f32 %v2785, %v2792
        %v2794 = vmul.f32 %v2793, %v1816
        %v2795 = vadd.f32 %v2794, %v1823
        %v2796 = vpack.c.bf16 %v2795, %v2795
        %v2797 = vld [vmem:[#allocation22] sm:$0xf]
        %v2798 = vld [vmem:[#allocation22 + $0x4] sm:$0xf]
        %v2799 = vld [vmem:[#allocation22 + $0x8] sm:$0xf]
        %v2800 = vld [vmem:[#allocation22 + $0xc] sm:$0xf]
        %v2801 = vld [vmem:[#allocation22 + $0x10] sm:$0xf]
        %v2802 = vld [vmem:[#allocation22 + $0x14] sm:$0xf]
        %v2803 = vld [vmem:[#allocation22 + $0x18] sm:$0xf]
        %v2804 = vld [vmem:[#allocation22 + $0x1c] sm:$0xf]
        %v2813 = vunpack.c.l.b16 %v2797
        %v2814 = vunpack.c.l.b16 %v2798
        %v2815 = vunpack.c.l.b16 %v2799
        %v2816 = vunpack.c.l.b16 %v2800
        %v2817 = vunpack.c.l.b16 %v2801
        %v2818 = vunpack.c.l.b16 %v2802
        %v2819 = vunpack.c.l.b16 %v2803
        %v2820 = vunpack.c.l.b16 %v2804
        %v2821 = vpack.c.b16 %v2814, %v2813
        %v2822 = vpack.c.b16 %v2816, %v2815
        %v2823 = vpack.c.b16 %v2818, %v2817
        %v2824 = vpack.c.b16 %v2820, %v2819
        %v2830 = vsel %vm1051, %v2796, 0
        %2832 = vmatprep.subr.bf16.mxu0 0
        %2833 = vmatpush1.bf16.msra.mxu0 0
        %2834 = vmatprep.subr.bf16.mxu0 0
        %2835 = vmatpush1.bf16.msra.mxu0 0
        %2836 = vmatprep.subr.bf16.mxu0 0
        %2837 = vmatpush1.bf16.msra.mxu0 0
        %2838 = vmatprep.subr.bf16.mxu0 0
        %2839 = vmatpush1.bf16.msra.mxu0 0
        %2840 = vmatprep.subr.bf16.mxu0 0
        %2841 = vmatpush1.bf16.msra.mxu0 %v2824
        %2842 = vmatprep.subr.bf16.mxu0 0
        %2843 = vmatpush1.bf16.msra.mxu0 %v2823
        %2844 = vmatprep.subr.bf16.mxu0 0
        %2845 = vmatpush1.bf16.msra.mxu0 %v2822
        %2846 = vmatprep.subr.bf16.mxu0 0
        %2847 = vmatpush1.bf16.msra.mxu0 %v2821
        %2848 = vmatprep.subr.bf16.mxu0 0
        %2849 = vmatpush2.bf16.msra.mxu0 0
        %2850 = vmatprep.subr.bf16.mxu0 0
        %2851 = vmatpush2.bf16.msra.mxu0 0
        %2852 = vmatprep.subr.bf16.mxu0 0
        %2853 = vmatpush2.bf16.msra.mxu0 0
        %2854 = vmatprep.subr.bf16.mxu0 0
        %2855 = vmatpush2.bf16.msra.mxu0 0
        %2856 = vmatprep.subr.bf16.mxu0 0
        %2857 = vmatpush2.bf16.msra.mxu0 0
        %2858 = vmatprep.subr.bf16.mxu0 0
        %2859 = vmatpush2.bf16.msra.mxu0 0
        %2860 = vmatprep.subr.bf16.mxu0 0
        %2861 = vmatpush2.bf16.msra.mxu0 0
        %2862 = vmatprep.subr.bf16.mxu0 0
        %2863 = vmatpush2.bf16.msra.mxu0 0
        %2864 = vmatprep.mubr.bf16.mxu0 0
        %2865 = vmatmul.mubr.bf16.gmra.mxu0 %v2830
        %v2866 = vpop.f32.mrf.mxu0
        %v2867 = vadd.f32 %v1839, %v2866
        %v2868 = vpop.f32.mrf.mxu0
        %v2869 = vpop.f32.mrf.mxu0
        %v2870 = vpop.f32.mrf.mxu0
        %2871 = vdwg.mxu0
        %v2872 = vmax.f32 %v2867, 0.0
        %v2873 = vpack.c.bf16 %v2872, %v2872
        %v2874 = vld [vmem:[#allocation25] sm:$0xf]
        %v2875 = vld [vmem:[#allocation25 + $0x4] sm:$0xf]
        %v2876 = vld [vmem:[#allocation25 + $0x8] sm:$0xf]
        %v2877 = vld [vmem:[#allocation25 + $0xc] sm:$0xf]
        %v2878 = vld [vmem:[#allocation25 + $0x10] sm:$0xf]
        %v2879 = vld [vmem:[#allocation25 + $0x14] sm:$0xf]
        %v2880 = vld [vmem:[#allocation25 + $0x18] sm:$0xf]
        %v2881 = vld [vmem:[#allocation25 + $0x1c] sm:$0xf]
        %v2890 = vunpack.c.l.b16 %v2874
        %v2891 = vunpack.c.l.b16 %v2875
        %v2892 = vunpack.c.l.b16 %v2876
        %v2893 = vunpack.c.l.b16 %v2877
        %v2894 = vunpack.c.l.b16 %v2878
        %v2895 = vunpack.c.l.b16 %v2879
        %v2896 = vunpack.c.l.b16 %v2880
        %v2897 = vunpack.c.l.b16 %v2881
        %v2898 = vpack.c.b16 %v2891, %v2890
        %v2899 = vpack.c.b16 %v2893, %v2892
        %v2900 = vpack.c.b16 %v2895, %v2894
        %v2901 = vpack.c.b16 %v2897, %v2896
        %v2907 = vsel %vm1051, %v2873, 0
        %2909 = vmatprep.subr.bf16.mxu0 0
        %2910 = vmatpush1.bf16.msra.mxu0 0
        %2911 = vmatprep.subr.bf16.mxu0 0
        %2912 = vmatpush1.bf16.msra.mxu0 0
        %2913 = vmatprep.subr.bf16.mxu0 0
        %2914 = vmatpush1.bf16.msra.mxu0 0
        %2915 = vmatprep.subr.bf16.mxu0 0
        %2916 = vmatpush1.bf16.msra.mxu0 0
        %2917 = vmatprep.subr.bf16.mxu0 0
        %2918 = vmatpush1.bf16.msra.mxu0 %v2901
        %2919 = vmatprep.subr.bf16.mxu0 0
        %2920 = vmatpush1.bf16.msra.mxu0 %v2900
        %2921 = vmatprep.subr.bf16.mxu0 0
        %2922 = vmatpush1.bf16.msra.mxu0 %v2899
        %2923 = vmatprep.subr.bf16.mxu0 0
        %2924 = vmatpush1.bf16.msra.mxu0 %v2898
        %2925 = vmatprep.subr.bf16.mxu0 0
        %2926 = vmatpush2.bf16.msra.mxu0 0
        %2927 = vmatprep.subr.bf16.mxu0 0
        %2928 = vmatpush2.bf16.msra.mxu0 0
        %2929 = vmatprep.subr.bf16.mxu0 0
        %2930 = vmatpush2.bf16.msra.mxu0 0
        %2931 = vmatprep.subr.bf16.mxu0 0
        %2932 = vmatpush2.bf16.msra.mxu0 0
        %2933 = vmatprep.subr.bf16.mxu0 0
        %2934 = vmatpush2.bf16.msra.mxu0 0
        %2935 = vmatprep.subr.bf16.mxu0 0
        %2936 = vmatpush2.bf16.msra.mxu0 0
        %2937 = vmatprep.subr.bf16.mxu0 0
        %2938 = vmatpush2.bf16.msra.mxu0 0
        %2939 = vmatprep.subr.bf16.mxu0 0
        %2940 = vmatpush2.bf16.msra.mxu0 0
        %2941 = vmatprep.mubr.bf16.mxu0 0
        %2942 = vmatmul.mubr.bf16.gmra.mxu0 %v2907
        %v2943 = vpop.f32.mrf.mxu0
        %v2944 = vadd.f32 %v1922, %v2943
        %v2945 = vpop.f32.mrf.mxu0
        %v2946 = vpop.f32.mrf.mxu0
        %v2947 = vpop.f32.mrf.mxu0
        %2948 = vdwg.mxu0
        %v2949 = vadd.f32 %v2795, %v2944
        %v2950 = vsel %vm1051, %v2949, 0.0
        %2951 = vadd.xlane.f32.xlu0 %v2950
        %v2952 = vpop.xlane.xlu0 %2951
        %v2953 = vmul.f32 %v2952, %v1801
        %v2954 = vsub.f32 %v2949, %v2953
        %v2955 = vmul.f32 %v2954, %v2954
        %v2956 = vsel %vm1051, %v2955, 0.0
        %2957 = vadd.xlane.f32.xlu0 %v2956
        %v2958 = vpop.xlane.xlu0 %2957
        %v2959 = vmul.f32 %v2958, %v1801
        %v2960 = vadd.f32 %v2959, 1e-05
        %v2961 = vrsqrt.pop %v2960
        %v2962 = vmul.f32 %v2954, %v2961
        %v2963 = vmul.f32 %v2962, %v2009
        %v2964 = vadd.f32 %v2963, %v2016
        %v2965 = vpack.c.bf16 %v2964, %v2964
        %v2966 = vld [vmem:[%s19] sm:$0xf]
        %v2967 = vld [vmem:[%s19 + $0x4] sm:$0xf]
        %v2968 = vld [vmem:[%s19 + $0x8] sm:$0xf]
        %v2969 = vld [vmem:[%s19 + $0xc] sm:$0xf]
        %v2970 = vld [vmem:[%s19 + $0x10] sm:$0xf]
        %v2971 = vld [vmem:[%s19 + $0x14] sm:$0xf]
        %v2972 = vld [vmem:[%s19 + $0x18] sm:$0xf]
        %v2973 = vld [vmem:[%s19 + $0x1c] sm:$0xf]
        %v2974 = vld [vmem:[%s20] sm:$0x1]
        %v2976 = vlaneseq
        %v2977 = vshrl.u32 %v2976, 7
        %v2978 = vsub.s32 0, %v2977
        %v2979 = vrot.slane %v2974, %v2978
        %v2989 = vunpack.c.l.b16 %v2966
        %v2990 = vunpack.c.l.b16 %v2967
        %v2991 = vunpack.c.l.b16 %v2968
        %v2992 = vunpack.c.l.b16 %v2969
        %v2993 = vunpack.c.l.b16 %v2970
        %v2994 = vunpack.c.l.b16 %v2971
        %v2995 = vunpack.c.l.b16 %v2972
        %v2996 = vunpack.c.l.b16 %v2973
        %v2997 = vpack.c.b16 %v2990, %v2989
        %v2998 = vpack.c.b16 %v2992, %v2991
        %v2999 = vpack.c.b16 %v2994, %v2993
        %v3000 = vpack.c.b16 %v2996, %v2995
        %v3006 = vsel %vm1051, %v2965, 0
        %3008 = vmatprep.subr.bf16.mxu0 0
        %3009 = vmatpush1.bf16.msra.mxu0 0
        %3010 = vmatprep.subr.bf16.mxu0 0
        %3011 = vmatpush1.bf16.msra.mxu0 0
        %3012 = vmatprep.subr.bf16.mxu0 0
        %3013 = vmatpush1.bf16.msra.mxu0 0
        %3014 = vmatprep.subr.bf16.mxu0 0
        %3015 = vmatpush1.bf16.msra.mxu0 0
        %3016 = vmatprep.subr.bf16.mxu0 0
        %3017 = vmatpush1.bf16.msra.mxu0 %v3000
        %3018 = vmatprep.subr.bf16.mxu0 0
        %3019 = vmatpush1.bf16.msra.mxu0 %v2999
        %3020 = vmatprep.subr.bf16.mxu0 0
        %3021 = vmatpush1.bf16.msra.mxu0 %v2998
        %3022 = vmatprep.subr.bf16.mxu0 0
        %3023 = vmatpush1.bf16.msra.mxu0 %v2997
        %3024 = vmatprep.subr.bf16.mxu0 0
        %3025 = vmatpush2.bf16.msra.mxu0 0
        %3026 = vmatprep.subr.bf16.mxu0 0
        %3027 = vmatpush2.bf16.msra.mxu0 0
        %3028 = vmatprep.subr.bf16.mxu0 0
        %3029 = vmatpush2.bf16.msra.mxu0 0
        %3030 = vmatprep.subr.bf16.mxu0 0
        %3031 = vmatpush2.bf16.msra.mxu0 0
        %3032 = vmatprep.subr.bf16.mxu0 0
        %3033 = vmatpush2.bf16.msra.mxu0 0
        %3034 = vmatprep.subr.bf16.mxu0 0
        %3035 = vmatpush2.bf16.msra.mxu0 0
        %3036 = vmatprep.subr.bf16.mxu0 0
        %3037 = vmatpush2.bf16.msra.mxu0 0
        %3038 = vmatprep.subr.bf16.mxu0 0
        %3039 = vmatpush2.bf16.msra.mxu0 0
        %3040 = vmatprep.mubr.bf16.mxu0 0
        %3041 = vmatmul.mubr.bf16.gmra.mxu0 %v3006
        %v3042 = vpop.f32.mrf.mxu0
        %v3043 = vadd.f32 %v2979, %v3042
        %v3044 = vpop.f32.mrf.mxu0
        %v3045 = vpop.f32.mrf.mxu0
        %v3046 = vpop.f32.mrf.mxu0
        %3047 = vdwg.mxu0
        %v3048 = vmax.f32 %v3043, 0.0
        %v3049 = vpack.c.bf16 %v3048, %v3048
        %v3050 = vld [vmem:[#allocation31] sm:$0xf]
        %v3051 = vld [vmem:[#allocation31 + $0x4] sm:$0xf]
        %v3052 = vld [vmem:[#allocation31 + $0x8] sm:$0xf]
        %v3053 = vld [vmem:[#allocation31 + $0xc] sm:$0xf]
        %v3054 = vld [vmem:[#allocation31 + $0x10] sm:$0xf]
        %v3055 = vld [vmem:[#allocation31 + $0x14] sm:$0xf]
        %v3056 = vld [vmem:[#allocation31 + $0x18] sm:$0xf]
        %v3057 = vld [vmem:[#allocation31 + $0x1c] sm:$0xf]
        %v3058 = vld [vmem:[%s22] sm:$0x1]
        %v3060 = vlaneseq
        %v3061 = vshrl.u32 %v3060, 7
        %v3062 = vsub.s32 0, %v3061
        %v3063 = vrot.slane %v3058, %v3062
        %v3073 = vunpack.c.l.b16 %v3050
        %v3074 = vunpack.c.l.b16 %v3051
        %v3075 = vunpack.c.l.b16 %v3052
        %v3076 = vunpack.c.l.b16 %v3053
        %v3077 = vunpack.c.l.b16 %v3054
        %v3078 = vunpack.c.l.b16 %v3055
        %v3079 = vunpack.c.l.b16 %v3056
        %v3080 = vunpack.c.l.b16 %v3057
        %v3081 = vpack.c.b16 %v3074, %v3073
        %v3082 = vpack.c.b16 %v3076, %v3075
        %v3083 = vpack.c.b16 %v3078, %v3077
        %v3084 = vpack.c.b16 %v3080, %v3079
        %v3090 = vsel %vm1051, %v3049, 0
        %3092 = vmatprep.subr.bf16.mxu0 0
        %3093 = vmatpush1.bf16.msra.mxu0 0
        %3094 = vmatprep.subr.bf16.mxu0 0
        %3095 = vmatpush1.bf16.msra.mxu0 0
        %3096 = vmatprep.subr.bf16.mxu0 0
        %3097 = vmatpush1.bf16.msra.mxu0 0
        %3098 = vmatprep.subr.bf16.mxu0 0
        %3099 = vmatpush1.bf16.msra.mxu0 0
        %3100 = vmatprep.subr.bf16.mxu0 0
        %3101 = vmatpush1.bf16.msra.mxu0 %v3084
        %3102 = vmatprep.subr.bf16.mxu0 0
        %3103 = vmatpush1.bf16.msra.mxu0 %v3083
        %3104 = vmatprep.subr.bf16.mxu0 0
        %3105 = vmatpush1.bf16.msra.mxu0 %v3082
        %3106 = vmatprep.subr.bf16.mxu0 0
        %3107 = vmatpush1.bf16.msra.mxu0 %v3081
        %3108 = vmatprep.subr.bf16.mxu0 0
        %3109 = vmatpush2.bf16.msra.mxu0 0
        %3110 = vmatprep.subr.bf16.mxu0 0
        %3111 = vmatpush2.bf16.msra.mxu0 0
        %3112 = vmatprep.subr.bf16.mxu0 0
        %3113 = vmatpush2.bf16.msra.mxu0 0
        %3114 = vmatprep.subr.bf16.mxu0 0
        %3115 = vmatpush2.bf16.msra.mxu0 0
        %3116 = vmatprep.subr.bf16.mxu0 0
        %3117 = vmatpush2.bf16.msra.mxu0 0
        %3118 = vmatprep.subr.bf16.mxu0 0
        %3119 = vmatpush2.bf16.msra.mxu0 0
        %3120 = vmatprep.subr.bf16.mxu0 0
        %3121 = vmatpush2.bf16.msra.mxu0 0
        %3122 = vmatprep.subr.bf16.mxu0 0
        %3123 = vmatpush2.bf16.msra.mxu0 0
        %3124 = vmatprep.mubr.bf16.mxu0 0
        %3125 = vmatmul.mubr.bf16.gmra.mxu0 %v3090
        %v3126 = vpop.f32.mrf.mxu0
        %v3127 = vadd.f32 %v3063, %v3126
        %v3128 = vpop.f32.mrf.mxu0
        %v3129 = vpop.f32.mrf.mxu0
        %v3130 = vpop.f32.mrf.mxu0
        %3131 = vdwg.mxu0
        %v3132 = vpack.c.bf16 %v3127, %v3127
        %3133 = vst [vmem:[%s985] sm:$0xf] %v3132
        %s3134 = sand.u32 %s552, 1
        %s3135 = scalar_lea.sflag [#allocation4], %s3134
        %s3136 = sand.u32 %s552, 1
        %s3137 = smul.addr %s3136, 4
        %s3138 = scalar_lea.vmem [#allocation32], %s3137
        // Predicated region
        $region189: #{tpu_custom_call.1} parent=111 // pred_check
          %p3139 = pneg %p562
        $region190: #{tpu_custom_call.1} parent=111 // pred_check_branch
          %3141 = sbr.rel (%p3139) target = $region192
        $region191: #{tpu_custom_call.1} parent=111 // pred_region
          %s3143 = ssub.s32 64, 64
          %3144 = vsyncadd %s3135, %s3143
          %s3145 = smul.addr %s51, 64
          %s3146 = scalar_lea.hbm %s23, %s3145
          %s3148 = sshll.u32 %s3138, 4
          %s3149 = int_to_ptr.vmem [resolvable:$true] %s3148
          %3151 = dma.vmem_to_hbm [thread:$0]  %s3149, 64, %s3146, %s3135
        $region192: #{tpu_custom_call.1} parent=111 // pred_fallthru
          _
      $region112: #{tpu_custom_call.1} parent=5 // pred_fallthru
        _
      %p3152 = scmp.le.s32.totalorder 2, %s46
      // Predicated region
      $region193: #{tpu_custom_call.1} parent=5 // pred_check
        %p3153 = pneg %p3152
      $region194: #{tpu_custom_call.1} parent=5 // pred_check_branch
        %3155 = sbr.rel (%p3153) target = $region196
      $region195: #{tpu_custom_call.1} parent=5 // pred_region
        %s3156 = ssub.s32 %s46, 2
        // Predicated region
        $region197: #{tpu_custom_call.1} parent=195 // pred_check
          %p3157 = pneg %p568
        $region198: #{tpu_custom_call.1} parent=195 // pred_check_branch
          %3159 = sbr.rel (%p3157) target = $region200
        $region199: #{tpu_custom_call.1} parent=195 // pred_region
          %s3160 = sand.u32 %s553, 1
          %s3161 = scalar_lea.sflag [#allocation4], %s3160
          %s3162 = sand.u32 %s553, 1
          %s3163 = smul.addr %s3162, 4
          %s3164 = scalar_lea.vmem [#allocation32], %s3163
          %3165 = dma.done %s3161, 64
        $region200: #{tpu_custom_call.1} parent=195 // pred_fallthru
          _
      $region196: #{tpu_custom_call.1} parent=5 // pred_fallthru
        _
    $region6: #{tpu_custom_call.1} parent=1 // loop_footer
      %s50 = sadd.s32 1, %s46
    $region7: #{tpu_custom_call.1} parent=1 // loop_footer_branch
      %45 = sbr.rel target = $region3
    $region8: #{tpu_custom_call.1} parent=1 // loop_exit
      _
    %3166 = vsyncpa [#allocation3], 1
    %s3167 = scalar_lea.sflag [#allocation3], 1
    %3168 = vsyncpa %s3167, 1
    %3169 = vsyncpa [#allocation6], 1
    %s3170 = scalar_lea.sflag [#allocation6], 1
    %3171 = vsyncpa %s3170, 1
    %3172 = vsyncpa [#allocation9], 1
    %3173 = vsyncpa [#allocation12], 1
    %3174 = vsyncpa [#allocation15], 1
    %3175 = vsyncpa [#allocation18], 1
    %3176 = vsyncpa [#allocation21], 1
    %3177 = vsyncpa [#allocation24], 1
    %3178 = vsyncpa [#allocation27], 1
    %3179 = vsyncpa [#allocation30], 1
    %3180 = vsyncpa [#allocation4], 1
    %s3181 = scalar_lea.sflag [#allocation4], 1
    %3182 = vsyncpa %s3181, 1

// kernel: tpu_custom_call.1
$region0: #{tpu_custom_call.1}
  #allocation0 [shape = 'u32[]', space=smem, size = 0x4, offset = 0x4, fixed_abs, tag = 'smem constant byte address 0x4 - core index']
  #allocation1 [shape = 'u32[144,128]{1,0:T(1,128)}', space=vmem, size = 0x12000, scoped, tag = 'internal scratch']
  %s0 = inlined_call_operand.hbm [shape: bf16[2,8,64], index: 0, kind: input, shape index: {}]
  %s1 = inlined_call_operand.hbm [shape: f32[2,1,8], index: 1, kind: input, shape index: {}]
  %s2 = inlined_call_operand.vmem [shape: f32[2,64], index: 2, kind: input, shape index: {}]
  %s3 = inlined_call_operand.hbm [shape: bf16[64,64], index: 3, kind: input, shape index: {}]
  %s4 = inlined_call_operand.hbm [shape: bf16[64,64], index: 4, kind: input, shape index: {}]
  %s5 = inlined_call_operand.hbm [shape: bf16[64,64], index: 5, kind: input, shape index: {}]
  %s6 = inlined_call_operand.hbm [shape: bf16[64,64], index: 6, kind: input, shape index: {}]
  %s7 = inlined_call_operand.hbm [shape: f32[1,64], index: 7, kind: input, shape index: {}]
  %s8 = inlined_call_operand.hbm [shape: f32[1,64], index: 8, kind: input, shape index: {}]
  %s9 = inlined_call_operand.hbm [shape: f32[1,64], index: 9, kind: input, shape index: {}]
  %s10 = inlined_call_operand.hbm [shape: f32[1,64], index: 10, kind: input, shape index: {}]
  %s11 = inlined_call_operand.hbm [shape: f32[1,64], index: 11, kind: input, shape index: {}]
  %s12 = inlined_call_operand.hbm [shape: f32[1,64], index: 12, kind: input, shape index: {}]
  %s13 = inlined_call_operand.hbm [shape: bf16[64,64], index: 13, kind: input, shape index: {}]
  %s14 = inlined_call_operand.hbm [shape: f32[1,64], index: 14, kind: input, shape index: {}]
  %s15 = inlined_call_operand.hbm [shape: bf16[64,64], index: 15, kind: input, shape index: {}]
  %s16 = inlined_call_operand.hbm [shape: f32[1,64], index: 16, kind: input, shape index: {}]
  %s17 = inlined_call_operand.hbm [shape: f32[1,64], index: 17, kind: input, shape index: {}]
  %s18 = inlined_call_operand.hbm [shape: f32[1,64], index: 18, kind: input, shape index: {}]
  %s19 = inlined_call_operand.vmem [shape: bf16[64,64], index: 19, kind: input, shape index: {}]
  %s20 = inlined_call_operand.vmem [shape: f32[1,64], index: 20, kind: input, shape index: {}]
  %s21 = inlined_call_operand.hbm [shape: bf16[64,128], index: 21, kind: input, shape index: {}]
  %s22 = inlined_call_operand.vmem [shape: f32[1,128], index: 22, kind: input, shape index: {}]
  %s23 = inlined_call_operand.hbm [shape: bf16[2,8,128], index: 23, kind: output, shape index: {}]
  %s24 = sld [smem:[#allocation0]]
  $region201: #{tpu_custom_call.1} parent=0
    _
  %s26 = ssub.s32 1, %s24
  %s27 = scalar_select 0, %s26, %s24
  $region1: #{tpu_custom_call.1} parent=0
    #allocation2 [shape = 'u8[4096]{0}', space=vmem, size = 0x1000, scoped, tag = 'input window, operand 0']
    #allocation3 [shape = 's32[2]{0}', space=sflag, size = 0x8, scoped, tag = 'scoped memory for tpu_custom_call.1']
    #allocation4 [shape = 's32[2]{0}', space=sflag, size = 0x8, scoped, tag = 'scoped memory for tpu_custom_call.1']
    #allocation5 [shape = 'u8[1024]{0}', space=vmem, size = 0x400, scoped, tag = 'input window, operand 1']
    #allocation6 [shape = 's32[2]{0}', space=sflag, size = 0x8, scoped, tag = 'scoped memory for tpu_custom_call.1']
    #allocation7 [shape = 'u8[16384]{0}', space=vmem, size = 0x4000, scoped, tag = 'input window, operand 3, single buffered']
    #allocation8 [shape = 'u8[16384]{0}', space=vmem, size = 0x4000, scoped, tag = 'input window, operand 4, single buffered']
    #allocation9 [shape = 's32[1]{0}', space=sflag, size = 0x4, scoped, tag = 'scoped memory for tpu_custom_call.1']
    #allocation10 [shape = 'u8[16384]{0}', space=vmem, size = 0x4000, scoped, tag = 'input window, operand 5, single buffered']
    #allocation11 [shape = 'u8[16384]{0}', space=vmem, size = 0x4000, scoped, tag = 'input window, operand 6, single buffered']
    #allocation12 [shape = 's32[1]{0}', space=sflag, size = 0x4, scoped, tag = 'scoped memory for tpu_custom_call.1']
    #allocation13 [shape = 'u8[512]{0}', space=vmem, size = 0x400, scoped, tag = 'input window, operand 7, single buffered']
    #allocation14 [shape = 'u8[512]{0}', space=vmem, size = 0x400, scoped, tag = 'input window, operand 8, single buffered']
    #allocation15 [shape = 's32[1]{0}', space=sflag, size = 0x4, scoped, tag = 'scoped memory for tpu_custom_call.1']
    #allocation16 [shape = 'u8[512]{0}', space=vmem, size = 0x400, scoped, tag = 'input window, operand 9, single buffered']
    #allocation17 [shape = 'u8[512]{0}', space=vmem, size = 0x400, scoped, tag = 'input window, operand 10, single buffered']
    #allocation18 [shape = 's32[1]{0}', space=sflag, size = 0x4, scoped, tag = 'scoped memory for tpu_custom_call.1']
    #allocation19 [shape = 'u8[512]{0}', space=vmem, size = 0x400, scoped, tag = 'input window, operand 11, single buffered']
    #allocation20 [shape = 'u8[512]{0}', space=vmem, size = 0x400, scoped, tag = 'input window, operand 12, single buffered']
    #allocation21 [shape = 's32[1]{0}', space=sflag, size = 0x4, scoped, tag = 'scoped memory for tpu_custom_call.1']
    #allocation22 [shape = 'u8[16384]{0}', space=vmem, size = 0x4000, scoped, tag = 'input window, operand 13, single buffered']
    #allocation23 [shape = 'u8[512]{0}', space=vmem, size = 0x400, scoped, tag = 'input window, operand 14, single buffered']
    #allocation24 [shape = 's32[1]{0}', space=sflag, size = 0x4, scoped, tag = 'scoped memory for tpu_custom_call.1']
    #allocation25 [shape = 'u8[16384]{0}', space=vmem, size = 0x4000, scoped, tag = 'input window, operand 15, single buffered']
    #allocation26 [shape = 'u8[512]{0}', space=vmem, size = 0x400, scoped, tag = 'input window, operand 16, single buffered']
    #allocation27 [shape = 's32[1]{0}', space=sflag, size = 0x4, scoped, tag = 'scoped memory for tpu_custom_call.1']
    #allocation28 [shape = 'u8[512]{0}', space=vmem, size = 0x400, scoped, tag = 'input window, operand 17, single buffered']
    #allocation29 [shape = 'u8[512]{0}', space=vmem, size = 0x400, scoped, tag = 'input window, operand 18, single buffered']
    #allocation30 [shape = 's32[1]{0}', space=sflag, size = 0x4, scoped, tag = 'scoped memory for tpu_custom_call.1']
    #allocation31 [shape = 'u8[16384]{0}', space=vmem, size = 0x4000, scoped, tag = 'input window, operand 21, single buffered']
    #allocation32 [shape = 'u8[4096]{0}', space=vmem, size = 0x1000, scoped, tag = 'output window, operand 0']
    %28 = vsyncpa [#allocation3], 0
    %s29 = scalar_lea.sflag [#allocation3], 1
    %30 = vsyncpa %s29, 0
    %31 = vsyncpa [#allocation6], 0
    %s32 = scalar_lea.sflag [#allocation6], 1
    %33 = vsyncpa %s32, 0
    %34 = vsyncpa [#allocation9], 0
    %35 = vsyncpa [#allocation12], 0
    %36 = vsyncpa [#allocation15], 0
    %37 = vsyncpa [#allocation18], 0
    %38 = vsyncpa [#allocation21], 0
    %39 = vsyncpa [#allocation24], 0
    %40 = vsyncpa [#allocation27], 0
    %41 = vsyncpa [#allocation30], 0
    %42 = vsyncpa [#allocation4], 0
    %s43 = scalar_lea.sflag [#allocation4], 1
    %44 = vsyncpa %s43, 0
    loop: start=0, step=1, limit=4
    $region2: #{tpu_custom_call.1} parent=1 // loop_pre_header
      _
    $region3: #{tpu_custom_call.1} parent=1 // loop_header
      %s46 = sphi 0, %s50
      %p47 = scmp.ge.s32.totalorder %s46, 4
      %s56 = sphi 0, %s58
      %s59 = sphi 0, %s56
      %s60 = sphi 0, %s59
      %s76 = sphi 0, %s60
      %s82 = sphi 0, %s84
      %s85 = sphi 0, %s82
      %s86 = sphi 0, %s85
      %s102 = sphi 0, %s86
      %s106 = sphi 0, %s106
      %s108 = sphi 0, %s106
      %s109 = sphi 0, %s108
      %s123 = sphi 0, %s109
      %s127 = sphi 0, %s127
      %s129 = sphi 0, %s127
      %s130 = sphi 0, %s129
      %s144 = sphi 0, %s130
      %s148 = sphi 0, %s148
      %s150 = sphi 0, %s148
      %s151 = sphi 0, %s150
      %s165 = sphi 0, %s151
      %s169 = sphi 0, %s169
      %s171 = sphi 0, %s169
      %s172 = sphi 0, %s171
      %s186 = sphi 0, %s172
      %s190 = sphi 0, %s190
      %s192 = sphi 0, %s190
      %s193 = sphi 0, %s192
      %s207 = sphi 0, %s193
      %s211 = sphi 0, %s211
      %s213 = sphi 0, %s211
      %s214 = sphi 0, %s213
      %s228 = sphi 0, %s214
      %s232 = sphi 0, %s232
      %s234 = sphi 0, %s232
      %s235 = sphi 0, %s234
      %s249 = sphi 0, %s235
      %s253 = sphi 0, %s253
      %s255 = sphi 0, %s253
      %s256 = sphi 0, %s255
      %s270 = sphi 0, %s256
      %s274 = sphi 0, %s274
      %s276 = sphi 0, %s274
      %s277 = sphi 0, %s276
      %s291 = sphi 0, %s277
      %s295 = sphi 0, %s295
      %s297 = sphi 0, %s295
      %s298 = sphi 0, %s297
      %s312 = sphi 0, %s298
      %s316 = sphi 0, %s316
      %s318 = sphi 0, %s316
      %s319 = sphi 0, %s318
      %s333 = sphi 0, %s319
      %s337 = sphi 0, %s337
      %s339 = sphi 0, %s337
      %s340 = sphi 0, %s339
      %s354 = sphi 0, %s340
      %s358 = sphi 0, %s358
      %s360 = sphi 0, %s358
      %s361 = sphi 0, %s360
      %s375 = sphi 0, %s361
      %s379 = sphi 0, %s379
      %s381 = sphi 0, %s379
      %s382 = sphi 0, %s381
      %s396 = sphi 0, %s382
      %s400 = sphi 0, %s400
      %s402 = sphi 0, %s400
      %s403 = sphi 0, %s402
      %s417 = sphi 0, %s403
      %s421 = sphi 0, %s421
      %s423 = sphi 0, %s421
      %s424 = sphi 0, %s423
      %s438 = sphi 0, %s424
      %s442 = sphi 0, %s442
      %s444 = sphi 0, %s442
      %s445 = sphi 0, %s444
      %s459 = sphi 0, %s445
      %s463 = sphi 0, %s463
      %s465 = sphi 0, %s463
      %s466 = sphi 0, %s465
      %s480 = sphi 0, %s466
      %s484 = sphi 0, %s484
      %s486 = sphi 0, %s484
      %s487 = sphi 0, %s486
      %s501 = sphi 0, %s487
      %s505 = sphi 0, %s505
      %s507 = sphi 0, %s505
      %s508 = sphi 0, %s507
      %s522 = sphi 0, %s508
      %s526 = sphi 0, %s526
      %s528 = sphi 0, %s526
      %s529 = sphi 0, %s528
      %s543 = sphi 0, %s529
      %s549 = sphi 0, %s551
      %s552 = sphi 0, %s549
      %s553 = sphi 0, %s552
      %s569 = sphi 0, %s553
    $region4: #{tpu_custom_call.1} parent=1 // loop_header_branch
      %49 = sbr.rel (%p47) target = $region8
    $region5: #{tpu_custom_call.1} parent=1 // loop_body
      %s51 = ssub.s32 %s46, 1
      %s52 = ssub.s32 %s46, 2
      %s53 = sadd.s32 %s46, 1
      %s54 = ssub.s32 %s46, %s53
      %p55 = scmp.eq.s32.totalorder %s54, 0
      %s57 = sadd.s32 %s56, 1
      %s58 = scalar_select %p55, %s56, %s57
      %p61 = pneg %p55
      %p62 = scmp.eq.s32.totalorder %s46, 1
      %p63 = por %p61, %p62
      %p64 = scmp.ne.s32.totalorder %s56, %s59
      %p65 = scmp.eq.s32.totalorder %s46, 0
      %p66 = por %p64, %p65
      %p67 = scmp.ne.s32.totalorder %s56, %s59
      %p68 = scmp.eq.s32.totalorder %s51, 1
      %p69 = por %p67, %p68
      %p70 = scmp.ne.s32.totalorder %s59, %s60
      %p71 = scmp.eq.s32.totalorder %s51, 0
      %p72 = por %p70, %p71
      %p73 = scmp.ne.s32.totalorder %s59, %s60
      %p74 = scmp.eq.s32.totalorder %s52, 1
      %p75 = por %p73, %p74
      %p77 = scmp.ne.s32.totalorder %s60, %s76
      %p78 = scmp.eq.s32.totalorder %s52, 0
      %p79 = por %p77, %p78
      %s80 = ssub.s32 %s46, %s53
      %p81 = scmp.eq.s32.totalorder %s80, 0
      %s83 = sadd.s32 %s82, 1
      %s84 = scalar_select %p81, %s82, %s83
      %p87 = pneg %p81
      %p88 = scmp.eq.s32.totalorder %s46, 1
      %p89 = por %p87, %p88
      %p90 = scmp.ne.s32.totalorder %s82, %s85
      %p91 = scmp.eq.s32.totalorder %s46, 0
      %p92 = por %p90, %p91
      %p93 = scmp.ne.s32.totalorder %s82, %s85
      %p94 = scmp.eq.s32.totalorder %s51, 1
      %p95 = por %p93, %p94
      %p96 = scmp.ne.s32.totalorder %s85, %s86
      %p97 = scmp.eq.s32.totalorder %s51, 0
      %p98 = por %p96, %p97
      %p99 = scmp.ne.s32.totalorder %s85, %s86
      %p100 = scmp.eq.s32.totalorder %s52, 1
      %p101 = por %p99, %p100
      %p103 = scmp.ne.s32.totalorder %s86, %s102
      %p104 = scmp.eq.s32.totalorder %s52, 0
      %p105 = por %p103, %p104
      %s107 = sadd.s32 %s106, 1
      %p110 = scmp.eq.s32.totalorder %s46, 1
      %p111 = scmp.ne.s32.totalorder %s106, %s108
      %p112 = scmp.eq.s32.totalorder %s46, 0
      %p113 = por %p111, %p112
      %p114 = scmp.ne.s32.totalorder %s106, %s108
      %p115 = scmp.eq.s32.totalorder %s51, 1
      %p116 = por %p114, %p115
      %p117 = scmp.ne.s32.totalorder %s108, %s109
      %p118 = scmp.eq.s32.totalorder %s51, 0
      %p119 = por %p117, %p118
      %p120 = scmp.ne.s32.totalorder %s108, %s109
      %p121 = scmp.eq.s32.totalorder %s52, 1
      %p122 = por %p120, %p121
      %p124 = scmp.ne.s32.totalorder %s109, %s123
      %p125 = scmp.eq.s32.totalorder %s52, 0
      %p126 = por %p124, %p125
      %s128 = sadd.s32 %s127, 1
      %p131 = scmp.eq.s32.totalorder %s46, 1
      %p132 = scmp.ne.s32.totalorder %s127, %s129
      %p133 = scmp.eq.s32.totalorder %s46, 0
      %p134 = por %p132, %p133
      %p135 = scmp.ne.s32.totalorder %s127, %s129
      %p136 = scmp.eq.s32.totalorder %s51, 1
      %p137 = por %p135, %p136
      %p138 = scmp.ne.s32.totalorder %s129, %s130
      %p139 = scmp.eq.s32.totalorder %s51, 0
      %p140 = por %p138, %p139
      %p141 = scmp.ne.s32.totalorder %s129, %s130
      %p142 = scmp.eq.s32.totalorder %s52, 1
      %p143 = por %p141, %p142
      %p145 = scmp.ne.s32.totalorder %s130, %s144
      %p146 = scmp.eq.s32.totalorder %s52, 0
      %p147 = por %p145, %p146
      %s149 = sadd.s32 %s148, 1
      %p152 = scmp.eq.s32.totalorder %s46, 1
      %p153 = scmp.ne.s32.totalorder %s148, %s150
      %p154 = scmp.eq.s32.totalorder %s46, 0
      %p155 = por %p153, %p154
      %p156 = scmp.ne.s32.totalorder %s148, %s150
      %p157 = scmp.eq.s32.totalorder %s51, 1
      %p158 = por %p156, %p157
      %p159 = scmp.ne.s32.totalorder %s150, %s151
      %p160 = scmp.eq.s32.totalorder %s51, 0
      %p161 = por %p159, %p160
      %p162 = scmp.ne.s32.totalorder %s150, %s151
      %p163 = scmp.eq.s32.totalorder %s52, 1
      %p164 = por %p162, %p163
      %p166 = scmp.ne.s32.totalorder %s151, %s165
      %p167 = scmp.eq.s32.totalorder %s52, 0
      %p168 = por %p166, %p167
      %s170 = sadd.s32 %s169, 1
      %p173 = scmp.eq.s32.totalorder %s46, 1
      %p174 = scmp.ne.s32.totalorder %s169, %s171
      %p175 = scmp.eq.s32.totalorder %s46, 0
      %p176 = por %p174, %p175
      %p177 = scmp.ne.s32.totalorder %s169, %s171
      %p178 = scmp.eq.s32.totalorder %s51, 1
      %p179 = por %p177, %p178
      %p180 = scmp.ne.s32.totalorder %s171, %s172
      %p181 = scmp.eq.s32.totalorder %s51, 0
      %p182 = por %p180, %p181
      %p183 = scmp.ne.s32.totalorder %s171, %s172
      %p184 = scmp.eq.s32.totalorder %s52, 1
      %p185 = por %p183, %p184
      %p187 = scmp.ne.s32.totalorder %s172, %s186
      %p188 = scmp.eq.s32.totalorder %s52, 0
      %p189 = por %p187, %p188
      %s191 = sadd.s32 %s190, 1
      %p194 = scmp.eq.s32.totalorder %s46, 1
      %p195 = scmp.ne.s32.totalorder %s190, %s192
      %p196 = scmp.eq.s32.totalorder %s46, 0
      %p197 = por %p195, %p196
      %p198 = scmp.ne.s32.totalorder %s190, %s192
      %p199 = scmp.eq.s32.totalorder %s51, 1
      %p200 = por %p198, %p199
      %p201 = scmp.ne.s32.totalorder %s192, %s193
      %p202 = scmp.eq.s32.totalorder %s51, 0
      %p203 = por %p201, %p202
      %p204 = scmp.ne.s32.totalorder %s192, %s193
      %p205 = scmp.eq.s32.totalorder %s52, 1
      %p206 = por %p204, %p205
      %p208 = scmp.ne.s32.totalorder %s193, %s207
      %p209 = scmp.eq.s32.totalorder %s52, 0
      %p210 = por %p208, %p209
      %s212 = sadd.s32 %s211, 1
      %p215 = scmp.eq.s32.totalorder %s46, 1
      %p216 = scmp.ne.s32.totalorder %s211, %s213
      %p217 = scmp.eq.s32.totalorder %s46, 0
      %p218 = por %p216, %p217
      %p219 = scmp.ne.s32.totalorder %s211, %s213
      %p220 = scmp.eq.s32.totalorder %s51, 1
      %p221 = por %p219, %p220
      %p222 = scmp.ne.s32.totalorder %s213, %s214
      %p223 = scmp.eq.s32.totalorder %s51, 0
      %p224 = por %p222, %p223
      %p225 = scmp.ne.s32.totalorder %s213, %s214
      %p226 = scmp.eq.s32.totalorder %s52, 1
      %p227 = por %p225, %p226
      %p229 = scmp.ne.s32.totalorder %s214, %s228
      %p230 = scmp.eq.s32.totalorder %s52, 0
      %p231 = por %p229, %p230
      %s233 = sadd.s32 %s232, 1
      %p236 = scmp.eq.s32.totalorder %s46, 1
      %p237 = scmp.ne.s32.totalorder %s232, %s234
      %p238 = scmp.eq.s32.totalorder %s46, 0
      %p239 = por %p237, %p238
      %p240 = scmp.ne.s32.totalorder %s232, %s234
      %p241 = scmp.eq.s32.totalorder %s51, 1
      %p242 = por %p240, %p241
      %p243 = scmp.ne.s32.totalorder %s234, %s235
      %p244 = scmp.eq.s32.totalorder %s51, 0
      %p245 = por %p243, %p244
      %p246 = scmp.ne.s32.totalorder %s234, %s235
      %p247 = scmp.eq.s32.totalorder %s52, 1
      %p248 = por %p246, %p247
      %p250 = scmp.ne.s32.totalorder %s235, %s249
      %p251 = scmp.eq.s32.totalorder %s52, 0
      %p252 = por %p250, %p251
      %s254 = sadd.s32 %s253, 1
      %p257 = scmp.eq.s32.totalorder %s46, 1
      %p258 = scmp.ne.s32.totalorder %s253, %s255
      %p259 = scmp.eq.s32.totalorder %s46, 0
      %p260 = por %p258, %p259
      %p261 = scmp.ne.s32.totalorder %s253, %s255
      %p262 = scmp.eq.s32.totalorder %s51, 1
      %p263 = por %p261, %p262
      %p264 = scmp.ne.s32.totalorder %s255, %s256
      %p265 = scmp.eq.s32.totalorder %s51, 0
      %p266 = por %p264, %p265
      %p267 = scmp.ne.s32.totalorder %s255, %s256
      %p268 = scmp.eq.s32.totalorder %s52, 1
      %p269 = por %p267, %p268
      %p271 = scmp.ne.s32.totalorder %s256, %s270
      %p272 = scmp.eq.s32.totalorder %s52, 0
      %p273 = por %p271, %p272
      %s275 = sadd.s32 %s274, 1
      %p278 = scmp.eq.s32.totalorder %s46, 1
      %p279 = scmp.ne.s32.totalorder %s274, %s276
      %p280 = scmp.eq.s32.totalorder %s46, 0
      %p281 = por %p279, %p280
      %p282 = scmp.ne.s32.totalorder %s274, %s276
      %p283 = scmp.eq.s32.totalorder %s51, 1
      %p284 = por %p282, %p283
      %p285 = scmp.ne.s32.totalorder %s276, %s277
      %p286 = scmp.eq.s32.totalorder %s51, 0
      %p287 = por %p285, %p286
      %p288 = scmp.ne.s32.totalorder %s276, %s277
      %p289 = scmp.eq.s32.totalorder %s52, 1
      %p290 = por %p288, %p289
      %p292 = scmp.ne.s32.totalorder %s277, %s291
      %p293 = scmp.eq.s32.totalorder %s52, 0
      %p294 = por %p292, %p293
      %s296 = sadd.s32 %s295, 1
      %p299 = scmp.eq.s32.totalorder %s46, 1
      %p300 = scmp.ne.s32.totalorder %s295, %s297
      %p301 = scmp.eq.s32.totalorder %s46, 0
      %p302 = por %p300, %p301
      %p303 = scmp.ne.s32.totalorder %s295, %s297
      %p304 = scmp.eq.s32.totalorder %s51, 1
      %p305 = por %p303, %p304
      %p306 = scmp.ne.s32.totalorder %s297, %s298
      %p307 = scmp.eq.s32.totalorder %s51, 0
      %p308 = por %p306, %p307
      %p309 = scmp.ne.s32.totalorder %s297, %s298
      %p310 = scmp.eq.s32.totalorder %s52, 1
      %p311 = por %p309, %p310
      %p313 = scmp.ne.s32.totalorder %s298, %s312
      %p314 = scmp.eq.s32.totalorder %s52, 0
      %p315 = por %p313, %p314
      %s317 = sadd.s32 %s316, 1
      %p320 = scmp.eq.s32.totalorder %s46, 1
      %p321 = scmp.ne.s32.totalorder %s316, %s318
      %p322 = scmp.eq.s32.totalorder %s46, 0
      %p323 = por %p321, %p322
      %p324 = scmp.ne.s32.totalorder %s316, %s318
      %p325 = scmp.eq.s32.totalorder %s51, 1
      %p326 = por %p324, %p325
      %p327 = scmp.ne.s32.totalorder %s318, %s319
      %p328 = scmp.eq.s32.totalorder %s51, 0
      %p329 = por %p327, %p328
      %p330 = scmp.ne.s32.totalorder %s318, %s319
      %p331 = scmp.eq.s32.totalorder %s52, 1
      %p332 = por %p330, %p331
      %p334 = scmp.ne.s32.totalorder %s319, %s333
      %p335 = scmp.eq.s32.totalorder %s52, 0
      %p336 = por %p334, %p335
      %s338 = sadd.s32 %s337, 1
      %p341 = scmp.eq.s32.totalorder %s46, 1
      %p342 = scmp.ne.s32.totalorder %s337, %s339
      %p343 = scmp.eq.s32.totalorder %s46, 0
      %p344 = por %p342, %p343
      %p345 = scmp.ne.s32.totalorder %s337, %s339
      %p346 = scmp.eq.s32.totalorder %s51, 1
      %p347 = por %p345, %p346
      %p348 = scmp.ne.s32.totalorder %s339, %s340
      %p349 = scmp.eq.s32.totalorder %s51, 0
      %p350 = por %p348, %p349
      %p351 = scmp.ne.s32.totalorder %s339, %s340
      %p352 = scmp.eq.s32.totalorder %s52, 1
      %p353 = por %p351, %p352
      %p355 = scmp.ne.s32.totalorder %s340, %s354
      %p356 = scmp.eq.s32.totalorder %s52, 0
      %p357 = por %p355, %p356
      %s359 = sadd.s32 %s358, 1
      %p362 = scmp.eq.s32.totalorder %s46, 1
      %p363 = scmp.ne.s32.totalorder %s358, %s360
      %p364 = scmp.eq.s32.totalorder %s46, 0
      %p365 = por %p363, %p364
      %p366 = scmp.ne.s32.totalorder %s358, %s360
      %p367 = scmp.eq.s32.totalorder %s51, 1
      %p368 = por %p366, %p367
      %p369 = scmp.ne.s32.totalorder %s360, %s361
      %p370 = scmp.eq.s32.totalorder %s51, 0
      %p371 = por %p369, %p370
      %p372 = scmp.ne.s32.totalorder %s360, %s361
      %p373 = scmp.eq.s32.totalorder %s52, 1
      %p374 = por %p372, %p373
      %p376 = scmp.ne.s32.totalorder %s361, %s375
      %p377 = scmp.eq.s32.totalorder %s52, 0
      %p378 = por %p376, %p377
      %s380 = sadd.s32 %s379, 1
      %p383 = scmp.eq.s32.totalorder %s46, 1
      %p384 = scmp.ne.s32.totalorder %s379, %s381
      %p385 = scmp.eq.s32.totalorder %s46, 0
      %p386 = por %p384, %p385
      %p387 = scmp.ne.s32.totalorder %s379, %s381
      %p388 = scmp.eq.s32.totalorder %s51, 1
      %p389 = por %p387, %p388
      %p390 = scmp.ne.s32.totalorder %s381, %s382
      %p391 = scmp.eq.s32.totalorder %s51, 0
      %p392 = por %p390, %p391
      %p393 = scmp.ne.s32.totalorder %s381, %s382
      %p394 = scmp.eq.s32.totalorder %s52, 1
      %p395 = por %p393, %p394
      %p397 = scmp.ne.s32.totalorder %s382, %s396
      %p398 = scmp.eq.s32.totalorder %s52, 0
      %p399 = por %p397, %p398
      %s401 = sadd.s32 %s400, 1
      %p404 = scmp.eq.s32.totalorder %s46, 1
      %p405 = scmp.ne.s32.totalorder %s400, %s402
      %p406 = scmp.eq.s32.totalorder %s46, 0
      %p407 = por %p405, %p406
      %p408 = scmp.ne.s32.totalorder %s400, %s402
      %p409 = scmp.eq.s32.totalorder %s51, 1
      %p410 = por %p408, %p409
      %p411 = scmp.ne.s32.totalorder %s402, %s403
      %p412 = scmp.eq.s32.totalorder %s51, 0
      %p413 = por %p411, %p412
      %p414 = scmp.ne.s32.totalorder %s402, %s403
      %p415 = scmp.eq.s32.totalorder %s52, 1
      %p416 = por %p414, %p415
      %p418 = scmp.ne.s32.totalorder %s403, %s417
      %p419 = scmp.eq.s32.totalorder %s52, 0
      %p420 = por %p418, %p419
      %s422 = sadd.s32 %s421, 1
      %p425 = scmp.eq.s32.totalorder %s46, 1
      %p426 = scmp.ne.s32.totalorder %s421, %s423
      %p427 = scmp.eq.s32.totalorder %s46, 0
      %p428 = por %p426, %p427
      %p429 = scmp.ne.s32.totalorder %s421, %s423
      %p430 = scmp.eq.s32.totalorder %s51, 1
      %p431 = por %p429, %p430
      %p432 = scmp.ne.s32.totalorder %s423, %s424
      %p433 = scmp.eq.s32.totalorder %s51, 0
      %p434 = por %p432, %p433
      %p435 = scmp.ne.s32.totalorder %s423, %s424
      %p436 = scmp.eq.s32.totalorder %s52, 1
      %p437 = por %p435, %p436
      %p439 = scmp.ne.s32.totalorder %s424, %s438
      %p440 = scmp.eq.s32.totalorder %s52, 0
      %p441 = por %p439, %p440
      %s443 = sadd.s32 %s442, 1
      %p446 = scmp.eq.s32.totalorder %s46, 1
      %p447 = scmp.ne.s32.totalorder %s442, %s444
      %p448 = scmp.eq.s32.totalorder %s46, 0
      %p449 = por %p447, %p448
      %p450 = scmp.ne.s32.totalorder %s442, %s444
      %p451 = scmp.eq.s32.totalorder %s51, 1
      %p452 = por %p450, %p451
      %p453 = scmp.ne.s32.totalorder %s444, %s445
      %p454 = scmp.eq.s32.totalorder %s51, 0
      %p455 = por %p453, %p454
      %p456 = scmp.ne.s32.totalorder %s444, %s445
      %p457 = scmp.eq.s32.totalorder %s52, 1
      %p458 = por %p456, %p457
      %p460 = scmp.ne.s32.totalorder %s445, %s459
      %p461 = scmp.eq.s32.totalorder %s52, 0
      %p462 = por %p460, %p461
      %s464 = sadd.s32 %s463, 1
      %p467 = scmp.eq.s32.totalorder %s46, 1
      %p468 = scmp.ne.s32.totalorder %s463, %s465
      %p469 = scmp.eq.s32.totalorder %s46, 0
      %p470 = por %p468, %p469
      %p471 = scmp.ne.s32.totalorder %s463, %s465
      %p472 = scmp.eq.s32.totalorder %s51, 1
      %p473 = por %p471, %p472
      %p474 = scmp.ne.s32.totalorder %s465, %s466
      %p475 = scmp.eq.s32.totalorder %s51, 0
      %p476 = por %p474, %p475
      %p477 = scmp.ne.s32.totalorder %s465, %s466
      %p478 = scmp.eq.s32.totalorder %s52, 1
      %p479 = por %p477, %p478
      %p481 = scmp.ne.s32.totalorder %s466, %s480
      %p482 = scmp.eq.s32.totalorder %s52, 0
      %p483 = por %p481, %p482
      %s485 = sadd.s32 %s484, 1
      %p488 = scmp.eq.s32.totalorder %s46, 1
      %p489 = scmp.ne.s32.totalorder %s484, %s486
      %p490 = scmp.eq.s32.totalorder %s46, 0
      %p491 = por %p489, %p490
      %p492 = scmp.ne.s32.totalorder %s484, %s486
      %p493 = scmp.eq.s32.totalorder %s51, 1
      %p494 = por %p492, %p493
      %p495 = scmp.ne.s32.totalorder %s486, %s487
      %p496 = scmp.eq.s32.totalorder %s51, 0
      %p497 = por %p495, %p496
      %p498 = scmp.ne.s32.totalorder %s486, %s487
      %p499 = scmp.eq.s32.totalorder %s52, 1
      %p500 = por %p498, %p499
      %p502 = scmp.ne.s32.totalorder %s487, %s501
      %p503 = scmp.eq.s32.totalorder %s52, 0
      %p504 = por %p502, %p503
      %s506 = sadd.s32 %s505, 1
      %p509 = scmp.eq.s32.totalorder %s46, 1
      %p510 = scmp.ne.s32.totalorder %s505, %s507
      %p511 = scmp.eq.s32.totalorder %s46, 0
      %p512 = por %p510, %p511
      %p513 = scmp.ne.s32.totalorder %s505, %s507
      %p514 = scmp.eq.s32.totalorder %s51, 1
      %p515 = por %p513, %p514
      %p516 = scmp.ne.s32.totalorder %s507, %s508
      %p517 = scmp.eq.s32.totalorder %s51, 0
      %p518 = por %p516, %p517
      %p519 = scmp.ne.s32.totalorder %s507, %s508
      %p520 = scmp.eq.s32.totalorder %s52, 1
      %p521 = por %p519, %p520
      %p523 = scmp.ne.s32.totalorder %s508, %s522
      %p524 = scmp.eq.s32.totalorder %s52, 0
      %p525 = por %p523, %p524
      %s527 = sadd.s32 %s526, 1
      %p530 = scmp.eq.s32.totalorder %s46, 1
      %p531 = scmp.ne.s32.totalorder %s526, %s528
      %p532 = scmp.eq.s32.totalorder %s46, 0
      %p533 = por %p531, %p532
      %p534 = scmp.ne.s32.totalorder %s526, %s528
      %p535 = scmp.eq.s32.totalorder %s51, 1
      %p536 = por %p534, %p535
      %p537 = scmp.ne.s32.totalorder %s528, %s529
      %p538 = scmp.eq.s32.totalorder %s51, 0
      %p539 = por %p537, %p538
      %p540 = scmp.ne.s32.totalorder %s528, %s529
      %p541 = scmp.eq.s32.totalorder %s52, 1
      %p542 = por %p540, %p541
      %p544 = scmp.ne.s32.totalorder %s529, %s543
      %p545 = scmp.eq.s32.totalorder %s52, 0
      %p546 = por %p544, %p545
      %s547 = ssub.s32 %s46, %s53
      %p548 = scmp.eq.s32.totalorder %s547, 0
      %s550 = sadd.s32 %s549, 1
      %s551 = scalar_select %p548, %s549, %s550
      %p554 = pneg %p548
      %p555 = scmp.eq.s32.totalorder %s46, 1
      %p556 = por %p554, %p555
      %p557 = scmp.ne.s32.totalorder %s549, %s552
      %p558 = scmp.eq.s32.totalorder %s46, 0
      %p559 = por %p557, %p558
      %p560 = scmp.ne.s32.totalorder %s549, %s552
      %p561 = scmp.eq.s32.totalorder %s51, 1
      %p562 = por %p560, %p561
      %p563 = scmp.ne.s32.totalorder %s552, %s553
      %p564 = scmp.eq.s32.totalorder %s51, 0
      %p565 = por %p563, %p564
      %p566 = scmp.ne.s32.totalorder %s552, %s553
      %p567 = scmp.eq.s32.totalorder %s52, 1
      %p568 = por %p566, %p567
      %p570 = scmp.ne.s32.totalorder %s553, %s569
      %p571 = scmp.eq.s32.totalorder %s52, 0
      %p572 = por %p570, %p571
      %p573 = scmp.le.s32.totalorder 1, %s46
      %p574 = scmp.lt.s32.totalorder %s46, 3
      %p575 = pnand %p573, %p574
      %p576 = pneg %p575
      // Predicated region
      $region9: #{tpu_custom_call.1} parent=5 // pred_check
        _
      $region10: #{tpu_custom_call.1} parent=5 // pred_check_branch
        %578 = sbr.rel (%p575) target = $region12
      $region11: #{tpu_custom_call.1} parent=5 // pred_region
        %s579 = ssub.s32 %s46, 1
        // Predicated region
        $region13: #{tpu_custom_call.1} parent=11 // pred_check
          %p580 = pneg %p119
        $region14: #{tpu_custom_call.1} parent=11 // pred_check_branch
          %582 = sbr.rel (%p580) target = $region16
        $region15: #{tpu_custom_call.1} parent=11 // pred_region
          _
        $region16: #{tpu_custom_call.1} parent=11 // pred_fallthru
          _
        // Predicated region
        $region17: #{tpu_custom_call.1} parent=11 // pred_check
          %p583 = pneg %p140
        $region18: #{tpu_custom_call.1} parent=11 // pred_check_branch
          %585 = sbr.rel (%p583) target = $region20
        $region19: #{tpu_custom_call.1} parent=11 // pred_region
          %s587 = ssub.s32 512, 512
          %588 = vsyncadd [#allocation6], %s587
          %s589 = sshll.u32 [#allocation7], 4
          %s590 = int_to_ptr.vmem [resolvable:$true] %s589
          %595 = dma.hbm_to_vmem [thread:$0]  %s3, 512, %s590, [#allocation6], 64, 64, 4
        $region20: #{tpu_custom_call.1} parent=11 // pred_fallthru
          _
        // Predicated region
        $region21: #{tpu_custom_call.1} parent=11 // pred_check
          %p596 = pneg %p161
        $region22: #{tpu_custom_call.1} parent=11 // pred_check_branch
          %598 = sbr.rel (%p596) target = $region24
        $region23: #{tpu_custom_call.1} parent=11 // pred_region
          %s600 = ssub.s32 512, 512
          %601 = vsyncadd [#allocation9], %s600
          %s602 = sshll.u32 [#allocation8], 4
          %s603 = int_to_ptr.vmem [resolvable:$true] %s602
          %608 = dma.hbm_to_vmem [thread:$0]  %s4, 512, %s603, [#allocation9], 64, 64, 4
        $region24: #{tpu_custom_call.1} parent=11 // pred_fallthru
          _
        // Predicated region
        $region25: #{tpu_custom_call.1} parent=11 // pred_check
          %p609 = pneg %p182
        $region26: #{tpu_custom_call.1} parent=11 // pred_check_branch
          %611 = sbr.rel (%p609) target = $region28
        $region27: #{tpu_custom_call.1} parent=11 // pred_region
          %s613 = ssub.s32 512, 512
          %614 = vsyncadd [#allocation9], %s613
          %s615 = sshll.u32 [#allocation10], 4
          %s616 = int_to_ptr.vmem [resolvable:$true] %s615
          %621 = dma.hbm_to_vmem [thread:$0]  %s5, 512, %s616, [#allocation9], 64, 64, 4
        $region28: #{tpu_custom_call.1} parent=11 // pred_fallthru
          _
        // Predicated region
        $region29: #{tpu_custom_call.1} parent=11 // pred_check
          %p622 = pneg %p203
        $region30: #{tpu_custom_call.1} parent=11 // pred_check_branch
          %624 = sbr.rel (%p622) target = $region32
        $region31: #{tpu_custom_call.1} parent=11 // pred_region
          %s626 = ssub.s32 512, 512
          %627 = vsyncadd [#allocation12], %s626
          %s628 = sshll.u32 [#allocation11], 4
          %s629 = int_to_ptr.vmem [resolvable:$true] %s628
          %634 = dma.hbm_to_vmem [thread:$0]  %s6, 512, %s629, [#allocation12], 64, 64, 4
        $region32: #{tpu_custom_call.1} parent=11 // pred_fallthru
          _
        // Predicated region
        $region33: #{tpu_custom_call.1} parent=11 // pred_check
          %p635 = pneg %p224
        $region34: #{tpu_custom_call.1} parent=11 // pred_check_branch
          %637 = sbr.rel (%p635) target = $region36
        $region35: #{tpu_custom_call.1} parent=11 // pred_region
          %s639 = ssub.s32 16, 16
          %640 = vsyncadd [#allocation12], %s639
          %s642 = sshll.u32 [#allocation13], 4
          %s643 = int_to_ptr.vmem [resolvable:$true] %s642
          %645 = dma.hbm_to_vmem [thread:$0]  %s7, 16, %s643, [#allocation12]
        $region36: #{tpu_custom_call.1} parent=11 // pred_fallthru
          _
        // Predicated region
        $region37: #{tpu_custom_call.1} parent=11 // pred_check
          %p646 = pneg %p245
        $region38: #{tpu_custom_call.1} parent=11 // pred_check_branch
          %648 = sbr.rel (%p646) target = $region40
        $region39: #{tpu_custom_call.1} parent=11 // pred_region
          %s650 = ssub.s32 16, 16
          %651 = vsyncadd [#allocation15], %s650
          %s653 = sshll.u32 [#allocation14], 4
          %s654 = int_to_ptr.vmem [resolvable:$true] %s653
          %656 = dma.hbm_to_vmem [thread:$0]  %s8, 16, %s654, [#allocation15]
        $region40: #{tpu_custom_call.1} parent=11 // pred_fallthru
          _
        // Predicated region
        $region41: #{tpu_custom_call.1} parent=11 // pred_check
          %p657 = pneg %p266
        $region42: #{tpu_custom_call.1} parent=11 // pred_check_branch
          %659 = sbr.rel (%p657) target = $region44
        $region43: #{tpu_custom_call.1} parent=11 // pred_region
          %s661 = ssub.s32 16, 16
          %662 = vsyncadd [#allocation15], %s661
          %s664 = sshll.u32 [#allocation16], 4
          %s665 = int_to_ptr.vmem [resolvable:$true] %s664
          %667 = dma.hbm_to_vmem [thread:$0]  %s9, 16, %s665, [#allocation15]
        $region44: #{tpu_custom_call.1} parent=11 // pred_fallthru
          _
        // Predicated region
        $region45: #{tpu_custom_call.1} parent=11 // pred_check
          %p668 = pneg %p287
        $region46: #{tpu_custom_call.1} parent=11 // pred_check_branch
          %670 = sbr.rel (%p668) target = $region48
        $region47: #{tpu_custom_call.1} parent=11 // pred_region
          %s672 = ssub.s32 16, 16
          %673 = vsyncadd [#allocation18], %s672
          %s675 = sshll.u32 [#allocation17], 4
          %s676 = int_to_ptr.vmem [resolvable:$true] %s675
          %678 = dma.hbm_to_vmem [thread:$0]  %s10, 16, %s676, [#allocation18]
        $region48: #{tpu_custom_call.1} parent=11 // pred_fallthru
          _
        // Predicated region
        $region49: #{tpu_custom_call.1} parent=11 // pred_check
          %p679 = pneg %p308
        $region50: #{tpu_custom_call.1} parent=11 // pred_check_branch
          %681 = sbr.rel (%p679) target = $region52
        $region51: #{tpu_custom_call.1} parent=11 // pred_region
          %s683 = ssub.s32 16, 16
          %684 = vsyncadd [#allocation18], %s683
          %s686 = sshll.u32 [#allocation19], 4
          %s687 = int_to_ptr.vmem [resolvable:$true] %s686
          %689 = dma.hbm_to_vmem [thread:$0]  %s11, 16, %s687, [#allocation18]
        $region52: #{tpu_custom_call.1} parent=11 // pred_fallthru
          _
        // Predicated region
        $region53: #{tpu_custom_call.1} parent=11 // pred_check
          %p690 = pneg %p329
        $region54: #{tpu_custom_call.1} parent=11 // pred_check_branch
          %692 = sbr.rel (%p690) target = $region56
        $region55: #{tpu_custom_call.1} parent=11 // pred_region
          %s694 = ssub.s32 16, 16
          %695 = vsyncadd [#allocation21], %s694
          %s697 = sshll.u32 [#allocation20], 4
          %s698 = int_to_ptr.vmem [resolvable:$true] %s697
          %700 = dma.hbm_to_vmem [thread:$0]  %s12, 16, %s698, [#allocation21]
        $region56: #{tpu_custom_call.1} parent=11 // pred_fallthru
          _
        // Predicated region
        $region57: #{tpu_custom_call.1} parent=11 // pred_check
          %p701 = pneg %p350
        $region58: #{tpu_custom_call.1} parent=11 // pred_check_branch
          %703 = sbr.rel (%p701) target = $region60
        $region59: #{tpu_custom_call.1} parent=11 // pred_region
          %s705 = ssub.s32 512, 512
          %706 = vsyncadd [#allocation21], %s705
          %s707 = sshll.u32 [#allocation22], 4
          %s708 = int_to_ptr.vmem [resolvable:$true] %s707
          %713 = dma.hbm_to_vmem [thread:$0]  %s13, 512, %s708, [#allocation21], 64, 64, 4
        $region60: #{tpu_custom_call.1} parent=11 // pred_fallthru
          _
        // Predicated region
        $region61: #{tpu_custom_call.1} parent=11 // pred_check
          %p714 = pneg %p371
        $region62: #{tpu_custom_call.1} parent=11 // pred_check_branch
          %716 = sbr.rel (%p714) target = $region64
        $region63: #{tpu_custom_call.1} parent=11 // pred_region
          %s718 = ssub.s32 16, 16
          %719 = vsyncadd [#allocation24], %s718
          %s721 = sshll.u32 [#allocation23], 4
          %s722 = int_to_ptr.vmem [resolvable:$true] %s721
          %724 = dma.hbm_to_vmem [thread:$0]  %s14, 16, %s722, [#allocation24]
        $region64: #{tpu_custom_call.1} parent=11 // pred_fallthru
          _
        // Predicated region
        $region65: #{tpu_custom_call.1} parent=11 // pred_check
          %p725 = pneg %p392
        $region66: #{tpu_custom_call.1} parent=11 // pred_check_branch
          %727 = sbr.rel (%p725) target = $region68
        $region67: #{tpu_custom_call.1} parent=11 // pred_region
          %s729 = ssub.s32 512, 512
          %730 = vsyncadd [#allocation24], %s729
          %s731 = sshll.u32 [#allocation25], 4
          %s732 = int_to_ptr.vmem [resolvable:$true] %s731
          %737 = dma.hbm_to_vmem [thread:$0]  %s15, 512, %s732, [#allocation24], 64, 64, 4
        $region68: #{tpu_custom_call.1} parent=11 // pred_fallthru
          _
        // Predicated region
        $region69: #{tpu_custom_call.1} parent=11 // pred_check
          %p738 = pneg %p413
        $region70: #{tpu_custom_call.1} parent=11 // pred_check_branch
          %740 = sbr.rel (%p738) target = $region72
        $region71: #{tpu_custom_call.1} parent=11 // pred_region
          %s742 = ssub.s32 16, 16
          %743 = vsyncadd [#allocation27], %s742
          %s745 = sshll.u32 [#allocation26], 4
          %s746 = int_to_ptr.vmem [resolvable:$true] %s745
          %748 = dma.hbm_to_vmem [thread:$0]  %s16, 16, %s746, [#allocation27]
        $region72: #{tpu_custom_call.1} parent=11 // pred_fallthru
          _
        // Predicated region
        $region73: #{tpu_custom_call.1} parent=11 // pred_check
          %p749 = pneg %p434
        $region74: #{tpu_custom_call.1} parent=11 // pred_check_branch
          %751 = sbr.rel (%p749) target = $region76
        $region75: #{tpu_custom_call.1} parent=11 // pred_region
          %s753 = ssub.s32 16, 16
          %754 = vsyncadd [#allocation27], %s753
          %s756 = sshll.u32 [#allocation28], 4
          %s757 = int_to_ptr.vmem [resolvable:$true] %s756
          %759 = dma.hbm_to_vmem [thread:$0]  %s17, 16, %s757, [#allocation27]
        $region76: #{tpu_custom_call.1} parent=11 // pred_fallthru
          _
        // Predicated region
        $region77: #{tpu_custom_call.1} parent=11 // pred_check
          %p760 = pneg %p455
        $region78: #{tpu_custom_call.1} parent=11 // pred_check_branch
          %762 = sbr.rel (%p760) target = $region80
        $region79: #{tpu_custom_call.1} parent=11 // pred_region
          %s764 = ssub.s32 16, 16
          %765 = vsyncadd [#allocation30], %s764
          %s767 = sshll.u32 [#allocation29], 4
          %s768 = int_to_ptr.vmem [resolvable:$true] %s767
          %770 = dma.hbm_to_vmem [thread:$0]  %s18, 16, %s768, [#allocation30]
        $region80: #{tpu_custom_call.1} parent=11 // pred_fallthru
          _
        // Predicated region
        $region81: #{tpu_custom_call.1} parent=11 // pred_check
          %p771 = pneg %p476
        $region82: #{tpu_custom_call.1} parent=11 // pred_check_branch
          %773 = sbr.rel (%p771) target = $region84
        $region83: #{tpu_custom_call.1} parent=11 // pred_region
          _
        $region84: #{tpu_custom_call.1} parent=11 // pred_fallthru
          _
        // Predicated region
        $region85: #{tpu_custom_call.1} parent=11 // pred_check
          %p774 = pneg %p497
        $region86: #{tpu_custom_call.1} parent=11 // pred_check_branch
          %776 = sbr.rel (%p774) target = $region88
        $region87: #{tpu_custom_call.1} parent=11 // pred_region
          _
        $region88: #{tpu_custom_call.1} parent=11 // pred_fallthru
          _
        // Predicated region
        $region89: #{tpu_custom_call.1} parent=11 // pred_check
          %p777 = pneg %p518
        $region90: #{tpu_custom_call.1} parent=11 // pred_check_branch
          %779 = sbr.rel (%p777) target = $region92
        $region91: #{tpu_custom_call.1} parent=11 // pred_region
          %s781 = ssub.s32 512, 512
          %782 = vsyncadd [#allocation30], %s781
          %s783 = sshll.u32 [#allocation31], 4
          %s784 = int_to_ptr.vmem [resolvable:$true] %s783
          %789 = dma.hbm_to_vmem [thread:$0]  %s21, 512, %s784, [#allocation30], 64, 64, 4
        $region92: #{tpu_custom_call.1} parent=11 // pred_fallthru
          _
        // Predicated region
        $region93: #{tpu_custom_call.1} parent=11 // pred_check
          %p790 = pneg %p539
        $region94: #{tpu_custom_call.1} parent=11 // pred_check_branch
          %792 = sbr.rel (%p790) target = $region96
        $region95: #{tpu_custom_call.1} parent=11 // pred_region
          _
        $region96: #{tpu_custom_call.1} parent=11 // pred_fallthru
          _
      $region12: #{tpu_custom_call.1} parent=5 // pred_fallthru
        _
      %p793 = scmp.lt.s32.totalorder %s46, 2
      // Predicated region
      $region97: #{tpu_custom_call.1} parent=5 // pred_check
        %p794 = pneg %p793
      $region98: #{tpu_custom_call.1} parent=5 // pred_check_branch
        %796 = sbr.rel (%p794) target = $region100
      $region99: #{tpu_custom_call.1} parent=5 // pred_region
        // Predicated region
        $region101: #{tpu_custom_call.1} parent=99 // pred_check
          %p797 = pneg %p66
        $region102: #{tpu_custom_call.1} parent=99 // pred_check_branch
          %799 = sbr.rel (%p797) target = $region104
        $region103: #{tpu_custom_call.1} parent=99 // pred_region
          %s800 = sand.u32 %s56, 1
          %s801 = scalar_lea.sflag [#allocation3], %s800
          %s802 = sand.u32 %s56, 1
          %s803 = smul.addr %s802, 4
          %s804 = scalar_lea.vmem [#allocation2], %s803
          %s806 = ssub.s32 64, 64
          %807 = vsyncadd %s801, %s806
          %s808 = smul.addr %s46, 64
          %s809 = scalar_lea.hbm %s0, %s808
          %s811 = sshll.u32 %s804, 4
          %s812 = int_to_ptr.vmem [resolvable:$true] %s811
          %814 = dma.hbm_to_vmem [thread:$0]  %s809, 64, %s812, %s801
        $region104: #{tpu_custom_call.1} parent=99 // pred_fallthru
          _
        // Predicated region
        $region105: #{tpu_custom_call.1} parent=99 // pred_check
          %p815 = pneg %p92
        $region106: #{tpu_custom_call.1} parent=99 // pred_check_branch
          %817 = sbr.rel (%p815) target = $region108
        $region107: #{tpu_custom_call.1} parent=99 // pred_region
          %s818 = sand.u32 %s46, 1
          %s819 = scalar_lea.sflag [#allocation6], %s818
          %s820 = sand.u32 %s82, 1
          %s821 = scalar_lea.vmem [#allocation5], %s820
          %s823 = ssub.s32 16, 16
          %824 = vsyncadd %s819, %s823
          %s825 = smul.addr %s46, 16
          %s826 = scalar_lea.hbm %s1, %s825
          %s828 = sshll.u32 %s821, 4
          %s829 = int_to_ptr.vmem [resolvable:$true] %s828
          %831 = dma.hbm_to_vmem [thread:$0]  %s826, 16, %s829, %s819
        $region108: #{tpu_custom_call.1} parent=99 // pred_fallthru
          _
      $region100: #{tpu_custom_call.1} parent=5 // pred_fallthru
        _
      %p832 = scmp.le.s32.totalorder 1, %s46
      %p833 = scmp.lt.s32.totalorder %s46, 3
      %p834 = pnand %p832, %p833
      %p835 = pneg %p834
      // Predicated region
      $region109: #{tpu_custom_call.1} parent=5 // pred_check
        _
      $region110: #{tpu_custom_call.1} parent=5 // pred_check_branch
        %837 = sbr.rel (%p834) target = $region112
      $region111: #{tpu_custom_call.1} parent=5 // pred_region
        %s838 = ssub.s32 %s46, 1
        %s839 = sand.u32 %s59, 1
        %s840 = scalar_lea.sflag [#allocation3], %s839
        %s841 = sand.u32 %s59, 1
        %s842 = smul.addr %s841, 4
        %s843 = scalar_lea.vmem [#allocation2], %s842
        // Predicated region
        $region113: #{tpu_custom_call.1} parent=111 // pred_check
          %p844 = pneg %p72
        $region114: #{tpu_custom_call.1} parent=111 // pred_check_branch
          %846 = sbr.rel (%p844) target = $region116
        $region115: #{tpu_custom_call.1} parent=111 // pred_region
          %847 = dma.done %s840, 64
        $region116: #{tpu_custom_call.1} parent=111 // pred_fallthru
          _
        %s848 = sand.u32 %s51, 1
        %s849 = scalar_lea.sflag [#allocation6], %s848
        %s850 = sand.u32 %s85, 1
        %s851 = scalar_lea.vmem [#allocation5], %s850
        // Predicated region
        $region117: #{tpu_custom_call.1} parent=111 // pred_check
          %p852 = pneg %p98
        $region118: #{tpu_custom_call.1} parent=111 // pred_check_branch
          %854 = sbr.rel (%p852) target = $region120
        $region119: #{tpu_custom_call.1} parent=111 // pred_region
          %855 = dma.done %s849, 16
        $region120: #{tpu_custom_call.1} parent=111 // pred_fallthru
          _
        // Predicated region
        $region121: #{tpu_custom_call.1} parent=111 // pred_check
          %p856 = pneg %p140
        $region122: #{tpu_custom_call.1} parent=111 // pred_check_branch
          %858 = sbr.rel (%p856) target = $region124
        $region123: #{tpu_custom_call.1} parent=111 // pred_region
          %859 = dma.done [#allocation6], 512
        $region124: #{tpu_custom_call.1} parent=111 // pred_fallthru
          _
        // Predicated region
        $region125: #{tpu_custom_call.1} parent=111 // pred_check
          %p860 = pneg %p161
        $region126: #{tpu_custom_call.1} parent=111 // pred_check_branch
          %862 = sbr.rel (%p860) target = $region128
        $region127: #{tpu_custom_call.1} parent=111 // pred_region
          %863 = dma.done [#allocation9], 512
        $region128: #{tpu_custom_call.1} parent=111 // pred_fallthru
          _
        // Predicated region
        $region129: #{tpu_custom_call.1} parent=111 // pred_check
          %p864 = pneg %p182
        $region130: #{tpu_custom_call.1} parent=111 // pred_check_branch
          %866 = sbr.rel (%p864) target = $region132
        $region131: #{tpu_custom_call.1} parent=111 // pred_region
          %867 = dma.done [#allocation9], 512
        $region132: #{tpu_custom_call.1} parent=111 // pred_fallthru
          _
        // Predicated region
        $region133: #{tpu_custom_call.1} parent=111 // pred_check
          %p868 = pneg %p203
        $region134: #{tpu_custom_call.1} parent=111 // pred_check_branch
          %870 = sbr.rel (%p868) target = $region136
        $region135: #{tpu_custom_call.1} parent=111 // pred_region
          %871 = dma.done [#allocation12], 512
        $region136: #{tpu_custom_call.1} parent=111 // pred_fallthru
          _
        // Predicated region
        $region137: #{tpu_custom_call.1} parent=111 // pred_check
          %p872 = pneg %p224
        $region138: #{tpu_custom_call.1} parent=111 // pred_check_branch
          %874 = sbr.rel (%p872) target = $region140
        $region139: #{tpu_custom_call.1} parent=111 // pred_region
          %875 = dma.done [#allocation12], 16
        $region140: #{tpu_custom_call.1} parent=111 // pred_fallthru
          _
        // Predicated region
        $region141: #{tpu_custom_call.1} parent=111 // pred_check
          %p876 = pneg %p245
        $region142: #{tpu_custom_call.1} parent=111 // pred_check_branch
          %878 = sbr.rel (%p876) target = $region144
        $region143: #{tpu_custom_call.1} parent=111 // pred_region
          %879 = dma.done [#allocation15], 16
        $region144: #{tpu_custom_call.1} parent=111 // pred_fallthru
          _
        // Predicated region
        $region145: #{tpu_custom_call.1} parent=111 // pred_check
          %p880 = pneg %p266
        $region146: #{tpu_custom_call.1} parent=111 // pred_check_branch
          %882 = sbr.rel (%p880) target = $region148
        $region147: #{tpu_custom_call.1} parent=111 // pred_region
          %883 = dma.done [#allocation15], 16
        $region148: #{tpu_custom_call.1} parent=111 // pred_fallthru
          _
        // Predicated region
        $region149: #{tpu_custom_call.1} parent=111 // pred_check
          %p884 = pneg %p287
        $region150: #{tpu_custom_call.1} parent=111 // pred_check_branch
          %886 = sbr.rel (%p884) target = $region152
        $region151: #{tpu_custom_call.1} parent=111 // pred_region
          %887 = dma.done [#allocation18], 16
        $region152: #{tpu_custom_call.1} parent=111 // pred_fallthru
          _
        // Predicated region
        $region153: #{tpu_custom_call.1} parent=111 // pred_check
          %p888 = pneg %p308
        $region154: #{tpu_custom_call.1} parent=111 // pred_check_branch
          %890 = sbr.rel (%p888) target = $region156
        $region155: #{tpu_custom_call.1} parent=111 // pred_region
          %891 = dma.done [#allocation18], 16
        $region156: #{tpu_custom_call.1} parent=111 // pred_fallthru
          _
        // Predicated region
        $region157: #{tpu_custom_call.1} parent=111 // pred_check
          %p892 = pneg %p329
        $region158: #{tpu_custom_call.1} parent=111 // pred_check_branch
          %894 = sbr.rel (%p892) target = $region160
        $region159: #{tpu_custom_call.1} parent=111 // pred_region
          %895 = dma.done [#allocation21], 16
        $region160: #{tpu_custom_call.1} parent=111 // pred_fallthru
          _
        // Predicated region
        $region161: #{tpu_custom_call.1} parent=111 // pred_check
          %p896 = pneg %p350
        $region162: #{tpu_custom_call.1} parent=111 // pred_check_branch
          %898 = sbr.rel (%p896) target = $region164
        $region163: #{tpu_custom_call.1} parent=111 // pred_region
          %899 = dma.done [#allocation21], 512
        $region164: #{tpu_custom_call.1} parent=111 // pred_fallthru
          _
        // Predicated region
        $region165: #{tpu_custom_call.1} parent=111 // pred_check
          %p900 = pneg %p371
        $region166: #{tpu_custom_call.1} parent=111 // pred_check_branch
          %902 = sbr.rel (%p900) target = $region168
        $region167: #{tpu_custom_call.1} parent=111 // pred_region
          %903 = dma.done [#allocation24], 16
        $region168: #{tpu_custom_call.1} parent=111 // pred_fallthru
          _
        // Predicated region
        $region169: #{tpu_custom_call.1} parent=111 // pred_check
          %p904 = pneg %p392
        $region170: #{tpu_custom_call.1} parent=111 // pred_check_branch
          %906 = sbr.rel (%p904) target = $region172
        $region171: #{tpu_custom_call.1} parent=111 // pred_region
          %907 = dma.done [#allocation24], 512
        $region172: #{tpu_custom_call.1} parent=111 // pred_fallthru
          _
        // Predicated region
        $region173: #{tpu_custom_call.1} parent=111 // pred_check
          %p908 = pneg %p413
        $region174: #{tpu_custom_call.1} parent=111 // pred_check_branch
          %910 = sbr.rel (%p908) target = $region176
        $region175: #{tpu_custom_call.1} parent=111 // pred_region
          %911 = dma.done [#allocation27], 16
        $region176: #{tpu_custom_call.1} parent=111 // pred_fallthru
          _
        // Predicated region
        $region177: #{tpu_custom_call.1} parent=111 // pred_check
          %p912 = pneg %p434
        $region178: #{tpu_custom_call.1} parent=111 // pred_check_branch
          %914 = sbr.rel (%p912) target = $region180
        $region179: #{tpu_custom_call.1} parent=111 // pred_region
          %915 = dma.done [#allocation27], 16
        $region180: #{tpu_custom_call.1} parent=111 // pred_fallthru
          _
        // Predicated region
        $region181: #{tpu_custom_call.1} parent=111 // pred_check
          %p916 = pneg %p455
        $region182: #{tpu_custom_call.1} parent=111 // pred_check_branch
          %918 = sbr.rel (%p916) target = $region184
        $region183: #{tpu_custom_call.1} parent=111 // pred_region
          %919 = dma.done [#allocation30], 16
        $region184: #{tpu_custom_call.1} parent=111 // pred_fallthru
          _
        // Predicated region
        $region185: #{tpu_custom_call.1} parent=111 // pred_check
          %p920 = pneg %p518
        $region186: #{tpu_custom_call.1} parent=111 // pred_check_branch
          %922 = sbr.rel (%p920) target = $region188
        $region187: #{tpu_custom_call.1} parent=111 // pred_region
          %923 = dma.done [#allocation30], 512
        $region188: #{tpu_custom_call.1} parent=111 // pred_fallthru
          _
        %s924 = sand.u32 %s59, 1
        %s925 = scalar_lea.sflag [#allocation3], %s924
        %s926 = sand.u32 %s59, 1
        %s927 = smul.addr %s926, 4
        %s928 = scalar_lea.vmem [#allocation2], %s927
        %p929 = pneg %p72
        %p930 = pneg %p69
        %s931 = sand.u32 %s51, 1
        %s932 = scalar_lea.sflag [#allocation6], %s931
        %s933 = sand.u32 %s85, 1
        %s934 = scalar_lea.vmem [#allocation5], %s933
        %p935 = pneg %p98
        %p936 = pneg %p95
        %p937 = pneg %p119
        %p938 = pneg %p116
        %p939 = pneg %p140
        %p940 = pneg %p137
        %p941 = pneg %p161
        %p942 = pneg %p158
        %p943 = pneg %p182
        %p944 = pneg %p179
        %p945 = pneg %p203
        %p946 = pneg %p200
        %p947 = pneg %p224
        %p948 = pneg %p221
        %p949 = pneg %p245
        %p950 = pneg %p242
        %p951 = pneg %p266
        %p952 = pneg %p263
        %p953 = pneg %p287
        %p954 = pneg %p284
        %p955 = pneg %p308
        %p956 = pneg %p305
        %p957 = pneg %p329
        %p958 = pneg %p326
        %p959 = pneg %p350
        %p960 = pneg %p347
        %p961 = pneg %p371
        %p962 = pneg %p368
        %p963 = pneg %p392
        %p964 = pneg %p389
        %p965 = pneg %p413
        %p966 = pneg %p410
        %p967 = pneg %p434
        %p968 = pneg %p431
        %p969 = pneg %p455
        %p970 = pneg %p452
        %p971 = pneg %p476
        %p972 = pneg %p473
        %p973 = pneg %p497
        %p974 = pneg %p494
        %p975 = pneg %p518
        %p976 = pneg %p515
        %p977 = pneg %p539
        %p978 = pneg %p536
        %p979 = pneg %p565
        %p980 = pneg %p562
        %s981 = sand.u32 %s552, 1
        %s982 = scalar_lea.sflag [#allocation4], %s981
        %s983 = sand.u32 %s552, 1
        %s984 = smul.addr %s983, 4
        %s985 = scalar_lea.vmem [#allocation32], %s984
        %v987 = vld [vmem:[%s851] sm:$0x1]
        %v989 = vlaneseq
        %v990 = vshrl.u32 %v989, 7
        %v991 = vsub.s32 0, %v990
        %v992 = vrot.slane %v987, %v991
        %v994 = vld [vmem:[#allocation13] sm:$0x1]
        %v995 = vld [vmem:[#allocation14] sm:$0x1]
        %v996 = vld [vmem:[#allocation16] sm:$0x1]
        %v997 = vld [vmem:[#allocation17] sm:$0x1]
        %v998 = vld [vmem:[#allocation23] sm:$0x1]
        %v999 = vld [vmem:[#allocation26] sm:$0x1]
        %v1000 = vld [vmem:[#allocation19] sm:$0x1]
        %v1001 = vld [vmem:[#allocation20] sm:$0x1]
        %v1002 = vld [vmem:[#allocation28] sm:$0x1]
        %v1003 = vld [vmem:[#allocation29] sm:$0x1]
        %v1004 = vld [vmem:[%s843] sm:$0xf]
        %v1005 = vunpack.c.l.bf16 %v1004
        %v1006 = vld [vmem:[%s2] sm:$0x1]
        %v1007 = vlaneseq
        %v1008 = vshrl.u32 %v1007, 7
        %v1009 = vsub.s32 0, %v1008
        %v1010 = vrot.slane %v1006, %v1009
        %v1011 = vadd.f32 %v1005, %v1010
        %v1012 = vpack.c.bf16 %v1011, %v1011
        %v1013 = vld [vmem:[#allocation7] sm:$0xf]
        %v1014 = vld [vmem:[#allocation7 + $0x4] sm:$0xf]
        %v1015 = vld [vmem:[#allocation7 + $0x8] sm:$0xf]
        %v1016 = vld [vmem:[#allocation7 + $0xc] sm:$0xf]
        %v1017 = vld [vmem:[#allocation7 + $0x10] sm:$0xf]
        %v1018 = vld [vmem:[#allocation7 + $0x14] sm:$0xf]
        %v1019 = vld [vmem:[#allocation7 + $0x18] sm:$0xf]
        %v1020 = vld [vmem:[#allocation7 + $0x1c] sm:$0xf]
        %v1022 = vlaneseq
        %v1023 = vshrl.u32 %v1022, 7
        %v1024 = vsub.s32 0, %v1023
        %v1025 = vrot.slane %v994, %v1024
        %v1035 = vunpack.c.l.b16 %v1013
        %v1036 = vunpack.c.l.b16 %v1014
        %v1037 = vunpack.c.l.b16 %v1015
        %v1038 = vunpack.c.l.b16 %v1016
        %v1039 = vunpack.c.l.b16 %v1017
        %v1040 = vunpack.c.l.b16 %v1018
        %v1041 = vunpack.c.l.b16 %v1019
        %v1042 = vunpack.c.l.b16 %v1020
        %v1043 = vpack.c.b16 %v1036, %v1035
        %v1044 = vpack.c.b16 %v1038, %v1037
        %v1045 = vpack.c.b16 %v1040, %v1039
        %v1046 = vpack.c.b16 %v1042, %v1041
        %vm1051 = vcmask 523264
        %v1053 = vsel %vm1051, %v1012, 0
        %1055 = vmatprep.subr.bf16.mxu0 0
        %1056 = vmatpush1.bf16.msra.mxu0 0
        %1057 = vmatprep.subr.bf16.mxu0 0
        %1058 = vmatpush1.bf16.msra.mxu0 0
        %1059 = vmatprep.subr.bf16.mxu0 0
        %1060 = vmatpush1.bf16.msra.mxu0 0
        %1061 = vmatprep.subr.bf16.mxu0 0
        %1062 = vmatpush1.bf16.msra.mxu0 0
        %1063 = vmatprep.subr.bf16.mxu0 0
        %1064 = vmatpush1.bf16.msra.mxu0 %v1046
        %1065 = vmatprep.subr.bf16.mxu0 0
        %1066 = vmatpush1.bf16.msra.mxu0 %v1045
        %1067 = vmatprep.subr.bf16.mxu0 0
        %1068 = vmatpush1.bf16.msra.mxu0 %v1044
        %1069 = vmatprep.subr.bf16.mxu0 0
        %1070 = vmatpush1.bf16.msra.mxu0 %v1043
        %1071 = vmatprep.subr.bf16.mxu0 0
        %1072 = vmatpush2.bf16.msra.mxu0 0
        %1073 = vmatprep.subr.bf16.mxu0 0
        %1074 = vmatpush2.bf16.msra.mxu0 0
        %1075 = vmatprep.subr.bf16.mxu0 0
        %1076 = vmatpush2.bf16.msra.mxu0 0
        %1077 = vmatprep.subr.bf16.mxu0 0
        %1078 = vmatpush2.bf16.msra.mxu0 0
        %1079 = vmatprep.subr.bf16.mxu0 0
        %1080 = vmatpush2.bf16.msra.mxu0 0
        %1081 = vmatprep.subr.bf16.mxu0 0
        %1082 = vmatpush2.bf16.msra.mxu0 0
        %1083 = vmatprep.subr.bf16.mxu0 0
        %1084 = vmatpush2.bf16.msra.mxu0 0
        %1085 = vmatprep.subr.bf16.mxu0 0
        %1086 = vmatpush2.bf16.msra.mxu0 0
        %1087 = vmatprep.mubr.bf16.mxu0 0
        %1088 = vmatmul.mubr.bf16.gmra.mxu0 %v1053
        %v1089 = vpop.f32.mrf.mxu0
        %v1090 = vadd.f32 %v1025, %v1089
        %v1091 = vpop.f32.mrf.mxu0
        %v1092 = vpop.f32.mrf.mxu0
        %v1093 = vpop.f32.mrf.mxu0
        %1094 = vdwg.mxu0
        %v1095 = vmul.f32 %v1090, 0.25
        %v1096 = vld [vmem:[#allocation8] sm:$0xf]
        %v1097 = vld [vmem:[#allocation8 + $0x4] sm:$0xf]
        %v1098 = vld [vmem:[#allocation8 + $0x8] sm:$0xf]
        %v1099 = vld [vmem:[#allocation8 + $0xc] sm:$0xf]
        %v1100 = vld [vmem:[#allocation8 + $0x10] sm:$0xf]
        %v1101 = vld [vmem:[#allocation8 + $0x14] sm:$0xf]
        %v1102 = vld [vmem:[#allocation8 + $0x18] sm:$0xf]
        %v1103 = vld [vmem:[#allocation8 + $0x1c] sm:$0xf]
        %v1105 = vlaneseq
        %v1106 = vshrl.u32 %v1105, 7
        %v1107 = vsub.s32 0, %v1106
        %v1108 = vrot.slane %v995, %v1107
        %v1118 = vunpack.c.l.b16 %v1096
        %v1119 = vunpack.c.l.b16 %v1097
        %v1120 = vunpack.c.l.b16 %v1098
        %v1121 = vunpack.c.l.b16 %v1099
        %v1122 = vunpack.c.l.b16 %v1100
        %v1123 = vunpack.c.l.b16 %v1101
        %v1124 = vunpack.c.l.b16 %v1102
        %v1125 = vunpack.c.l.b16 %v1103
        %v1126 = vpack.c.b16 %v1119, %v1118
        %v1127 = vpack.c.b16 %v1121, %v1120
        %v1128 = vpack.c.b16 %v1123, %v1122
        %v1129 = vpack.c.b16 %v1125, %v1124
        %1134 = vmatprep.subr.bf16.mxu0 0
        %1135 = vmatpush1.bf16.msra.mxu0 0
        %1136 = vmatprep.subr.bf16.mxu0 0
        %1137 = vmatpush1.bf16.msra.mxu0 0
        %1138 = vmatprep.subr.bf16.mxu0 0
        %1139 = vmatpush1.bf16.msra.mxu0 0
        %1140 = vmatprep.subr.bf16.mxu0 0
        %1141 = vmatpush1.bf16.msra.mxu0 0
        %1142 = vmatprep.subr.bf16.mxu0 0
        %1143 = vmatpush1.bf16.msra.mxu0 %v1129
        %1144 = vmatprep.subr.bf16.mxu0 0
        %1145 = vmatpush1.bf16.msra.mxu0 %v1128
        %1146 = vmatprep.subr.bf16.mxu0 0
        %1147 = vmatpush1.bf16.msra.mxu0 %v1127
        %1148 = vmatprep.subr.bf16.mxu0 0
        %1149 = vmatpush1.bf16.msra.mxu0 %v1126
        %1150 = vmatprep.subr.bf16.mxu0 0
        %1151 = vmatpush2.bf16.msra.mxu0 0
        %1152 = vmatprep.subr.bf16.mxu0 0
        %1153 = vmatpush2.bf16.msra.mxu0 0
        %1154 = vmatprep.subr.bf16.mxu0 0
        %1155 = vmatpush2.bf16.msra.mxu0 0
        %1156 = vmatprep.subr.bf16.mxu0 0
        %1157 = vmatpush2.bf16.msra.mxu0 0
        %1158 = vmatprep.subr.bf16.mxu0 0
        %1159 = vmatpush2.bf16.msra.mxu0 0
        %1160 = vmatprep.subr.bf16.mxu0 0
        %1161 = vmatpush2.bf16.msra.mxu0 0
        %1162 = vmatprep.subr.bf16.mxu0 0
        %1163 = vmatpush2.bf16.msra.mxu0 0
        %1164 = vmatprep.subr.bf16.mxu0 0
        %1165 = vmatpush2.bf16.msra.mxu0 0
        %1166 = vmatprep.mubr.bf16.mxu0 0
        %1167 = vmatmul.mubr.bf16.gmra.mxu0 %v1053
        %v1168 = vpop.f32.mrf.mxu0
        %v1169 = vadd.f32 %v1108, %v1168
        %v1170 = vpop.f32.mrf.mxu0
        %v1171 = vpop.f32.mrf.mxu0
        %v1172 = vpop.f32.mrf.mxu0
        %1173 = vdwg.mxu0
        %v1174 = vld [vmem:[#allocation10] sm:$0xf]
        %v1175 = vld [vmem:[#allocation10 + $0x4] sm:$0xf]
        %v1176 = vld [vmem:[#allocation10 + $0x8] sm:$0xf]
        %v1177 = vld [vmem:[#allocation10 + $0xc] sm:$0xf]
        %v1178 = vld [vmem:[#allocation10 + $0x10] sm:$0xf]
        %v1179 = vld [vmem:[#allocation10 + $0x14] sm:$0xf]
        %v1180 = vld [vmem:[#allocation10 + $0x18] sm:$0xf]
        %v1181 = vld [vmem:[#allocation10 + $0x1c] sm:$0xf]
        %v1183 = vlaneseq
        %v1184 = vshrl.u32 %v1183, 7
        %v1185 = vsub.s32 0, %v1184
        %v1186 = vrot.slane %v996, %v1185
        %v1196 = vunpack.c.l.b16 %v1174
        %v1197 = vunpack.c.l.b16 %v1175
        %v1198 = vunpack.c.l.b16 %v1176
        %v1199 = vunpack.c.l.b16 %v1177
        %v1200 = vunpack.c.l.b16 %v1178
        %v1201 = vunpack.c.l.b16 %v1179
        %v1202 = vunpack.c.l.b16 %v1180
        %v1203 = vunpack.c.l.b16 %v1181
        %v1204 = vpack.c.b16 %v1197, %v1196
        %v1205 = vpack.c.b16 %v1199, %v1198
        %v1206 = vpack.c.b16 %v1201, %v1200
        %v1207 = vpack.c.b16 %v1203, %v1202
        %1212 = vmatprep.subr.bf16.mxu0 0
        %1213 = vmatpush1.bf16.msra.mxu0 0
        %1214 = vmatprep.subr.bf16.mxu0 0
        %1215 = vmatpush1.bf16.msra.mxu0 0
        %1216 = vmatprep.subr.bf16.mxu0 0
        %1217 = vmatpush1.bf16.msra.mxu0 0
        %1218 = vmatprep.subr.bf16.mxu0 0
        %1219 = vmatpush1.bf16.msra.mxu0 0
        %1220 = vmatprep.subr.bf16.mxu0 0
        %1221 = vmatpush1.bf16.msra.mxu0 %v1207
        %1222 = vmatprep.subr.bf16.mxu0 0
        %1223 = vmatpush1.bf16.msra.mxu0 %v1206
        %1224 = vmatprep.subr.bf16.mxu0 0
        %1225 = vmatpush1.bf16.msra.mxu0 %v1205
        %1226 = vmatprep.subr.bf16.mxu0 0
        %1227 = vmatpush1.bf16.msra.mxu0 %v1204
        %1228 = vmatprep.subr.bf16.mxu0 0
        %1229 = vmatpush2.bf16.msra.mxu0 0
        %1230 = vmatprep.subr.bf16.mxu0 0
        %1231 = vmatpush2.bf16.msra.mxu0 0
        %1232 = vmatprep.subr.bf16.mxu0 0
        %1233 = vmatpush2.bf16.msra.mxu0 0
        %1234 = vmatprep.subr.bf16.mxu0 0
        %1235 = vmatpush2.bf16.msra.mxu0 0
        %1236 = vmatprep.subr.bf16.mxu0 0
        %1237 = vmatpush2.bf16.msra.mxu0 0
        %1238 = vmatprep.subr.bf16.mxu0 0
        %1239 = vmatpush2.bf16.msra.mxu0 0
        %1240 = vmatprep.subr.bf16.mxu0 0
        %1241 = vmatpush2.bf16.msra.mxu0 0
        %1242 = vmatprep.subr.bf16.mxu0 0
        %1243 = vmatpush2.bf16.msra.mxu0 0
        %1244 = vmatprep.mubr.bf16.mxu0 0
        %1245 = vmatmul.mubr.bf16.gmra.mxu0 %v1053
        %v1246 = vpop.f32.mrf.mxu0
        %v1247 = vadd.f32 %v1186, %v1246
        %v1248 = vpop.f32.mrf.mxu0
        %v1249 = vpop.f32.mrf.mxu0
        %v1250 = vpop.f32.mrf.mxu0
        %1251 = vdwg.mxu0
        %v1252 = vpack.c.bf16 %v1095, %v1095
        %v1253 = vpack.c.bf16 %v1169, %v1169
        %v1254 = vpack.c.bf16 %v1247, %v1247
        %vm1255 = vcmask 130048
        %v1257 = vsel %vm1255, %v1252, 0
        %v1260 = vsel %vm1255, %v1253, 0
        %1262 = vmatprep.subr.bf16.mxu0 0
        %1263 = vmatpush1.bf16.xpose.msra.mxu0 0
        %1264 = vmatprep.subr.bf16.mxu0 0
        %1265 = vmatpush1.bf16.xpose.msra.mxu0 0
        %1266 = vmatprep.subr.bf16.mxu0 0
        %1267 = vmatpush1.bf16.xpose.msra.mxu0 0
        %1268 = vmatprep.subr.bf16.mxu0 0
        %1269 = vmatpush1.bf16.xpose.msra.mxu0 0
        %1270 = vmatprep.subr.bf16.mxu0 0
        %1271 = vmatpush1.bf16.xpose.msra.mxu0 0
        %1272 = vmatprep.subr.bf16.mxu0 0
        %1273 = vmatpush1.bf16.xpose.msra.mxu0 0
        %1274 = vmatprep.subr.bf16.mxu0 0
        %1275 = vmatpush1.bf16.xpose.msra.mxu0 0
        %1276 = vmatprep.subr.bf16.mxu0 0
        %1277 = vmatpush1.bf16.xpose.msra.mxu0 %v1260
        %1278 = vmatprep.subr.bf16.mxu0 0
        %1279 = vmatpush2.bf16.xpose.msra.mxu0 0
        %1280 = vmatprep.subr.bf16.mxu0 0
        %1281 = vmatpush2.bf16.xpose.msra.mxu0 0
        %1282 = vmatprep.subr.bf16.mxu0 0
        %1283 = vmatpush2.bf16.xpose.msra.mxu0 0
        %1284 = vmatprep.subr.bf16.mxu0 0
        %1285 = vmatpush2.bf16.xpose.msra.mxu0 0
        %1286 = vmatprep.subr.bf16.mxu0 0
        %1287 = vmatpush2.bf16.xpose.msra.mxu0 0
        %1288 = vmatprep.subr.bf16.mxu0 0
        %1289 = vmatpush2.bf16.xpose.msra.mxu0 0
        %1290 = vmatprep.subr.bf16.mxu0 0
        %1291 = vmatpush2.bf16.xpose.msra.mxu0 0
        %1292 = vmatprep.subr.bf16.mxu0 0
        %1293 = vmatpush2.bf16.xpose.msra.mxu0 0
        %1294 = vmatprep.mubr.bf16.mxu0 0
        %1295 = vmatmul.mubr.bf16.gmra.mxu0 %v1257
        %v1296 = vpop.f32.mrf.mxu0
        %v1297 = vadd.f32 %v992, %v1296
        %v1298 = vpop.f32.mrf.mxu0
        %v1299 = vpop.f32.mrf.mxu0
        %v1300 = vpop.f32.mrf.mxu0
        %1301 = vdwg.mxu0
        %vm1302 = vcmask 64512
        %v1303 = vsel %vm1302, %v1297, -inf
        %1304 = vmax.xlane.f32.xlu0 %v1303
        %v1305 = vpop.xlane.xlu0 %1304
        %v1306 = vsub.f32 %v1297, %v1305
        %v1307 = vmul.f32 %v1306, 1.442695
        %v1308 = vpow.pop %v1307
        %v1309 = vsel %vm1302, %v1308, 0.0
        %1310 = vadd.xlane.f32.xlu0 %v1309
        %v1311 = vpop.xlane.xlu0 %1310
        %v1312 = vrcp.pop %v1311
        %v1313 = vmul.f32 %v1308, %v1312
        %v1314 = vpack.c.bf16 %v1313, %v1313
        %v1316 = vsel %vm1302, %v1314, 0
        %vm1318 = vcmask 1043456
        %v1320 = vsel %vm1318, %v1254, 0
        %1322 = vmatprep.subr.bf16.mxu0 0
        %1323 = vmatpush1.bf16.msra.mxu0 0
        %1324 = vmatprep.subr.bf16.mxu0 0
        %1325 = vmatpush1.bf16.msra.mxu0 0
        %1326 = vmatprep.subr.bf16.mxu0 0
        %1327 = vmatpush1.bf16.msra.mxu0 0
        %1328 = vmatprep.subr.bf16.mxu0 0
        %1329 = vmatpush1.bf16.msra.mxu0 0
        %1330 = vmatprep.subr.bf16.mxu0 0
        %1331 = vmatpush1.bf16.msra.mxu0 0
        %1332 = vmatprep.subr.bf16.mxu0 0
        %1333 = vmatpush1.bf16.msra.mxu0 0
        %1334 = vmatprep.subr.bf16.mxu0 0
        %1335 = vmatpush1.bf16.msra.mxu0 0
        %1336 = vmatprep.subr.bf16.mxu0 0
        %1337 = vmatpush1.bf16.msra.mxu0 %v1320
        %1338 = vmatprep.subr.bf16.mxu0 0
        %1339 = vmatpush2.bf16.msra.mxu0 0
        %1340 = vmatprep.subr.bf16.mxu0 0
        %1341 = vmatpush2.bf16.msra.mxu0 0
        %1342 = vmatprep.subr.bf16.mxu0 0
        %1343 = vmatpush2.bf16.msra.mxu0 0
        %1344 = vmatprep.subr.bf16.mxu0 0
        %1345 = vmatpush2.bf16.msra.mxu0 0
        %1346 = vmatprep.subr.bf16.mxu0 0
        %1347 = vmatpush2.bf16.msra.mxu0 0
        %1348 = vmatprep.subr.bf16.mxu0 0
        %1349 = vmatpush2.bf16.msra.mxu0 0
        %1350 = vmatprep.subr.bf16.mxu0 0
        %1351 = vmatpush2.bf16.msra.mxu0 0
        %1352 = vmatprep.subr.bf16.mxu0 0
        %1353 = vmatpush2.bf16.msra.mxu0 0
        %1354 = vmatprep.mubr.bf16.mxu0 0
        %1355 = vmatmul.mubr.bf16.gmra.mxu0 %v1316
        %v1356 = vpop.f32.mrf.mxu0
        %v1357 = vadd.f32 0.0, %v1356
        %v1358 = vpop.f32.mrf.mxu0
        %v1359 = vpop.f32.mrf.mxu0
        %v1360 = vpop.f32.mrf.mxu0
        %1361 = vdwg.mxu0
        %v1362 = vpack.c.bf16 %v1357, %v1357
        %1364 = vrot.lane.b32.xlu0 %v1252, 112
        %v1365 = vpop.permute.xlu0 %1364
        %1367 = vrot.lane.b32.xlu0 %v1253, 112
        %v1368 = vpop.permute.xlu0 %1367
        %v1370 = vsel %vm1255, %v1365, 0
        %v1373 = vsel %vm1255, %v1368, 0
        %1375 = vmatprep.subr.bf16.mxu0 0
        %1376 = vmatpush1.bf16.xpose.msra.mxu0 0
        %1377 = vmatprep.subr.bf16.mxu0 0
        %1378 = vmatpush1.bf16.xpose.msra.mxu0 0
        %1379 = vmatprep.subr.bf16.mxu0 0
        %1380 = vmatpush1.bf16.xpose.msra.mxu0 0
        %1381 = vmatprep.subr.bf16.mxu0 0
        %1382 = vmatpush1.bf16.xpose.msra.mxu0 0
        %1383 = vmatprep.subr.bf16.mxu0 0
        %1384 = vmatpush1.bf16.xpose.msra.mxu0 0
        %1385 = vmatprep.subr.bf16.mxu0 0
        %1386 = vmatpush1.bf16.xpose.msra.mxu0 0
        %1387 = vmatprep.subr.bf16.mxu0 0
        %1388 = vmatpush1.bf16.xpose.msra.mxu0 0
        %1389 = vmatprep.subr.bf16.mxu0 0
        %1390 = vmatpush1.bf16.xpose.msra.mxu0 %v1373
        %1391 = vmatprep.subr.bf16.mxu0 0
        %1392 = vmatpush2.bf16.xpose.msra.mxu0 0
        %1393 = vmatprep.subr.bf16.mxu0 0
        %1394 = vmatpush2.bf16.xpose.msra.mxu0 0
        %1395 = vmatprep.subr.bf16.mxu0 0
        %1396 = vmatpush2.bf16.xpose.msra.mxu0 0
        %1397 = vmatprep.subr.bf16.mxu0 0
        %1398 = vmatpush2.bf16.xpose.msra.mxu0 0
        %1399 = vmatprep.subr.bf16.mxu0 0
        %1400 = vmatpush2.bf16.xpose.msra.mxu0 0
        %1401 = vmatprep.subr.bf16.mxu0 0
        %1402 = vmatpush2.bf16.xpose.msra.mxu0 0
        %1403 = vmatprep.subr.bf16.mxu0 0
        %1404 = vmatpush2.bf16.xpose.msra.mxu0 0
        %1405 = vmatprep.subr.bf16.mxu0 0
        %1406 = vmatpush2.bf16.xpose.msra.mxu0 0
        %1407 = vmatprep.mubr.bf16.mxu0 0
        %1408 = vmatmul.mubr.bf16.gmra.mxu0 %v1370
        %v1409 = vpop.f32.mrf.mxu0
        %v1410 = vadd.f32 %v992, %v1409
        %v1411 = vpop.f32.mrf.mxu0
        %v1412 = vpop.f32.mrf.mxu0
        %v1413 = vpop.f32.mrf.mxu0
        %1414 = vdwg.mxu0
        %v1415 = vsel %vm1302, %v1410, -inf
        %1416 = vmax.xlane.f32.xlu0 %v1415
        %v1417 = vpop.xlane.xlu0 %1416
        %v1418 = vsub.f32 %v1410, %v1417
        %v1419 = vmul.f32 %v1418, 1.442695
        %v1420 = vpow.pop %v1419
        %v1421 = vsel %vm1302, %v1420, 0.0
        %1422 = vadd.xlane.f32.xlu0 %v1421
        %v1423 = vpop.xlane.xlu0 %1422
        %v1424 = vrcp.pop %v1423
        %v1425 = vmul.f32 %v1420, %v1424
        %v1426 = vpack.c.bf16 %v1425, %v1425
        %1428 = vrot.lane.b32.xlu0 %v1254, 112
        %v1429 = vpop.permute.xlu0 %1428
        %v1431 = vsel %vm1302, %v1426, 0
        %v1434 = vsel %vm1318, %v1429, 0
        %1436 = vmatprep.subr.bf16.mxu0 0
        %1437 = vmatpush1.bf16.msra.mxu0 0
        %1438 = vmatprep.subr.bf16.mxu0 0
        %1439 = vmatpush1.bf16.msra.mxu0 0
        %1440 = vmatprep.subr.bf16.mxu0 0
        %1441 = vmatpush1.bf16.msra.mxu0 0
        %1442 = vmatprep.subr.bf16.mxu0 0
        %1443 = vmatpush1.bf16.msra.mxu0 0
        %1444 = vmatprep.subr.bf16.mxu0 0
        %1445 = vmatpush1.bf16.msra.mxu0 0
        %1446 = vmatprep.subr.bf16.mxu0 0
        %1447 = vmatpush1.bf16.msra.mxu0 0
        %1448 = vmatprep.subr.bf16.mxu0 0
        %1449 = vmatpush1.bf16.msra.mxu0 0
        %1450 = vmatprep.subr.bf16.mxu0 0
        %1451 = vmatpush1.bf16.msra.mxu0 %v1434
        %1452 = vmatprep.subr.bf16.mxu0 0
        %1453 = vmatpush2.bf16.msra.mxu0 0
        %1454 = vmatprep.subr.bf16.mxu0 0
        %1455 = vmatpush2.bf16.msra.mxu0 0
        %1456 = vmatprep.subr.bf16.mxu0 0
        %1457 = vmatpush2.bf16.msra.mxu0 0
        %1458 = vmatprep.subr.bf16.mxu0 0
        %1459 = vmatpush2.bf16.msra.mxu0 0
        %1460 = vmatprep.subr.bf16.mxu0 0
        %1461 = vmatpush2.bf16.msra.mxu0 0
        %1462 = vmatprep.subr.bf16.mxu0 0
        %1463 = vmatpush2.bf16.msra.mxu0 0
        %1464 = vmatprep.subr.bf16.mxu0 0
        %1465 = vmatpush2.bf16.msra.mxu0 0
        %1466 = vmatprep.subr.bf16.mxu0 0
        %1467 = vmatpush2.bf16.msra.mxu0 0
        %1468 = vmatprep.mubr.bf16.mxu0 0
        %1469 = vmatmul.mubr.bf16.gmra.mxu0 %v1431
        %v1470 = vpop.f32.mrf.mxu0
        %v1471 = vadd.f32 0.0, %v1470
        %v1472 = vpop.f32.mrf.mxu0
        %v1473 = vpop.f32.mrf.mxu0
        %v1474 = vpop.f32.mrf.mxu0
        %1475 = vdwg.mxu0
        %v1476 = vpack.c.bf16 %v1471, %v1471
        %1477 = vrot.lane.b32.xlu0 %v1252, 96
        %v1478 = vpop.permute.xlu0 %1477
        %1479 = vrot.lane.b32.xlu0 %v1253, 96
        %v1480 = vpop.permute.xlu0 %1479
        %v1482 = vsel %vm1255, %v1478, 0
        %v1485 = vsel %vm1255, %v1480, 0
        %1487 = vmatprep.subr.bf16.mxu0 0
        %1488 = vmatpush1.bf16.xpose.msra.mxu0 0
        %1489 = vmatprep.subr.bf16.mxu0 0
        %1490 = vmatpush1.bf16.xpose.msra.mxu0 0
        %1491 = vmatprep.subr.bf16.mxu0 0
        %1492 = vmatpush1.bf16.xpose.msra.mxu0 0
        %1493 = vmatprep.subr.bf16.mxu0 0
        %1494 = vmatpush1.bf16.xpose.msra.mxu0 0
        %1495 = vmatprep.subr.bf16.mxu0 0
        %1496 = vmatpush1.bf16.xpose.msra.mxu0 0
        %1497 = vmatprep.subr.bf16.mxu0 0
        %1498 = vmatpush1.bf16.xpose.msra.mxu0 0
        %1499 = vmatprep.subr.bf16.mxu0 0
        %1500 = vmatpush1.bf16.xpose.msra.mxu0 0
        %1501 = vmatprep.subr.bf16.mxu0 0
        %1502 = vmatpush1.bf16.xpose.msra.mxu0 %v1485
        %1503 = vmatprep.subr.bf16.mxu0 0
        %1504 = vmatpush2.bf16.xpose.msra.mxu0 0
        %1505 = vmatprep.subr.bf16.mxu0 0
        %1506 = vmatpush2.bf16.xpose.msra.mxu0 0
        %1507 = vmatprep.subr.bf16.mxu0 0
        %1508 = vmatpush2.bf16.xpose.msra.mxu0 0
        %1509 = vmatprep.subr.bf16.mxu0 0
        %1510 = vmatpush2.bf16.xpose.msra.mxu0 0
        %1511 = vmatprep.subr.bf16.mxu0 0
        %1512 = vmatpush2.bf16.xpose.msra.mxu0 0
        %1513 = vmatprep.subr.bf16.mxu0 0
        %1514 = vmatpush2.bf16.xpose.msra.mxu0 0
        %1515 = vmatprep.subr.bf16.mxu0 0
        %1516 = vmatpush2.bf16.xpose.msra.mxu0 0
        %1517 = vmatprep.subr.bf16.mxu0 0
        %1518 = vmatpush2.bf16.xpose.msra.mxu0 0
        %1519 = vmatprep.mubr.bf16.mxu0 0
        %1520 = vmatmul.mubr.bf16.gmra.mxu0 %v1482
        %v1521 = vpop.f32.mrf.mxu0
        %v1522 = vadd.f32 %v992, %v1521
        %v1523 = vpop.f32.mrf.mxu0
        %v1524 = vpop.f32.mrf.mxu0
        %v1525 = vpop.f32.mrf.mxu0
        %1526 = vdwg.mxu0
        %v1527 = vsel %vm1302, %v1522, -inf
        %1528 = vmax.xlane.f32.xlu0 %v1527
        %v1529 = vpop.xlane.xlu0 %1528
        %v1530 = vsub.f32 %v1522, %v1529
        %v1531 = vmul.f32 %v1530, 1.442695
        %v1532 = vpow.pop %v1531
        %v1533 = vsel %vm1302, %v1532, 0.0
        %1534 = vadd.xlane.f32.xlu0 %v1533
        %v1535 = vpop.xlane.xlu0 %1534
        %v1536 = vrcp.pop %v1535
        %v1537 = vmul.f32 %v1532, %v1536
        %v1538 = vpack.c.bf16 %v1537, %v1537
        %1539 = vrot.lane.b32.xlu0 %v1254, 96
        %v1540 = vpop.permute.xlu0 %1539
        %v1542 = vsel %vm1302, %v1538, 0
        %v1545 = vsel %vm1318, %v1540, 0
        %1547 = vmatprep.subr.bf16.mxu0 0
        %1548 = vmatpush1.bf16.msra.mxu0 0
        %1549 = vmatprep.subr.bf16.mxu0 0
        %1550 = vmatpush1.bf16.msra.mxu0 0
        %1551 = vmatprep.subr.bf16.mxu0 0
        %1552 = vmatpush1.bf16.msra.mxu0 0
        %1553 = vmatprep.subr.bf16.mxu0 0
        %1554 = vmatpush1.bf16.msra.mxu0 0
        %1555 = vmatprep.subr.bf16.mxu0 0
        %1556 = vmatpush1.bf16.msra.mxu0 0
        %1557 = vmatprep.subr.bf16.mxu0 0
        %1558 = vmatpush1.bf16.msra.mxu0 0
        %1559 = vmatprep.subr.bf16.mxu0 0
        %1560 = vmatpush1.bf16.msra.mxu0 0
        %1561 = vmatprep.subr.bf16.mxu0 0
        %1562 = vmatpush1.bf16.msra.mxu0 %v1545
        %1563 = vmatprep.subr.bf16.mxu0 0
        %1564 = vmatpush2.bf16.msra.mxu0 0
        %1565 = vmatprep.subr.bf16.mxu0 0
        %1566 = vmatpush2.bf16.msra.mxu0 0
        %1567 = vmatprep.subr.bf16.mxu0 0
        %1568 = vmatpush2.bf16.msra.mxu0 0
        %1569 = vmatprep.subr.bf16.mxu0 0
        %1570 = vmatpush2.bf16.msra.mxu0 0
        %1571 = vmatprep.subr.bf16.mxu0 0
        %1572 = vmatpush2.bf16.msra.mxu0 0
        %1573 = vmatprep.subr.bf16.mxu0 0
        %1574 = vmatpush2.bf16.msra.mxu0 0
        %1575 = vmatprep.subr.bf16.mxu0 0
        %1576 = vmatpush2.bf16.msra.mxu0 0
        %1577 = vmatprep.subr.bf16.mxu0 0
        %1578 = vmatpush2.bf16.msra.mxu0 0
        %1579 = vmatprep.mubr.bf16.mxu0 0
        %1580 = vmatmul.mubr.bf16.gmra.mxu0 %v1542
        %v1581 = vpop.f32.mrf.mxu0
        %v1582 = vadd.f32 0.0, %v1581
        %v1583 = vpop.f32.mrf.mxu0
        %v1584 = vpop.f32.mrf.mxu0
        %v1585 = vpop.f32.mrf.mxu0
        %1586 = vdwg.mxu0
        %v1587 = vpack.c.bf16 %v1582, %v1582
        %1588 = vrot.lane.b32.xlu0 %v1252, 80
        %v1589 = vpop.permute.xlu0 %1588
        %1590 = vrot.lane.b32.xlu0 %v1253, 80
        %v1591 = vpop.permute.xlu0 %1590
        %v1593 = vsel %vm1255, %v1589, 0
        %v1596 = vsel %vm1255, %v1591, 0
        %1598 = vmatprep.subr.bf16.mxu0 0
        %1599 = vmatpush1.bf16.xpose.msra.mxu0 0
        %1600 = vmatprep.subr.bf16.mxu0 0
        %1601 = vmatpush1.bf16.xpose.msra.mxu0 0
        %1602 = vmatprep.subr.bf16.mxu0 0
        %1603 = vmatpush1.bf16.xpose.msra.mxu0 0
        %1604 = vmatprep.subr.bf16.mxu0 0
        %1605 = vmatpush1.bf16.xpose.msra.mxu0 0
        %1606 = vmatprep.subr.bf16.mxu0 0
        %1607 = vmatpush1.bf16.xpose.msra.mxu0 0
        %1608 = vmatprep.subr.bf16.mxu0 0
        %1609 = vmatpush1.bf16.xpose.msra.mxu0 0
        %1610 = vmatprep.subr.bf16.mxu0 0
        %1611 = vmatpush1.bf16.xpose.msra.mxu0 0
        %1612 = vmatprep.subr.bf16.mxu0 0
        %1613 = vmatpush1.bf16.xpose.msra.mxu0 %v1596
        %1614 = vmatprep.subr.bf16.mxu0 0
        %1615 = vmatpush2.bf16.xpose.msra.mxu0 0
        %1616 = vmatprep.subr.bf16.mxu0 0
        %1617 = vmatpush2.bf16.xpose.msra.mxu0 0
        %1618 = vmatprep.subr.bf16.mxu0 0
        %1619 = vmatpush2.bf16.xpose.msra.mxu0 0
        %1620 = vmatprep.subr.bf16.mxu0 0
        %1621 = vmatpush2.bf16.xpose.msra.mxu0 0
        %1622 = vmatprep.subr.bf16.mxu0 0
        %1623 = vmatpush2.bf16.xpose.msra.mxu0 0
        %1624 = vmatprep.subr.bf16.mxu0 0
        %1625 = vmatpush2.bf16.xpose.msra.mxu0 0
        %1626 = vmatprep.subr.bf16.mxu0 0
        %1627 = vmatpush2.bf16.xpose.msra.mxu0 0
        %1628 = vmatprep.subr.bf16.mxu0 0
        %1629 = vmatpush2.bf16.xpose.msra.mxu0 0
        %1630 = vmatprep.mubr.bf16.mxu0 0
        %1631 = vmatmul.mubr.bf16.gmra.mxu0 %v1593
        %v1632 = vpop.f32.mrf.mxu0
        %v1633 = vadd.f32 %v992, %v1632
        %v1634 = vpop.f32.mrf.mxu0
        %v1635 = vpop.f32.mrf.mxu0
        %v1636 = vpop.f32.mrf.mxu0
        %1637 = vdwg.mxu0
        %v1638 = vsel %vm1302, %v1633, -inf
        %1639 = vmax.xlane.f32.xlu0 %v1638
        %v1640 = vpop.xlane.xlu0 %1639
        %v1641 = vsub.f32 %v1633, %v1640
        %v1642 = vmul.f32 %v1641, 1.442695
        %v1643 = vpow.pop %v1642
        %v1644 = vsel %vm1302, %v1643, 0.0
        %1645 = vadd.xlane.f32.xlu0 %v1644
        %v1646 = vpop.xlane.xlu0 %1645
        %v1647 = vrcp.pop %v1646
        %v1648 = vmul.f32 %v1643, %v1647
        %v1649 = vpack.c.bf16 %v1648, %v1648
        %1650 = vrot.lane.b32.xlu0 %v1254, 80
        %v1651 = vpop.permute.xlu0 %1650
        %v1653 = vsel %vm1302, %v1649, 0
        %v1656 = vsel %vm1318, %v1651, 0
        %1658 = vmatprep.subr.bf16.mxu0 0
        %1659 = vmatpush1.bf16.msra.mxu0 0
        %1660 = vmatprep.subr.bf16.mxu0 0
        %1661 = vmatpush1.bf16.msra.mxu0 0
        %1662 = vmatprep.subr.bf16.mxu0 0
        %1663 = vmatpush1.bf16.msra.mxu0 0
        %1664 = vmatprep.subr.bf16.mxu0 0
        %1665 = vmatpush1.bf16.msra.mxu0 0
        %1666 = vmatprep.subr.bf16.mxu0 0
        %1667 = vmatpush1.bf16.msra.mxu0 0
        %1668 = vmatprep.subr.bf16.mxu0 0
        %1669 = vmatpush1.bf16.msra.mxu0 0
        %1670 = vmatprep.subr.bf16.mxu0 0
        %1671 = vmatpush1.bf16.msra.mxu0 0
        %1672 = vmatprep.subr.bf16.mxu0 0
        %1673 = vmatpush1.bf16.msra.mxu0 %v1656
        %1674 = vmatprep.subr.bf16.mxu0 0
        %1675 = vmatpush2.bf16.msra.mxu0 0
        %1676 = vmatprep.subr.bf16.mxu0 0
        %1677 = vmatpush2.bf16.msra.mxu0 0
        %1678 = vmatprep.subr.bf16.mxu0 0
        %1679 = vmatpush2.bf16.msra.mxu0 0
        %1680 = vmatprep.subr.bf16.mxu0 0
        %1681 = vmatpush2.bf16.msra.mxu0 0
        %1682 = vmatprep.subr.bf16.mxu0 0
        %1683 = vmatpush2.bf16.msra.mxu0 0
        %1684 = vmatprep.subr.bf16.mxu0 0
        %1685 = vmatpush2.bf16.msra.mxu0 0
        %1686 = vmatprep.subr.bf16.mxu0 0
        %1687 = vmatpush2.bf16.msra.mxu0 0
        %1688 = vmatprep.subr.bf16.mxu0 0
        %1689 = vmatpush2.bf16.msra.mxu0 0
        %1690 = vmatprep.mubr.bf16.mxu0 0
        %1691 = vmatmul.mubr.bf16.gmra.mxu0 %v1653
        %v1692 = vpop.f32.mrf.mxu0
        %v1693 = vadd.f32 0.0, %v1692
        %v1694 = vpop.f32.mrf.mxu0
        %v1695 = vpop.f32.mrf.mxu0
        %v1696 = vpop.f32.mrf.mxu0
        %1697 = vdwg.mxu0
        %v1698 = vpack.c.bf16 %v1693, %v1693
        %1700 = vrot.lane.b32.xlu0 %v1476, 16
        %v1701 = vpop.permute.xlu0 %1700
        %1703 = vrot.lane.b32.xlu0 %v1587, 32
        %v1704 = vpop.permute.xlu0 %1703
        %1706 = vrot.lane.b32.xlu0 %v1698, 48
        %v1707 = vpop.permute.xlu0 %1706
        %v1710 = vsel %vm1255, %v1362, %v1701
        %vm1711 = vcmask 261120
        %v1713 = vsel %vm1711, %v1710, %v1704
        %vm1714 = vcmask 392192
        %v1716 = vsel %vm1714, %v1713, %v1707
        %v1717 = vld [vmem:[#allocation11] sm:$0xf]
        %v1718 = vld [vmem:[#allocation11 + $0x4] sm:$0xf]
        %v1719 = vld [vmem:[#allocation11 + $0x8] sm:$0xf]
        %v1720 = vld [vmem:[#allocation11 + $0xc] sm:$0xf]
        %v1721 = vld [vmem:[#allocation11 + $0x10] sm:$0xf]
        %v1722 = vld [vmem:[#allocation11 + $0x14] sm:$0xf]
        %v1723 = vld [vmem:[#allocation11 + $0x18] sm:$0xf]
        %v1724 = vld [vmem:[#allocation11 + $0x1c] sm:$0xf]
        %v1726 = vlaneseq
        %v1727 = vshrl.u32 %v1726, 7
        %v1728 = vsub.s32 0, %v1727
        %v1729 = vrot.slane %v997, %v1728
        %v1739 = vunpack.c.l.b16 %v1717
        %v1740 = vunpack.c.l.b16 %v1718
        %v1741 = vunpack.c.l.b16 %v1719
        %v1742 = vunpack.c.l.b16 %v1720
        %v1743 = vunpack.c.l.b16 %v1721
        %v1744 = vunpack.c.l.b16 %v1722
        %v1745 = vunpack.c.l.b16 %v1723
        %v1746 = vunpack.c.l.b16 %v1724
        %v1747 = vpack.c.b16 %v1740, %v1739
        %v1748 = vpack.c.b16 %v1742, %v1741
        %v1749 = vpack.c.b16 %v1744, %v1743
        %v1750 = vpack.c.b16 %v1746, %v1745
        %v1755 = vsel %vm1051, %v1716, 0
        %1757 = vmatprep.subr.bf16.mxu0 0
        %1758 = vmatpush1.bf16.msra.mxu0 0
        %1759 = vmatprep.subr.bf16.mxu0 0
        %1760 = vmatpush1.bf16.msra.mxu0 0
        %1761 = vmatprep.subr.bf16.mxu0 0
        %1762 = vmatpush1.bf16.msra.mxu0 0
        %1763 = vmatprep.subr.bf16.mxu0 0
        %1764 = vmatpush1.bf16.msra.mxu0 0
        %1765 = vmatprep.subr.bf16.mxu0 0
        %1766 = vmatpush1.bf16.msra.mxu0 %v1750
        %1767 = vmatprep.subr.bf16.mxu0 0
        %1768 = vmatpush1.bf16.msra.mxu0 %v1749
        %1769 = vmatprep.subr.bf16.mxu0 0
        %1770 = vmatpush1.bf16.msra.mxu0 %v1748
        %1771 = vmatprep.subr.bf16.mxu0 0
        %1772 = vmatpush1.bf16.msra.mxu0 %v1747
        %1773 = vmatprep.subr.bf16.mxu0 0
        %1774 = vmatpush2.bf16.msra.mxu0 0
        %1775 = vmatprep.subr.bf16.mxu0 0
        %1776 = vmatpush2.bf16.msra.mxu0 0
        %1777 = vmatprep.subr.bf16.mxu0 0
        %1778 = vmatpush2.bf16.msra.mxu0 0
        %1779 = vmatprep.subr.bf16.mxu0 0
        %1780 = vmatpush2.bf16.msra.mxu0 0
        %1781 = vmatprep.subr.bf16.mxu0 0
        %1782 = vmatpush2.bf16.msra.mxu0 0
        %1783 = vmatprep.subr.bf16.mxu0 0
        %1784 = vmatpush2.bf16.msra.mxu0 0
        %1785 = vmatprep.subr.bf16.mxu0 0
        %1786 = vmatpush2.bf16.msra.mxu0 0
        %1787 = vmatprep.subr.bf16.mxu0 0
        %1788 = vmatpush2.bf16.msra.mxu0 0
        %1789 = vmatprep.mubr.bf16.mxu0 0
        %1790 = vmatmul.mubr.bf16.gmra.mxu0 %v1755
        %v1791 = vpop.f32.mrf.mxu0
        %v1792 = vadd.f32 %v1729, %v1791
        %v1793 = vpop.f32.mrf.mxu0
        %v1794 = vpop.f32.mrf.mxu0
        %v1795 = vpop.f32.mrf.mxu0
        %1796 = vdwg.mxu0
        %v1797 = vadd.f32 %v1011, %v1792
        %v1798 = vsel %vm1051, %v1797, 0.0
        %1799 = vadd.xlane.f32.xlu0 %v1798
        %v1800 = vpop.xlane.xlu0 %1799
        %v1801 = vrcp.pop 64.0
        %v1802 = vmul.f32 %v1800, %v1801
        %v1803 = vsub.f32 %v1797, %v1802
        %v1804 = vmul.f32 %v1803, %v1803
        %v1805 = vsel %vm1051, %v1804, 0.0
        %1806 = vadd.xlane.f32.xlu0 %v1805
        %v1807 = vpop.xlane.xlu0 %1806
        %v1808 = vmul.f32 %v1807, %v1801
        %v1809 = vadd.f32 %v1808, 1e-05
        %v1810 = vrsqrt.pop %v1809
        %v1811 = vmul.f32 %v1803, %v1810
        %v1813 = vlaneseq
        %v1814 = vshrl.u32 %v1813, 7
        %v1815 = vsub.s32 0, %v1814
        %v1816 = vrot.slane %v1000, %v1815
        %v1818 = vmul.f32 %v1811, %v1816
        %v1820 = vlaneseq
        %v1821 = vshrl.u32 %v1820, 7
        %v1822 = vsub.s32 0, %v1821
        %v1823 = vrot.slane %v1001, %v1822
        %v1825 = vadd.f32 %v1818, %v1823
        %v1826 = vpack.c.bf16 %v1825, %v1825
        %v1827 = vld [vmem:[#allocation22] sm:$0xf]
        %v1828 = vld [vmem:[#allocation22 + $0x4] sm:$0xf]
        %v1829 = vld [vmem:[#allocation22 + $0x8] sm:$0xf]
        %v1830 = vld [vmem:[#allocation22 + $0xc] sm:$0xf]
        %v1831 = vld [vmem:[#allocation22 + $0x10] sm:$0xf]
        %v1832 = vld [vmem:[#allocation22 + $0x14] sm:$0xf]
        %v1833 = vld [vmem:[#allocation22 + $0x18] sm:$0xf]
        %v1834 = vld [vmem:[#allocation22 + $0x1c] sm:$0xf]
        %v1836 = vlaneseq
        %v1837 = vshrl.u32 %v1836, 7
        %v1838 = vsub.s32 0, %v1837
        %v1839 = vrot.slane %v998, %v1838
        %v1849 = vunpack.c.l.b16 %v1827
        %v1850 = vunpack.c.l.b16 %v1828
        %v1851 = vunpack.c.l.b16 %v1829
        %v1852 = vunpack.c.l.b16 %v1830
        %v1853 = vunpack.c.l.b16 %v1831
        %v1854 = vunpack.c.l.b16 %v1832
        %v1855 = vunpack.c.l.b16 %v1833
        %v1856 = vunpack.c.l.b16 %v1834
        %v1857 = vpack.c.b16 %v1850, %v1849
        %v1858 = vpack.c.b16 %v1852, %v1851
        %v1859 = vpack.c.b16 %v1854, %v1853
        %v1860 = vpack.c.b16 %v1856, %v1855
        %v1866 = vsel %vm1051, %v1826, 0
        %1868 = vmatprep.subr.bf16.mxu0 0
        %1869 = vmatpush1.bf16.msra.mxu0 0
        %1870 = vmatprep.subr.bf16.mxu0 0
        %1871 = vmatpush1.bf16.msra.mxu0 0
        %1872 = vmatprep.subr.bf16.mxu0 0
        %1873 = vmatpush1.bf16.msra.mxu0 0
        %1874 = vmatprep.subr.bf16.mxu0 0
        %1875 = vmatpush1.bf16.msra.mxu0 0
        %1876 = vmatprep.subr.bf16.mxu0 0
        %1877 = vmatpush1.bf16.msra.mxu0 %v1860
        %1878 = vmatprep.subr.bf16.mxu0 0
        %1879 = vmatpush1.bf16.msra.mxu0 %v1859
        %1880 = vmatprep.subr.bf16.mxu0 0
        %1881 = vmatpush1.bf16.msra.mxu0 %v1858
        %1882 = vmatprep.subr.bf16.mxu0 0
        %1883 = vmatpush1.bf16.msra.mxu0 %v1857
        %1884 = vmatprep.subr.bf16.mxu0 0
        %1885 = vmatpush2.bf16.msra.mxu0 0
        %1886 = vmatprep.subr.bf16.mxu0 0
        %1887 = vmatpush2.bf16.msra.mxu0 0
        %1888 = vmatprep.subr.bf16.mxu0 0
        %1889 = vmatpush2.bf16.msra.mxu0 0
        %1890 = vmatprep.subr.bf16.mxu0 0
        %1891 = vmatpush2.bf16.msra.mxu0 0
        %1892 = vmatprep.subr.bf16.mxu0 0
        %1893 = vmatpush2.bf16.msra.mxu0 0
        %1894 = vmatprep.subr.bf16.mxu0 0
        %1895 = vmatpush2.bf16.msra.mxu0 0
        %1896 = vmatprep.subr.bf16.mxu0 0
        %1897 = vmatpush2.bf16.msra.mxu0 0
        %1898 = vmatprep.subr.bf16.mxu0 0
        %1899 = vmatpush2.bf16.msra.mxu0 0
        %1900 = vmatprep.mubr.bf16.mxu0 0
        %1901 = vmatmul.mubr.bf16.gmra.mxu0 %v1866
        %v1902 = vpop.f32.mrf.mxu0
        %v1903 = vadd.f32 %v1839, %v1902
        %v1904 = vpop.f32.mrf.mxu0
        %v1905 = vpop.f32.mrf.mxu0
        %v1906 = vpop.f32.mrf.mxu0
        %1907 = vdwg.mxu0
        %v1908 = vmax.f32 %v1903, 0.0
        %v1909 = vpack.c.bf16 %v1908, %v1908
        %v1910 = vld [vmem:[#allocation25] sm:$0xf]
        %v1911 = vld [vmem:[#allocation25 + $0x4] sm:$0xf]
        %v1912 = vld [vmem:[#allocation25 + $0x8] sm:$0xf]
        %v1913 = vld [vmem:[#allocation25 + $0xc] sm:$0xf]
        %v1914 = vld [vmem:[#allocation25 + $0x10] sm:$0xf]
        %v1915 = vld [vmem:[#allocation25 + $0x14] sm:$0xf]
        %v1916 = vld [vmem:[#allocation25 + $0x18] sm:$0xf]
        %v1917 = vld [vmem:[#allocation25 + $0x1c] sm:$0xf]
        %v1919 = vlaneseq
        %v1920 = vshrl.u32 %v1919, 7
        %v1921 = vsub.s32 0, %v1920
        %v1922 = vrot.slane %v999, %v1921
        %v1932 = vunpack.c.l.b16 %v1910
        %v1933 = vunpack.c.l.b16 %v1911
        %v1934 = vunpack.c.l.b16 %v1912
        %v1935 = vunpack.c.l.b16 %v1913
        %v1936 = vunpack.c.l.b16 %v1914
        %v1937 = vunpack.c.l.b16 %v1915
        %v1938 = vunpack.c.l.b16 %v1916
        %v1939 = vunpack.c.l.b16 %v1917
        %v1940 = vpack.c.b16 %v1933, %v1932
        %v1941 = vpack.c.b16 %v1935, %v1934
        %v1942 = vpack.c.b16 %v1937, %v1936
        %v1943 = vpack.c.b16 %v1939, %v1938
        %v1949 = vsel %vm1051, %v1909, 0
        %1951 = vmatprep.subr.bf16.mxu0 0
        %1952 = vmatpush1.bf16.msra.mxu0 0
        %1953 = vmatprep.subr.bf16.mxu0 0
        %1954 = vmatpush1.bf16.msra.mxu0 0
        %1955 = vmatprep.subr.bf16.mxu0 0
        %1956 = vmatpush1.bf16.msra.mxu0 0
        %1957 = vmatprep.subr.bf16.mxu0 0
        %1958 = vmatpush1.bf16.msra.mxu0 0
        %1959 = vmatprep.subr.bf16.mxu0 0
        %1960 = vmatpush1.bf16.msra.mxu0 %v1943
        %1961 = vmatprep.subr.bf16.mxu0 0
        %1962 = vmatpush1.bf16.msra.mxu0 %v1942
        %1963 = vmatprep.subr.bf16.mxu0 0
        %1964 = vmatpush1.bf16.msra.mxu0 %v1941
        %1965 = vmatprep.subr.bf16.mxu0 0
        %1966 = vmatpush1.bf16.msra.mxu0 %v1940
        %1967 = vmatprep.subr.bf16.mxu0 0
        %1968 = vmatpush2.bf16.msra.mxu0 0
        %1969 = vmatprep.subr.bf16.mxu0 0
        %1970 = vmatpush2.bf16.msra.mxu0 0
        %1971 = vmatprep.subr.bf16.mxu0 0
        %1972 = vmatpush2.bf16.msra.mxu0 0
        %1973 = vmatprep.subr.bf16.mxu0 0
        %1974 = vmatpush2.bf16.msra.mxu0 0
        %1975 = vmatprep.subr.bf16.mxu0 0
        %1976 = vmatpush2.bf16.msra.mxu0 0
        %1977 = vmatprep.subr.bf16.mxu0 0
        %1978 = vmatpush2.bf16.msra.mxu0 0
        %1979 = vmatprep.subr.bf16.mxu0 0
        %1980 = vmatpush2.bf16.msra.mxu0 0
        %1981 = vmatprep.subr.bf16.mxu0 0
        %1982 = vmatpush2.bf16.msra.mxu0 0
        %1983 = vmatprep.mubr.bf16.mxu0 0
        %1984 = vmatmul.mubr.bf16.gmra.mxu0 %v1949
        %v1985 = vpop.f32.mrf.mxu0
        %v1986 = vadd.f32 %v1922, %v1985
        %v1987 = vpop.f32.mrf.mxu0
        %v1988 = vpop.f32.mrf.mxu0
        %v1989 = vpop.f32.mrf.mxu0
        %1990 = vdwg.mxu0
        %v1991 = vadd.f32 %v1825, %v1986
        %v1992 = vsel %vm1051, %v1991, 0.0
        %1993 = vadd.xlane.f32.xlu0 %v1992
        %v1994 = vpop.xlane.xlu0 %1993
        %v1995 = vmul.f32 %v1994, %v1801
        %v1996 = vsub.f32 %v1991, %v1995
        %v1997 = vmul.f32 %v1996, %v1996
        %v1998 = vsel %vm1051, %v1997, 0.0
        %1999 = vadd.xlane.f32.xlu0 %v1998
        %v2000 = vpop.xlane.xlu0 %1999
        %v2001 = vmul.f32 %v2000, %v1801
        %v2002 = vadd.f32 %v2001, 1e-05
        %v2003 = vrsqrt.pop %v2002
        %v2004 = vmul.f32 %v1996, %v2003
        %v2006 = vlaneseq
        %v2007 = vshrl.u32 %v2006, 7
        %v2008 = vsub.s32 0, %v2007
        %v2009 = vrot.slane %v1002, %v2008
        %v2011 = vmul.f32 %v2004, %v2009
        %v2013 = vlaneseq
        %v2014 = vshrl.u32 %v2013, 7
        %v2015 = vsub.s32 0, %v2014
        %v2016 = vrot.slane %v1003, %v2015
        %v2018 = vadd.f32 %v2011, %v2016
        %v2019 = vld [vmem:[%s2 + $0x1] sm:$0x1]
        %v2020 = vlaneseq
        %v2021 = vshrl.u32 %v2020, 7
        %v2022 = vsub.s32 0, %v2021
        %v2023 = vrot.slane %v2019, %v2022
        %v2024 = vadd.f32 %v2018, %v2023
        %v2025 = vpack.c.bf16 %v2024, %v2024
        %v2026 = vld [vmem:[#allocation7] sm:$0xf]
        %v2027 = vld [vmem:[#allocation7 + $0x4] sm:$0xf]
        %v2028 = vld [vmem:[#allocation7 + $0x8] sm:$0xf]
        %v2029 = vld [vmem:[#allocation7 + $0xc] sm:$0xf]
        %v2030 = vld [vmem:[#allocation7 + $0x10] sm:$0xf]
        %v2031 = vld [vmem:[#allocation7 + $0x14] sm:$0xf]
        %v2032 = vld [vmem:[#allocation7 + $0x18] sm:$0xf]
        %v2033 = vld [vmem:[#allocation7 + $0x1c] sm:$0xf]
        %v2042 = vunpack.c.l.b16 %v2026
        %v2043 = vunpack.c.l.b16 %v2027
        %v2044 = vunpack.c.l.b16 %v2028
        %v2045 = vunpack.c.l.b16 %v2029
        %v2046 = vunpack.c.l.b16 %v2030
        %v2047 = vunpack.c.l.b16 %v2031
        %v2048 = vunpack.c.l.b16 %v2032
        %v2049 = vunpack.c.l.b16 %v2033
        %v2050 = vpack.c.b16 %v2043, %v2042
        %v2051 = vpack.c.b16 %v2045, %v2044
        %v2052 = vpack.c.b16 %v2047, %v2046
        %v2053 = vpack.c.b16 %v2049, %v2048
        %v2059 = vsel %vm1051, %v2025, 0
        %2061 = vmatprep.subr.bf16.mxu0 0
        %2062 = vmatpush1.bf16.msra.mxu0 0
        %2063 = vmatprep.subr.bf16.mxu0 0
        %2064 = vmatpush1.bf16.msra.mxu0 0
        %2065 = vmatprep.subr.bf16.mxu0 0
        %2066 = vmatpush1.bf16.msra.mxu0 0
        %2067 = vmatprep.subr.bf16.mxu0 0
        %2068 = vmatpush1.bf16.msra.mxu0 0
        %2069 = vmatprep.subr.bf16.mxu0 0
        %2070 = vmatpush1.bf16.msra.mxu0 %v2053
        %2071 = vmatprep.subr.bf16.mxu0 0
        %2072 = vmatpush1.bf16.msra.mxu0 %v2052
        %2073 = vmatprep.subr.bf16.mxu0 0
        %2074 = vmatpush1.bf16.msra.mxu0 %v2051
        %2075 = vmatprep.subr.bf16.mxu0 0
        %2076 = vmatpush1.bf16.msra.mxu0 %v2050
        %2077 = vmatprep.subr.bf16.mxu0 0
        %2078 = vmatpush2.bf16.msra.mxu0 0
        %2079 = vmatprep.subr.bf16.mxu0 0
        %2080 = vmatpush2.bf16.msra.mxu0 0
        %2081 = vmatprep.subr.bf16.mxu0 0
        %2082 = vmatpush2.bf16.msra.mxu0 0
        %2083 = vmatprep.subr.bf16.mxu0 0
        %2084 = vmatpush2.bf16.msra.mxu0 0
        %2085 = vmatprep.subr.bf16.mxu0 0
        %2086 = vmatpush2.bf16.msra.mxu0 0
        %2087 = vmatprep.subr.bf16.mxu0 0
        %2088 = vmatpush2.bf16.msra.mxu0 0
        %2089 = vmatprep.subr.bf16.mxu0 0
        %2090 = vmatpush2.bf16.msra.mxu0 0
        %2091 = vmatprep.subr.bf16.mxu0 0
        %2092 = vmatpush2.bf16.msra.mxu0 0
        %2093 = vmatprep.mubr.bf16.mxu0 0
        %2094 = vmatmul.mubr.bf16.gmra.mxu0 %v2059
        %v2095 = vpop.f32.mrf.mxu0
        %v2096 = vadd.f32 %v1025, %v2095
        %v2097 = vpop.f32.mrf.mxu0
        %v2098 = vpop.f32.mrf.mxu0
        %v2099 = vpop.f32.mrf.mxu0
        %2100 = vdwg.mxu0
        %v2101 = vmul.f32 %v2096, 0.25
        %v2102 = vld [vmem:[#allocation8] sm:$0xf]
        %v2103 = vld [vmem:[#allocation8 + $0x4] sm:$0xf]
        %v2104 = vld [vmem:[#allocation8 + $0x8] sm:$0xf]
        %v2105 = vld [vmem:[#allocation8 + $0xc] sm:$0xf]
        %v2106 = vld [vmem:[#allocation8 + $0x10] sm:$0xf]
        %v2107 = vld [vmem:[#allocation8 + $0x14] sm:$0xf]
        %v2108 = vld [vmem:[#allocation8 + $0x18] sm:$0xf]
        %v2109 = vld [vmem:[#allocation8 + $0x1c] sm:$0xf]
        %v2118 = vunpack.c.l.b16 %v2102
        %v2119 = vunpack.c.l.b16 %v2103
        %v2120 = vunpack.c.l.b16 %v2104
        %v2121 = vunpack.c.l.b16 %v2105
        %v2122 = vunpack.c.l.b16 %v2106
        %v2123 = vunpack.c.l.b16 %v2107
        %v2124 = vunpack.c.l.b16 %v2108
        %v2125 = vunpack.c.l.b16 %v2109
        %v2126 = vpack.c.b16 %v2119, %v2118
        %v2127 = vpack.c.b16 %v2121, %v2120
        %v2128 = vpack.c.b16 %v2123, %v2122
        %v2129 = vpack.c.b16 %v2125, %v2124
        %2134 = vmatprep.subr.bf16.mxu0 0
        %2135 = vmatpush1.bf16.msra.mxu0 0
        %2136 = vmatprep.subr.bf16.mxu0 0
        %2137 = vmatpush1.bf16.msra.mxu0 0
        %2138 = vmatprep.subr.bf16.mxu0 0
        %2139 = vmatpush1.bf16.msra.mxu0 0
        %2140 = vmatprep.subr.bf16.mxu0 0
        %2141 = vmatpush1.bf16.msra.mxu0 0
        %2142 = vmatprep.subr.bf16.mxu0 0
        %2143 = vmatpush1.bf16.msra.mxu0 %v2129
        %2144 = vmatprep.subr.bf16.mxu0 0
        %2145 = vmatpush1.bf16.msra.mxu0 %v2128
        %2146 = vmatprep.subr.bf16.mxu0 0
        %2147 = vmatpush1.bf16.msra.mxu0 %v2127
        %2148 = vmatprep.subr.bf16.mxu0 0
        %2149 = vmatpush1.bf16.msra.mxu0 %v2126
        %2150 = vmatprep.subr.bf16.mxu0 0
        %2151 = vmatpush2.bf16.msra.mxu0 0
        %2152 = vmatprep.subr.bf16.mxu0 0
        %2153 = vmatpush2.bf16.msra.mxu0 0
        %2154 = vmatprep.subr.bf16.mxu0 0
        %2155 = vmatpush2.bf16.msra.mxu0 0
        %2156 = vmatprep.subr.bf16.mxu0 0
        %2157 = vmatpush2.bf16.msra.mxu0 0
        %2158 = vmatprep.subr.bf16.mxu0 0
        %2159 = vmatpush2.bf16.msra.mxu0 0
        %2160 = vmatprep.subr.bf16.mxu0 0
        %2161 = vmatpush2.bf16.msra.mxu0 0
        %2162 = vmatprep.subr.bf16.mxu0 0
        %2163 = vmatpush2.bf16.msra.mxu0 0
        %2164 = vmatprep.subr.bf16.mxu0 0
        %2165 = vmatpush2.bf16.msra.mxu0 0
        %2166 = vmatprep.mubr.bf16.mxu0 0
        %2167 = vmatmul.mubr.bf16.gmra.mxu0 %v2059
        %v2168 = vpop.f32.mrf.mxu0
        %v2169 = vadd.f32 %v1108, %v2168
        %v2170 = vpop.f32.mrf.mxu0
        %v2171 = vpop.f32.mrf.mxu0
        %v2172 = vpop.f32.mrf.mxu0
        %2173 = vdwg.mxu0
        %v2174 = vld [vmem:[#allocation10] sm:$0xf]
        %v2175 = vld [vmem:[#allocation10 + $0x4] sm:$0xf]
        %v2176 = vld [vmem:[#allocation10 + $0x8] sm:$0xf]
        %v2177 = vld [vmem:[#allocation10 + $0xc] sm:$0xf]
        %v2178 = vld [vmem:[#allocation10 + $0x10] sm:$0xf]
        %v2179 = vld [vmem:[#allocation10 + $0x14] sm:$0xf]
        %v2180 = vld [vmem:[#allocation10 + $0x18] sm:$0xf]
        %v2181 = vld [vmem:[#allocation10 + $0x1c] sm:$0xf]
        %v2190 = vunpack.c.l.b16 %v2174
        %v2191 = vunpack.c.l.b16 %v2175
        %v2192 = vunpack.c.l.b16 %v2176
        %v2193 = vunpack.c.l.b16 %v2177
        %v2194 = vunpack.c.l.b16 %v2178
        %v2195 = vunpack.c.l.b16 %v2179
        %v2196 = vunpack.c.l.b16 %v2180
        %v2197 = vunpack.c.l.b16 %v2181
        %v2198 = vpack.c.b16 %v2191, %v2190
        %v2199 = vpack.c.b16 %v2193, %v2192
        %v2200 = vpack.c.b16 %v2195, %v2194
        %v2201 = vpack.c.b16 %v2197, %v2196
        %2206 = vmatprep.subr.bf16.mxu0 0
        %2207 = vmatpush1.bf16.msra.mxu0 0
        %2208 = vmatprep.subr.bf16.mxu0 0
        %2209 = vmatpush1.bf16.msra.mxu0 0
        %2210 = vmatprep.subr.bf16.mxu0 0
        %2211 = vmatpush1.bf16.msra.mxu0 0
        %2212 = vmatprep.subr.bf16.mxu0 0
        %2213 = vmatpush1.bf16.msra.mxu0 0
        %2214 = vmatprep.subr.bf16.mxu0 0
        %2215 = vmatpush1.bf16.msra.mxu0 %v2201
        %2216 = vmatprep.subr.bf16.mxu0 0
        %2217 = vmatpush1.bf16.msra.mxu0 %v2200
        %2218 = vmatprep.subr.bf16.mxu0 0
        %2219 = vmatpush1.bf16.msra.mxu0 %v2199
        %2220 = vmatprep.subr.bf16.mxu0 0
        %2221 = vmatpush1.bf16.msra.mxu0 %v2198
        %2222 = vmatprep.subr.bf16.mxu0 0
        %2223 = vmatpush2.bf16.msra.mxu0 0
        %2224 = vmatprep.subr.bf16.mxu0 0
        %2225 = vmatpush2.bf16.msra.mxu0 0
        %2226 = vmatprep.subr.bf16.mxu0 0
        %2227 = vmatpush2.bf16.msra.mxu0 0
        %2228 = vmatprep.subr.bf16.mxu0 0
        %2229 = vmatpush2.bf16.msra.mxu0 0
        %2230 = vmatprep.subr.bf16.mxu0 0
        %2231 = vmatpush2.bf16.msra.mxu0 0
        %2232 = vmatprep.subr.bf16.mxu0 0
        %2233 = vmatpush2.bf16.msra.mxu0 0
        %2234 = vmatprep.subr.bf16.mxu0 0
        %2235 = vmatpush2.bf16.msra.mxu0 0
        %2236 = vmatprep.subr.bf16.mxu0 0
        %2237 = vmatpush2.bf16.msra.mxu0 0
        %2238 = vmatprep.mubr.bf16.mxu0 0
        %2239 = vmatmul.mubr.bf16.gmra.mxu0 %v2059
        %v2240 = vpop.f32.mrf.mxu0
        %v2241 = vadd.f32 %v1186, %v2240
        %v2242 = vpop.f32.mrf.mxu0
        %v2243 = vpop.f32.mrf.mxu0
        %v2244 = vpop.f32.mrf.mxu0
        %2245 = vdwg.mxu0
        %v2246 = vpack.c.bf16 %v2101, %v2101
        %v2247 = vpack.c.bf16 %v2169, %v2169
        %v2248 = vpack.c.bf16 %v2241, %v2241
        %v2250 = vsel %vm1255, %v2246, 0
        %v2253 = vsel %vm1255, %v2247, 0
        %2255 = vmatprep.subr.bf16.mxu0 0
        %2256 = vmatpush1.bf16.xpose.msra.mxu0 0
        %2257 = vmatprep.subr.bf16.mxu0 0
        %2258 = vmatpush1.bf16.xpose.msra.mxu0 0
        %2259 = vmatprep.subr.bf16.mxu0 0
        %2260 = vmatpush1.bf16.xpose.msra.mxu0 0
        %2261 = vmatprep.subr.bf16.mxu0 0
        %2262 = vmatpush1.bf16.xpose.msra.mxu0 0
        %2263 = vmatprep.subr.bf16.mxu0 0
        %2264 = vmatpush1.bf16.xpose.msra.mxu0 0
        %2265 = vmatprep.subr.bf16.mxu0 0
        %2266 = vmatpush1.bf16.xpose.msra.mxu0 0
        %2267 = vmatprep.subr.bf16.mxu0 0
        %2268 = vmatpush1.bf16.xpose.msra.mxu0 0
        %2269 = vmatprep.subr.bf16.mxu0 0
        %2270 = vmatpush1.bf16.xpose.msra.mxu0 %v2253
        %2271 = vmatprep.subr.bf16.mxu0 0
        %2272 = vmatpush2.bf16.xpose.msra.mxu0 0
        %2273 = vmatprep.subr.bf16.mxu0 0
        %2274 = vmatpush2.bf16.xpose.msra.mxu0 0
        %2275 = vmatprep.subr.bf16.mxu0 0
        %2276 = vmatpush2.bf16.xpose.msra.mxu0 0
        %2277 = vmatprep.subr.bf16.mxu0 0
        %2278 = vmatpush2.bf16.xpose.msra.mxu0 0
        %2279 = vmatprep.subr.bf16.mxu0 0
        %2280 = vmatpush2.bf16.xpose.msra.mxu0 0
        %2281 = vmatprep.subr.bf16.mxu0 0
        %2282 = vmatpush2.bf16.xpose.msra.mxu0 0
        %2283 = vmatprep.subr.bf16.mxu0 0
        %2284 = vmatpush2.bf16.xpose.msra.mxu0 0
        %2285 = vmatprep.subr.bf16.mxu0 0
        %2286 = vmatpush2.bf16.xpose.msra.mxu0 0
        %2287 = vmatprep.mubr.bf16.mxu0 0
        %2288 = vmatmul.mubr.bf16.gmra.mxu0 %v2250
        %v2289 = vpop.f32.mrf.mxu0
        %v2290 = vadd.f32 %v992, %v2289
        %v2291 = vpop.f32.mrf.mxu0
        %v2292 = vpop.f32.mrf.mxu0
        %v2293 = vpop.f32.mrf.mxu0
        %2294 = vdwg.mxu0
        %v2295 = vsel %vm1302, %v2290, -inf
        %2296 = vmax.xlane.f32.xlu0 %v2295
        %v2297 = vpop.xlane.xlu0 %2296
        %v2298 = vsub.f32 %v2290, %v2297
        %v2299 = vmul.f32 %v2298, 1.442695
        %v2300 = vpow.pop %v2299
        %v2301 = vsel %vm1302, %v2300, 0.0
        %2302 = vadd.xlane.f32.xlu0 %v2301
        %v2303 = vpop.xlane.xlu0 %2302
        %v2304 = vrcp.pop %v2303
        %v2305 = vmul.f32 %v2300, %v2304
        %v2306 = vpack.c.bf16 %v2305, %v2305
        %v2308 = vsel %vm1302, %v2306, 0
        %v2311 = vsel %vm1318, %v2248, 0
        %2313 = vmatprep.subr.bf16.mxu0 0
        %2314 = vmatpush1.bf16.msra.mxu0 0
        %2315 = vmatprep.subr.bf16.mxu0 0
        %2316 = vmatpush1.bf16.msra.mxu0 0
        %2317 = vmatprep.subr.bf16.mxu0 0
        %2318 = vmatpush1.bf16.msra.mxu0 0
        %2319 = vmatprep.subr.bf16.mxu0 0
        %2320 = vmatpush1.bf16.msra.mxu0 0
        %2321 = vmatprep.subr.bf16.mxu0 0
        %2322 = vmatpush1.bf16.msra.mxu0 0
        %2323 = vmatprep.subr.bf16.mxu0 0
        %2324 = vmatpush1.bf16.msra.mxu0 0
        %2325 = vmatprep.subr.bf16.mxu0 0
        %2326 = vmatpush1.bf16.msra.mxu0 0
        %2327 = vmatprep.subr.bf16.mxu0 0
        %2328 = vmatpush1.bf16.msra.mxu0 %v2311
        %2329 = vmatprep.subr.bf16.mxu0 0
        %2330 = vmatpush2.bf16.msra.mxu0 0
        %2331 = vmatprep.subr.bf16.mxu0 0
        %2332 = vmatpush2.bf16.msra.mxu0 0
        %2333 = vmatprep.subr.bf16.mxu0 0
        %2334 = vmatpush2.bf16.msra.mxu0 0
        %2335 = vmatprep.subr.bf16.mxu0 0
        %2336 = vmatpush2.bf16.msra.mxu0 0
        %2337 = vmatprep.subr.bf16.mxu0 0
        %2338 = vmatpush2.bf16.msra.mxu0 0
        %2339 = vmatprep.subr.bf16.mxu0 0
        %2340 = vmatpush2.bf16.msra.mxu0 0
        %2341 = vmatprep.subr.bf16.mxu0 0
        %2342 = vmatpush2.bf16.msra.mxu0 0
        %2343 = vmatprep.subr.bf16.mxu0 0
        %2344 = vmatpush2.bf16.msra.mxu0 0
        %2345 = vmatprep.mubr.bf16.mxu0 0
        %2346 = vmatmul.mubr.bf16.gmra.mxu0 %v2308
        %v2347 = vpop.f32.mrf.mxu0
        %v2348 = vadd.f32 0.0, %v2347
        %v2349 = vpop.f32.mrf.mxu0
        %v2350 = vpop.f32.mrf.mxu0
        %v2351 = vpop.f32.mrf.mxu0
        %2352 = vdwg.mxu0
        %v2353 = vpack.c.bf16 %v2348, %v2348
        %2355 = vrot.lane.b32.xlu0 %v2246, 112
        %v2356 = vpop.permute.xlu0 %2355
        %2358 = vrot.lane.b32.xlu0 %v2247, 112
        %v2359 = vpop.permute.xlu0 %2358
        %v2361 = vsel %vm1255, %v2356, 0
        %v2364 = vsel %vm1255, %v2359, 0
        %2366 = vmatprep.subr.bf16.mxu0 0
        %2367 = vmatpush1.bf16.xpose.msra.mxu0 0
        %2368 = vmatprep.subr.bf16.mxu0 0
        %2369 = vmatpush1.bf16.xpose.msra.mxu0 0
        %2370 = vmatprep.subr.bf16.mxu0 0
        %2371 = vmatpush1.bf16.xpose.msra.mxu0 0
        %2372 = vmatprep.subr.bf16.mxu0 0
        %2373 = vmatpush1.bf16.xpose.msra.mxu0 0
        %2374 = vmatprep.subr.bf16.mxu0 0
        %2375 = vmatpush1.bf16.xpose.msra.mxu0 0
        %2376 = vmatprep.subr.bf16.mxu0 0
        %2377 = vmatpush1.bf16.xpose.msra.mxu0 0
        %2378 = vmatprep.subr.bf16.mxu0 0
        %2379 = vmatpush1.bf16.xpose.msra.mxu0 0
        %2380 = vmatprep.subr.bf16.mxu0 0
        %2381 = vmatpush1.bf16.xpose.msra.mxu0 %v2364
        %2382 = vmatprep.subr.bf16.mxu0 0
        %2383 = vmatpush2.bf16.xpose.msra.mxu0 0
        %2384 = vmatprep.subr.bf16.mxu0 0
        %2385 = vmatpush2.bf16.xpose.msra.mxu0 0
        %2386 = vmatprep.subr.bf16.mxu0 0
        %2387 = vmatpush2.bf16.xpose.msra.mxu0 0
        %2388 = vmatprep.subr.bf16.mxu0 0
        %2389 = vmatpush2.bf16.xpose.msra.mxu0 0
        %2390 = vmatprep.subr.bf16.mxu0 0
        %2391 = vmatpush2.bf16.xpose.msra.mxu0 0
        %2392 = vmatprep.subr.bf16.mxu0 0
        %2393 = vmatpush2.bf16.xpose.msra.mxu0 0
        %2394 = vmatprep.subr.bf16.mxu0 0
        %2395 = vmatpush2.bf16.xpose.msra.mxu0 0
        %2396 = vmatprep.subr.bf16.mxu0 0
        %2397 = vmatpush2.bf16.xpose.msra.mxu0 0
        %2398 = vmatprep.mubr.bf16.mxu0 0
        %2399 = vmatmul.mubr.bf16.gmra.mxu0 %v2361
        %v2400 = vpop.f32.mrf.mxu0
        %v2401 = vadd.f32 %v992, %v2400
        %v2402 = vpop.f32.mrf.mxu0
        %v2403 = vpop.f32.mrf.mxu0
        %v2404 = vpop.f32.mrf.mxu0
        %2405 = vdwg.mxu0
        %v2406 = vsel %vm1302, %v2401, -inf
        %2407 = vmax.xlane.f32.xlu0 %v2406
        %v2408 = vpop.xlane.xlu0 %2407
        %v2409 = vsub.f32 %v2401, %v2408
        %v2410 = vmul.f32 %v2409, 1.442695
        %v2411 = vpow.pop %v2410
        %v2412 = vsel %vm1302, %v2411, 0.0
        %2413 = vadd.xlane.f32.xlu0 %v2412
        %v2414 = vpop.xlane.xlu0 %2413
        %v2415 = vrcp.pop %v2414
        %v2416 = vmul.f32 %v2411, %v2415
        %v2417 = vpack.c.bf16 %v2416, %v2416
        %2419 = vrot.lane.b32.xlu0 %v2248, 112
        %v2420 = vpop.permute.xlu0 %2419
        %v2422 = vsel %vm1302, %v2417, 0
        %v2425 = vsel %vm1318, %v2420, 0
        %2427 = vmatprep.subr.bf16.mxu0 0
        %2428 = vmatpush1.bf16.msra.mxu0 0
        %2429 = vmatprep.subr.bf16.mxu0 0
        %2430 = vmatpush1.bf16.msra.mxu0 0
        %2431 = vmatprep.subr.bf16.mxu0 0
        %2432 = vmatpush1.bf16.msra.mxu0 0
        %2433 = vmatprep.subr.bf16.mxu0 0
        %2434 = vmatpush1.bf16.msra.mxu0 0
        %2435 = vmatprep.subr.bf16.mxu0 0
        %2436 = vmatpush1.bf16.msra.mxu0 0
        %2437 = vmatprep.subr.bf16.mxu0 0
        %2438 = vmatpush1.bf16.msra.mxu0 0
        %2439 = vmatprep.subr.bf16.mxu0 0
        %2440 = vmatpush1.bf16.msra.mxu0 0
        %2441 = vmatprep.subr.bf16.mxu0 0
        %2442 = vmatpush1.bf16.msra.mxu0 %v2425
        %2443 = vmatprep.subr.bf16.mxu0 0
        %2444 = vmatpush2.bf16.msra.mxu0 0
        %2445 = vmatprep.subr.bf16.mxu0 0
        %2446 = vmatpush2.bf16.msra.mxu0 0
        %2447 = vmatprep.subr.bf16.mxu0 0
        %2448 = vmatpush2.bf16.msra.mxu0 0
        %2449 = vmatprep.subr.bf16.mxu0 0
        %2450 = vmatpush2.bf16.msra.mxu0 0
        %2451 = vmatprep.subr.bf16.mxu0 0
        %2452 = vmatpush2.bf16.msra.mxu0 0
        %2453 = vmatprep.subr.bf16.mxu0 0
        %2454 = vmatpush2.bf16.msra.mxu0 0
        %2455 = vmatprep.subr.bf16.mxu0 0
        %2456 = vmatpush2.bf16.msra.mxu0 0
        %2457 = vmatprep.subr.bf16.mxu0 0
        %2458 = vmatpush2.bf16.msra.mxu0 0
        %2459 = vmatprep.mubr.bf16.mxu0 0
        %2460 = vmatmul.mubr.bf16.gmra.mxu0 %v2422
        %v2461 = vpop.f32.mrf.mxu0
        %v2462 = vadd.f32 0.0, %v2461
        %v2463 = vpop.f32.mrf.mxu0
        %v2464 = vpop.f32.mrf.mxu0
        %v2465 = vpop.f32.mrf.mxu0
        %2466 = vdwg.mxu0
        %v2467 = vpack.c.bf16 %v2462, %v2462
        %2468 = vrot.lane.b32.xlu0 %v2246, 96
        %v2469 = vpop.permute.xlu0 %2468
        %2470 = vrot.lane.b32.xlu0 %v2247, 96
        %v2471 = vpop.permute.xlu0 %2470
        %v2473 = vsel %vm1255, %v2469, 0
        %v2476 = vsel %vm1255, %v2471, 0
        %2478 = vmatprep.subr.bf16.mxu0 0
        %2479 = vmatpush1.bf16.xpose.msra.mxu0 0
        %2480 = vmatprep.subr.bf16.mxu0 0
        %2481 = vmatpush1.bf16.xpose.msra.mxu0 0
        %2482 = vmatprep.subr.bf16.mxu0 0
        %2483 = vmatpush1.bf16.xpose.msra.mxu0 0
        %2484 = vmatprep.subr.bf16.mxu0 0
        %2485 = vmatpush1.bf16.xpose.msra.mxu0 0
        %2486 = vmatprep.subr.bf16.mxu0 0
        %2487 = vmatpush1.bf16.xpose.msra.mxu0 0
        %2488 = vmatprep.subr.bf16.mxu0 0
        %2489 = vmatpush1.bf16.xpose.msra.mxu0 0
        %2490 = vmatprep.subr.bf16.mxu0 0
        %2491 = vmatpush1.bf16.xpose.msra.mxu0 0
        %2492 = vmatprep.subr.bf16.mxu0 0
        %2493 = vmatpush1.bf16.xpose.msra.mxu0 %v2476
        %2494 = vmatprep.subr.bf16.mxu0 0
        %2495 = vmatpush2.bf16.xpose.msra.mxu0 0
        %2496 = vmatprep.subr.bf16.mxu0 0
        %2497 = vmatpush2.bf16.xpose.msra.mxu0 0
        %2498 = vmatprep.subr.bf16.mxu0 0
        %2499 = vmatpush2.bf16.xpose.msra.mxu0 0
        %2500 = vmatprep.subr.bf16.mxu0 0
        %2501 = vmatpush2.bf16.xpose.msra.mxu0 0
        %2502 = vmatprep.subr.bf16.mxu0 0
        %2503 = vmatpush2.bf16.xpose.msra.mxu0 0
        %2504 = vmatprep.subr.bf16.mxu0 0
        %2505 = vmatpush2.bf16.xpose.msra.mxu0 0
        %2506 = vmatprep.subr.bf16.mxu0 0
        %2507 = vmatpush2.bf16.xpose.msra.mxu0 0
        %2508 = vmatprep.subr.bf16.mxu0 0
        %2509 = vmatpush2.bf16.xpose.msra.mxu0 0
        %2510 = vmatprep.mubr.bf16.mxu0 0
        %2511 = vmatmul.mubr.bf16.gmra.mxu0 %v2473
        %v2512 = vpop.f32.mrf.mxu0
        %v2513 = vadd.f32 %v992, %v2512
        %v2514 = vpop.f32.mrf.mxu0
        %v2515 = vpop.f32.mrf.mxu0
        %v2516 = vpop.f32.mrf.mxu0
        %2517 = vdwg.mxu0
        %v2518 = vsel %vm1302, %v2513, -inf
        %2519 = vmax.xlane.f32.xlu0 %v2518
        %v2520 = vpop.xlane.xlu0 %2519
        %v2521 = vsub.f32 %v2513, %v2520
        %v2522 = vmul.f32 %v2521, 1.442695
        %v2523 = vpow.pop %v2522
        %v2524 = vsel %vm1302, %v2523, 0.0
        %2525 = vadd.xlane.f32.xlu0 %v2524
        %v2526 = vpop.xlane.xlu0 %2525
        %v2527 = vrcp.pop %v2526
        %v2528 = vmul.f32 %v2523, %v2527
        %v2529 = vpack.c.bf16 %v2528, %v2528
        %2530 = vrot.lane.b32.xlu0 %v2248, 96
        %v2531 = vpop.permute.xlu0 %2530
        %v2533 = vsel %vm1302, %v2529, 0
        %v2536 = vsel %vm1318, %v2531, 0
        %2538 = vmatprep.subr.bf16.mxu0 0
        %2539 = vmatpush1.bf16.msra.mxu0 0
        %2540 = vmatprep.subr.bf16.mxu0 0
        %2541 = vmatpush1.bf16.msra.mxu0 0
        %2542 = vmatprep.subr.bf16.mxu0 0
        %2543 = vmatpush1.bf16.msra.mxu0 0
        %2544 = vmatprep.subr.bf16.mxu0 0
        %2545 = vmatpush1.bf16.msra.mxu0 0
        %2546 = vmatprep.subr.bf16.mxu0 0
        %2547 = vmatpush1.bf16.msra.mxu0 0
        %2548 = vmatprep.subr.bf16.mxu0 0
        %2549 = vmatpush1.bf16.msra.mxu0 0
        %2550 = vmatprep.subr.bf16.mxu0 0
        %2551 = vmatpush1.bf16.msra.mxu0 0
        %2552 = vmatprep.subr.bf16.mxu0 0
        %2553 = vmatpush1.bf16.msra.mxu0 %v2536
        %2554 = vmatprep.subr.bf16.mxu0 0
        %2555 = vmatpush2.bf16.msra.mxu0 0
        %2556 = vmatprep.subr.bf16.mxu0 0
        %2557 = vmatpush2.bf16.msra.mxu0 0
        %2558 = vmatprep.subr.bf16.mxu0 0
        %2559 = vmatpush2.bf16.msra.mxu0 0
        %2560 = vmatprep.subr.bf16.mxu0 0
        %2561 = vmatpush2.bf16.msra.mxu0 0
        %2562 = vmatprep.subr.bf16.mxu0 0
        %2563 = vmatpush2.bf16.msra.mxu0 0
        %2564 = vmatprep.subr.bf16.mxu0 0
        %2565 = vmatpush2.bf16.msra.mxu0 0
        %2566 = vmatprep.subr.bf16.mxu0 0
        %2567 = vmatpush2.bf16.msra.mxu0 0
        %2568 = vmatprep.subr.bf16.mxu0 0
        %2569 = vmatpush2.bf16.msra.mxu0 0
        %2570 = vmatprep.mubr.bf16.mxu0 0
        %2571 = vmatmul.mubr.bf16.gmra.mxu0 %v2533
        %v2572 = vpop.f32.mrf.mxu0
        %v2573 = vadd.f32 0.0, %v2572
        %v2574 = vpop.f32.mrf.mxu0
        %v2575 = vpop.f32.mrf.mxu0
        %v2576 = vpop.f32.mrf.mxu0
        %2577 = vdwg.mxu0
        %v2578 = vpack.c.bf16 %v2573, %v2573
        %2579 = vrot.lane.b32.xlu0 %v2246, 80
        %v2580 = vpop.permute.xlu0 %2579
        %2581 = vrot.lane.b32.xlu0 %v2247, 80
        %v2582 = vpop.permute.xlu0 %2581
        %v2584 = vsel %vm1255, %v2580, 0
        %v2587 = vsel %vm1255, %v2582, 0
        %2589 = vmatprep.subr.bf16.mxu0 0
        %2590 = vmatpush1.bf16.xpose.msra.mxu0 0
        %2591 = vmatprep.subr.bf16.mxu0 0
        %2592 = vmatpush1.bf16.xpose.msra.mxu0 0
        %2593 = vmatprep.subr.bf16.mxu0 0
        %2594 = vmatpush1.bf16.xpose.msra.mxu0 0
        %2595 = vmatprep.subr.bf16.mxu0 0
        %2596 = vmatpush1.bf16.xpose.msra.mxu0 0
        %2597 = vmatprep.subr.bf16.mxu0 0
        %2598 = vmatpush1.bf16.xpose.msra.mxu0 0
        %2599 = vmatprep.subr.bf16.mxu0 0
        %2600 = vmatpush1.bf16.xpose.msra.mxu0 0
        %2601 = vmatprep.subr.bf16.mxu0 0
        %2602 = vmatpush1.bf16.xpose.msra.mxu0 0
        %2603 = vmatprep.subr.bf16.mxu0 0
        %2604 = vmatpush1.bf16.xpose.msra.mxu0 %v2587
        %2605 = vmatprep.subr.bf16.mxu0 0
        %2606 = vmatpush2.bf16.xpose.msra.mxu0 0
        %2607 = vmatprep.subr.bf16.mxu0 0
        %2608 = vmatpush2.bf16.xpose.msra.mxu0 0
        %2609 = vmatprep.subr.bf16.mxu0 0
        %2610 = vmatpush2.bf16.xpose.msra.mxu0 0
        %2611 = vmatprep.subr.bf16.mxu0 0
        %2612 = vmatpush2.bf16.xpose.msra.mxu0 0
        %2613 = vmatprep.subr.bf16.mxu0 0
        %2614 = vmatpush2.bf16.xpose.msra.mxu0 0
        %2615 = vmatprep.subr.bf16.mxu0 0
        %2616 = vmatpush2.bf16.xpose.msra.mxu0 0
        %2617 = vmatprep.subr.bf16.mxu0 0
        %2618 = vmatpush2.bf16.xpose.msra.mxu0 0
        %2619 = vmatprep.subr.bf16.mxu0 0
        %2620 = vmatpush2.bf16.xpose.msra.mxu0 0
        %2621 = vmatprep.mubr.bf16.mxu0 0
        %2622 = vmatmul.mubr.bf16.gmra.mxu0 %v2584
        %v2623 = vpop.f32.mrf.mxu0
        %v2624 = vadd.f32 %v992, %v2623
        %v2625 = vpop.f32.mrf.mxu0
        %v2626 = vpop.f32.mrf.mxu0
        %v2627 = vpop.f32.mrf.mxu0
        %2628 = vdwg.mxu0
        %v2629 = vsel %vm1302, %v2624, -inf
        %2630 = vmax.xlane.f32.xlu0 %v2629
        %v2631 = vpop.xlane.xlu0 %2630
        %v2632 = vsub.f32 %v2624, %v2631
        %v2633 = vmul.f32 %v2632, 1.442695
        %v2634 = vpow.pop %v2633
        %v2635 = vsel %vm1302, %v2634, 0.0
        %2636 = vadd.xlane.f32.xlu0 %v2635
        %v2637 = vpop.xlane.xlu0 %2636
        %v2638 = vrcp.pop %v2637
        %v2639 = vmul.f32 %v2634, %v2638
        %v2640 = vpack.c.bf16 %v2639, %v2639
        %2641 = vrot.lane.b32.xlu0 %v2248, 80
        %v2642 = vpop.permute.xlu0 %2641
        %v2644 = vsel %vm1302, %v2640, 0
        %v2647 = vsel %vm1318, %v2642, 0
        %2649 = vmatprep.subr.bf16.mxu0 0
        %2650 = vmatpush1.bf16.msra.mxu0 0
        %2651 = vmatprep.subr.bf16.mxu0 0
        %2652 = vmatpush1.bf16.msra.mxu0 0
        %2653 = vmatprep.subr.bf16.mxu0 0
        %2654 = vmatpush1.bf16.msra.mxu0 0
        %2655 = vmatprep.subr.bf16.mxu0 0
        %2656 = vmatpush1.bf16.msra.mxu0 0
        %2657 = vmatprep.subr.bf16.mxu0 0
        %2658 = vmatpush1.bf16.msra.mxu0 0
        %2659 = vmatprep.subr.bf16.mxu0 0
        %2660 = vmatpush1.bf16.msra.mxu0 0
        %2661 = vmatprep.subr.bf16.mxu0 0
        %2662 = vmatpush1.bf16.msra.mxu0 0
        %2663 = vmatprep.subr.bf16.mxu0 0
        %2664 = vmatpush1.bf16.msra.mxu0 %v2647
        %2665 = vmatprep.subr.bf16.mxu0 0
        %2666 = vmatpush2.bf16.msra.mxu0 0
        %2667 = vmatprep.subr.bf16.mxu0 0
        %2668 = vmatpush2.bf16.msra.mxu0 0
        %2669 = vmatprep.subr.bf16.mxu0 0
        %2670 = vmatpush2.bf16.msra.mxu0 0
        %2671 = vmatprep.subr.bf16.mxu0 0
        %2672 = vmatpush2.bf16.msra.mxu0 0
        %2673 = vmatprep.subr.bf16.mxu0 0
        %2674 = vmatpush2.bf16.msra.mxu0 0
        %2675 = vmatprep.subr.bf16.mxu0 0
        %2676 = vmatpush2.bf16.msra.mxu0 0
        %2677 = vmatprep.subr.bf16.mxu0 0
        %2678 = vmatpush2.bf16.msra.mxu0 0
        %2679 = vmatprep.subr.bf16.mxu0 0
        %2680 = vmatpush2.bf16.msra.mxu0 0
        %2681 = vmatprep.mubr.bf16.mxu0 0
        %2682 = vmatmul.mubr.bf16.gmra.mxu0 %v2644
        %v2683 = vpop.f32.mrf.mxu0
        %v2684 = vadd.f32 0.0, %v2683
        %v2685 = vpop.f32.mrf.mxu0
        %v2686 = vpop.f32.mrf.mxu0
        %v2687 = vpop.f32.mrf.mxu0
        %2688 = vdwg.mxu0
        %v2689 = vpack.c.bf16 %v2684, %v2684
        %2691 = vrot.lane.b32.xlu0 %v2467, 16
        %v2692 = vpop.permute.xlu0 %2691
        %2694 = vrot.lane.b32.xlu0 %v2578, 32
        %v2695 = vpop.permute.xlu0 %2694
        %2697 = vrot.lane.b32.xlu0 %v2689, 48
        %v2698 = vpop.permute.xlu0 %2697
        %v2701 = vsel %vm1255, %v2353, %v2692
        %v2703 = vsel %vm1711, %v2701, %v2695
        %v2705 = vsel %vm1714, %v2703, %v2698
        %v2706 = vld [vmem:[#allocation11] sm:$0xf]
        %v2707 = vld [vmem:[#allocation11 + $0x4] sm:$0xf]
        %v2708 = vld [vmem:[#allocation11 + $0x8] sm:$0xf]
        %v2709 = vld [vmem:[#allocation11 + $0xc] sm:$0xf]
        %v2710 = vld [vmem:[#allocation11 + $0x10] sm:$0xf]
        %v2711 = vld [vmem:[#allocation11 + $0x14] sm:$0xf]
        %v2712 = vld [vmem:[#allocation11 + $0x18] sm:$0xf]
        %v2713 = vld [vmem:[#allocation11 + $0x1c] sm:$0xf]
        %v2722 = vunpack.c.l.b16 %v2706
        %v2723 = vunpack.c.l.b16 %v2707
        %v2724 = vunpack.c.l.b16 %v2708
        %v2725 = vunpack.c.l.b16 %v2709
        %v2726 = vunpack.c.l.b16 %v2710
        %v2727 = vunpack.c.l.b16 %v2711
        %v2728 = vunpack.c.l.b16 %v2712
        %v2729 = vunpack.c.l.b16 %v2713
        %v2730 = vpack.c.b16 %v2723, %v2722
        %v2731 = vpack.c.b16 %v2725, %v2724
        %v2732 = vpack.c.b16 %v2727, %v2726
        %v2733 = vpack.c.b16 %v2729, %v2728
        %v2738 = vsel %vm1051, %v2705, 0
        %2740 = vmatprep.subr.bf16.mxu0 0
        %2741 = vmatpush1.bf16.msra.mxu0 0
        %2742 = vmatprep.subr.bf16.mxu0 0
        %2743 = vmatpush1.bf16.msra.mxu0 0
        %2744 = vmatprep.subr.bf16.mxu0 0
        %2745 = vmatpush1.bf16.msra.mxu0 0
        %2746 = vmatprep.subr.bf16.mxu0 0
        %2747 = vmatpush1.bf16.msra.mxu0 0
        %2748 = vmatprep.subr.bf16.mxu0 0
        %2749 = vmatpush1.bf16.msra.mxu0 %v2733
        %2750 = vmatprep.subr.bf16.mxu0 0
        %2751 = vmatpush1.bf16.msra.mxu0 %v2732
        %2752 = vmatprep.subr.bf16.mxu0 0
        %2753 = vmatpush1.bf16.msra.mxu0 %v2731
        %2754 = vmatprep.subr.bf16.mxu0 0
        %2755 = vmatpush1.bf16.msra.mxu0 %v2730
        %2756 = vmatprep.subr.bf16.mxu0 0
        %2757 = vmatpush2.bf16.msra.mxu0 0
        %2758 = vmatprep.subr.bf16.mxu0 0
        %2759 = vmatpush2.bf16.msra.mxu0 0
        %2760 = vmatprep.subr.bf16.mxu0 0
        %2761 = vmatpush2.bf16.msra.mxu0 0
        %2762 = vmatprep.subr.bf16.mxu0 0
        %2763 = vmatpush2.bf16.msra.mxu0 0
        %2764 = vmatprep.subr.bf16.mxu0 0
        %2765 = vmatpush2.bf16.msra.mxu0 0
        %2766 = vmatprep.subr.bf16.mxu0 0
        %2767 = vmatpush2.bf16.msra.mxu0 0
        %2768 = vmatprep.subr.bf16.mxu0 0
        %2769 = vmatpush2.bf16.msra.mxu0 0
        %2770 = vmatprep.subr.bf16.mxu0 0
        %2771 = vmatpush2.bf16.msra.mxu0 0
        %2772 = vmatprep.mubr.bf16.mxu0 0
        %2773 = vmatmul.mubr.bf16.gmra.mxu0 %v2738
        %v2774 = vpop.f32.mrf.mxu0
        %v2775 = vadd.f32 %v1729, %v2774
        %v2776 = vpop.f32.mrf.mxu0
        %v2777 = vpop.f32.mrf.mxu0
        %v2778 = vpop.f32.mrf.mxu0
        %2779 = vdwg.mxu0
        %v2780 = vadd.f32 %v2024, %v2775
        %v2781 = vsel %vm1051, %v2780, 0.0
        %2782 = vadd.xlane.f32.xlu0 %v2781
        %v2783 = vpop.xlane.xlu0 %2782
        %v2784 = vmul.f32 %v2783, %v1801
        %v2785 = vsub.f32 %v2780, %v2784
        %v2786 = vmul.f32 %v2785, %v2785
        %v2787 = vsel %vm1051, %v2786, 0.0
        %2788 = vadd.xlane.f32.xlu0 %v2787
        %v2789 = vpop.xlane.xlu0 %2788
        %v2790 = vmul.f32 %v2789, %v1801
        %v2791 = vadd.f32 %v2790, 1e-05
        %v2792 = vrsqrt.pop %v2791
        %v2793 = vmul.f32 %v2785, %v2792
        %v2794 = vmul.f32 %v2793, %v1816
        %v2795 = vadd.f32 %v2794, %v1823
        %v2796 = vpack.c.bf16 %v2795, %v2795
        %v2797 = vld [vmem:[#allocation22] sm:$0xf]
        %v2798 = vld [vmem:[#allocation22 + $0x4] sm:$0xf]
        %v2799 = vld [vmem:[#allocation22 + $0x8] sm:$0xf]
        %v2800 = vld [vmem:[#allocation22 + $0xc] sm:$0xf]
        %v2801 = vld [vmem:[#allocation22 + $0x10] sm:$0xf]
        %v2802 = vld [vmem:[#allocation22 + $0x14] sm:$0xf]
        %v2803 = vld [vmem:[#allocation22 + $0x18] sm:$0xf]
        %v2804 = vld [vmem:[#allocation22 + $0x1c] sm:$0xf]
        %v2813 = vunpack.c.l.b16 %v2797
        %v2814 = vunpack.c.l.b16 %v2798
        %v2815 = vunpack.c.l.b16 %v2799
        %v2816 = vunpack.c.l.b16 %v2800
        %v2817 = vunpack.c.l.b16 %v2801
        %v2818 = vunpack.c.l.b16 %v2802
        %v2819 = vunpack.c.l.b16 %v2803
        %v2820 = vunpack.c.l.b16 %v2804
        %v2821 = vpack.c.b16 %v2814, %v2813
        %v2822 = vpack.c.b16 %v2816, %v2815
        %v2823 = vpack.c.b16 %v2818, %v2817
        %v2824 = vpack.c.b16 %v2820, %v2819
        %v2830 = vsel %vm1051, %v2796, 0
        %2832 = vmatprep.subr.bf16.mxu0 0
        %2833 = vmatpush1.bf16.msra.mxu0 0
        %2834 = vmatprep.subr.bf16.mxu0 0
        %2835 = vmatpush1.bf16.msra.mxu0 0
        %2836 = vmatprep.subr.bf16.mxu0 0
        %2837 = vmatpush1.bf16.msra.mxu0 0
        %2838 = vmatprep.subr.bf16.mxu0 0
        %2839 = vmatpush1.bf16.msra.mxu0 0
        %2840 = vmatprep.subr.bf16.mxu0 0
        %2841 = vmatpush1.bf16.msra.mxu0 %v2824
        %2842 = vmatprep.subr.bf16.mxu0 0
        %2843 = vmatpush1.bf16.msra.mxu0 %v2823
        %2844 = vmatprep.subr.bf16.mxu0 0
        %2845 = vmatpush1.bf16.msra.mxu0 %v2822
        %2846 = vmatprep.subr.bf16.mxu0 0
        %2847 = vmatpush1.bf16.msra.mxu0 %v2821
        %2848 = vmatprep.subr.bf16.mxu0 0
        %2849 = vmatpush2.bf16.msra.mxu0 0
        %2850 = vmatprep.subr.bf16.mxu0 0
        %2851 = vmatpush2.bf16.msra.mxu0 0
        %2852 = vmatprep.subr.bf16.mxu0 0
        %2853 = vmatpush2.bf16.msra.mxu0 0
        %2854 = vmatprep.subr.bf16.mxu0 0
        %2855 = vmatpush2.bf16.msra.mxu0 0
        %2856 = vmatprep.subr.bf16.mxu0 0
        %2857 = vmatpush2.bf16.msra.mxu0 0
        %2858 = vmatprep.subr.bf16.mxu0 0
        %2859 = vmatpush2.bf16.msra.mxu0 0
        %2860 = vmatprep.subr.bf16.mxu0 0
        %2861 = vmatpush2.bf16.msra.mxu0 0
        %2862 = vmatprep.subr.bf16.mxu0 0
        %2863 = vmatpush2.bf16.msra.mxu0 0
        %2864 = vmatprep.mubr.bf16.mxu0 0
        %2865 = vmatmul.mubr.bf16.gmra.mxu0 %v2830
        %v2866 = vpop.f32.mrf.mxu0
        %v2867 = vadd.f32 %v1839, %v2866
        %v2868 = vpop.f32.mrf.mxu0
        %v2869 = vpop.f32.mrf.mxu0
        %v2870 = vpop.f32.mrf.mxu0
        %2871 = vdwg.mxu0
        %v2872 = vmax.f32 %v2867, 0.0
        %v2873 = vpack.c.bf16 %v2872, %v2872
        %v2874 = vld [vmem:[#allocation25] sm:$0xf]
        %v2875 = vld [vmem:[#allocation25 + $0x4] sm:$0xf]
        %v2876 = vld [vmem:[#allocation25 + $0x8] sm:$0xf]
        %v2877 = vld [vmem:[#allocation25 + $0xc] sm:$0xf]
        %v2878 = vld [vmem:[#allocation25 + $0x10] sm:$0xf]
        %v2879 = vld [vmem:[#allocation25 + $0x14] sm:$0xf]
        %v2880 = vld [vmem:[#allocation25 + $0x18] sm:$0xf]
        %v2881 = vld [vmem:[#allocation25 + $0x1c] sm:$0xf]
        %v2890 = vunpack.c.l.b16 %v2874
        %v2891 = vunpack.c.l.b16 %v2875
        %v2892 = vunpack.c.l.b16 %v2876
        %v2893 = vunpack.c.l.b16 %v2877
        %v2894 = vunpack.c.l.b16 %v2878
        %v2895 = vunpack.c.l.b16 %v2879
        %v2896 = vunpack.c.l.b16 %v2880
        %v2897 = vunpack.c.l.b16 %v2881
        %v2898 = vpack.c.b16 %v2891, %v2890
        %v2899 = vpack.c.b16 %v2893, %v2892
        %v2900 = vpack.c.b16 %v2895, %v2894
        %v2901 = vpack.c.b16 %v2897, %v2896
        %v2907 = vsel %vm1051, %v2873, 0
        %2909 = vmatprep.subr.bf16.mxu0 0
        %2910 = vmatpush1.bf16.msra.mxu0 0
        %2911 = vmatprep.subr.bf16.mxu0 0
        %2912 = vmatpush1.bf16.msra.mxu0 0
        %2913 = vmatprep.subr.bf16.mxu0 0
        %2914 = vmatpush1.bf16.msra.mxu0 0
        %2915 = vmatprep.subr.bf16.mxu0 0
        %2916 = vmatpush1.bf16.msra.mxu0 0
        %2917 = vmatprep.subr.bf16.mxu0 0
        %2918 = vmatpush1.bf16.msra.mxu0 %v2901
        %2919 = vmatprep.subr.bf16.mxu0 0
        %2920 = vmatpush1.bf16.msra.mxu0 %v2900
        %2921 = vmatprep.subr.bf16.mxu0 0
        %2922 = vmatpush1.bf16.msra.mxu0 %v2899
        %2923 = vmatprep.subr.bf16.mxu0 0
        %2924 = vmatpush1.bf16.msra.mxu0 %v2898
        %2925 = vmatprep.subr.bf16.mxu0 0
        %2926 = vmatpush2.bf16.msra.mxu0 0
        %2927 = vmatprep.subr.bf16.mxu0 0
        %2928 = vmatpush2.bf16.msra.mxu0 0
        %2929 = vmatprep.subr.bf16.mxu0 0
        %2930 = vmatpush2.bf16.msra.mxu0 0
        %2931 = vmatprep.subr.bf16.mxu0 0
        %2932 = vmatpush2.bf16.msra.mxu0 0
        %2933 = vmatprep.subr.bf16.mxu0 0
        %2934 = vmatpush2.bf16.msra.mxu0 0
        %2935 = vmatprep.subr.bf16.mxu0 0
        %2936 = vmatpush2.bf16.msra.mxu0 0
        %2937 = vmatprep.subr.bf16.mxu0 0
        %2938 = vmatpush2.bf16.msra.mxu0 0
        %2939 = vmatprep.subr.bf16.mxu0 0
        %2940 = vmatpush2.bf16.msra.mxu0 0
        %2941 = vmatprep.mubr.bf16.mxu0 0
        %2942 = vmatmul.mubr.bf16.gmra.mxu0 %v2907
        %v2943 = vpop.f32.mrf.mxu0
        %v2944 = vadd.f32 %v1922, %v2943
        %v2945 = vpop.f32.mrf.mxu0
        %v2946 = vpop.f32.mrf.mxu0
        %v2947 = vpop.f32.mrf.mxu0
        %2948 = vdwg.mxu0
        %v2949 = vadd.f32 %v2795, %v2944
        %v2950 = vsel %vm1051, %v2949, 0.0
        %2951 = vadd.xlane.f32.xlu0 %v2950
        %v2952 = vpop.xlane.xlu0 %2951
        %v2953 = vmul.f32 %v2952, %v1801
        %v2954 = vsub.f32 %v2949, %v2953
        %v2955 = vmul.f32 %v2954, %v2954
        %v2956 = vsel %vm1051, %v2955, 0.0
        %2957 = vadd.xlane.f32.xlu0 %v2956
        %v2958 = vpop.xlane.xlu0 %2957
        %v2959 = vmul.f32 %v2958, %v1801
        %v2960 = vadd.f32 %v2959, 1e-05
        %v2961 = vrsqrt.pop %v2960
        %v2962 = vmul.f32 %v2954, %v2961
        %v2963 = vmul.f32 %v2962, %v2009
        %v2964 = vadd.f32 %v2963, %v2016
        %v2965 = vpack.c.bf16 %v2964, %v2964
        %v2966 = vld [vmem:[%s19] sm:$0xf]
        %v2967 = vld [vmem:[%s19 + $0x4] sm:$0xf]
        %v2968 = vld [vmem:[%s19 + $0x8] sm:$0xf]
        %v2969 = vld [vmem:[%s19 + $0xc] sm:$0xf]
        %v2970 = vld [vmem:[%s19 + $0x10] sm:$0xf]
        %v2971 = vld [vmem:[%s19 + $0x14] sm:$0xf]
        %v2972 = vld [vmem:[%s19 + $0x18] sm:$0xf]
        %v2973 = vld [vmem:[%s19 + $0x1c] sm:$0xf]
        %v2974 = vld [vmem:[%s20] sm:$0x1]
        %v2976 = vlaneseq
        %v2977 = vshrl.u32 %v2976, 7
        %v2978 = vsub.s32 0, %v2977
        %v2979 = vrot.slane %v2974, %v2978
        %v2989 = vunpack.c.l.b16 %v2966
        %v2990 = vunpack.c.l.b16 %v2967
        %v2991 = vunpack.c.l.b16 %v2968
        %v2992 = vunpack.c.l.b16 %v2969
        %v2993 = vunpack.c.l.b16 %v2970
        %v2994 = vunpack.c.l.b16 %v2971
        %v2995 = vunpack.c.l.b16 %v2972
        %v2996 = vunpack.c.l.b16 %v2973
        %v2997 = vpack.c.b16 %v2990, %v2989
        %v2998 = vpack.c.b16 %v2992, %v2991
        %v2999 = vpack.c.b16 %v2994, %v2993
        %v3000 = vpack.c.b16 %v2996, %v2995
        %v3006 = vsel %vm1051, %v2965, 0
        %3008 = vmatprep.subr.bf16.mxu0 0
        %3009 = vmatpush1.bf16.msra.mxu0 0
        %3010 = vmatprep.subr.bf16.mxu0 0
        %3011 = vmatpush1.bf16.msra.mxu0 0
        %3012 = vmatprep.subr.bf16.mxu0 0
        %3013 = vmatpush1.bf16.msra.mxu0 0
        %3014 = vmatprep.subr.bf16.mxu0 0
        %3015 = vmatpush1.bf16.msra.mxu0 0
        %3016 = vmatprep.subr.bf16.mxu0 0
        %3017 = vmatpush1.bf16.msra.mxu0 %v3000
        %3018 = vmatprep.subr.bf16.mxu0 0
        %3019 = vmatpush1.bf16.msra.mxu0 %v2999
        %3020 = vmatprep.subr.bf16.mxu0 0
        %3021 = vmatpush1.bf16.msra.mxu0 %v2998
        %3022 = vmatprep.subr.bf16.mxu0 0
        %3023 = vmatpush1.bf16.msra.mxu0 %v2997
        %3024 = vmatprep.subr.bf16.mxu0 0
        %3025 = vmatpush2.bf16.msra.mxu0 0
        %3026 = vmatprep.subr.bf16.mxu0 0
        %3027 = vmatpush2.bf16.msra.mxu0 0
        %3028 = vmatprep.subr.bf16.mxu0 0
        %3029 = vmatpush2.bf16.msra.mxu0 0
        %3030 = vmatprep.subr.bf16.mxu0 0
        %3031 = vmatpush2.bf16.msra.mxu0 0
        %3032 = vmatprep.subr.bf16.mxu0 0
        %3033 = vmatpush2.bf16.msra.mxu0 0
        %3034 = vmatprep.subr.bf16.mxu0 0
        %3035 = vmatpush2.bf16.msra.mxu0 0
        %3036 = vmatprep.subr.bf16.mxu0 0
        %3037 = vmatpush2.bf16.msra.mxu0 0
        %3038 = vmatprep.subr.bf16.mxu0 0
        %3039 = vmatpush2.bf16.msra.mxu0 0
        %3040 = vmatprep.mubr.bf16.mxu0 0
        %3041 = vmatmul.mubr.bf16.gmra.mxu0 %v3006
        %v3042 = vpop.f32.mrf.mxu0
        %v3043 = vadd.f32 %v2979, %v3042
        %v3044 = vpop.f32.mrf.mxu0
        %v3045 = vpop.f32.mrf.mxu0
        %v3046 = vpop.f32.mrf.mxu0
        %3047 = vdwg.mxu0
        %v3048 = vmax.f32 %v3043, 0.0
        %v3049 = vpack.c.bf16 %v3048, %v3048
        %v3050 = vld [vmem:[#allocation31] sm:$0xf]
        %v3051 = vld [vmem:[#allocation31 + $0x4] sm:$0xf]
        %v3052 = vld [vmem:[#allocation31 + $0x8] sm:$0xf]
        %v3053 = vld [vmem:[#allocation31 + $0xc] sm:$0xf]
        %v3054 = vld [vmem:[#allocation31 + $0x10] sm:$0xf]
        %v3055 = vld [vmem:[#allocation31 + $0x14] sm:$0xf]
        %v3056 = vld [vmem:[#allocation31 + $0x18] sm:$0xf]
        %v3057 = vld [vmem:[#allocation31 + $0x1c] sm:$0xf]
        %v3058 = vld [vmem:[%s22] sm:$0x1]
        %v3060 = vlaneseq
        %v3061 = vshrl.u32 %v3060, 7
        %v3062 = vsub.s32 0, %v3061
        %v3063 = vrot.slane %v3058, %v3062
        %v3073 = vunpack.c.l.b16 %v3050
        %v3074 = vunpack.c.l.b16 %v3051
        %v3075 = vunpack.c.l.b16 %v3052
        %v3076 = vunpack.c.l.b16 %v3053
        %v3077 = vunpack.c.l.b16 %v3054
        %v3078 = vunpack.c.l.b16 %v3055
        %v3079 = vunpack.c.l.b16 %v3056
        %v3080 = vunpack.c.l.b16 %v3057
        %v3081 = vpack.c.b16 %v3074, %v3073
        %v3082 = vpack.c.b16 %v3076, %v3075
        %v3083 = vpack.c.b16 %v3078, %v3077
        %v3084 = vpack.c.b16 %v3080, %v3079
        %v3090 = vsel %vm1051, %v3049, 0
        %3092 = vmatprep.subr.bf16.mxu0 0
        %3093 = vmatpush1.bf16.msra.mxu0 0
        %3094 = vmatprep.subr.bf16.mxu0 0
        %3095 = vmatpush1.bf16.msra.mxu0 0
        %3096 = vmatprep.subr.bf16.mxu0 0
        %3097 = vmatpush1.bf16.msra.mxu0 0
        %3098 = vmatprep.subr.bf16.mxu0 0
        %3099 = vmatpush1.bf16.msra.mxu0 0
        %3100 = vmatprep.subr.bf16.mxu0 0
        %3101 = vmatpush1.bf16.msra.mxu0 %v3084
        %3102 = vmatprep.subr.bf16.mxu0 0
        %3103 = vmatpush1.bf16.msra.mxu0 %v3083
        %3104 = vmatprep.subr.bf16.mxu0 0
        %3105 = vmatpush1.bf16.msra.mxu0 %v3082
        %3106 = vmatprep.subr.bf16.mxu0 0
        %3107 = vmatpush1.bf16.msra.mxu0 %v3081
        %3108 = vmatprep.subr.bf16.mxu0 0
        %3109 = vmatpush2.bf16.msra.mxu0 0
        %3110 = vmatprep.subr.bf16.mxu0 0
        %3111 = vmatpush2.bf16.msra.mxu0 0
        %3112 = vmatprep.subr.bf16.mxu0 0
        %3113 = vmatpush2.bf16.msra.mxu0 0
        %3114 = vmatprep.subr.bf16.mxu0 0
        %3115 = vmatpush2.bf16.msra.mxu0 0
        %3116 = vmatprep.subr.bf16.mxu0 0
        %3117 = vmatpush2.bf16.msra.mxu0 0
        %3118 = vmatprep.subr.bf16.mxu0 0
        %3119 = vmatpush2.bf16.msra.mxu0 0
        %3120 = vmatprep.subr.bf16.mxu0 0
        %3121 = vmatpush2.bf16.msra.mxu0 0
        %3122 = vmatprep.subr.bf16.mxu0 0
        %3123 = vmatpush2.bf16.msra.mxu0 0
        %3124 = vmatprep.mubr.bf16.mxu0 0
        %3125 = vmatmul.mubr.bf16.gmra.mxu0 %v3090
        %v3126 = vpop.f32.mrf.mxu0
        %v3127 = vadd.f32 %v3063, %v3126
        %v3128 = vpop.f32.mrf.mxu0
        %v3129 = vpop.f32.mrf.mxu0
        %v3130 = vpop.f32.mrf.mxu0
        %3131 = vdwg.mxu0
        %v3132 = vpack.c.bf16 %v3127, %v3127
        %3133 = vst [vmem:[%s985] sm:$0xf] %v3132
        %s3134 = sand.u32 %s552, 1
        %s3135 = scalar_lea.sflag [#allocation4], %s3134
        %s3136 = sand.u32 %s552, 1
        %s3137 = smul.addr %s3136, 4
        %s3138 = scalar_lea.vmem [#allocation32], %s3137
        // Predicated region
        $region189: #{tpu_custom_call.1} parent=111 // pred_check
          %p3139 = pneg %p562
        $region190: #{tpu_custom_call.1} parent=111 // pred_check_branch
          %3141 = sbr.rel (%p3139) target = $region192
        $region191: #{tpu_custom_call.1} parent=111 // pred_region
          %s3143 = ssub.s32 64, 64
          %3144 = vsyncadd %s3135, %s3143
          %s3145 = smul.addr %s51, 64
          %s3146 = scalar_lea.hbm %s23, %s3145
          %s3148 = sshll.u32 %s3138, 4
          %s3149 = int_to_ptr.vmem [resolvable:$true] %s3148
          %3151 = dma.vmem_to_hbm [thread:$0]  %s3149, 64, %s3146, %s3135
        $region192: #{tpu_custom_call.1} parent=111 // pred_fallthru
          _
      $region112: #{tpu_custom_call.1} parent=5 // pred_fallthru
        _
      %p3152 = scmp.le.s32.totalorder 2, %s46
      // Predicated region
      $region193: #{tpu_custom_call.1} parent=5 // pred_check
        %p3153 = pneg %p3152
      $region194: #{tpu_custom_call.1} parent=5 // pred_check_branch
        %3155 = sbr.rel (%p3153) target = $region196
      $region195: #{tpu_custom_call.1} parent=5 // pred_region
        %s3156 = ssub.s32 %s46, 2
        // Predicated region
        $region197: #{tpu_custom_call.1} parent=195 // pred_check
          %p3157 = pneg %p568
        $region198: #{tpu_custom_call.1} parent=195 // pred_check_branch
          %3159 = sbr.rel (%p3157) target = $region200
        $region199: #{tpu_custom_call.1} parent=195 // pred_region
          %s3160 = sand.u32 %s553, 1
          %s3161 = scalar_lea.sflag [#allocation4], %s3160
          %s3162 = sand.u32 %s553, 1
          %s3163 = smul.addr %s3162, 4
          %s3164 = scalar_lea.vmem [#allocation32], %s3163
          %3165 = dma.done %s3161, 64
        $region200: #{tpu_custom_call.1} parent=195 // pred_fallthru
          _
      $region196: #{tpu_custom_call.1} parent=5 // pred_fallthru
        _
    $region6: #{tpu_custom_call.1} parent=1 // loop_footer
      %s50 = sadd.s32 1, %s46
    $region7: #{tpu_custom_call.1} parent=1 // loop_footer_branch
      %45 = sbr.rel target = $region3
    $region8: #{tpu_custom_call.1} parent=1 // loop_exit
      _
    %3166 = vsyncpa [#allocation3], 1
    %s3167 = scalar_lea.sflag [#allocation3], 1
    %3168 = vsyncpa %s3167, 1
    %3169 = vsyncpa [#allocation6], 1
    %s3170 = scalar_lea.sflag [#allocation6], 1
    %3171 = vsyncpa %s3170, 1
    %3172 = vsyncpa [#allocation9], 1
    %3173 = vsyncpa [#allocation12], 1
    %3174 = vsyncpa [#allocation15], 1
    %3175 = vsyncpa [#allocation18], 1
    %3176 = vsyncpa [#allocation21], 1
    %3177 = vsyncpa [#allocation24], 1
    %3178 = vsyncpa [#allocation27], 1
    %3179 = vsyncpa [#allocation30], 1
    %3180 = vsyncpa [#allocation4], 1
    %s3181 = scalar_lea.sflag [#allocation4], 1
    %3182 = vsyncpa %s3181, 1

</llo_original>
